<compile_context>
chip_gen: v7x
topology: tpu7x:2x2x1
jax: 0.10.0
libtpu: 0.0.40
codegen_flags: <defaults>
</compile_context>

<pallas_src>
import jax
import jax.numpy as jnp
import numpy as np
from jax.experimental import pallas as pl
from jax.experimental.pallas import tpu as pltpu

BN_EPS = 1e-5


def _vmem_limit_bytes():
    # Generation-aware scoped-VMEM limit: ~3/4 of capacity (96 MiB on v5e/v6e's
    # 128 MiB, 48 MiB on v7x's 64 MiB); fall back to the known-good 48 MiB.
    try:
        cap = pltpu.get_tpu_info().vmem_capacity_bytes
    except Exception:
        return 48 * 1024 * 1024
    return min(int(cap) * 3 // 4, 100 * 1024 * 1024)


# ----------------------------------------------------------------------------
# Kernel 1: fused Conv1d + folded BatchNorm + ReLU stack (all layers, one call).
# Grid over batch rows; activation stays in a zero-halo VMEM buffer between
# layers; each layer is a single im2col GEMM.
# ----------------------------------------------------------------------------
def conv_stack_kernel(x_ref, w_ref, scale_ref, shift_ref, out_ref, buf_ref):
    # x_ref    : (1, T, C) unpadded input row
    # w_ref    : (L, K*C, C) im2col-flattened conv weights (tap-major rows)
    # scale/shift : (L, 1, C) folded BatchNorm (+ conv bias)
    # out_ref  : (1, T, C) activation after the last conv layer
    # buf_ref  : (Tp_pad, C) VMEM scratch; halo + alignment rows stay zero
    T = out_ref.shape[1]
    C = out_ref.shape[2]
    L = w_ref.shape[0]
    K = w_ref.shape[1] // C
    pad = (K - 1) // 2
    Tp_pad = buf_ref.shape[0]

    buf_ref[...] = jnp.zeros_like(buf_ref)           # zero halo rows (once)
    buf_ref[pad:pad + T, :] = x_ref[0]
    for layer in range(L):                           # static unroll over layers
        xp = buf_ref[...]                            # (Tp_pad, C)
        # Build the (T, K*C) im2col slab: tap k is buf shifted up by k rows.
        # pltpu.roll matches jnp.roll; shift = Tp_pad - k  =>  out[i] = xp[i+k]
        # (no wraparound inside the first T rows since T + K - 1 <= Tp_pad).
        taps = [xp[:T, :]]
        for k in range(1, K):
            taps.append(pltpu.roll(xp, shift=Tp_pad - k, axis=0)[:T, :])
        slab = jnp.concatenate(taps, axis=-1)        # (T, K*C)
        y = jnp.dot(slab, w_ref[layer], preferred_element_type=jnp.float32)
        y = jnp.maximum(y * scale_ref[layer] + shift_ref[layer], 0.0)
        if layer + 1 < L:
            buf_ref[pad:pad + T, :] = y              # halo rows remain zero
        else:
            out_ref[0] = y
    # TODO(synk): dropout(p=0.5) and batch-statistics BatchNorm are training-mode
    #             only; this is the eval-mode (folded BN) forward.
    # TODO(synk): for very long T on v7x (64 MiB VMEM), additionally tile the
    #             time axis with an L*(K-1)//2 overlap-save halo and cast the
    #             conv weights to bf16 (kept f32 here to keep the f32 check tight).


def conv_stack(x_btc, conv_params):
    B, T, C = x_btc.shape
    L = len(conv_params)
    K = conv_params[0]["w"].shape[0]
    pad = (K - 1) // 2
    Tp_pad = ((T + 2 * pad + 7) // 8) * 8            # sublane-aligned halo buffer
    w_all = jnp.stack([p["w"] for p in conv_params]).reshape(L, K * C, C)
    scale_all = jnp.stack([p["scale"] for p in conv_params])  # (L, 1, C)
    shift_all = jnp.stack([p["shift"] for p in conv_params])  # (L, 1, C)
    return pl.pallas_call(
        conv_stack_kernel,
        out_shape=jax.ShapeDtypeStruct((B, T, C), jnp.float32),
        grid_spec=pltpu.PrefetchScalarGridSpec(
            num_scalar_prefetch=0,
            grid=(B,),
            in_specs=[
                pl.BlockSpec((1, T, C), lambda b: (b, 0, 0)),
                # grid-invariant operands: single-buffered (no wasted VMEM)
                pl.BlockSpec((L, K * C, C), lambda b: (0, 0, 0),
                             pipeline_mode=pl.Buffered(1)),
                pl.BlockSpec((L, 1, C), lambda b: (0, 0, 0),
                             pipeline_mode=pl.Buffered(1)),
                pl.BlockSpec((L, 1, C), lambda b: (0, 0, 0),
                             pipeline_mode=pl.Buffered(1)),
            ],
            out_specs=pl.BlockSpec((1, T, C), lambda b: (b, 0, 0)),
            scratch_shapes=[pltpu.VMEM((Tp_pad, C), jnp.float32)],
        ),
        compiler_params=pltpu.CompilerParams(
            dimension_semantics=("parallel",),
            vmem_limit_bytes=_vmem_limit_bytes()),
    )(x_btc, w_all, scale_all, shift_all)


# ----------------------------------------------------------------------------
# Kernel 2: bidirectional LSTM. Grid = (batch groups, time chunks); recurrent
# state in VMEM scratch; gates/outputs staged time-major for aligned per-step
# access; fwd/bwd cells interleaved in one statically unrolled loop.
# ----------------------------------------------------------------------------
def bilstm_kernel(len_ref, xf_ref, xb_ref, wih_f_ref, wih_b_ref,
                  b_f_ref, b_b_ref, whh_f_ref, whh_b_ref,
                  out_f_ref, out_b_ref,
                  h_f, c_f, h_b, c_b, gxf_s, gxb_s, of_s, ob_s):
    gi = pl.program_id(0)                            # batch group (parallel)
    ci = pl.program_id(1)                            # time chunk (arbitrary)
    n_chunks = pl.num_programs(1)
    BT, TILE_T, C = xf_ref.shape
    H = whh_f_ref.shape[0]

    @pl.when(ci == 0)
    def _():                                         # re-init state per batch group
        h_f[...] = jnp.zeros_like(h_f)
        c_f[...] = jnp.zeros_like(c_f)
        h_b[...] = jnp.zeros_like(h_b)
        c_b[...] = jnp.zeros_like(c_b)

    # Hoisted input projection (bias folded in), staged TIME-MAJOR so every
    # per-step read below is a leading-dim, sublane-aligned index.
    xf_t = jnp.transpose(xf_ref[...], (1, 0, 2)).reshape(TILE_T * BT, C)
    xb_t = jnp.transpose(xb_ref[...], (1, 0, 2)).reshape(TILE_T * BT, C)
    gxf_s[...] = (jnp.dot(xf_t, wih_f_ref[...], preferred_element_type=jnp.float32)
                  + b_f_ref[...]).reshape(TILE_T, BT, 4 * H)
    gxb_s[...] = (jnp.dot(xb_t, wih_b_ref[...], preferred_element_type=jnp.float32)
                  + b_b_ref[...]).reshape(TILE_T, BT, 4 * H)

    whh_f = whh_f_ref[...]
    whh_b = whh_b_ref[...]
    lens = len_ref[pl.ds(gi * BT, BT), :]            # (BT, 1) int32 for this group
    t0_f = ci * TILE_T                               # global start of fwd chunk
    t0_b = (n_chunks - 1 - ci) * TILE_T              # global start of bwd chunk

    def cell(gx_t, h_ref, c_ref, whh, m):
        gates = gx_t + jnp.dot(h_ref[...], whh, preferred_element_type=jnp.float32)
        sig = jax.nn.sigmoid(gates[:, :2 * H])       # contiguous i|f slab (EUP)
        i_g = sig[:, :H]
        f_g = sig[:, H:]
        g_g = jnp.tanh(gates[:, 2 * H:3 * H])
        o_g = jax.nn.sigmoid(gates[:, 3 * H:])
        c_new = f_g * c_ref[...] + i_g * g_g
        h_new = o_g * jnp.tanh(c_new)
        # pack_padded_sequence semantics: state frozen and output zero past length.
        h_ref[...] = m * h_new + (1.0 - m) * h_ref[...]
        c_ref[...] = m * c_new + (1.0 - m) * c_ref[...]
        return m * h_new
    # TODO(synk): on v6e/v7x the sigmoid/tanh above can run in bf16 (EUP is the
    #             per-step bottleneck); kept f32 so the f32 reference check stays tight.

    for tl in range(TILE_T):                         # static unroll; fwd/bwd interleaved
        m_f = ((t0_f + tl) < lens).astype(jnp.float32)          # (BT, 1)
        of_s[tl] = cell(gxf_s[tl], h_f, c_f, whh_f, m_f)

        tb = TILE_T - 1 - tl                         # backward walks the chunk in reverse
        m_b = ((t0_b + tb) < lens).astype(jnp.float32)
        ob_s[tb] = cell(gxb_s[tb], h_b, c_b, whh_b, m_b)

    # One blit per chunk per direction back to the batch-major output block.
    out_f_ref[...] = jnp.transpose(of_s[...], (1, 0, 2))
    out_b_ref[...] = jnp.transpose(ob_s[...], (1, 0, 2))


def _pick_tile_t(T):
    # Largest multiple-of-8 chunk (<=64): amortizes ~0.35us/grid-step overhead
    # and keeps reshape(B*TILE_T, C) / per-step indexing sublane-aligned.
    for cand in (64, 32, 16, 8):
        if T % cand == 0:
            return cand
    return T  # TODO(synk): pad T to a multiple of 8 for full alignment guarantees.


def _pick_batch_groups(B):
    # Leading "parallel" axis so the recurrent kernel can use both TensorCores
    # on v7x (the conv kernel already shards over B).
    return 2 if (B % 2 == 0 and B >= 2) else 1


def bilstm(xc_btc, lengths, lstm_params):
    B, T, C = xc_btc.shape
    H = C // 2
    TILE_T = _pick_tile_t(T)
    n_chunks = T // TILE_T
    n_bg = _pick_batch_groups(B)
    B_TILE = B // n_bg
    len2d = lengths.astype(jnp.int32).reshape(B, 1)

    out_f, out_b = pl.pallas_call(
        bilstm_kernel,
        out_shape=(jax.ShapeDtypeStruct((B, T, H), jnp.float32),
                   jax.ShapeDtypeStruct((B, T, H), jnp.float32)),
        grid_spec=pltpu.PrefetchScalarGridSpec(
            num_scalar_prefetch=0,
            grid=(n_bg, n_chunks),
            in_specs=[
                # lengths: small, resident for the whole call (sliced per group in-kernel)
                pl.BlockSpec((B, 1), lambda g, i: (0, 0),
                             pipeline_mode=pl.Buffered(1)),
                pl.BlockSpec((B_TILE, TILE_T, C), lambda g, i: (g, i, 0)),                 # x fwd chunk
                pl.BlockSpec((B_TILE, TILE_T, C), lambda g, i: (g, n_chunks - 1 - i, 0)),  # x bwd chunk
                # grid-invariant weights / biases: single-buffered
                pl.BlockSpec((C, 4 * H), lambda g, i: (0, 0), pipeline_mode=pl.Buffered(1)),
                pl.BlockSpec((C, 4 * H), lambda g, i: (0, 0), pipeline_mode=pl.Buffered(1)),
                pl.BlockSpec((1, 4 * H), lambda g, i: (0, 0), pipeline_mode=pl.Buffered(1)),
                pl.BlockSpec((1, 4 * H), lambda g, i: (0, 0), pipeline_mode=pl.Buffered(1)),
                pl.BlockSpec((H, 4 * H), lambda g, i: (0, 0), pipeline_mode=pl.Buffered(1)),
                pl.BlockSpec((H, 4 * H), lambda g, i: (0, 0), pipeline_mode=pl.Buffered(1)),
            ],
            out_specs=[pl.BlockSpec((B_TILE, TILE_T, H), lambda g, i: (g, i, 0)),
                       pl.BlockSpec((B_TILE, TILE_T, H), lambda g, i: (g, n_chunks - 1 - i, 0))],
            scratch_shapes=[pltpu.VMEM((B_TILE, H), jnp.float32) for _ in range(4)]
                          + [pltpu.VMEM((TILE_T, B_TILE, 4 * H), jnp.float32) for _ in range(2)]
                          + [pltpu.VMEM((TILE_T, B_TILE, H), jnp.float32) for _ in range(2)],
        ),
        compiler_params=pltpu.CompilerParams(
            dimension_semantics=("parallel", "arbitrary"),
            vmem_limit_bytes=_vmem_limit_bytes()),
    )(len2d, xc_btc, xc_btc,
      lstm_params["wih_f"], lstm_params["wih_b"],
      lstm_params["b_f"], lstm_params["b_b"],
      lstm_params["whh_f"], lstm_params["whh_b"])
    # Concat stays inside the same jit so XLA fuses it with the consumer.
    # TODO(synk): at production H (multiple of 128) write fwd/bwd directly into
    #             the two lane-aligned halves of a single (B, T, 2H) output.
    return jnp.concatenate([out_f, out_b], axis=-1)    # (B, T, 2H), batch-first


def encoder_forward(x_bct, input_lengths, params):
    # x_bct: (B, C, T) as in PyTorch; returns (B, T, C) like Encoder.forward.
    x = jnp.transpose(x_bct, (0, 2, 1)).astype(jnp.float32)     # (B, T, C)
    xc = conv_stack(x, params["convs"])
    return bilstm(xc, input_lengths, params["lstm"])


# ----------------------------------------------------------------------------
# Deterministic synthetic parameters (shapes implied by Encoder.__init__).
# ----------------------------------------------------------------------------
def init_params(key, C, K, n_convs):
    H = C // 2
    keys = jax.random.split(key, n_convs * 6 + 6)
    idx = 0

    def nxt():
        nonlocal idx
        k = keys[idx]
        idx += 1
        return k

    convs = []
    for _ in range(n_convs):
        w = 0.1 * jax.random.normal(nxt(), (K, C, C), jnp.float32)    # (k, Cin, Cout)
        b = 0.1 * jax.random.normal(nxt(), (C,), jnp.float32)
        gamma = 1.0 + 0.1 * jax.random.normal(nxt(), (C,), jnp.float32)
        beta = 0.1 * jax.random.normal(nxt(), (C,), jnp.float32)
        mean = 0.1 * jax.random.normal(nxt(), (C,), jnp.float32)
        var = 1.0 + 0.2 * jax.random.uniform(nxt(), (C,), jnp.float32)
        scale = gamma * jax.lax.rsqrt(var + BN_EPS)
        shift = beta + (b - mean) * scale
        convs.append({"w": w, "scale": scale[None, :], "shift": shift[None, :]})

    # NOTE: biases here are the pre-summed b_ih + b_hh of the PyTorch LSTM.
    lstm = {
        "wih_f": 0.1 * jax.random.normal(nxt(), (C, 4 * H), jnp.float32),
        "whh_f": 0.1 * jax.random.normal(nxt(), (H, 4 * H), jnp.float32),
        "b_f":   0.1 * jax.random.normal(nxt(), (1, 4 * H), jnp.float32),
        "wih_b": 0.1 * jax.random.normal(nxt(), (C, 4 * H), jnp.float32),
        "whh_b": 0.1 * jax.random.normal(nxt(), (H, 4 * H), jnp.float32),
        "b_b":   0.1 * jax.random.normal(nxt(), (1, 4 * H), jnp.float32),
    }
    return {"convs": convs, "lstm": lstm}


# ----------------------------------------------------------------------------
# Pure-JAX reference (same math) for a correctness check.
# ----------------------------------------------------------------------------
def encoder_reference(x_bct, lengths, params):
    x = jnp.transpose(x_bct, (0, 2, 1)).astype(jnp.float32)
    B, T, C = x.shape
    for layer in params["convs"]:
        w, scale, shift = layer["w"], layer["scale"], layer["shift"]
        K = w.shape[0]
        pad = (K - 1) // 2
        xpad = jnp.pad(x, ((0, 0), (pad, pad), (0, 0)))
        acc = jnp.zeros((B, T, C), jnp.float32)
        for k in range(K):
            acc = acc + jnp.einsum("btc,cd->btd", xpad[:, k:k + T, :], w[k])
        x = jnp.maximum(acc * scale + shift, 0.0)
    H = C // 2

    def run_dir(wih, whh, b, reverse):
        h = jnp.zeros((B, H), jnp.float32)
        c = jnp.zeros((B, H), jnp.float32)
        outs = [None] * T
        order = range(T - 1, -1, -1) if reverse else range(T)
        for t in order:
            m = (t < lengths).astype(jnp.float32)[:, None]
            gates = x[:, t, :] @ wih + h @ whh + b
            i = jax.nn.sigmoid(gates[:, 0:H])
            f = jax.nn.sigmoid(gates[:, H:2 * H])
            g = jnp.tanh(gates[:, 2 * H:3 * H])
            o = jax.nn.sigmoid(gates[:, 3 * H:4 * H])
            c_new = f * c + i * g
            h_new = o * jnp.tanh(c_new)
            h = m * h_new + (1.0 - m) * h
            c = m * c_new + (1.0 - m) * c
            outs[t] = m * h_new
        return jnp.stack(outs, axis=1)

    lp = params["lstm"]
    fwd = run_dir(lp["wih_f"], lp["whh_f"], lp["b_f"], False)
    bwd = run_dir(lp["wih_b"], lp["whh_b"], lp["b_b"], True)
    return jnp.concatenate([fwd, bwd], axis=-1)


if __name__ == "__main__":
    B, C, T, K, N_CONV = 2, 32, 16, 5, 3      # encoder_embedding_dim=32, kernel=5, 3 convs
    key = jax.random.PRNGKey(0)
    pkey, xkey = jax.random.split(key)
    params = init_params(pkey, C, K, N_CONV)
    x = jax.random.normal(xkey, (B, C, T), jnp.float32)       # PyTorch layout (B, C, T)
    input_lengths = jnp.array([T, 11], dtype=jnp.int32)       # sorted descending

    fwd_fn = jax.jit(encoder_forward)
    out = fwd_fn(x, input_lengths, params)
    out = jax.block_until_ready(out)

    ref = encoder_reference(x, input_lengths, params)
    assert out.shape == (B, T, C)
    np.testing.assert_allclose(np.asarray(out), np.asarray(ref), atol=2e-3, rtol=2e-3)
    print("KERNEL_OK")
</pallas_src>

<mosaic_0001>
module attributes {stable_mosaic.version = 11 : i64} {
  func.func @conv_stack_kernel(%arg0: i32, %arg1: memref<1x16x32xf32, #tpu.memory_space<vmem>>, %arg2: memref<3x160x32xf32, #tpu.memory_space<vmem>>, %arg3: memref<3x1x32xf32, #tpu.memory_space<vmem>>, %arg4: memref<3x1x32xf32, #tpu.memory_space<vmem>>, %arg5: memref<1x16x32xf32, #tpu.memory_space<vmem>>, %arg6: memref<24x32xf32, #tpu.memory_space<vmem>>) attributes {dimension_semantics = [#tpu.dimension_semantics<parallel>], iteration_bounds = array<i64: 2>, scalar_prefetch = 0 : i64, scratch_operands = 1 : i64, tpu.core_type = #tpu.core_type<tc>, window_params = [{transform_indices = @transform_0, window_bounds = array<i64: 1, 16, 32>}, {pipeline_mode = #tpu.pipeline_mode<synchronous>, transform_indices = @transform_1, window_bounds = array<i64: 3, 160, 32>}, {pipeline_mode = #tpu.pipeline_mode<synchronous>, transform_indices = @transform_2, window_bounds = array<i64: 3, 1, 32>}, {pipeline_mode = #tpu.pipeline_mode<synchronous>, transform_indices = @transform_3, window_bounds = array<i64: 3, 1, 32>}, {transform_indices = @transform_4, window_bounds = array<i64: 1, 16, 32>}]} {
    %cst = arith.constant 0.000000e+00 : f32
    %0 = vector.broadcast %cst : f32 to vector<24x32xf32>
    %c0 = arith.constant 0 : index
    %c0_0 = arith.constant 0 : index
    %1 = vector.load %arg6[%c0, %c0_0] : memref<24x32xf32, #tpu.memory_space<vmem>>, vector<24x32xf32>
    tpu.vector_store %arg6[%c0, %c0_0], %0 {strides = array<i32>} : memref<24x32xf32, #tpu.memory_space<vmem>>, vector<24x32xf32>,
    %c0_1 = arith.constant 0 : index
    %c0_2 = arith.constant 0 : index
    %c0_3 = arith.constant 0 : index
    %2 = vector.load %arg1[%c0_1, %c0_2, %c0_3] : memref<1x16x32xf32, #tpu.memory_space<vmem>>, vector<1x16x32xf32>
    %3 = vector.shape_cast %2 : vector<1x16x32xf32> to vector<16x32xf32>
    %c2 = arith.constant 2 : index
    %c0_4 = arith.constant 0 : index
    %4 = vector.load %arg6[%c2, %c0_4] : memref<24x32xf32, #tpu.memory_space<vmem>>, vector<16x32xf32>
    tpu.vector_store %arg6[%c2, %c0_4], %3 {strides = array<i32>} : memref<24x32xf32, #tpu.memory_space<vmem>>, vector<16x32xf32>,
    %c0_5 = arith.constant 0 : index
    %c0_6 = arith.constant 0 : index
    %5 = vector.load %arg6[%c0_5, %c0_6] : memref<24x32xf32, #tpu.memory_space<vmem>>, vector<24x32xf32>
    %6 = vector.extract_strided_slice %5 {offsets = [0, 0], sizes = [16, 32], strides = [1, 1]} : vector<24x32xf32> to vector<16x32xf32>
    %c23_i32 = arith.constant 23 : i32
    %7 = tpu.dynamic_rotate %5 by %c23_i32 dim 0 : vector<24x32xf32>, i32 -> vector<24x32xf32>
    %8 = vector.extract_strided_slice %7 {offsets = [0, 0], sizes = [16, 32], strides = [1, 1]} : vector<24x32xf32> to vector<16x32xf32>
    %c22_i32 = arith.constant 22 : i32
    %9 = tpu.dynamic_rotate %5 by %c22_i32 dim 0 : vector<24x32xf32>, i32 -> vector<24x32xf32>
    %10 = vector.extract_strided_slice %9 {offsets = [0, 0], sizes = [16, 32], strides = [1, 1]} : vector<24x32xf32> to vector<16x32xf32>
    %c21_i32 = arith.constant 21 : i32
    %11 = tpu.dynamic_rotate %5 by %c21_i32 dim 0 : vector<24x32xf32>, i32 -> vector<24x32xf32>
    %12 = vector.extract_strided_slice %11 {offsets = [0, 0], sizes = [16, 32], strides = [1, 1]} : vector<24x32xf32> to vector<16x32xf32>
    %c20_i32 = arith.constant 20 : i32
    %13 = tpu.dynamic_rotate %5 by %c20_i32 dim 0 : vector<24x32xf32>, i32 -> vector<24x32xf32>
    %14 = vector.extract_strided_slice %13 {offsets = [0, 0], sizes = [16, 32], strides = [1, 1]} : vector<24x32xf32> to vector<16x32xf32>
    %15 = tpu.concatenate %6, %8, %10, %12, %14 in 1 : vector<16x32xf32>, vector<16x32xf32>, vector<16x32xf32>, vector<16x32xf32>, vector<16x32xf32> -> vector<16x160xf32>
    %c0_7 = arith.constant 0 : index
    %c0_8 = arith.constant 0 : index
    %c0_9 = arith.constant 0 : index
    %16 = vector.load %arg2[%c0_7, %c0_8, %c0_9] : memref<3x160x32xf32, #tpu.memory_space<vmem>>, vector<1x160x32xf32>
    %17 = vector.shape_cast %16 : vector<1x160x32xf32> to vector<160x32xf32>
    %cst_10 = arith.constant dense<0.000000e+00> : vector<16x32xf32>
    %18 = tpu.matmul %15, %17, %cst_10 {dimension_numbers = #tpu.dot_dimension_numbers<[1], [0], [0], [1], [0, 0, 1, 1], [], []>} : vector<16x160xf32>, vector<160x32xf32>, vector<16x32xf32> -> vector<16x32xf32>
    %c0_11 = arith.constant 0 : index
    %c0_12 = arith.constant 0 : index
    %c0_13 = arith.constant 0 : index
    %19 = vector.load %arg3[%c0_11, %c0_12, %c0_13] : memref<3x1x32xf32, #tpu.memory_space<vmem>>, vector<1x1x32xf32>
    %20 = vector.shape_cast %19 : vector<1x1x32xf32> to vector<1x32xf32>
    %21 = vector.broadcast %20 : vector<1x32xf32> to vector<16x32xf32>
    %22 = arith.mulf %18, %21 : vector<16x32xf32>
    %c0_14 = arith.constant 0 : index
    %c0_15 = arith.constant 0 : index
    %c0_16 = arith.constant 0 : index
    %23 = vector.load %arg4[%c0_14, %c0_15, %c0_16] : memref<3x1x32xf32, #tpu.memory_space<vmem>>, vector<1x1x32xf32>
    %24 = vector.shape_cast %23 : vector<1x1x32xf32> to vector<1x32xf32>
    %25 = vector.broadcast %24 : vector<1x32xf32> to vector<16x32xf32>
    %26 = arith.addf %22, %25 : vector<16x32xf32>
    %cst_17 = arith.constant 0.000000e+00 : f32
    %27 = vector.broadcast %cst_17 : f32 to vector<16x32xf32>
    %28 = arith.maximumf %26, %27 : vector<16x32xf32>
    %c2_18 = arith.constant 2 : index
    %c0_19 = arith.constant 0 : index
    %29 = vector.load %arg6[%c2_18, %c0_19] : memref<24x32xf32, #tpu.memory_space<vmem>>, vector<16x32xf32>
    tpu.vector_store %arg6[%c2_18, %c0_19], %28 {strides = array<i32>} : memref<24x32xf32, #tpu.memory_space<vmem>>, vector<16x32xf32>,
    %c0_20 = arith.constant 0 : index
    %c0_21 = arith.constant 0 : index
    %30 = vector.load %arg6[%c0_20, %c0_21] : memref<24x32xf32, #tpu.memory_space<vmem>>, vector<24x32xf32>
    %31 = vector.extract_strided_slice %30 {offsets = [0, 0], sizes = [16, 32], strides = [1, 1]} : vector<24x32xf32> to vector<16x32xf32>
    %c23_i32_22 = arith.constant 23 : i32
    %32 = tpu.dynamic_rotate %30 by %c23_i32_22 dim 0 : vector<24x32xf32>, i32 -> vector<24x32xf32>
    %33 = vector.extract_strided_slice %32 {offsets = [0, 0], sizes = [16, 32], strides = [1, 1]} : vector<24x32xf32> to vector<16x32xf32>
    %c22_i32_23 = arith.constant 22 : i32
    %34 = tpu.dynamic_rotate %30 by %c22_i32_23 dim 0 : vector<24x32xf32>, i32 -> vector<24x32xf32>
    %35 = vector.extract_strided_slice %34 {offsets = [0, 0], sizes = [16, 32], strides = [1, 1]} : vector<24x32xf32> to vector<16x32xf32>
    %c21_i32_24 = arith.constant 21 : i32
    %36 = tpu.dynamic_rotate %30 by %c21_i32_24 dim 0 : vector<24x32xf32>, i32 -> vector<24x32xf32>
    %37 = vector.extract_strided_slice %36 {offsets = [0, 0], sizes = [16, 32], strides = [1, 1]} : vector<24x32xf32> to vector<16x32xf32>
    %c20_i32_25 = arith.constant 20 : i32
    %38 = tpu.dynamic_rotate %30 by %c20_i32_25 dim 0 : vector<24x32xf32>, i32 -> vector<24x32xf32>
    %39 = vector.extract_strided_slice %38 {offsets = [0, 0], sizes = [16, 32], strides = [1, 1]} : vector<24x32xf32> to vector<16x32xf32>
    %40 = tpu.concatenate %31, %33, %35, %37, %39 in 1 : vector<16x32xf32>, vector<16x32xf32>, vector<16x32xf32>, vector<16x32xf32>, vector<16x32xf32> -> vector<16x160xf32>
    %c1 = arith.constant 1 : index
    %c0_26 = arith.constant 0 : index
    %c0_27 = arith.constant 0 : index
    %41 = vector.load %arg2[%c1, %c0_26, %c0_27] : memref<3x160x32xf32, #tpu.memory_space<vmem>>, vector<1x160x32xf32>
    %42 = vector.shape_cast %41 : vector<1x160x32xf32> to vector<160x32xf32>
    %cst_28 = arith.constant dense<0.000000e+00> : vector<16x32xf32>
    %43 = tpu.matmul %40, %42, %cst_28 {dimension_numbers = #tpu.dot_dimension_numbers<[1], [0], [0], [1], [0, 0, 1, 1], [], []>} : vector<16x160xf32>, vector<160x32xf32>, vector<16x32xf32> -> vector<16x32xf32>
    %c1_29 = arith.constant 1 : index
    %c0_30 = arith.constant 0 : index
    %c0_31 = arith.constant 0 : index
    %44 = vector.load %arg3[%c1_29, %c0_30, %c0_31] : memref<3x1x32xf32, #tpu.memory_space<vmem>>, vector<1x1x32xf32>
    %45 = vector.shape_cast %44 : vector<1x1x32xf32> to vector<1x32xf32>
    %46 = vector.broadcast %45 : vector<1x32xf32> to vector<16x32xf32>
    %47 = arith.mulf %43, %46 : vector<16x32xf32>
    %c1_32 = arith.constant 1 : index
    %c0_33 = arith.constant 0 : index
    %c0_34 = arith.constant 0 : index
    %48 = vector.load %arg4[%c1_32, %c0_33, %c0_34] : memref<3x1x32xf32, #tpu.memory_space<vmem>>, vector<1x1x32xf32>
    %49 = vector.shape_cast %48 : vector<1x1x32xf32> to vector<1x32xf32>
    %50 = vector.broadcast %49 : vector<1x32xf32> to vector<16x32xf32>
    %51 = arith.addf %47, %50 : vector<16x32xf32>
    %cst_35 = arith.constant 0.000000e+00 : f32
    %52 = vector.broadcast %cst_35 : f32 to vector<16x32xf32>
    %53 = arith.maximumf %51, %52 : vector<16x32xf32>
    %c2_36 = arith.constant 2 : index
    %c0_37 = arith.constant 0 : index
    %54 = vector.load %arg6[%c2_36, %c0_37] : memref<24x32xf32, #tpu.memory_space<vmem>>, vector<16x32xf32>
    tpu.vector_store %arg6[%c2_36, %c0_37], %53 {strides = array<i32>} : memref<24x32xf32, #tpu.memory_space<vmem>>, vector<16x32xf32>,
    %c0_38 = arith.constant 0 : index
    %c0_39 = arith.constant 0 : index
    %55 = vector.load %arg6[%c0_38, %c0_39] : memref<24x32xf32, #tpu.memory_space<vmem>>, vector<24x32xf32>
    %56 = vector.extract_strided_slice %55 {offsets = [0, 0], sizes = [16, 32], strides = [1, 1]} : vector<24x32xf32> to vector<16x32xf32>
    %c23_i32_40 = arith.constant 23 : i32
    %57 = tpu.dynamic_rotate %55 by %c23_i32_40 dim 0 : vector<24x32xf32>, i32 -> vector<24x32xf32>
    %58 = vector.extract_strided_slice %57 {offsets = [0, 0], sizes = [16, 32], strides = [1, 1]} : vector<24x32xf32> to vector<16x32xf32>
    %c22_i32_41 = arith.constant 22 : i32
    %59 = tpu.dynamic_rotate %55 by %c22_i32_41 dim 0 : vector<24x32xf32>, i32 -> vector<24x32xf32>
    %60 = vector.extract_strided_slice %59 {offsets = [0, 0], sizes = [16, 32], strides = [1, 1]} : vector<24x32xf32> to vector<16x32xf32>
    %c21_i32_42 = arith.constant 21 : i32
    %61 = tpu.dynamic_rotate %55 by %c21_i32_42 dim 0 : vector<24x32xf32>, i32 -> vector<24x32xf32>
    %62 = vector.extract_strided_slice %61 {offsets = [0, 0], sizes = [16, 32], strides = [1, 1]} : vector<24x32xf32> to vector<16x32xf32>
    %c20_i32_43 = arith.constant 20 : i32
    %63 = tpu.dynamic_rotate %55 by %c20_i32_43 dim 0 : vector<24x32xf32>, i32 -> vector<24x32xf32>
    %64 = vector.extract_strided_slice %63 {offsets = [0, 0], sizes = [16, 32], strides = [1, 1]} : vector<24x32xf32> to vector<16x32xf32>
    %65 = tpu.concatenate %56, %58, %60, %62, %64 in 1 : vector<16x32xf32>, vector<16x32xf32>, vector<16x32xf32>, vector<16x32xf32>, vector<16x32xf32> -> vector<16x160xf32>
    %c2_44 = arith.constant 2 : index
    %c0_45 = arith.constant 0 : index
    %c0_46 = arith.constant 0 : index
    %66 = vector.load %arg2[%c2_44, %c0_45, %c0_46] : memref<3x160x32xf32, #tpu.memory_space<vmem>>, vector<1x160x32xf32>
    %67 = vector.shape_cast %66 : vector<1x160x32xf32> to vector<160x32xf32>
    %cst_47 = arith.constant dense<0.000000e+00> : vector<16x32xf32>
    %68 = tpu.matmul %65, %67, %cst_47 {dimension_numbers = #tpu.dot_dimension_numbers<[1], [0], [0], [1], [0, 0, 1, 1], [], []>} : vector<16x160xf32>, vector<160x32xf32>, vector<16x32xf32> -> vector<16x32xf32>
    %c2_48 = arith.constant 2 : index
    %c0_49 = arith.constant 0 : index
    %c0_50 = arith.constant 0 : index
    %69 = vector.load %arg3[%c2_48, %c0_49, %c0_50] : memref<3x1x32xf32, #tpu.memory_space<vmem>>, vector<1x1x32xf32>
    %70 = vector.shape_cast %69 : vector<1x1x32xf32> to vector<1x32xf32>
    %71 = vector.broadcast %70 : vector<1x32xf32> to vector<16x32xf32>
    %72 = arith.mulf %68, %71 : vector<16x32xf32>
    %c2_51 = arith.constant 2 : index
    %c0_52 = arith.constant 0 : index
    %c0_53 = arith.constant 0 : index
    %73 = vector.load %arg4[%c2_51, %c0_52, %c0_53] : memref<3x1x32xf32, #tpu.memory_space<vmem>>, vector<1x1x32xf32>
    %74 = vector.shape_cast %73 : vector<1x1x32xf32> to vector<1x32xf32>
    %75 = vector.broadcast %74 : vector<1x32xf32> to vector<16x32xf32>
    %76 = arith.addf %72, %75 : vector<16x32xf32>
    %cst_54 = arith.constant 0.000000e+00 : f32
    %77 = vector.broadcast %cst_54 : f32 to vector<16x32xf32>
    %78 = arith.maximumf %76, %77 : vector<16x32xf32>
    %c0_55 = arith.constant 0 : index
    %c0_56 = arith.constant 0 : index
    %c0_57 = arith.constant 0 : index
    %79 = vector.load %arg5[%c0_55, %c0_56, %c0_57] : memref<1x16x32xf32, #tpu.memory_space<vmem>>, vector<1x16x32xf32>
    %80 = vector.shape_cast %79 : vector<1x16x32xf32> to vector<16x32xf32>
    %81 = vector.shape_cast %78 : vector<16x32xf32> to vector<1x16x32xf32>
    tpu.vector_store %arg5[%c0_55, %c0_56, %c0_57], %81 {strides = array<i32>} : memref<1x16x32xf32, #tpu.memory_space<vmem>>, vector<1x16x32xf32>,
    return
  }
  func.func @transform_0(%arg0: i32) -> (i32, i32, i32) {
    %c0_i32 = arith.constant 0 : i32
    %c0_i32_0 = arith.constant 0 : i32
    %c0_i32_1 = arith.constant 0 : i32
    return %arg0, %c0_i32, %c0_i32_0 : i32, i32, i32
  }
  func.func @transform_1(%arg0: i32) -> (i32, i32, i32) {
    %c0_i32 = arith.constant 0 : i32
    %c0_i32_0 = arith.constant 0 : i32
    %c0_i32_1 = arith.constant 0 : i32
    %c0_i32_2 = arith.constant 0 : i32
    return %c0_i32, %c0_i32_0, %c0_i32_1 : i32, i32, i32
  }
  func.func @transform_2(%arg0: i32) -> (i32, i32, i32) {
    %c0_i32 = arith.constant 0 : i32
    %c0_i32_0 = arith.constant 0 : i32
    %c0_i32_1 = arith.constant 0 : i32
    %c0_i32_2 = arith.constant 0 : i32
    return %c0_i32, %c0_i32_0, %c0_i32_1 : i32, i32, i32
  }
  func.func @transform_3(%arg0: i32) -> (i32, i32, i32) {
    %c0_i32 = arith.constant 0 : i32
    %c0_i32_0 = arith.constant 0 : i32
    %c0_i32_1 = arith.constant 0 : i32
    %c0_i32_2 = arith.constant 0 : i32
    return %c0_i32, %c0_i32_0, %c0_i32_1 : i32, i32, i32
  }
  func.func @transform_4(%arg0: i32) -> (i32, i32, i32) {
    %c0_i32 = arith.constant 0 : i32
    %c0_i32_0 = arith.constant 0 : i32
    %c0_i32_1 = arith.constant 0 : i32
    return %arg0, %c0_i32, %c0_i32_0 : i32, i32, i32
  }
}

module attributes {stable_mosaic.version = 11 : i64} {
  func.func @bilstm_kernel(%arg0: i32, %arg1: i32, %arg2: memref<2x1xi32, #tpu.memory_space<vmem>>, %arg3: memref<1x16x32xf32, #tpu.memory_space<vmem>>, %arg4: memref<1x16x32xf32, #tpu.memory_space<vmem>>, %arg5: memref<32x64xf32, #tpu.memory_space<vmem>>, %arg6: memref<32x64xf32, #tpu.memory_space<vmem>>, %arg7: memref<1x64xf32, #tpu.memory_space<vmem>>, %arg8: memref<1x64xf32, #tpu.memory_space<vmem>>, %arg9: memref<16x64xf32, #tpu.memory_space<vmem>>, %arg10: memref<16x64xf32, #tpu.memory_space<vmem>>, %arg11: memref<1x16x16xf32, #tpu.memory_space<vmem>>, %arg12: memref<1x16x16xf32, #tpu.memory_space<vmem>>, %arg13: memref<1x16xf32, #tpu.memory_space<vmem>>, %arg14: memref<1x16xf32, #tpu.memory_space<vmem>>, %arg15: memref<1x16xf32, #tpu.memory_space<vmem>>, %arg16: memref<1x16xf32, #tpu.memory_space<vmem>>, %arg17: memref<16x1x64xf32, #tpu.memory_space<vmem>>, %arg18: memref<16x1x64xf32, #tpu.memory_space<vmem>>, %arg19: memref<16x1x16xf32, #tpu.memory_space<vmem>>, %arg20: memref<16x1x16xf32, #tpu.memory_space<vmem>>) attributes {dimension_semantics = [#tpu.dimension_semantics<parallel>, #tpu.dimension_semantics<arbitrary>], iteration_bounds = array<i64: 2, 1>, scalar_prefetch = 0 : i64, scratch_operands = 8 : i64, tpu.core_type = #tpu.core_type<tc>, window_params = [{pipeline_mode = #tpu.pipeline_mode<synchronous>, transform_indices = @transform_0, window_bounds = array<i64: 2, 1>}, {transform_indices = @transform_1, window_bounds = array<i64: 1, 16, 32>}, {transform_indices = @transform_2, window_bounds = array<i64: 1, 16, 32>}, {pipeline_mode = #tpu.pipeline_mode<synchronous>, transform_indices = @transform_3, window_bounds = array<i64: 32, 64>}, {pipeline_mode = #tpu.pipeline_mode<synchronous>, transform_indices = @transform_4, window_bounds = array<i64: 32, 64>}, {pipeline_mode = #tpu.pipeline_mode<synchronous>, transform_indices = @transform_5, window_bounds = array<i64: 1, 64>}, {pipeline_mode = #tpu.pipeline_mode<synchronous>, transform_indices = @transform_6, window_bounds = array<i64: 1, 64>}, {pipeline_mode = #tpu.pipeline_mode<synchronous>, transform_indices = @transform_7, window_bounds = array<i64: 16, 64>}, {pipeline_mode = #tpu.pipeline_mode<synchronous>, transform_indices = @transform_8, window_bounds = array<i64: 16, 64>}, {transform_indices = @transform_9, window_bounds = array<i64: 1, 16, 16>}, {transform_indices = @transform_10, window_bounds = array<i64: 1, 16, 16>}]} {
    %c0_i32 = arith.constant 0 : i32
    %0 = arith.cmpi eq, %arg1, %c0_i32 : i32
    %1 = arith.extui %0 : i1 to i32
    %c0_i32_0 = arith.constant 0 : i32
    %2 = arith.cmpi ne, %1, %c0_i32_0 : i32
    scf.if %2 {
      %cst_779 = arith.constant 0.000000e+00 : f32
      %1797 = vector.broadcast %cst_779 : f32 to vector<1x16xf32>
      %c0_780 = arith.constant 0 : index
      %c0_781 = arith.constant 0 : index
      %1798 = vector.load %arg13[%c0_780, %c0_781] : memref<1x16xf32, #tpu.memory_space<vmem>>, vector<1x16xf32>
      tpu.vector_store %arg13[%c0_780, %c0_781], %1797 {strides = array<i32>} : memref<1x16xf32, #tpu.memory_space<vmem>>, vector<1x16xf32>,
      %cst_782 = arith.constant 0.000000e+00 : f32
      %1799 = vector.broadcast %cst_782 : f32 to vector<1x16xf32>
      %c0_783 = arith.constant 0 : index
      %c0_784 = arith.constant 0 : index
      %1800 = vector.load %arg14[%c0_783, %c0_784] : memref<1x16xf32, #tpu.memory_space<vmem>>, vector<1x16xf32>
      tpu.vector_store %arg14[%c0_783, %c0_784], %1799 {strides = array<i32>} : memref<1x16xf32, #tpu.memory_space<vmem>>, vector<1x16xf32>,
      %cst_785 = arith.constant 0.000000e+00 : f32
      %1801 = vector.broadcast %cst_785 : f32 to vector<1x16xf32>
      %c0_786 = arith.constant 0 : index
      %c0_787 = arith.constant 0 : index
      %1802 = vector.load %arg15[%c0_786, %c0_787] : memref<1x16xf32, #tpu.memory_space<vmem>>, vector<1x16xf32>
      tpu.vector_store %arg15[%c0_786, %c0_787], %1801 {strides = array<i32>} : memref<1x16xf32, #tpu.memory_space<vmem>>, vector<1x16xf32>,
      %cst_788 = arith.constant 0.000000e+00 : f32
      %1803 = vector.broadcast %cst_788 : f32 to vector<1x16xf32>
      %c0_789 = arith.constant 0 : index
      %c0_790 = arith.constant 0 : index
      %1804 = vector.load %arg16[%c0_789, %c0_790] : memref<1x16xf32, #tpu.memory_space<vmem>>, vector<1x16xf32>
      tpu.vector_store %arg16[%c0_789, %c0_790], %1803 {strides = array<i32>} : memref<1x16xf32, #tpu.memory_space<vmem>>, vector<1x16xf32>,
    } else {
    }
    %c0 = arith.constant 0 : index
    %c0_1 = arith.constant 0 : index
    %c0_2 = arith.constant 0 : index
    %3 = vector.load %arg3[%c0, %c0_1, %c0_2] : memref<1x16x32xf32, #tpu.memory_space<vmem>>, vector<1x16x32xf32>
    %4 = tpu.transpose %3, [1, 0, 2] : vector<1x16x32xf32> -> vector<16x1x32xf32>
    %5 = vector.shape_cast %4 : vector<16x1x32xf32> to vector<16x32xf32>
    %c0_3 = arith.constant 0 : index
    %c0_4 = arith.constant 0 : index
    %c0_5 = arith.constant 0 : index
    %6 = vector.load %arg4[%c0_3, %c0_4, %c0_5] : memref<1x16x32xf32, #tpu.memory_space<vmem>>, vector<1x16x32xf32>
    %7 = tpu.transpose %6, [1, 0, 2] : vector<1x16x32xf32> -> vector<16x1x32xf32>
    %8 = vector.shape_cast %7 : vector<16x1x32xf32> to vector<16x32xf32>
    %c0_6 = arith.constant 0 : index
    %c0_7 = arith.constant 0 : index
    %9 = vector.load %arg5[%c0_6, %c0_7] : memref<32x64xf32, #tpu.memory_space<vmem>>, vector<32x64xf32>
    %cst = arith.constant dense<0.000000e+00> : vector<16x64xf32>
    %10 = tpu.matmul %5, %9, %cst {dimension_numbers = #tpu.dot_dimension_numbers<[1], [0], [0], [1], [0, 0, 1, 1], [], []>} : vector<16x32xf32>, vector<32x64xf32>, vector<16x64xf32> -> vector<16x64xf32>
    %c0_8 = arith.constant 0 : index
    %c0_9 = arith.constant 0 : index
    %11 = vector.load %arg7[%c0_8, %c0_9] : memref<1x64xf32, #tpu.memory_space<vmem>>, vector<1x64xf32>
    %12 = vector.broadcast %11 : vector<1x64xf32> to vector<16x64xf32>
    %13 = arith.addf %10, %12 : vector<16x64xf32>
    %14 = vector.shape_cast %13 : vector<16x64xf32> to vector<16x1x64xf32>
    %c0_10 = arith.constant 0 : index
    %c0_11 = arith.constant 0 : index
    %c0_12 = arith.constant 0 : index
    %15 = vector.load %arg17[%c0_10, %c0_11, %c0_12] : memref<16x1x64xf32, #tpu.memory_space<vmem>>, vector<16x1x64xf32>
    tpu.vector_store %arg17[%c0_10, %c0_11, %c0_12], %14 {strides = array<i32>} : memref<16x1x64xf32, #tpu.memory_space<vmem>>, vector<16x1x64xf32>,
    %c0_13 = arith.constant 0 : index
    %c0_14 = arith.constant 0 : index
    %16 = vector.load %arg6[%c0_13, %c0_14] : memref<32x64xf32, #tpu.memory_space<vmem>>, vector<32x64xf32>
    %cst_15 = arith.constant dense<0.000000e+00> : vector<16x64xf32>
    %17 = tpu.matmul %8, %16, %cst_15 {dimension_numbers = #tpu.dot_dimension_numbers<[1], [0], [0], [1], [0, 0, 1, 1], [], []>} : vector<16x32xf32>, vector<32x64xf32>, vector<16x64xf32> -> vector<16x64xf32>
    %c0_16 = arith.constant 0 : index
    %c0_17 = arith.constant 0 : index
    %18 = vector.load %arg8[%c0_16, %c0_17] : memref<1x64xf32, #tpu.memory_space<vmem>>, vector<1x64xf32>
    %19 = vector.broadcast %18 : vector<1x64xf32> to vector<16x64xf32>
    %20 = arith.addf %17, %19 : vector<16x64xf32>
    %21 = vector.shape_cast %20 : vector<16x64xf32> to vector<16x1x64xf32>
    %c0_18 = arith.constant 0 : index
    %c0_19 = arith.constant 0 : index
    %c0_20 = arith.constant 0 : index
    %22 = vector.load %arg18[%c0_18, %c0_19, %c0_20] : memref<16x1x64xf32, #tpu.memory_space<vmem>>, vector<16x1x64xf32>
    tpu.vector_store %arg18[%c0_18, %c0_19, %c0_20], %21 {strides = array<i32>} : memref<16x1x64xf32, #tpu.memory_space<vmem>>, vector<16x1x64xf32>,
    %c0_21 = arith.constant 0 : index
    %c0_22 = arith.constant 0 : index
    %23 = vector.load %arg9[%c0_21, %c0_22] : memref<16x64xf32, #tpu.memory_space<vmem>>, vector<16x64xf32>
    %c0_23 = arith.constant 0 : index
    %c0_24 = arith.constant 0 : index
    %24 = vector.load %arg10[%c0_23, %c0_24] : memref<16x64xf32, #tpu.memory_space<vmem>>, vector<16x64xf32>
    %c1_i32 = arith.constant 1 : i32
    %25 = arith.muli %arg0, %c1_i32 : i32
    %26 = arith.index_cast %25 : i32 to index
    %c0_25 = arith.constant 0 : index
    %27 = vector.load %arg2[%26, %c0_25] : memref<2x1xi32, #tpu.memory_space<vmem>>, vector<1x1xi32>
    %c16_i32 = arith.constant 16 : i32
    %28 = arith.muli %arg1, %c16_i32 : i32
    %c0_i32_26 = arith.constant 0 : i32
    %29 = arith.subi %c0_i32_26, %arg1 : i32
    %c16_i32_27 = arith.constant 16 : i32
    %30 = arith.muli %29, %c16_i32_27 : i32
    %c0_i32_28 = arith.constant 0 : i32
    %31 = arith.addi %28, %c0_i32_28 : i32
    %32 = vector.broadcast %31 : i32 to vector<1x1xi32>
    %33 = arith.cmpi slt, %32, %27 : vector<1x1xi32>
    %34 = arith.extui %33 : vector<1x1xi1> to vector<1x1xi32>
    %35 = arith.sitofp %34 : vector<1x1xi32> to vector<1x1xf32>
    %c0_29 = arith.constant 0 : index
    %c0_30 = arith.constant 0 : index
    %c0_31 = arith.constant 0 : index
    %36 = vector.load %arg17[%c0_29, %c0_30, %c0_31] : memref<16x1x64xf32, #tpu.memory_space<vmem>>, vector<1x1x64xf32>
    %37 = vector.shape_cast %36 : vector<1x1x64xf32> to vector<1x64xf32>
    %c0_32 = arith.constant 0 : index
    %c0_33 = arith.constant 0 : index
    %38 = vector.load %arg13[%c0_32, %c0_33] : memref<1x16xf32, #tpu.memory_space<vmem>>, vector<1x16xf32>
    %cst_34 = arith.constant dense<0.000000e+00> : vector<1x64xf32>
    %39 = tpu.matmul %38, %23, %cst_34 {dimension_numbers = #tpu.dot_dimension_numbers<[1], [0], [0], [1], [0, 0, 1, 1], [], []>} : vector<1x16xf32>, vector<16x64xf32>, vector<1x64xf32> -> vector<1x64xf32>
    %40 = arith.addf %37, %39 : vector<1x64xf32>
    %41 = vector.extract_strided_slice %40 {offsets = [0, 0], sizes = [1, 32], strides = [1, 1]} : vector<1x64xf32> to vector<1x32xf32>
    %42 = arith.negf %41 : vector<1x32xf32>
    %43 = math.exp %42 : vector<1x32xf32>
    %cst_35 = arith.constant 1.000000e+00 : f32
    %44 = vector.broadcast %cst_35 : f32 to vector<1x32xf32>
    %45 = arith.addf %44, %43 : vector<1x32xf32>
    %46 = arith.divf %44, %45 : vector<1x32xf32>
    %47 = vector.extract_strided_slice %46 {offsets = [0, 0], sizes = [1, 16], strides = [1, 1]} : vector<1x32xf32> to vector<1x16xf32>
    %48 = vector.extract_strided_slice %46 {offsets = [0, 16], sizes = [1, 16], strides = [1, 1]} : vector<1x32xf32> to vector<1x16xf32>
    %49 = vector.extract_strided_slice %40 {offsets = [0, 32], sizes = [1, 16], strides = [1, 1]} : vector<1x64xf32> to vector<1x16xf32>
    %50 = math.tanh %49 : vector<1x16xf32>
    %51 = vector.extract_strided_slice %40 {offsets = [0, 48], sizes = [1, 16], strides = [1, 1]} : vector<1x64xf32> to vector<1x16xf32>
    %52 = arith.negf %51 : vector<1x16xf32>
    %53 = math.exp %52 : vector<1x16xf32>
    %cst_36 = arith.constant 1.000000e+00 : f32
    %54 = vector.broadcast %cst_36 : f32 to vector<1x16xf32>
    %55 = arith.addf %54, %53 : vector<1x16xf32>
    %56 = arith.divf %54, %55 : vector<1x16xf32>
    %c0_37 = arith.constant 0 : index
    %c0_38 = arith.constant 0 : index
    %57 = vector.load %arg14[%c0_37, %c0_38] : memref<1x16xf32, #tpu.memory_space<vmem>>, vector<1x16xf32>
    %58 = arith.mulf %48, %57 : vector<1x16xf32>
    %59 = arith.mulf %47, %50 : vector<1x16xf32>
    %60 = arith.addf %58, %59 : vector<1x16xf32>
    %61 = math.tanh %60 : vector<1x16xf32>
    %62 = arith.mulf %56, %61 : vector<1x16xf32>
    %63 = vector.broadcast %35 : vector<1x1xf32> to vector<1x16xf32>
    %64 = arith.mulf %63, %62 : vector<1x16xf32>
    %cst_39 = arith.constant 1.000000e+00 : f32
    %65 = vector.broadcast %cst_39 : f32 to vector<1x1xf32>
    %66 = arith.subf %65, %35 : vector<1x1xf32>
    %c0_40 = arith.constant 0 : index
    %c0_41 = arith.constant 0 : index
    %67 = vector.load %arg13[%c0_40, %c0_41] : memref<1x16xf32, #tpu.memory_space<vmem>>, vector<1x16xf32>
    %68 = vector.broadcast %66 : vector<1x1xf32> to vector<1x16xf32>
    %69 = arith.mulf %68, %67 : vector<1x16xf32>
    %70 = arith.addf %64, %69 : vector<1x16xf32>
    %c0_42 = arith.constant 0 : index
    %c0_43 = arith.constant 0 : index
    %71 = vector.load %arg13[%c0_42, %c0_43] : memref<1x16xf32, #tpu.memory_space<vmem>>, vector<1x16xf32>
    tpu.vector_store %arg13[%c0_42, %c0_43], %70 {strides = array<i32>} : memref<1x16xf32, #tpu.memory_space<vmem>>, vector<1x16xf32>,
    %72 = vector.broadcast %35 : vector<1x1xf32> to vector<1x16xf32>
    %73 = arith.mulf %72, %60 : vector<1x16xf32>
    %cst_44 = arith.constant 1.000000e+00 : f32
    %74 = vector.broadcast %cst_44 : f32 to vector<1x1xf32>
    %75 = arith.subf %74, %35 : vector<1x1xf32>
    %c0_45 = arith.constant 0 : index
    %c0_46 = arith.constant 0 : index
    %76 = vector.load %arg14[%c0_45, %c0_46] : memref<1x16xf32, #tpu.memory_space<vmem>>, vector<1x16xf32>
    %77 = vector.broadcast %75 : vector<1x1xf32> to vector<1x16xf32>
    %78 = arith.mulf %77, %76 : vector<1x16xf32>
    %79 = arith.addf %73, %78 : vector<1x16xf32>
    %c0_47 = arith.constant 0 : index
    %c0_48 = arith.constant 0 : index
    %80 = vector.load %arg14[%c0_47, %c0_48] : memref<1x16xf32, #tpu.memory_space<vmem>>, vector<1x16xf32>
    tpu.vector_store %arg14[%c0_47, %c0_48], %79 {strides = array<i32>} : memref<1x16xf32, #tpu.memory_space<vmem>>, vector<1x16xf32>,
    %81 = vector.broadcast %35 : vector<1x1xf32> to vector<1x16xf32>
    %82 = arith.mulf %81, %62 : vector<1x16xf32>
    %c0_49 = arith.constant 0 : index
    %c0_50 = arith.constant 0 : index
    %c0_51 = arith.constant 0 : index
    %83 = vector.load %arg19[%c0_49, %c0_50, %c0_51] : memref<16x1x16xf32, #tpu.memory_space<vmem>>, vector<1x1x16xf32>
    %84 = vector.shape_cast %83 : vector<1x1x16xf32> to vector<1x16xf32>
    %85 = vector.shape_cast %82 : vector<1x16xf32> to vector<1x1x16xf32>
    tpu.vector_store %arg19[%c0_49, %c0_50, %c0_51], %85 {strides = array<i32>} : memref<16x1x16xf32, #tpu.memory_space<vmem>>, vector<1x1x16xf32>,
    %c15_i32 = arith.constant 15 : i32
    %86 = arith.addi %30, %c15_i32 : i32
    %87 = vector.broadcast %86 : i32 to vector<1x1xi32>
    %88 = arith.cmpi slt, %87, %27 : vector<1x1xi32>
    %89 = arith.extui %88 : vector<1x1xi1> to vector<1x1xi32>
    %90 = arith.sitofp %89 : vector<1x1xi32> to vector<1x1xf32>
    %c15 = arith.constant 15 : index
    %c0_52 = arith.constant 0 : index
    %c0_53 = arith.constant 0 : index
    %91 = vector.load %arg18[%c15, %c0_52, %c0_53] : memref<16x1x64xf32, #tpu.memory_space<vmem>>, vector<1x1x64xf32>
    %92 = vector.shape_cast %91 : vector<1x1x64xf32> to vector<1x64xf32>
    %c0_54 = arith.constant 0 : index
    %c0_55 = arith.constant 0 : index
    %93 = vector.load %arg15[%c0_54, %c0_55] : memref<1x16xf32, #tpu.memory_space<vmem>>, vector<1x16xf32>
    %cst_56 = arith.constant dense<0.000000e+00> : vector<1x64xf32>
    %94 = tpu.matmul %93, %24, %cst_56 {dimension_numbers = #tpu.dot_dimension_numbers<[1], [0], [0], [1], [0, 0, 1, 1], [], []>} : vector<1x16xf32>, vector<16x64xf32>, vector<1x64xf32> -> vector<1x64xf32>
    %95 = arith.addf %92, %94 : vector<1x64xf32>
    %96 = vector.extract_strided_slice %95 {offsets = [0, 0], sizes = [1, 32], strides = [1, 1]} : vector<1x64xf32> to vector<1x32xf32>
    %97 = arith.negf %96 : vector<1x32xf32>
    %98 = math.exp %97 : vector<1x32xf32>
    %cst_57 = arith.constant 1.000000e+00 : f32
    %99 = vector.broadcast %cst_57 : f32 to vector<1x32xf32>
    %100 = arith.addf %99, %98 : vector<1x32xf32>
    %101 = arith.divf %99, %100 : vector<1x32xf32>
    %102 = vector.extract_strided_slice %101 {offsets = [0, 0], sizes = [1, 16], strides = [1, 1]} : vector<1x32xf32> to vector<1x16xf32>
    %103 = vector.extract_strided_slice %101 {offsets = [0, 16], sizes = [1, 16], strides = [1, 1]} : vector<1x32xf32> to vector<1x16xf32>
    %104 = vector.extract_strided_slice %95 {offsets = [0, 32], sizes = [1, 16], strides = [1, 1]} : vector<1x64xf32> to vector<1x16xf32>
    %105 = math.tanh %104 : vector<1x16xf32>
    %106 = vector.extract_strided_slice %95 {offsets = [0, 48], sizes = [1, 16], strides = [1, 1]} : vector<1x64xf32> to vector<1x16xf32>
    %107 = arith.negf %106 : vector<1x16xf32>
    %108 = math.exp %107 : vector<1x16xf32>
    %cst_58 = arith.constant 1.000000e+00 : f32
    %109 = vector.broadcast %cst_58 : f32 to vector<1x16xf32>
    %110 = arith.addf %109, %108 : vector<1x16xf32>
    %111 = arith.divf %109, %110 : vector<1x16xf32>
    %c0_59 = arith.constant 0 : index
    %c0_60 = arith.constant 0 : index
    %112 = vector.load %arg16[%c0_59, %c0_60] : memref<1x16xf32, #tpu.memory_space<vmem>>, vector<1x16xf32>
    %113 = arith.mulf %103, %112 : vector<1x16xf32>
    %114 = arith.mulf %102, %105 : vector<1x16xf32>
    %115 = arith.addf %113, %114 : vector<1x16xf32>
    %116 = math.tanh %115 : vector<1x16xf32>
    %117 = arith.mulf %111, %116 : vector<1x16xf32>
    %118 = vector.broadcast %90 : vector<1x1xf32> to vector<1x16xf32>
    %119 = arith.mulf %118, %117 : vector<1x16xf32>
    %cst_61 = arith.constant 1.000000e+00 : f32
    %120 = vector.broadcast %cst_61 : f32 to vector<1x1xf32>
    %121 = arith.subf %120, %90 : vector<1x1xf32>
    %c0_62 = arith.constant 0 : index
    %c0_63 = arith.constant 0 : index
    %122 = vector.load %arg15[%c0_62, %c0_63] : memref<1x16xf32, #tpu.memory_space<vmem>>, vector<1x16xf32>
    %123 = vector.broadcast %121 : vector<1x1xf32> to vector<1x16xf32>
    %124 = arith.mulf %123, %122 : vector<1x16xf32>
    %125 = arith.addf %119, %124 : vector<1x16xf32>
    %c0_64 = arith.constant 0 : index
    %c0_65 = arith.constant 0 : index
    %126 = vector.load %arg15[%c0_64, %c0_65] : memref<1x16xf32, #tpu.memory_space<vmem>>, vector<1x16xf32>
    tpu.vector_store %arg15[%c0_64, %c0_65], %125 {strides = array<i32>} : memref<1x16xf32, #tpu.memory_space<vmem>>, vector<1x16xf32>,
    %127 = vector.broadcast %90 : vector<1x1xf32> to vector<1x16xf32>
    %128 = arith.mulf %127, %115 : vector<1x16xf32>
    %cst_66 = arith.constant 1.000000e+00 : f32
    %129 = vector.broadcast %cst_66 : f32 to vector<1x1xf32>
    %130 = arith.subf %129, %90 : vector<1x1xf32>
    %c0_67 = arith.constant 0 : index
    %c0_68 = arith.constant 0 : index
    %131 = vector.load %arg16[%c0_67, %c0_68] : memref<1x16xf32, #tpu.memory_space<vmem>>, vector<1x16xf32>
    %132 = vector.broadcast %130 : vector<1x1xf32> to vector<1x16xf32>
    %133 = arith.mulf %132, %131 : vector<1x16xf32>
    %134 = arith.addf %128, %133 : vector<1x16xf32>
    %c0_69 = arith.constant 0 : index
    %c0_70 = arith.constant 0 : index
    %135 = vector.load %arg16[%c0_69, %c0_70] : memref<1x16xf32, #tpu.memory_space<vmem>>, vector<1x16xf32>
    tpu.vector_store %arg16[%c0_69, %c0_70], %134 {strides = array<i32>} : memref<1x16xf32, #tpu.memory_space<vmem>>, vector<1x16xf32>,
    %136 = vector.broadcast %90 : vector<1x1xf32> to vector<1x16xf32>
    %137 = arith.mulf %136, %117 : vector<1x16xf32>
    %c15_71 = arith.constant 15 : index
    %c0_72 = arith.constant 0 : index
    %c0_73 = arith.constant 0 : index
    %138 = vector.load %arg20[%c15_71, %c0_72, %c0_73] : memref<16x1x16xf32, #tpu.memory_space<vmem>>, vector<1x1x16xf32>
    %139 = vector.shape_cast %138 : vector<1x1x16xf32> to vector<1x16xf32>
    %140 = vector.shape_cast %137 : vector<1x16xf32> to vector<1x1x16xf32>
    tpu.vector_store %arg20[%c15_71, %c0_72, %c0_73], %140 {strides = array<i32>} : memref<16x1x16xf32, #tpu.memory_space<vmem>>, vector<1x1x16xf32>,
    %c1_i32_74 = arith.constant 1 : i32
    %141 = arith.addi %28, %c1_i32_74 : i32
    %142 = vector.broadcast %141 : i32 to vector<1x1xi32>
    %143 = arith.cmpi slt, %142, %27 : vector<1x1xi32>
    %144 = arith.extui %143 : vector<1x1xi1> to vector<1x1xi32>
    %145 = arith.sitofp %144 : vector<1x1xi32> to vector<1x1xf32>
    %c1 = arith.constant 1 : index
    %c0_75 = arith.constant 0 : index
    %c0_76 = arith.constant 0 : index
    %146 = vector.load %arg17[%c1, %c0_75, %c0_76] : memref<16x1x64xf32, #tpu.memory_space<vmem>>, vector<1x1x64xf32>
    %147 = vector.shape_cast %146 : vector<1x1x64xf32> to vector<1x64xf32>
    %c0_77 = arith.constant 0 : index
    %c0_78 = arith.constant 0 : index
    %148 = vector.load %arg13[%c0_77, %c0_78] : memref<1x16xf32, #tpu.memory_space<vmem>>, vector<1x16xf32>
    %cst_79 = arith.constant dense<0.000000e+00> : vector<1x64xf32>
    %149 = tpu.matmul %148, %23, %cst_79 {dimension_numbers = #tpu.dot_dimension_numbers<[1], [0], [0], [1], [0, 0, 1, 1], [], []>} : vector<1x16xf32>, vector<16x64xf32>, vector<1x64xf32> -> vector<1x64xf32>
    %150 = arith.addf %147, %149 : vector<1x64xf32>
    %151 = vector.extract_strided_slice %150 {offsets = [0, 0], sizes = [1, 32], strides = [1, 1]} : vector<1x64xf32> to vector<1x32xf32>
    %152 = arith.negf %151 : vector<1x32xf32>
    %153 = math.exp %152 : vector<1x32xf32>
    %cst_80 = arith.constant 1.000000e+00 : f32
    %154 = vector.broadcast %cst_80 : f32 to vector<1x32xf32>
    %155 = arith.addf %154, %153 : vector<1x32xf32>
    %156 = arith.divf %154, %155 : vector<1x32xf32>
    %157 = vector.extract_strided_slice %156 {offsets = [0, 0], sizes = [1, 16], strides = [1, 1]} : vector<1x32xf32> to vector<1x16xf32>
    %158 = vector.extract_strided_slice %156 {offsets = [0, 16], sizes = [1, 16], strides = [1, 1]} : vector<1x32xf32> to vector<1x16xf32>
    %159 = vector.extract_strided_slice %150 {offsets = [0, 32], sizes = [1, 16], strides = [1, 1]} : vector<1x64xf32> to vector<1x16xf32>
    %160 = math.tanh %159 : vector<1x16xf32>
    %161 = vector.extract_strided_slice %150 {offsets = [0, 48], sizes = [1, 16], strides = [1, 1]} : vector<1x64xf32> to vector<1x16xf32>
    %162 = arith.negf %161 : vector<1x16xf32>
    %163 = math.exp %162 : vector<1x16xf32>
    %cst_81 = arith.constant 1.000000e+00 : f32
    %164 = vector.broadcast %cst_81 : f32 to vector<1x16xf32>
    %165 = arith.addf %164, %163 : vector<1x16xf32>
    %166 = arith.divf %164, %165 : vector<1x16xf32>
    %c0_82 = arith.constant 0 : index
    %c0_83 = arith.constant 0 : index
    %167 = vector.load %arg14[%c0_82, %c0_83] : memref<1x16xf32, #tpu.memory_space<vmem>>, vector<1x16xf32>
    %168 = arith.mulf %158, %167 : vector<1x16xf32>
    %169 = arith.mulf %157, %160 : vector<1x16xf32>
    %170 = arith.addf %168, %169 : vector<1x16xf32>
    %171 = math.tanh %170 : vector<1x16xf32>
    %172 = arith.mulf %166, %171 : vector<1x16xf32>
    %173 = vector.broadcast %145 : vector<1x1xf32> to vector<1x16xf32>
    %174 = arith.mulf %173, %172 : vector<1x16xf32>
    %cst_84 = arith.constant 1.000000e+00 : f32
    %175 = vector.broadcast %cst_84 : f32 to vector<1x1xf32>
    %176 = arith.subf %175, %145 : vector<1x1xf32>
    %c0_85 = arith.constant 0 : index
    %c0_86 = arith.constant 0 : index
    %177 = vector.load %arg13[%c0_85, %c0_86] : memref<1x16xf32, #tpu.memory_space<vmem>>, vector<1x16xf32>
    %178 = vector.broadcast %176 : vector<1x1xf32> to vector<1x16xf32>
    %179 = arith.mulf %178, %177 : vector<1x16xf32>
    %180 = arith.addf %174, %179 : vector<1x16xf32>
    %c0_87 = arith.constant 0 : index
    %c0_88 = arith.constant 0 : index
    %181 = vector.load %arg13[%c0_87, %c0_88] : memref<1x16xf32, #tpu.memory_space<vmem>>, vector<1x16xf32>
    tpu.vector_store %arg13[%c0_87, %c0_88], %180 {strides = array<i32>} : memref<1x16xf32, #tpu.memory_space<vmem>>, vector<1x16xf32>,
    %182 = vector.broadcast %145 : vector<1x1xf32> to vector<1x16xf32>
    %183 = arith.mulf %182, %170 : vector<1x16xf32>
    %cst_89 = arith.constant 1.000000e+00 : f32
    %184 = vector.broadcast %cst_89 : f32 to vector<1x1xf32>
    %185 = arith.subf %184, %145 : vector<1x1xf32>
    %c0_90 = arith.constant 0 : index
    %c0_91 = arith.constant 0 : index
    %186 = vector.load %arg14[%c0_90, %c0_91] : memref<1x16xf32, #tpu.memory_space<vmem>>, vector<1x16xf32>
    %187 = vector.broadcast %185 : vector<1x1xf32> to vector<1x16xf32>
    %188 = arith.mulf %187, %186 : vector<1x16xf32>
    %189 = arith.addf %183, %188 : vector<1x16xf32>
    %c0_92 = arith.constant 0 : index
    %c0_93 = arith.constant 0 : index
    %190 = vector.load %arg14[%c0_92, %c0_93] : memref<1x16xf32, #tpu.memory_space<vmem>>, vector<1x16xf32>
    tpu.vector_store %arg14[%c0_92, %c0_93], %189 {strides = array<i32>} : memref<1x16xf32, #tpu.memory_space<vmem>>, vector<1x16xf32>,
    %191 = vector.broadcast %145 : vector<1x1xf32> to vector<1x16xf32>
    %192 = arith.mulf %191, %172 : vector<1x16xf32>
    %c1_94 = arith.constant 1 : index
    %c0_95 = arith.constant 0 : index
    %c0_96 = arith.constant 0 : index
    %193 = vector.load %arg19[%c1_94, %c0_95, %c0_96] : memref<16x1x16xf32, #tpu.memory_space<vmem>>, vector<1x1x16xf32>
    %194 = vector.shape_cast %193 : vector<1x1x16xf32> to vector<1x16xf32>
    %195 = vector.shape_cast %192 : vector<1x16xf32> to vector<1x1x16xf32>
    tpu.vector_store %arg19[%c1_94, %c0_95, %c0_96], %195 {strides = array<i32>} : memref<16x1x16xf32, #tpu.memory_space<vmem>>, vector<1x1x16xf32>,
    %c14_i32 = arith.constant 14 : i32
    %196 = arith.addi %30, %c14_i32 : i32
    %197 = vector.broadcast %196 : i32 to vector<1x1xi32>
    %198 = arith.cmpi slt, %197, %27 : vector<1x1xi32>
    %199 = arith.extui %198 : vector<1x1xi1> to vector<1x1xi32>
    %200 = arith.sitofp %199 : vector<1x1xi32> to vector<1x1xf32>
    %c14 = arith.constant 14 : index
    %c0_97 = arith.constant 0 : index
    %c0_98 = arith.constant 0 : index
    %201 = vector.load %arg18[%c14, %c0_97, %c0_98] : memref<16x1x64xf32, #tpu.memory_space<vmem>>, vector<1x1x64xf32>
    %202 = vector.shape_cast %201 : vector<1x1x64xf32> to vector<1x64xf32>
    %c0_99 = arith.constant 0 : index
    %c0_100 = arith.constant 0 : index
    %203 = vector.load %arg15[%c0_99, %c0_100] : memref<1x16xf32, #tpu.memory_space<vmem>>, vector<1x16xf32>
    %cst_101 = arith.constant dense<0.000000e+00> : vector<1x64xf32>
    %204 = tpu.matmul %203, %24, %cst_101 {dimension_numbers = #tpu.dot_dimension_numbers<[1], [0], [0], [1], [0, 0, 1, 1], [], []>} : vector<1x16xf32>, vector<16x64xf32>, vector<1x64xf32> -> vector<1x64xf32>
    %205 = arith.addf %202, %204 : vector<1x64xf32>
    %206 = vector.extract_strided_slice %205 {offsets = [0, 0], sizes = [1, 32], strides = [1, 1]} : vector<1x64xf32> to vector<1x32xf32>
    %207 = arith.negf %206 : vector<1x32xf32>
    %208 = math.exp %207 : vector<1x32xf32>
    %cst_102 = arith.constant 1.000000e+00 : f32
    %209 = vector.broadcast %cst_102 : f32 to vector<1x32xf32>
    %210 = arith.addf %209, %208 : vector<1x32xf32>
    %211 = arith.divf %209, %210 : vector<1x32xf32>
    %212 = vector.extract_strided_slice %211 {offsets = [0, 0], sizes = [1, 16], strides = [1, 1]} : vector<1x32xf32> to vector<1x16xf32>
    %213 = vector.extract_strided_slice %211 {offsets = [0, 16], sizes = [1, 16], strides = [1, 1]} : vector<1x32xf32> to vector<1x16xf32>
    %214 = vector.extract_strided_slice %205 {offsets = [0, 32], sizes = [1, 16], strides = [1, 1]} : vector<1x64xf32> to vector<1x16xf32>
    %215 = math.tanh %214 : vector<1x16xf32>
    %216 = vector.extract_strided_slice %205 {offsets = [0, 48], sizes = [1, 16], strides = [1, 1]} : vector<1x64xf32> to vector<1x16xf32>
    %217 = arith.negf %216 : vector<1x16xf32>
    %218 = math.exp %217 : vector<1x16xf32>
    %cst_103 = arith.constant 1.000000e+00 : f32
    %219 = vector.broadcast %cst_103 : f32 to vector<1x16xf32>
    %220 = arith.addf %219, %218 : vector<1x16xf32>
    %221 = arith.divf %219, %220 : vector<1x16xf32>
    %c0_104 = arith.constant 0 : index
    %c0_105 = arith.constant 0 : index
    %222 = vector.load %arg16[%c0_104, %c0_105] : memref<1x16xf32, #tpu.memory_space<vmem>>, vector<1x16xf32>
    %223 = arith.mulf %213, %222 : vector<1x16xf32>
    %224 = arith.mulf %212, %215 : vector<1x16xf32>
    %225 = arith.addf %223, %224 : vector<1x16xf32>
    %226 = math.tanh %225 : vector<1x16xf32>
    %227 = arith.mulf %221, %226 : vector<1x16xf32>
    %228 = vector.broadcast %200 : vector<1x1xf32> to vector<1x16xf32>
    %229 = arith.mulf %228, %227 : vector<1x16xf32>
    %cst_106 = arith.constant 1.000000e+00 : f32
    %230 = vector.broadcast %cst_106 : f32 to vector<1x1xf32>
    %231 = arith.subf %230, %200 : vector<1x1xf32>
    %c0_107 = arith.constant 0 : index
    %c0_108 = arith.constant 0 : index
    %232 = vector.load %arg15[%c0_107, %c0_108] : memref<1x16xf32, #tpu.memory_space<vmem>>, vector<1x16xf32>
    %233 = vector.broadcast %231 : vector<1x1xf32> to vector<1x16xf32>
    %234 = arith.mulf %233, %232 : vector<1x16xf32>
    %235 = arith.addf %229, %234 : vector<1x16xf32>
    %c0_109 = arith.constant 0 : index
    %c0_110 = arith.constant 0 : index
    %236 = vector.load %arg15[%c0_109, %c0_110] : memref<1x16xf32, #tpu.memory_space<vmem>>, vector<1x16xf32>
    tpu.vector_store %arg15[%c0_109, %c0_110], %235 {strides = array<i32>} : memref<1x16xf32, #tpu.memory_space<vmem>>, vector<1x16xf32>,
    %237 = vector.broadcast %200 : vector<1x1xf32> to vector<1x16xf32>
    %238 = arith.mulf %237, %225 : vector<1x16xf32>
    %cst_111 = arith.constant 1.000000e+00 : f32
    %239 = vector.broadcast %cst_111 : f32 to vector<1x1xf32>
    %240 = arith.subf %239, %200 : vector<1x1xf32>
    %c0_112 = arith.constant 0 : index
    %c0_113 = arith.constant 0 : index
    %241 = vector.load %arg16[%c0_112, %c0_113] : memref<1x16xf32, #tpu.memory_space<vmem>>, vector<1x16xf32>
    %242 = vector.broadcast %240 : vector<1x1xf32> to vector<1x16xf32>
    %243 = arith.mulf %242, %241 : vector<1x16xf32>
    %244 = arith.addf %238, %243 : vector<1x16xf32>
    %c0_114 = arith.constant 0 : index
    %c0_115 = arith.constant 0 : index
    %245 = vector.load %arg16[%c0_114, %c0_115] : memref<1x16xf32, #tpu.memory_space<vmem>>, vector<1x16xf32>
    tpu.vector_store %arg16[%c0_114, %c0_115], %244 {strides = array<i32>} : memref<1x16xf32, #tpu.memory_space<vmem>>, vector<1x16xf32>,
    %246 = vector.broadcast %200 : vector<1x1xf32> to vector<1x16xf32>
    %247 = arith.mulf %246, %227 : vector<1x16xf32>
    %c14_116 = arith.constant 14 : index
    %c0_117 = arith.constant 0 : index
    %c0_118 = arith.constant 0 : index
    %248 = vector.load %arg20[%c14_116, %c0_117, %c0_118] : memref<16x1x16xf32, #tpu.memory_space<vmem>>, vector<1x1x16xf32>
    %249 = vector.shape_cast %248 : vector<1x1x16xf32> to vector<1x16xf32>
    %250 = vector.shape_cast %247 : vector<1x16xf32> to vector<1x1x16xf32>
    tpu.vector_store %arg20[%c14_116, %c0_117, %c0_118], %250 {strides = array<i32>} : memref<16x1x16xf32, #tpu.memory_space<vmem>>, vector<1x1x16xf32>,
    %c2_i32 = arith.constant 2 : i32
    %251 = arith.addi %28, %c2_i32 : i32
    %252 = vector.broadcast %251 : i32 to vector<1x1xi32>
    %253 = arith.cmpi slt, %252, %27 : vector<1x1xi32>
    %254 = arith.extui %253 : vector<1x1xi1> to vector<1x1xi32>
    %255 = arith.sitofp %254 : vector<1x1xi32> to vector<1x1xf32>
    %c2 = arith.constant 2 : index
    %c0_119 = arith.constant 0 : index
    %c0_120 = arith.constant 0 : index
    %256 = vector.load %arg17[%c2, %c0_119, %c0_120] : memref<16x1x64xf32, #tpu.memory_space<vmem>>, vector<1x1x64xf32>
    %257 = vector.shape_cast %256 : vector<1x1x64xf32> to vector<1x64xf32>
    %c0_121 = arith.constant 0 : index
    %c0_122 = arith.constant 0 : index
    %258 = vector.load %arg13[%c0_121, %c0_122] : memref<1x16xf32, #tpu.memory_space<vmem>>, vector<1x16xf32>
    %cst_123 = arith.constant dense<0.000000e+00> : vector<1x64xf32>
    %259 = tpu.matmul %258, %23, %cst_123 {dimension_numbers = #tpu.dot_dimension_numbers<[1], [0], [0], [1], [0, 0, 1, 1], [], []>} : vector<1x16xf32>, vector<16x64xf32>, vector<1x64xf32> -> vector<1x64xf32>
    %260 = arith.addf %257, %259 : vector<1x64xf32>
    %261 = vector.extract_strided_slice %260 {offsets = [0, 0], sizes = [1, 32], strides = [1, 1]} : vector<1x64xf32> to vector<1x32xf32>
    %262 = arith.negf %261 : vector<1x32xf32>
    %263 = math.exp %262 : vector<1x32xf32>
    %cst_124 = arith.constant 1.000000e+00 : f32
    %264 = vector.broadcast %cst_124 : f32 to vector<1x32xf32>
    %265 = arith.addf %264, %263 : vector<1x32xf32>
    %266 = arith.divf %264, %265 : vector<1x32xf32>
    %267 = vector.extract_strided_slice %266 {offsets = [0, 0], sizes = [1, 16], strides = [1, 1]} : vector<1x32xf32> to vector<1x16xf32>
    %268 = vector.extract_strided_slice %266 {offsets = [0, 16], sizes = [1, 16], strides = [1, 1]} : vector<1x32xf32> to vector<1x16xf32>
    %269 = vector.extract_strided_slice %260 {offsets = [0, 32], sizes = [1, 16], strides = [1, 1]} : vector<1x64xf32> to vector<1x16xf32>
    %270 = math.tanh %269 : vector<1x16xf32>
    %271 = vector.extract_strided_slice %260 {offsets = [0, 48], sizes = [1, 16], strides = [1, 1]} : vector<1x64xf32> to vector<1x16xf32>
    %272 = arith.negf %271 : vector<1x16xf32>
    %273 = math.exp %272 : vector<1x16xf32>
    %cst_125 = arith.constant 1.000000e+00 : f32
    %274 = vector.broadcast %cst_125 : f32 to vector<1x16xf32>
    %275 = arith.addf %274, %273 : vector<1x16xf32>
    %276 = arith.divf %274, %275 : vector<1x16xf32>
    %c0_126 = arith.constant 0 : index
    %c0_127 = arith.constant 0 : index
    %277 = vector.load %arg14[%c0_126, %c0_127] : memref<1x16xf32, #tpu.memory_space<vmem>>, vector<1x16xf32>
    %278 = arith.mulf %268, %277 : vector<1x16xf32>
    %279 = arith.mulf %267, %270 : vector<1x16xf32>
    %280 = arith.addf %278, %279 : vector<1x16xf32>
    %281 = math.tanh %280 : vector<1x16xf32>
    %282 = arith.mulf %276, %281 : vector<1x16xf32>
    %283 = vector.broadcast %255 : vector<1x1xf32> to vector<1x16xf32>
    %284 = arith.mulf %283, %282 : vector<1x16xf32>
    %cst_128 = arith.constant 1.000000e+00 : f32
    %285 = vector.broadcast %cst_128 : f32 to vector<1x1xf32>
    %286 = arith.subf %285, %255 : vector<1x1xf32>
    %c0_129 = arith.constant 0 : index
    %c0_130 = arith.constant 0 : index
    %287 = vector.load %arg13[%c0_129, %c0_130] : memref<1x16xf32, #tpu.memory_space<vmem>>, vector<1x16xf32>
    %288 = vector.broadcast %286 : vector<1x1xf32> to vector<1x16xf32>
    %289 = arith.mulf %288, %287 : vector<1x16xf32>
    %290 = arith.addf %284, %289 : vector<1x16xf32>
    %c0_131 = arith.constant 0 : index
    %c0_132 = arith.constant 0 : index
    %291 = vector.load %arg13[%c0_131, %c0_132] : memref<1x16xf32, #tpu.memory_space<vmem>>, vector<1x16xf32>
    tpu.vector_store %arg13[%c0_131, %c0_132], %290 {strides = array<i32>} : memref<1x16xf32, #tpu.memory_space<vmem>>, vector<1x16xf32>,
    %292 = vector.broadcast %255 : vector<1x1xf32> to vector<1x16xf32>
    %293 = arith.mulf %292, %280 : vector<1x16xf32>
    %cst_133 = arith.constant 1.000000e+00 : f32
    %294 = vector.broadcast %cst_133 : f32 to vector<1x1xf32>
    %295 = arith.subf %294, %255 : vector<1x1xf32>
    %c0_134 = arith.constant 0 : index
    %c0_135 = arith.constant 0 : index
    %296 = vector.load %arg14[%c0_134, %c0_135] : memref<1x16xf32, #tpu.memory_space<vmem>>, vector<1x16xf32>
    %297 = vector.broadcast %295 : vector<1x1xf32> to vector<1x16xf32>
    %298 = arith.mulf %297, %296 : vector<1x16xf32>
    %299 = arith.addf %293, %298 : vector<1x16xf32>
    %c0_136 = arith.constant 0 : index
    %c0_137 = arith.constant 0 : index
    %300 = vector.load %arg14[%c0_136, %c0_137] : memref<1x16xf32, #tpu.memory_space<vmem>>, vector<1x16xf32>
    tpu.vector_store %arg14[%c0_136, %c0_137], %299 {strides = array<i32>} : memref<1x16xf32, #tpu.memory_space<vmem>>, vector<1x16xf32>,
    %301 = vector.broadcast %255 : vector<1x1xf32> to vector<1x16xf32>
    %302 = arith.mulf %301, %282 : vector<1x16xf32>
    %c2_138 = arith.constant 2 : index
    %c0_139 = arith.constant 0 : index
    %c0_140 = arith.constant 0 : index
    %303 = vector.load %arg19[%c2_138, %c0_139, %c0_140] : memref<16x1x16xf32, #tpu.memory_space<vmem>>, vector<1x1x16xf32>
    %304 = vector.shape_cast %303 : vector<1x1x16xf32> to vector<1x16xf32>
    %305 = vector.shape_cast %302 : vector<1x16xf32> to vector<1x1x16xf32>
    tpu.vector_store %arg19[%c2_138, %c0_139, %c0_140], %305 {strides = array<i32>} : memref<16x1x16xf32, #tpu.memory_space<vmem>>, vector<1x1x16xf32>,
    %c13_i32 = arith.constant 13 : i32
    %306 = arith.addi %30, %c13_i32 : i32
    %307 = vector.broadcast %306 : i32 to vector<1x1xi32>
    %308 = arith.cmpi slt, %307, %27 : vector<1x1xi32>
    %309 = arith.extui %308 : vector<1x1xi1> to vector<1x1xi32>
    %310 = arith.sitofp %309 : vector<1x1xi32> to vector<1x1xf32>
    %c13 = arith.constant 13 : index
    %c0_141 = arith.constant 0 : index
    %c0_142 = arith.constant 0 : index
    %311 = vector.load %arg18[%c13, %c0_141, %c0_142] : memref<16x1x64xf32, #tpu.memory_space<vmem>>, vector<1x1x64xf32>
    %312 = vector.shape_cast %311 : vector<1x1x64xf32> to vector<1x64xf32>
    %c0_143 = arith.constant 0 : index
    %c0_144 = arith.constant 0 : index
    %313 = vector.load %arg15[%c0_143, %c0_144] : memref<1x16xf32, #tpu.memory_space<vmem>>, vector<1x16xf32>
    %cst_145 = arith.constant dense<0.000000e+00> : vector<1x64xf32>
    %314 = tpu.matmul %313, %24, %cst_145 {dimension_numbers = #tpu.dot_dimension_numbers<[1], [0], [0], [1], [0, 0, 1, 1], [], []>} : vector<1x16xf32>, vector<16x64xf32>, vector<1x64xf32> -> vector<1x64xf32>
    %315 = arith.addf %312, %314 : vector<1x64xf32>
    %316 = vector.extract_strided_slice %315 {offsets = [0, 0], sizes = [1, 32], strides = [1, 1]} : vector<1x64xf32> to vector<1x32xf32>
    %317 = arith.negf %316 : vector<1x32xf32>
    %318 = math.exp %317 : vector<1x32xf32>
    %cst_146 = arith.constant 1.000000e+00 : f32
    %319 = vector.broadcast %cst_146 : f32 to vector<1x32xf32>
    %320 = arith.addf %319, %318 : vector<1x32xf32>
    %321 = arith.divf %319, %320 : vector<1x32xf32>
    %322 = vector.extract_strided_slice %321 {offsets = [0, 0], sizes = [1, 16], strides = [1, 1]} : vector<1x32xf32> to vector<1x16xf32>
    %323 = vector.extract_strided_slice %321 {offsets = [0, 16], sizes = [1, 16], strides = [1, 1]} : vector<1x32xf32> to vector<1x16xf32>
    %324 = vector.extract_strided_slice %315 {offsets = [0, 32], sizes = [1, 16], strides = [1, 1]} : vector<1x64xf32> to vector<1x16xf32>
    %325 = math.tanh %324 : vector<1x16xf32>
    %326 = vector.extract_strided_slice %315 {offsets = [0, 48], sizes = [1, 16], strides = [1, 1]} : vector<1x64xf32> to vector<1x16xf32>
    %327 = arith.negf %326 : vector<1x16xf32>
    %328 = math.exp %327 : vector<1x16xf32>
    %cst_147 = arith.constant 1.000000e+00 : f32
    %329 = vector.broadcast %cst_147 : f32 to vector<1x16xf32>
    %330 = arith.addf %329, %328 : vector<1x16xf32>
    %331 = arith.divf %329, %330 : vector<1x16xf32>
    %c0_148 = arith.constant 0 : index
    %c0_149 = arith.constant 0 : index
    %332 = vector.load %arg16[%c0_148, %c0_149] : memref<1x16xf32, #tpu.memory_space<vmem>>, vector<1x16xf32>
    %333 = arith.mulf %323, %332 : vector<1x16xf32>
    %334 = arith.mulf %322, %325 : vector<1x16xf32>
    %335 = arith.addf %333, %334 : vector<1x16xf32>
    %336 = math.tanh %335 : vector<1x16xf32>
    %337 = arith.mulf %331, %336 : vector<1x16xf32>
    %338 = vector.broadcast %310 : vector<1x1xf32> to vector<1x16xf32>
    %339 = arith.mulf %338, %337 : vector<1x16xf32>
    %cst_150 = arith.constant 1.000000e+00 : f32
    %340 = vector.broadcast %cst_150 : f32 to vector<1x1xf32>
    %341 = arith.subf %340, %310 : vector<1x1xf32>
    %c0_151 = arith.constant 0 : index
    %c0_152 = arith.constant 0 : index
    %342 = vector.load %arg15[%c0_151, %c0_152] : memref<1x16xf32, #tpu.memory_space<vmem>>, vector<1x16xf32>
    %343 = vector.broadcast %341 : vector<1x1xf32> to vector<1x16xf32>
    %344 = arith.mulf %343, %342 : vector<1x16xf32>
    %345 = arith.addf %339, %344 : vector<1x16xf32>
    %c0_153 = arith.constant 0 : index
    %c0_154 = arith.constant 0 : index
    %346 = vector.load %arg15[%c0_153, %c0_154] : memref<1x16xf32, #tpu.memory_space<vmem>>, vector<1x16xf32>
    tpu.vector_store %arg15[%c0_153, %c0_154], %345 {strides = array<i32>} : memref<1x16xf32, #tpu.memory_space<vmem>>, vector<1x16xf32>,
    %347 = vector.broadcast %310 : vector<1x1xf32> to vector<1x16xf32>
    %348 = arith.mulf %347, %335 : vector<1x16xf32>
    %cst_155 = arith.constant 1.000000e+00 : f32
    %349 = vector.broadcast %cst_155 : f32 to vector<1x1xf32>
    %350 = arith.subf %349, %310 : vector<1x1xf32>
    %c0_156 = arith.constant 0 : index
    %c0_157 = arith.constant 0 : index
    %351 = vector.load %arg16[%c0_156, %c0_157] : memref<1x16xf32, #tpu.memory_space<vmem>>, vector<1x16xf32>
    %352 = vector.broadcast %350 : vector<1x1xf32> to vector<1x16xf32>
    %353 = arith.mulf %352, %351 : vector<1x16xf32>
    %354 = arith.addf %348, %353 : vector<1x16xf32>
    %c0_158 = arith.constant 0 : index
    %c0_159 = arith.constant 0 : index
    %355 = vector.load %arg16[%c0_158, %c0_159] : memref<1x16xf32, #tpu.memory_space<vmem>>, vector<1x16xf32>
    tpu.vector_store %arg16[%c0_158, %c0_159], %354 {strides = array<i32>} : memref<1x16xf32, #tpu.memory_space<vmem>>, vector<1x16xf32>,
    %356 = vector.broadcast %310 : vector<1x1xf32> to vector<1x16xf32>
    %357 = arith.mulf %356, %337 : vector<1x16xf32>
    %c13_160 = arith.constant 13 : index
    %c0_161 = arith.constant 0 : index
    %c0_162 = arith.constant 0 : index
    %358 = vector.load %arg20[%c13_160, %c0_161, %c0_162] : memref<16x1x16xf32, #tpu.memory_space<vmem>>, vector<1x1x16xf32>
    %359 = vector.shape_cast %358 : vector<1x1x16xf32> to vector<1x16xf32>
    %360 = vector.shape_cast %357 : vector<1x16xf32> to vector<1x1x16xf32>
    tpu.vector_store %arg20[%c13_160, %c0_161, %c0_162], %360 {strides = array<i32>} : memref<16x1x16xf32, #tpu.memory_space<vmem>>, vector<1x1x16xf32>,
    %c3_i32 = arith.constant 3 : i32
    %361 = arith.addi %28, %c3_i32 : i32
    %362 = vector.broadcast %361 : i32 to vector<1x1xi32>
    %363 = arith.cmpi slt, %362, %27 : vector<1x1xi32>
    %364 = arith.extui %363 : vector<1x1xi1> to vector<1x1xi32>
    %365 = arith.sitofp %364 : vector<1x1xi32> to vector<1x1xf32>
    %c3 = arith.constant 3 : index
    %c0_163 = arith.constant 0 : index
    %c0_164 = arith.constant 0 : index
    %366 = vector.load %arg17[%c3, %c0_163, %c0_164] : memref<16x1x64xf32, #tpu.memory_space<vmem>>, vector<1x1x64xf32>
    %367 = vector.shape_cast %366 : vector<1x1x64xf32> to vector<1x64xf32>
    %c0_165 = arith.constant 0 : index
    %c0_166 = arith.constant 0 : index
    %368 = vector.load %arg13[%c0_165, %c0_166] : memref<1x16xf32, #tpu.memory_space<vmem>>, vector<1x16xf32>
    %cst_167 = arith.constant dense<0.000000e+00> : vector<1x64xf32>
    %369 = tpu.matmul %368, %23, %cst_167 {dimension_numbers = #tpu.dot_dimension_numbers<[1], [0], [0], [1], [0, 0, 1, 1], [], []>} : vector<1x16xf32>, vector<16x64xf32>, vector<1x64xf32> -> vector<1x64xf32>
    %370 = arith.addf %367, %369 : vector<1x64xf32>
    %371 = vector.extract_strided_slice %370 {offsets = [0, 0], sizes = [1, 32], strides = [1, 1]} : vector<1x64xf32> to vector<1x32xf32>
    %372 = arith.negf %371 : vector<1x32xf32>
    %373 = math.exp %372 : vector<1x32xf32>
    %cst_168 = arith.constant 1.000000e+00 : f32
    %374 = vector.broadcast %cst_168 : f32 to vector<1x32xf32>
    %375 = arith.addf %374, %373 : vector<1x32xf32>
    %376 = arith.divf %374, %375 : vector<1x32xf32>
    %377 = vector.extract_strided_slice %376 {offsets = [0, 0], sizes = [1, 16], strides = [1, 1]} : vector<1x32xf32> to vector<1x16xf32>
    %378 = vector.extract_strided_slice %376 {offsets = [0, 16], sizes = [1, 16], strides = [1, 1]} : vector<1x32xf32> to vector<1x16xf32>
    %379 = vector.extract_strided_slice %370 {offsets = [0, 32], sizes = [1, 16], strides = [1, 1]} : vector<1x64xf32> to vector<1x16xf32>
    %380 = math.tanh %379 : vector<1x16xf32>
    %381 = vector.extract_strided_slice %370 {offsets = [0, 48], sizes = [1, 16], strides = [1, 1]} : vector<1x64xf32> to vector<1x16xf32>
    %382 = arith.negf %381 : vector<1x16xf32>
    %383 = math.exp %382 : vector<1x16xf32>
    %cst_169 = arith.constant 1.000000e+00 : f32
    %384 = vector.broadcast %cst_169 : f32 to vector<1x16xf32>
    %385 = arith.addf %384, %383 : vector<1x16xf32>
    %386 = arith.divf %384, %385 : vector<1x16xf32>
    %c0_170 = arith.constant 0 : index
    %c0_171 = arith.constant 0 : index
    %387 = vector.load %arg14[%c0_170, %c0_171] : memref<1x16xf32, #tpu.memory_space<vmem>>, vector<1x16xf32>
    %388 = arith.mulf %378, %387 : vector<1x16xf32>
    %389 = arith.mulf %377, %380 : vector<1x16xf32>
    %390 = arith.addf %388, %389 : vector<1x16xf32>
    %391 = math.tanh %390 : vector<1x16xf32>
    %392 = arith.mulf %386, %391 : vector<1x16xf32>
    %393 = vector.broadcast %365 : vector<1x1xf32> to vector<1x16xf32>
    %394 = arith.mulf %393, %392 : vector<1x16xf32>
    %cst_172 = arith.constant 1.000000e+00 : f32
    %395 = vector.broadcast %cst_172 : f32 to vector<1x1xf32>
    %396 = arith.subf %395, %365 : vector<1x1xf32>
    %c0_173 = arith.constant 0 : index
    %c0_174 = arith.constant 0 : index
    %397 = vector.load %arg13[%c0_173, %c0_174] : memref<1x16xf32, #tpu.memory_space<vmem>>, vector<1x16xf32>
    %398 = vector.broadcast %396 : vector<1x1xf32> to vector<1x16xf32>
    %399 = arith.mulf %398, %397 : vector<1x16xf32>
    %400 = arith.addf %394, %399 : vector<1x16xf32>
    %c0_175 = arith.constant 0 : index
    %c0_176 = arith.constant 0 : index
    %401 = vector.load %arg13[%c0_175, %c0_176] : memref<1x16xf32, #tpu.memory_space<vmem>>, vector<1x16xf32>
    tpu.vector_store %arg13[%c0_175, %c0_176], %400 {strides = array<i32>} : memref<1x16xf32, #tpu.memory_space<vmem>>, vector<1x16xf32>,
    %402 = vector.broadcast %365 : vector<1x1xf32> to vector<1x16xf32>
    %403 = arith.mulf %402, %390 : vector<1x16xf32>
    %cst_177 = arith.constant 1.000000e+00 : f32
    %404 = vector.broadcast %cst_177 : f32 to vector<1x1xf32>
    %405 = arith.subf %404, %365 : vector<1x1xf32>
    %c0_178 = arith.constant 0 : index
    %c0_179 = arith.constant 0 : index
    %406 = vector.load %arg14[%c0_178, %c0_179] : memref<1x16xf32, #tpu.memory_space<vmem>>, vector<1x16xf32>
    %407 = vector.broadcast %405 : vector<1x1xf32> to vector<1x16xf32>
    %408 = arith.mulf %407, %406 : vector<1x16xf32>
    %409 = arith.addf %403, %408 : vector<1x16xf32>
    %c0_180 = arith.constant 0 : index
    %c0_181 = arith.constant 0 : index
    %410 = vector.load %arg14[%c0_180, %c0_181] : memref<1x16xf32, #tpu.memory_space<vmem>>, vector<1x16xf32>
    tpu.vector_store %arg14[%c0_180, %c0_181], %409 {strides = array<i32>} : memref<1x16xf32, #tpu.memory_space<vmem>>, vector<1x16xf32>,
    %411 = vector.broadcast %365 : vector<1x1xf32> to vector<1x16xf32>
    %412 = arith.mulf %411, %392 : vector<1x16xf32>
    %c3_182 = arith.constant 3 : index
    %c0_183 = arith.constant 0 : index
    %c0_184 = arith.constant 0 : index
    %413 = vector.load %arg19[%c3_182, %c0_183, %c0_184] : memref<16x1x16xf32, #tpu.memory_space<vmem>>, vector<1x1x16xf32>
    %414 = vector.shape_cast %413 : vector<1x1x16xf32> to vector<1x16xf32>
    %415 = vector.shape_cast %412 : vector<1x16xf32> to vector<1x1x16xf32>
    tpu.vector_store %arg19[%c3_182, %c0_183, %c0_184], %415 {strides = array<i32>} : memref<16x1x16xf32, #tpu.memory_space<vmem>>, vector<1x1x16xf32>,
    %c12_i32 = arith.constant 12 : i32
    %416 = arith.addi %30, %c12_i32 : i32
    %417 = vector.broadcast %416 : i32 to vector<1x1xi32>
    %418 = arith.cmpi slt, %417, %27 : vector<1x1xi32>
    %419 = arith.extui %418 : vector<1x1xi1> to vector<1x1xi32>
    %420 = arith.sitofp %419 : vector<1x1xi32> to vector<1x1xf32>
    %c12 = arith.constant 12 : index
    %c0_185 = arith.constant 0 : index
    %c0_186 = arith.constant 0 : index
    %421 = vector.load %arg18[%c12, %c0_185, %c0_186] : memref<16x1x64xf32, #tpu.memory_space<vmem>>, vector<1x1x64xf32>
    %422 = vector.shape_cast %421 : vector<1x1x64xf32> to vector<1x64xf32>
    %c0_187 = arith.constant 0 : index
    %c0_188 = arith.constant 0 : index
    %423 = vector.load %arg15[%c0_187, %c0_188] : memref<1x16xf32, #tpu.memory_space<vmem>>, vector<1x16xf32>
    %cst_189 = arith.constant dense<0.000000e+00> : vector<1x64xf32>
    %424 = tpu.matmul %423, %24, %cst_189 {dimension_numbers = #tpu.dot_dimension_numbers<[1], [0], [0], [1], [0, 0, 1, 1], [], []>} : vector<1x16xf32>, vector<16x64xf32>, vector<1x64xf32> -> vector<1x64xf32>
    %425 = arith.addf %422, %424 : vector<1x64xf32>
    %426 = vector.extract_strided_slice %425 {offsets = [0, 0], sizes = [1, 32], strides = [1, 1]} : vector<1x64xf32> to vector<1x32xf32>
    %427 = arith.negf %426 : vector<1x32xf32>
    %428 = math.exp %427 : vector<1x32xf32>
    %cst_190 = arith.constant 1.000000e+00 : f32
    %429 = vector.broadcast %cst_190 : f32 to vector<1x32xf32>
    %430 = arith.addf %429, %428 : vector<1x32xf32>
    %431 = arith.divf %429, %430 : vector<1x32xf32>
    %432 = vector.extract_strided_slice %431 {offsets = [0, 0], sizes = [1, 16], strides = [1, 1]} : vector<1x32xf32> to vector<1x16xf32>
    %433 = vector.extract_strided_slice %431 {offsets = [0, 16], sizes = [1, 16], strides = [1, 1]} : vector<1x32xf32> to vector<1x16xf32>
    %434 = vector.extract_strided_slice %425 {offsets = [0, 32], sizes = [1, 16], strides = [1, 1]} : vector<1x64xf32> to vector<1x16xf32>
    %435 = math.tanh %434 : vector<1x16xf32>
    %436 = vector.extract_strided_slice %425 {offsets = [0, 48], sizes = [1, 16], strides = [1, 1]} : vector<1x64xf32> to vector<1x16xf32>
    %437 = arith.negf %436 : vector<1x16xf32>
    %438 = math.exp %437 : vector<1x16xf32>
    %cst_191 = arith.constant 1.000000e+00 : f32
    %439 = vector.broadcast %cst_191 : f32 to vector<1x16xf32>
    %440 = arith.addf %439, %438 : vector<1x16xf32>
    %441 = arith.divf %439, %440 : vector<1x16xf32>
    %c0_192 = arith.constant 0 : index
    %c0_193 = arith.constant 0 : index
    %442 = vector.load %arg16[%c0_192, %c0_193] : memref<1x16xf32, #tpu.memory_space<vmem>>, vector<1x16xf32>
    %443 = arith.mulf %433, %442 : vector<1x16xf32>
    %444 = arith.mulf %432, %435 : vector<1x16xf32>
    %445 = arith.addf %443, %444 : vector<1x16xf32>
    %446 = math.tanh %445 : vector<1x16xf32>
    %447 = arith.mulf %441, %446 : vector<1x16xf32>
    %448 = vector.broadcast %420 : vector<1x1xf32> to vector<1x16xf32>
    %449 = arith.mulf %448, %447 : vector<1x16xf32>
    %cst_194 = arith.constant 1.000000e+00 : f32
    %450 = vector.broadcast %cst_194 : f32 to vector<1x1xf32>
    %451 = arith.subf %450, %420 : vector<1x1xf32>
    %c0_195 = arith.constant 0 : index
    %c0_196 = arith.constant 0 : index
    %452 = vector.load %arg15[%c0_195, %c0_196] : memref<1x16xf32, #tpu.memory_space<vmem>>, vector<1x16xf32>
    %453 = vector.broadcast %451 : vector<1x1xf32> to vector<1x16xf32>
    %454 = arith.mulf %453, %452 : vector<1x16xf32>
    %455 = arith.addf %449, %454 : vector<1x16xf32>
    %c0_197 = arith.constant 0 : index
    %c0_198 = arith.constant 0 : index
    %456 = vector.load %arg15[%c0_197, %c0_198] : memref<1x16xf32, #tpu.memory_space<vmem>>, vector<1x16xf32>
    tpu.vector_store %arg15[%c0_197, %c0_198], %455 {strides = array<i32>} : memref<1x16xf32, #tpu.memory_space<vmem>>, vector<1x16xf32>,
    %457 = vector.broadcast %420 : vector<1x1xf32> to vector<1x16xf32>
    %458 = arith.mulf %457, %445 : vector<1x16xf32>
    %cst_199 = arith.constant 1.000000e+00 : f32
    %459 = vector.broadcast %cst_199 : f32 to vector<1x1xf32>
    %460 = arith.subf %459, %420 : vector<1x1xf32>
    %c0_200 = arith.constant 0 : index
    %c0_201 = arith.constant 0 : index
    %461 = vector.load %arg16[%c0_200, %c0_201] : memref<1x16xf32, #tpu.memory_space<vmem>>, vector<1x16xf32>
    %462 = vector.broadcast %460 : vector<1x1xf32> to vector<1x16xf32>
    %463 = arith.mulf %462, %461 : vector<1x16xf32>
    %464 = arith.addf %458, %463 : vector<1x16xf32>
    %c0_202 = arith.constant 0 : index
    %c0_203 = arith.constant 0 : index
    %465 = vector.load %arg16[%c0_202, %c0_203] : memref<1x16xf32, #tpu.memory_space<vmem>>, vector<1x16xf32>
    tpu.vector_store %arg16[%c0_202, %c0_203], %464 {strides = array<i32>} : memref<1x16xf32, #tpu.memory_space<vmem>>, vector<1x16xf32>,
    %466 = vector.broadcast %420 : vector<1x1xf32> to vector<1x16xf32>
    %467 = arith.mulf %466, %447 : vector<1x16xf32>
    %c12_204 = arith.constant 12 : index
    %c0_205 = arith.constant 0 : index
    %c0_206 = arith.constant 0 : index
    %468 = vector.load %arg20[%c12_204, %c0_205, %c0_206] : memref<16x1x16xf32, #tpu.memory_space<vmem>>, vector<1x1x16xf32>
    %469 = vector.shape_cast %468 : vector<1x1x16xf32> to vector<1x16xf32>
    %470 = vector.shape_cast %467 : vector<1x16xf32> to vector<1x1x16xf32>
    tpu.vector_store %arg20[%c12_204, %c0_205, %c0_206], %470 {strides = array<i32>} : memref<16x1x16xf32, #tpu.memory_space<vmem>>, vector<1x1x16xf32>,
    %c4_i32 = arith.constant 4 : i32
    %471 = arith.addi %28, %c4_i32 : i32
    %472 = vector.broadcast %471 : i32 to vector<1x1xi32>
    %473 = arith.cmpi slt, %472, %27 : vector<1x1xi32>
    %474 = arith.extui %473 : vector<1x1xi1> to vector<1x1xi32>
    %475 = arith.sitofp %474 : vector<1x1xi32> to vector<1x1xf32>
    %c4 = arith.constant 4 : index
    %c0_207 = arith.constant 0 : index
    %c0_208 = arith.constant 0 : index
    %476 = vector.load %arg17[%c4, %c0_207, %c0_208] : memref<16x1x64xf32, #tpu.memory_space<vmem>>, vector<1x1x64xf32>
    %477 = vector.shape_cast %476 : vector<1x1x64xf32> to vector<1x64xf32>
    %c0_209 = arith.constant 0 : index
    %c0_210 = arith.constant 0 : index
    %478 = vector.load %arg13[%c0_209, %c0_210] : memref<1x16xf32, #tpu.memory_space<vmem>>, vector<1x16xf32>
    %cst_211 = arith.constant dense<0.000000e+00> : vector<1x64xf32>
    %479 = tpu.matmul %478, %23, %cst_211 {dimension_numbers = #tpu.dot_dimension_numbers<[1], [0], [0], [1], [0, 0, 1, 1], [], []>} : vector<1x16xf32>, vector<16x64xf32>, vector<1x64xf32> -> vector<1x64xf32>
    %480 = arith.addf %477, %479 : vector<1x64xf32>
    %481 = vector.extract_strided_slice %480 {offsets = [0, 0], sizes = [1, 32], strides = [1, 1]} : vector<1x64xf32> to vector<1x32xf32>
    %482 = arith.negf %481 : vector<1x32xf32>
    %483 = math.exp %482 : vector<1x32xf32>
    %cst_212 = arith.constant 1.000000e+00 : f32
    %484 = vector.broadcast %cst_212 : f32 to vector<1x32xf32>
    %485 = arith.addf %484, %483 : vector<1x32xf32>
    %486 = arith.divf %484, %485 : vector<1x32xf32>
    %487 = vector.extract_strided_slice %486 {offsets = [0, 0], sizes = [1, 16], strides = [1, 1]} : vector<1x32xf32> to vector<1x16xf32>
    %488 = vector.extract_strided_slice %486 {offsets = [0, 16], sizes = [1, 16], strides = [1, 1]} : vector<1x32xf32> to vector<1x16xf32>
    %489 = vector.extract_strided_slice %480 {offsets = [0, 32], sizes = [1, 16], strides = [1, 1]} : vector<1x64xf32> to vector<1x16xf32>
    %490 = math.tanh %489 : vector<1x16xf32>
    %491 = vector.extract_strided_slice %480 {offsets = [0, 48], sizes = [1, 16], strides = [1, 1]} : vector<1x64xf32> to vector<1x16xf32>
    %492 = arith.negf %491 : vector<1x16xf32>
    %493 = math.exp %492 : vector<1x16xf32>
    %cst_213 = arith.constant 1.000000e+00 : f32
    %494 = vector.broadcast %cst_213 : f32 to vector<1x16xf32>
    %495 = arith.addf %494, %493 : vector<1x16xf32>
    %496 = arith.divf %494, %495 : vector<1x16xf32>
    %c0_214 = arith.constant 0 : index
    %c0_215 = arith.constant 0 : index
    %497 = vector.load %arg14[%c0_214, %c0_215] : memref<1x16xf32, #tpu.memory_space<vmem>>, vector<1x16xf32>
    %498 = arith.mulf %488, %497 : vector<1x16xf32>
    %499 = arith.mulf %487, %490 : vector<1x16xf32>
    %500 = arith.addf %498, %499 : vector<1x16xf32>
    %501 = math.tanh %500 : vector<1x16xf32>
    %502 = arith.mulf %496, %501 : vector<1x16xf32>
    %503 = vector.broadcast %475 : vector<1x1xf32> to vector<1x16xf32>
    %504 = arith.mulf %503, %502 : vector<1x16xf32>
    %cst_216 = arith.constant 1.000000e+00 : f32
    %505 = vector.broadcast %cst_216 : f32 to vector<1x1xf32>
    %506 = arith.subf %505, %475 : vector<1x1xf32>
    %c0_217 = arith.constant 0 : index
    %c0_218 = arith.constant 0 : index
    %507 = vector.load %arg13[%c0_217, %c0_218] : memref<1x16xf32, #tpu.memory_space<vmem>>, vector<1x16xf32>
    %508 = vector.broadcast %506 : vector<1x1xf32> to vector<1x16xf32>
    %509 = arith.mulf %508, %507 : vector<1x16xf32>
    %510 = arith.addf %504, %509 : vector<1x16xf32>
    %c0_219 = arith.constant 0 : index
    %c0_220 = arith.constant 0 : index
    %511 = vector.load %arg13[%c0_219, %c0_220] : memref<1x16xf32, #tpu.memory_space<vmem>>, vector<1x16xf32>
    tpu.vector_store %arg13[%c0_219, %c0_220], %510 {strides = array<i32>} : memref<1x16xf32, #tpu.memory_space<vmem>>, vector<1x16xf32>,
    %512 = vector.broadcast %475 : vector<1x1xf32> to vector<1x16xf32>
    %513 = arith.mulf %512, %500 : vector<1x16xf32>
    %cst_221 = arith.constant 1.000000e+00 : f32
    %514 = vector.broadcast %cst_221 : f32 to vector<1x1xf32>
    %515 = arith.subf %514, %475 : vector<1x1xf32>
    %c0_222 = arith.constant 0 : index
    %c0_223 = arith.constant 0 : index
    %516 = vector.load %arg14[%c0_222, %c0_223] : memref<1x16xf32, #tpu.memory_space<vmem>>, vector<1x16xf32>
    %517 = vector.broadcast %515 : vector<1x1xf32> to vector<1x16xf32>
    %518 = arith.mulf %517, %516 : vector<1x16xf32>
    %519 = arith.addf %513, %518 : vector<1x16xf32>
    %c0_224 = arith.constant 0 : index
    %c0_225 = arith.constant 0 : index
    %520 = vector.load %arg14[%c0_224, %c0_225] : memref<1x16xf32, #tpu.memory_space<vmem>>, vector<1x16xf32>
    tpu.vector_store %arg14[%c0_224, %c0_225], %519 {strides = array<i32>} : memref<1x16xf32, #tpu.memory_space<vmem>>, vector<1x16xf32>,
    %521 = vector.broadcast %475 : vector<1x1xf32> to vector<1x16xf32>
    %522 = arith.mulf %521, %502 : vector<1x16xf32>
    %c4_226 = arith.constant 4 : index
    %c0_227 = arith.constant 0 : index
    %c0_228 = arith.constant 0 : index
    %523 = vector.load %arg19[%c4_226, %c0_227, %c0_228] : memref<16x1x16xf32, #tpu.memory_space<vmem>>, vector<1x1x16xf32>
    %524 = vector.shape_cast %523 : vector<1x1x16xf32> to vector<1x16xf32>
    %525 = vector.shape_cast %522 : vector<1x16xf32> to vector<1x1x16xf32>
    tpu.vector_store %arg19[%c4_226, %c0_227, %c0_228], %525 {strides = array<i32>} : memref<16x1x16xf32, #tpu.memory_space<vmem>>, vector<1x1x16xf32>,
    %c11_i32 = arith.constant 11 : i32
    %526 = arith.addi %30, %c11_i32 : i32
    %527 = vector.broadcast %526 : i32 to vector<1x1xi32>
    %528 = arith.cmpi slt, %527, %27 : vector<1x1xi32>
    %529 = arith.extui %528 : vector<1x1xi1> to vector<1x1xi32>
    %530 = arith.sitofp %529 : vector<1x1xi32> to vector<1x1xf32>
    %c11 = arith.constant 11 : index
    %c0_229 = arith.constant 0 : index
    %c0_230 = arith.constant 0 : index
    %531 = vector.load %arg18[%c11, %c0_229, %c0_230] : memref<16x1x64xf32, #tpu.memory_space<vmem>>, vector<1x1x64xf32>
    %532 = vector.shape_cast %531 : vector<1x1x64xf32> to vector<1x64xf32>
    %c0_231 = arith.constant 0 : index
    %c0_232 = arith.constant 0 : index
    %533 = vector.load %arg15[%c0_231, %c0_232] : memref<1x16xf32, #tpu.memory_space<vmem>>, vector<1x16xf32>
    %cst_233 = arith.constant dense<0.000000e+00> : vector<1x64xf32>
    %534 = tpu.matmul %533, %24, %cst_233 {dimension_numbers = #tpu.dot_dimension_numbers<[1], [0], [0], [1], [0, 0, 1, 1], [], []>} : vector<1x16xf32>, vector<16x64xf32>, vector<1x64xf32> -> vector<1x64xf32>
    %535 = arith.addf %532, %534 : vector<1x64xf32>
    %536 = vector.extract_strided_slice %535 {offsets = [0, 0], sizes = [1, 32], strides = [1, 1]} : vector<1x64xf32> to vector<1x32xf32>
    %537 = arith.negf %536 : vector<1x32xf32>
    %538 = math.exp %537 : vector<1x32xf32>
    %cst_234 = arith.constant 1.000000e+00 : f32
    %539 = vector.broadcast %cst_234 : f32 to vector<1x32xf32>
    %540 = arith.addf %539, %538 : vector<1x32xf32>
    %541 = arith.divf %539, %540 : vector<1x32xf32>
    %542 = vector.extract_strided_slice %541 {offsets = [0, 0], sizes = [1, 16], strides = [1, 1]} : vector<1x32xf32> to vector<1x16xf32>
    %543 = vector.extract_strided_slice %541 {offsets = [0, 16], sizes = [1, 16], strides = [1, 1]} : vector<1x32xf32> to vector<1x16xf32>
    %544 = vector.extract_strided_slice %535 {offsets = [0, 32], sizes = [1, 16], strides = [1, 1]} : vector<1x64xf32> to vector<1x16xf32>
    %545 = math.tanh %544 : vector<1x16xf32>
    %546 = vector.extract_strided_slice %535 {offsets = [0, 48], sizes = [1, 16], strides = [1, 1]} : vector<1x64xf32> to vector<1x16xf32>
    %547 = arith.negf %546 : vector<1x16xf32>
    %548 = math.exp %547 : vector<1x16xf32>
    %cst_235 = arith.constant 1.000000e+00 : f32
    %549 = vector.broadcast %cst_235 : f32 to vector<1x16xf32>
    %550 = arith.addf %549, %548 : vector<1x16xf32>
    %551 = arith.divf %549, %550 : vector<1x16xf32>
    %c0_236 = arith.constant 0 : index
    %c0_237 = arith.constant 0 : index
    %552 = vector.load %arg16[%c0_236, %c0_237] : memref<1x16xf32, #tpu.memory_space<vmem>>, vector<1x16xf32>
    %553 = arith.mulf %543, %552 : vector<1x16xf32>
    %554 = arith.mulf %542, %545 : vector<1x16xf32>
    %555 = arith.addf %553, %554 : vector<1x16xf32>
    %556 = math.tanh %555 : vector<1x16xf32>
    %557 = arith.mulf %551, %556 : vector<1x16xf32>
    %558 = vector.broadcast %530 : vector<1x1xf32> to vector<1x16xf32>
    %559 = arith.mulf %558, %557 : vector<1x16xf32>
    %cst_238 = arith.constant 1.000000e+00 : f32
    %560 = vector.broadcast %cst_238 : f32 to vector<1x1xf32>
    %561 = arith.subf %560, %530 : vector<1x1xf32>
    %c0_239 = arith.constant 0 : index
    %c0_240 = arith.constant 0 : index
    %562 = vector.load %arg15[%c0_239, %c0_240] : memref<1x16xf32, #tpu.memory_space<vmem>>, vector<1x16xf32>
    %563 = vector.broadcast %561 : vector<1x1xf32> to vector<1x16xf32>
    %564 = arith.mulf %563, %562 : vector<1x16xf32>
    %565 = arith.addf %559, %564 : vector<1x16xf32>
    %c0_241 = arith.constant 0 : index
    %c0_242 = arith.constant 0 : index
    %566 = vector.load %arg15[%c0_241, %c0_242] : memref<1x16xf32, #tpu.memory_space<vmem>>, vector<1x16xf32>
    tpu.vector_store %arg15[%c0_241, %c0_242], %565 {strides = array<i32>} : memref<1x16xf32, #tpu.memory_space<vmem>>, vector<1x16xf32>,
    %567 = vector.broadcast %530 : vector<1x1xf32> to vector<1x16xf32>
    %568 = arith.mulf %567, %555 : vector<1x16xf32>
    %cst_243 = arith.constant 1.000000e+00 : f32
    %569 = vector.broadcast %cst_243 : f32 to vector<1x1xf32>
    %570 = arith.subf %569, %530 : vector<1x1xf32>
    %c0_244 = arith.constant 0 : index
    %c0_245 = arith.constant 0 : index
    %571 = vector.load %arg16[%c0_244, %c0_245] : memref<1x16xf32, #tpu.memory_space<vmem>>, vector<1x16xf32>
    %572 = vector.broadcast %570 : vector<1x1xf32> to vector<1x16xf32>
    %573 = arith.mulf %572, %571 : vector<1x16xf32>
    %574 = arith.addf %568, %573 : vector<1x16xf32>
    %c0_246 = arith.constant 0 : index
    %c0_247 = arith.constant 0 : index
    %575 = vector.load %arg16[%c0_246, %c0_247] : memref<1x16xf32, #tpu.memory_space<vmem>>, vector<1x16xf32>
    tpu.vector_store %arg16[%c0_246, %c0_247], %574 {strides = array<i32>} : memref<1x16xf32, #tpu.memory_space<vmem>>, vector<1x16xf32>,
    %576 = vector.broadcast %530 : vector<1x1xf32> to vector<1x16xf32>
    %577 = arith.mulf %576, %557 : vector<1x16xf32>
    %c11_248 = arith.constant 11 : index
    %c0_249 = arith.constant 0 : index
    %c0_250 = arith.constant 0 : index
    %578 = vector.load %arg20[%c11_248, %c0_249, %c0_250] : memref<16x1x16xf32, #tpu.memory_space<vmem>>, vector<1x1x16xf32>
    %579 = vector.shape_cast %578 : vector<1x1x16xf32> to vector<1x16xf32>
    %580 = vector.shape_cast %577 : vector<1x16xf32> to vector<1x1x16xf32>
    tpu.vector_store %arg20[%c11_248, %c0_249, %c0_250], %580 {strides = array<i32>} : memref<16x1x16xf32, #tpu.memory_space<vmem>>, vector<1x1x16xf32>,
    %c5_i32 = arith.constant 5 : i32
    %581 = arith.addi %28, %c5_i32 : i32
    %582 = vector.broadcast %581 : i32 to vector<1x1xi32>
    %583 = arith.cmpi slt, %582, %27 : vector<1x1xi32>
    %584 = arith.extui %583 : vector<1x1xi1> to vector<1x1xi32>
    %585 = arith.sitofp %584 : vector<1x1xi32> to vector<1x1xf32>
    %c5 = arith.constant 5 : index
    %c0_251 = arith.constant 0 : index
    %c0_252 = arith.constant 0 : index
    %586 = vector.load %arg17[%c5, %c0_251, %c0_252] : memref<16x1x64xf32, #tpu.memory_space<vmem>>, vector<1x1x64xf32>
    %587 = vector.shape_cast %586 : vector<1x1x64xf32> to vector<1x64xf32>
    %c0_253 = arith.constant 0 : index
    %c0_254 = arith.constant 0 : index
    %588 = vector.load %arg13[%c0_253, %c0_254] : memref<1x16xf32, #tpu.memory_space<vmem>>, vector<1x16xf32>
    %cst_255 = arith.constant dense<0.000000e+00> : vector<1x64xf32>
    %589 = tpu.matmul %588, %23, %cst_255 {dimension_numbers = #tpu.dot_dimension_numbers<[1], [0], [0], [1], [0, 0, 1, 1], [], []>} : vector<1x16xf32>, vector<16x64xf32>, vector<1x64xf32> -> vector<1x64xf32>
    %590 = arith.addf %587, %589 : vector<1x64xf32>
    %591 = vector.extract_strided_slice %590 {offsets = [0, 0], sizes = [1, 32], strides = [1, 1]} : vector<1x64xf32> to vector<1x32xf32>
    %592 = arith.negf %591 : vector<1x32xf32>
    %593 = math.exp %592 : vector<1x32xf32>
    %cst_256 = arith.constant 1.000000e+00 : f32
    %594 = vector.broadcast %cst_256 : f32 to vector<1x32xf32>
    %595 = arith.addf %594, %593 : vector<1x32xf32>
    %596 = arith.divf %594, %595 : vector<1x32xf32>
    %597 = vector.extract_strided_slice %596 {offsets = [0, 0], sizes = [1, 16], strides = [1, 1]} : vector<1x32xf32> to vector<1x16xf32>
    %598 = vector.extract_strided_slice %596 {offsets = [0, 16], sizes = [1, 16], strides = [1, 1]} : vector<1x32xf32> to vector<1x16xf32>
    %599 = vector.extract_strided_slice %590 {offsets = [0, 32], sizes = [1, 16], strides = [1, 1]} : vector<1x64xf32> to vector<1x16xf32>
    %600 = math.tanh %599 : vector<1x16xf32>
    %601 = vector.extract_strided_slice %590 {offsets = [0, 48], sizes = [1, 16], strides = [1, 1]} : vector<1x64xf32> to vector<1x16xf32>
    %602 = arith.negf %601 : vector<1x16xf32>
    %603 = math.exp %602 : vector<1x16xf32>
    %cst_257 = arith.constant 1.000000e+00 : f32
    %604 = vector.broadcast %cst_257 : f32 to vector<1x16xf32>
    %605 = arith.addf %604, %603 : vector<1x16xf32>
    %606 = arith.divf %604, %605 : vector<1x16xf32>
    %c0_258 = arith.constant 0 : index
    %c0_259 = arith.constant 0 : index
    %607 = vector.load %arg14[%c0_258, %c0_259] : memref<1x16xf32, #tpu.memory_space<vmem>>, vector<1x16xf32>
    %608 = arith.mulf %598, %607 : vector<1x16xf32>
    %609 = arith.mulf %597, %600 : vector<1x16xf32>
    %610 = arith.addf %608, %609 : vector<1x16xf32>
    %611 = math.tanh %610 : vector<1x16xf32>
    %612 = arith.mulf %606, %611 : vector<1x16xf32>
    %613 = vector.broadcast %585 : vector<1x1xf32> to vector<1x16xf32>
    %614 = arith.mulf %613, %612 : vector<1x16xf32>
    %cst_260 = arith.constant 1.000000e+00 : f32
    %615 = vector.broadcast %cst_260 : f32 to vector<1x1xf32>
    %616 = arith.subf %615, %585 : vector<1x1xf32>
    %c0_261 = arith.constant 0 : index
    %c0_262 = arith.constant 0 : index
    %617 = vector.load %arg13[%c0_261, %c0_262] : memref<1x16xf32, #tpu.memory_space<vmem>>, vector<1x16xf32>
    %618 = vector.broadcast %616 : vector<1x1xf32> to vector<1x16xf32>
    %619 = arith.mulf %618, %617 : vector<1x16xf32>
    %620 = arith.addf %614, %619 : vector<1x16xf32>
    %c0_263 = arith.constant 0 : index
    %c0_264 = arith.constant 0 : index
    %621 = vector.load %arg13[%c0_263, %c0_264] : memref<1x16xf32, #tpu.memory_space<vmem>>, vector<1x16xf32>
    tpu.vector_store %arg13[%c0_263, %c0_264], %620 {strides = array<i32>} : memref<1x16xf32, #tpu.memory_space<vmem>>, vector<1x16xf32>,
    %622 = vector.broadcast %585 : vector<1x1xf32> to vector<1x16xf32>
    %623 = arith.mulf %622, %610 : vector<1x16xf32>
    %cst_265 = arith.constant 1.000000e+00 : f32
    %624 = vector.broadcast %cst_265 : f32 to vector<1x1xf32>
    %625 = arith.subf %624, %585 : vector<1x1xf32>
    %c0_266 = arith.constant 0 : index
    %c0_267 = arith.constant 0 : index
    %626 = vector.load %arg14[%c0_266, %c0_267] : memref<1x16xf32, #tpu.memory_space<vmem>>, vector<1x16xf32>
    %627 = vector.broadcast %625 : vector<1x1xf32> to vector<1x16xf32>
    %628 = arith.mulf %627, %626 : vector<1x16xf32>
    %629 = arith.addf %623, %628 : vector<1x16xf32>
    %c0_268 = arith.constant 0 : index
    %c0_269 = arith.constant 0 : index
    %630 = vector.load %arg14[%c0_268, %c0_269] : memref<1x16xf32, #tpu.memory_space<vmem>>, vector<1x16xf32>
    tpu.vector_store %arg14[%c0_268, %c0_269], %629 {strides = array<i32>} : memref<1x16xf32, #tpu.memory_space<vmem>>, vector<1x16xf32>,
    %631 = vector.broadcast %585 : vector<1x1xf32> to vector<1x16xf32>
    %632 = arith.mulf %631, %612 : vector<1x16xf32>
    %c5_270 = arith.constant 5 : index
    %c0_271 = arith.constant 0 : index
    %c0_272 = arith.constant 0 : index
    %633 = vector.load %arg19[%c5_270, %c0_271, %c0_272] : memref<16x1x16xf32, #tpu.memory_space<vmem>>, vector<1x1x16xf32>
    %634 = vector.shape_cast %633 : vector<1x1x16xf32> to vector<1x16xf32>
    %635 = vector.shape_cast %632 : vector<1x16xf32> to vector<1x1x16xf32>
    tpu.vector_store %arg19[%c5_270, %c0_271, %c0_272], %635 {strides = array<i32>} : memref<16x1x16xf32, #tpu.memory_space<vmem>>, vector<1x1x16xf32>,
    %c10_i32 = arith.constant 10 : i32
    %636 = arith.addi %30, %c10_i32 : i32
    %637 = vector.broadcast %636 : i32 to vector<1x1xi32>
    %638 = arith.cmpi slt, %637, %27 : vector<1x1xi32>
    %639 = arith.extui %638 : vector<1x1xi1> to vector<1x1xi32>
    %640 = arith.sitofp %639 : vector<1x1xi32> to vector<1x1xf32>
    %c10 = arith.constant 10 : index
    %c0_273 = arith.constant 0 : index
    %c0_274 = arith.constant 0 : index
    %641 = vector.load %arg18[%c10, %c0_273, %c0_274] : memref<16x1x64xf32, #tpu.memory_space<vmem>>, vector<1x1x64xf32>
    %642 = vector.shape_cast %641 : vector<1x1x64xf32> to vector<1x64xf32>
    %c0_275 = arith.constant 0 : index
    %c0_276 = arith.constant 0 : index
    %643 = vector.load %arg15[%c0_275, %c0_276] : memref<1x16xf32, #tpu.memory_space<vmem>>, vector<1x16xf32>
    %cst_277 = arith.constant dense<0.000000e+00> : vector<1x64xf32>
    %644 = tpu.matmul %643, %24, %cst_277 {dimension_numbers = #tpu.dot_dimension_numbers<[1], [0], [0], [1], [0, 0, 1, 1], [], []>} : vector<1x16xf32>, vector<16x64xf32>, vector<1x64xf32> -> vector<1x64xf32>
    %645 = arith.addf %642, %644 : vector<1x64xf32>
    %646 = vector.extract_strided_slice %645 {offsets = [0, 0], sizes = [1, 32], strides = [1, 1]} : vector<1x64xf32> to vector<1x32xf32>
    %647 = arith.negf %646 : vector<1x32xf32>
    %648 = math.exp %647 : vector<1x32xf32>
    %cst_278 = arith.constant 1.000000e+00 : f32
    %649 = vector.broadcast %cst_278 : f32 to vector<1x32xf32>
    %650 = arith.addf %649, %648 : vector<1x32xf32>
    %651 = arith.divf %649, %650 : vector<1x32xf32>
    %652 = vector.extract_strided_slice %651 {offsets = [0, 0], sizes = [1, 16], strides = [1, 1]} : vector<1x32xf32> to vector<1x16xf32>
    %653 = vector.extract_strided_slice %651 {offsets = [0, 16], sizes = [1, 16], strides = [1, 1]} : vector<1x32xf32> to vector<1x16xf32>
    %654 = vector.extract_strided_slice %645 {offsets = [0, 32], sizes = [1, 16], strides = [1, 1]} : vector<1x64xf32> to vector<1x16xf32>
    %655 = math.tanh %654 : vector<1x16xf32>
    %656 = vector.extract_strided_slice %645 {offsets = [0, 48], sizes = [1, 16], strides = [1, 1]} : vector<1x64xf32> to vector<1x16xf32>
    %657 = arith.negf %656 : vector<1x16xf32>
    %658 = math.exp %657 : vector<1x16xf32>
    %cst_279 = arith.constant 1.000000e+00 : f32
    %659 = vector.broadcast %cst_279 : f32 to vector<1x16xf32>
    %660 = arith.addf %659, %658 : vector<1x16xf32>
    %661 = arith.divf %659, %660 : vector<1x16xf32>
    %c0_280 = arith.constant 0 : index
    %c0_281 = arith.constant 0 : index
    %662 = vector.load %arg16[%c0_280, %c0_281] : memref<1x16xf32, #tpu.memory_space<vmem>>, vector<1x16xf32>
    %663 = arith.mulf %653, %662 : vector<1x16xf32>
    %664 = arith.mulf %652, %655 : vector<1x16xf32>
    %665 = arith.addf %663, %664 : vector<1x16xf32>
    %666 = math.tanh %665 : vector<1x16xf32>
    %667 = arith.mulf %661, %666 : vector<1x16xf32>
    %668 = vector.broadcast %640 : vector<1x1xf32> to vector<1x16xf32>
    %669 = arith.mulf %668, %667 : vector<1x16xf32>
    %cst_282 = arith.constant 1.000000e+00 : f32
    %670 = vector.broadcast %cst_282 : f32 to vector<1x1xf32>
    %671 = arith.subf %670, %640 : vector<1x1xf32>
    %c0_283 = arith.constant 0 : index
    %c0_284 = arith.constant 0 : index
    %672 = vector.load %arg15[%c0_283, %c0_284] : memref<1x16xf32, #tpu.memory_space<vmem>>, vector<1x16xf32>
    %673 = vector.broadcast %671 : vector<1x1xf32> to vector<1x16xf32>
    %674 = arith.mulf %673, %672 : vector<1x16xf32>
    %675 = arith.addf %669, %674 : vector<1x16xf32>
    %c0_285 = arith.constant 0 : index
    %c0_286 = arith.constant 0 : index
    %676 = vector.load %arg15[%c0_285, %c0_286] : memref<1x16xf32, #tpu.memory_space<vmem>>, vector<1x16xf32>
    tpu.vector_store %arg15[%c0_285, %c0_286], %675 {strides = array<i32>} : memref<1x16xf32, #tpu.memory_space<vmem>>, vector<1x16xf32>,
    %677 = vector.broadcast %640 : vector<1x1xf32> to vector<1x16xf32>
    %678 = arith.mulf %677, %665 : vector<1x16xf32>
    %cst_287 = arith.constant 1.000000e+00 : f32
    %679 = vector.broadcast %cst_287 : f32 to vector<1x1xf32>
    %680 = arith.subf %679, %640 : vector<1x1xf32>
    %c0_288 = arith.constant 0 : index
    %c0_289 = arith.constant 0 : index
    %681 = vector.load %arg16[%c0_288, %c0_289] : memref<1x16xf32, #tpu.memory_space<vmem>>, vector<1x16xf32>
    %682 = vector.broadcast %680 : vector<1x1xf32> to vector<1x16xf32>
    %683 = arith.mulf %682, %681 : vector<1x16xf32>
    %684 = arith.addf %678, %683 : vector<1x16xf32>
    %c0_290 = arith.constant 0 : index
    %c0_291 = arith.constant 0 : index
    %685 = vector.load %arg16[%c0_290, %c0_291] : memref<1x16xf32, #tpu.memory_space<vmem>>, vector<1x16xf32>
    tpu.vector_store %arg16[%c0_290, %c0_291], %684 {strides = array<i32>} : memref<1x16xf32, #tpu.memory_space<vmem>>, vector<1x16xf32>,
    %686 = vector.broadcast %640 : vector<1x1xf32> to vector<1x16xf32>
    %687 = arith.mulf %686, %667 : vector<1x16xf32>
    %c10_292 = arith.constant 10 : index
    %c0_293 = arith.constant 0 : index
    %c0_294 = arith.constant 0 : index
    %688 = vector.load %arg20[%c10_292, %c0_293, %c0_294] : memref<16x1x16xf32, #tpu.memory_space<vmem>>, vector<1x1x16xf32>
    %689 = vector.shape_cast %688 : vector<1x1x16xf32> to vector<1x16xf32>
    %690 = vector.shape_cast %687 : vector<1x16xf32> to vector<1x1x16xf32>
    tpu.vector_store %arg20[%c10_292, %c0_293, %c0_294], %690 {strides = array<i32>} : memref<16x1x16xf32, #tpu.memory_space<vmem>>, vector<1x1x16xf32>,
    %c6_i32 = arith.constant 6 : i32
    %691 = arith.addi %28, %c6_i32 : i32
    %692 = vector.broadcast %691 : i32 to vector<1x1xi32>
    %693 = arith.cmpi slt, %692, %27 : vector<1x1xi32>
    %694 = arith.extui %693 : vector<1x1xi1> to vector<1x1xi32>
    %695 = arith.sitofp %694 : vector<1x1xi32> to vector<1x1xf32>
    %c6 = arith.constant 6 : index
    %c0_295 = arith.constant 0 : index
    %c0_296 = arith.constant 0 : index
    %696 = vector.load %arg17[%c6, %c0_295, %c0_296] : memref<16x1x64xf32, #tpu.memory_space<vmem>>, vector<1x1x64xf32>
    %697 = vector.shape_cast %696 : vector<1x1x64xf32> to vector<1x64xf32>
    %c0_297 = arith.constant 0 : index
    %c0_298 = arith.constant 0 : index
    %698 = vector.load %arg13[%c0_297, %c0_298] : memref<1x16xf32, #tpu.memory_space<vmem>>, vector<1x16xf32>
    %cst_299 = arith.constant dense<0.000000e+00> : vector<1x64xf32>
    %699 = tpu.matmul %698, %23, %cst_299 {dimension_numbers = #tpu.dot_dimension_numbers<[1], [0], [0], [1], [0, 0, 1, 1], [], []>} : vector<1x16xf32>, vector<16x64xf32>, vector<1x64xf32> -> vector<1x64xf32>
    %700 = arith.addf %697, %699 : vector<1x64xf32>
    %701 = vector.extract_strided_slice %700 {offsets = [0, 0], sizes = [1, 32], strides = [1, 1]} : vector<1x64xf32> to vector<1x32xf32>
    %702 = arith.negf %701 : vector<1x32xf32>
    %703 = math.exp %702 : vector<1x32xf32>
    %cst_300 = arith.constant 1.000000e+00 : f32
    %704 = vector.broadcast %cst_300 : f32 to vector<1x32xf32>
    %705 = arith.addf %704, %703 : vector<1x32xf32>
    %706 = arith.divf %704, %705 : vector<1x32xf32>
    %707 = vector.extract_strided_slice %706 {offsets = [0, 0], sizes = [1, 16], strides = [1, 1]} : vector<1x32xf32> to vector<1x16xf32>
    %708 = vector.extract_strided_slice %706 {offsets = [0, 16], sizes = [1, 16], strides = [1, 1]} : vector<1x32xf32> to vector<1x16xf32>
    %709 = vector.extract_strided_slice %700 {offsets = [0, 32], sizes = [1, 16], strides = [1, 1]} : vector<1x64xf32> to vector<1x16xf32>
    %710 = math.tanh %709 : vector<1x16xf32>
    %711 = vector.extract_strided_slice %700 {offsets = [0, 48], sizes = [1, 16], strides = [1, 1]} : vector<1x64xf32> to vector<1x16xf32>
    %712 = arith.negf %711 : vector<1x16xf32>
    %713 = math.exp %712 : vector<1x16xf32>
    %cst_301 = arith.constant 1.000000e+00 : f32
    %714 = vector.broadcast %cst_301 : f32 to vector<1x16xf32>
    %715 = arith.addf %714, %713 : vector<1x16xf32>
    %716 = arith.divf %714, %715 : vector<1x16xf32>
    %c0_302 = arith.constant 0 : index
    %c0_303 = arith.constant 0 : index
    %717 = vector.load %arg14[%c0_302, %c0_303] : memref<1x16xf32, #tpu.memory_space<vmem>>, vector<1x16xf32>
    %718 = arith.mulf %708, %717 : vector<1x16xf32>
    %719 = arith.mulf %707, %710 : vector<1x16xf32>
    %720 = arith.addf %718, %719 : vector<1x16xf32>
    %721 = math.tanh %720 : vector<1x16xf32>
    %722 = arith.mulf %716, %721 : vector<1x16xf32>
    %723 = vector.broadcast %695 : vector<1x1xf32> to vector<1x16xf32>
    %724 = arith.mulf %723, %722 : vector<1x16xf32>
    %cst_304 = arith.constant 1.000000e+00 : f32
    %725 = vector.broadcast %cst_304 : f32 to vector<1x1xf32>
    %726 = arith.subf %725, %695 : vector<1x1xf32>
    %c0_305 = arith.constant 0 : index
    %c0_306 = arith.constant 0 : index
    %727 = vector.load %arg13[%c0_305, %c0_306] : memref<1x16xf32, #tpu.memory_space<vmem>>, vector<1x16xf32>
    %728 = vector.broadcast %726 : vector<1x1xf32> to vector<1x16xf32>
    %729 = arith.mulf %728, %727 : vector<1x16xf32>
    %730 = arith.addf %724, %729 : vector<1x16xf32>
    %c0_307 = arith.constant 0 : index
    %c0_308 = arith.constant 0 : index
    %731 = vector.load %arg13[%c0_307, %c0_308] : memref<1x16xf32, #tpu.memory_space<vmem>>, vector<1x16xf32>
    tpu.vector_store %arg13[%c0_307, %c0_308], %730 {strides = array<i32>} : memref<1x16xf32, #tpu.memory_space<vmem>>, vector<1x16xf32>,
    %732 = vector.broadcast %695 : vector<1x1xf32> to vector<1x16xf32>
    %733 = arith.mulf %732, %720 : vector<1x16xf32>
    %cst_309 = arith.constant 1.000000e+00 : f32
    %734 = vector.broadcast %cst_309 : f32 to vector<1x1xf32>
    %735 = arith.subf %734, %695 : vector<1x1xf32>
    %c0_310 = arith.constant 0 : index
    %c0_311 = arith.constant 0 : index
    %736 = vector.load %arg14[%c0_310, %c0_311] : memref<1x16xf32, #tpu.memory_space<vmem>>, vector<1x16xf32>
    %737 = vector.broadcast %735 : vector<1x1xf32> to vector<1x16xf32>
    %738 = arith.mulf %737, %736 : vector<1x16xf32>
    %739 = arith.addf %733, %738 : vector<1x16xf32>
    %c0_312 = arith.constant 0 : index
    %c0_313 = arith.constant 0 : index
    %740 = vector.load %arg14[%c0_312, %c0_313] : memref<1x16xf32, #tpu.memory_space<vmem>>, vector<1x16xf32>
    tpu.vector_store %arg14[%c0_312, %c0_313], %739 {strides = array<i32>} : memref<1x16xf32, #tpu.memory_space<vmem>>, vector<1x16xf32>,
    %741 = vector.broadcast %695 : vector<1x1xf32> to vector<1x16xf32>
    %742 = arith.mulf %741, %722 : vector<1x16xf32>
    %c6_314 = arith.constant 6 : index
    %c0_315 = arith.constant 0 : index
    %c0_316 = arith.constant 0 : index
    %743 = vector.load %arg19[%c6_314, %c0_315, %c0_316] : memref<16x1x16xf32, #tpu.memory_space<vmem>>, vector<1x1x16xf32>
    %744 = vector.shape_cast %743 : vector<1x1x16xf32> to vector<1x16xf32>
    %745 = vector.shape_cast %742 : vector<1x16xf32> to vector<1x1x16xf32>
    tpu.vector_store %arg19[%c6_314, %c0_315, %c0_316], %745 {strides = array<i32>} : memref<16x1x16xf32, #tpu.memory_space<vmem>>, vector<1x1x16xf32>,
    %c9_i32 = arith.constant 9 : i32
    %746 = arith.addi %30, %c9_i32 : i32
    %747 = vector.broadcast %746 : i32 to vector<1x1xi32>
    %748 = arith.cmpi slt, %747, %27 : vector<1x1xi32>
    %749 = arith.extui %748 : vector<1x1xi1> to vector<1x1xi32>
    %750 = arith.sitofp %749 : vector<1x1xi32> to vector<1x1xf32>
    %c9 = arith.constant 9 : index
    %c0_317 = arith.constant 0 : index
    %c0_318 = arith.constant 0 : index
    %751 = vector.load %arg18[%c9, %c0_317, %c0_318] : memref<16x1x64xf32, #tpu.memory_space<vmem>>, vector<1x1x64xf32>
    %752 = vector.shape_cast %751 : vector<1x1x64xf32> to vector<1x64xf32>
    %c0_319 = arith.constant 0 : index
    %c0_320 = arith.constant 0 : index
    %753 = vector.load %arg15[%c0_319, %c0_320] : memref<1x16xf32, #tpu.memory_space<vmem>>, vector<1x16xf32>
    %cst_321 = arith.constant dense<0.000000e+00> : vector<1x64xf32>
    %754 = tpu.matmul %753, %24, %cst_321 {dimension_numbers = #tpu.dot_dimension_numbers<[1], [0], [0], [1], [0, 0, 1, 1], [], []>} : vector<1x16xf32>, vector<16x64xf32>, vector<1x64xf32> -> vector<1x64xf32>
    %755 = arith.addf %752, %754 : vector<1x64xf32>
    %756 = vector.extract_strided_slice %755 {offsets = [0, 0], sizes = [1, 32], strides = [1, 1]} : vector<1x64xf32> to vector<1x32xf32>
    %757 = arith.negf %756 : vector<1x32xf32>
    %758 = math.exp %757 : vector<1x32xf32>
    %cst_322 = arith.constant 1.000000e+00 : f32
    %759 = vector.broadcast %cst_322 : f32 to vector<1x32xf32>
    %760 = arith.addf %759, %758 : vector<1x32xf32>
    %761 = arith.divf %759, %760 : vector<1x32xf32>
    %762 = vector.extract_strided_slice %761 {offsets = [0, 0], sizes = [1, 16], strides = [1, 1]} : vector<1x32xf32> to vector<1x16xf32>
    %763 = vector.extract_strided_slice %761 {offsets = [0, 16], sizes = [1, 16], strides = [1, 1]} : vector<1x32xf32> to vector<1x16xf32>
    %764 = vector.extract_strided_slice %755 {offsets = [0, 32], sizes = [1, 16], strides = [1, 1]} : vector<1x64xf32> to vector<1x16xf32>
    %765 = math.tanh %764 : vector<1x16xf32>
    %766 = vector.extract_strided_slice %755 {offsets = [0, 48], sizes = [1, 16], strides = [1, 1]} : vector<1x64xf32> to vector<1x16xf32>
    %767 = arith.negf %766 : vector<1x16xf32>
    %768 = math.exp %767 : vector<1x16xf32>
    %cst_323 = arith.constant 1.000000e+00 : f32
    %769 = vector.broadcast %cst_323 : f32 to vector<1x16xf32>
    %770 = arith.addf %769, %768 : vector<1x16xf32>
    %771 = arith.divf %769, %770 : vector<1x16xf32>
    %c0_324 = arith.constant 0 : index
    %c0_325 = arith.constant 0 : index
    %772 = vector.load %arg16[%c0_324, %c0_325] : memref<1x16xf32, #tpu.memory_space<vmem>>, vector<1x16xf32>
    %773 = arith.mulf %763, %772 : vector<1x16xf32>
    %774 = arith.mulf %762, %765 : vector<1x16xf32>
    %775 = arith.addf %773, %774 : vector<1x16xf32>
    %776 = math.tanh %775 : vector<1x16xf32>
    %777 = arith.mulf %771, %776 : vector<1x16xf32>
    %778 = vector.broadcast %750 : vector<1x1xf32> to vector<1x16xf32>
    %779 = arith.mulf %778, %777 : vector<1x16xf32>
    %cst_326 = arith.constant 1.000000e+00 : f32
    %780 = vector.broadcast %cst_326 : f32 to vector<1x1xf32>
    %781 = arith.subf %780, %750 : vector<1x1xf32>
    %c0_327 = arith.constant 0 : index
    %c0_328 = arith.constant 0 : index
    %782 = vector.load %arg15[%c0_327, %c0_328] : memref<1x16xf32, #tpu.memory_space<vmem>>, vector<1x16xf32>
    %783 = vector.broadcast %781 : vector<1x1xf32> to vector<1x16xf32>
    %784 = arith.mulf %783, %782 : vector<1x16xf32>
    %785 = arith.addf %779, %784 : vector<1x16xf32>
    %c0_329 = arith.constant 0 : index
    %c0_330 = arith.constant 0 : index
    %786 = vector.load %arg15[%c0_329, %c0_330] : memref<1x16xf32, #tpu.memory_space<vmem>>, vector<1x16xf32>
    tpu.vector_store %arg15[%c0_329, %c0_330], %785 {strides = array<i32>} : memref<1x16xf32, #tpu.memory_space<vmem>>, vector<1x16xf32>,
    %787 = vector.broadcast %750 : vector<1x1xf32> to vector<1x16xf32>
    %788 = arith.mulf %787, %775 : vector<1x16xf32>
    %cst_331 = arith.constant 1.000000e+00 : f32
    %789 = vector.broadcast %cst_331 : f32 to vector<1x1xf32>
    %790 = arith.subf %789, %750 : vector<1x1xf32>
    %c0_332 = arith.constant 0 : index
    %c0_333 = arith.constant 0 : index
    %791 = vector.load %arg16[%c0_332, %c0_333] : memref<1x16xf32, #tpu.memory_space<vmem>>, vector<1x16xf32>
    %792 = vector.broadcast %790 : vector<1x1xf32> to vector<1x16xf32>
    %793 = arith.mulf %792, %791 : vector<1x16xf32>
    %794 = arith.addf %788, %793 : vector<1x16xf32>
    %c0_334 = arith.constant 0 : index
    %c0_335 = arith.constant 0 : index
    %795 = vector.load %arg16[%c0_334, %c0_335] : memref<1x16xf32, #tpu.memory_space<vmem>>, vector<1x16xf32>
    tpu.vector_store %arg16[%c0_334, %c0_335], %794 {strides = array<i32>} : memref<1x16xf32, #tpu.memory_space<vmem>>, vector<1x16xf32>,
    %796 = vector.broadcast %750 : vector<1x1xf32> to vector<1x16xf32>
    %797 = arith.mulf %796, %777 : vector<1x16xf32>
    %c9_336 = arith.constant 9 : index
    %c0_337 = arith.constant 0 : index
    %c0_338 = arith.constant 0 : index
    %798 = vector.load %arg20[%c9_336, %c0_337, %c0_338] : memref<16x1x16xf32, #tpu.memory_space<vmem>>, vector<1x1x16xf32>
    %799 = vector.shape_cast %798 : vector<1x1x16xf32> to vector<1x16xf32>
    %800 = vector.shape_cast %797 : vector<1x16xf32> to vector<1x1x16xf32>
    tpu.vector_store %arg20[%c9_336, %c0_337, %c0_338], %800 {strides = array<i32>} : memref<16x1x16xf32, #tpu.memory_space<vmem>>, vector<1x1x16xf32>,
    %c7_i32 = arith.constant 7 : i32
    %801 = arith.addi %28, %c7_i32 : i32
    %802 = vector.broadcast %801 : i32 to vector<1x1xi32>
    %803 = arith.cmpi slt, %802, %27 : vector<1x1xi32>
    %804 = arith.extui %803 : vector<1x1xi1> to vector<1x1xi32>
    %805 = arith.sitofp %804 : vector<1x1xi32> to vector<1x1xf32>
    %c7 = arith.constant 7 : index
    %c0_339 = arith.constant 0 : index
    %c0_340 = arith.constant 0 : index
    %806 = vector.load %arg17[%c7, %c0_339, %c0_340] : memref<16x1x64xf32, #tpu.memory_space<vmem>>, vector<1x1x64xf32>
    %807 = vector.shape_cast %806 : vector<1x1x64xf32> to vector<1x64xf32>
    %c0_341 = arith.constant 0 : index
    %c0_342 = arith.constant 0 : index
    %808 = vector.load %arg13[%c0_341, %c0_342] : memref<1x16xf32, #tpu.memory_space<vmem>>, vector<1x16xf32>
    %cst_343 = arith.constant dense<0.000000e+00> : vector<1x64xf32>
    %809 = tpu.matmul %808, %23, %cst_343 {dimension_numbers = #tpu.dot_dimension_numbers<[1], [0], [0], [1], [0, 0, 1, 1], [], []>} : vector<1x16xf32>, vector<16x64xf32>, vector<1x64xf32> -> vector<1x64xf32>
    %810 = arith.addf %807, %809 : vector<1x64xf32>
    %811 = vector.extract_strided_slice %810 {offsets = [0, 0], sizes = [1, 32], strides = [1, 1]} : vector<1x64xf32> to vector<1x32xf32>
    %812 = arith.negf %811 : vector<1x32xf32>
    %813 = math.exp %812 : vector<1x32xf32>
    %cst_344 = arith.constant 1.000000e+00 : f32
    %814 = vector.broadcast %cst_344 : f32 to vector<1x32xf32>
    %815 = arith.addf %814, %813 : vector<1x32xf32>
    %816 = arith.divf %814, %815 : vector<1x32xf32>
    %817 = vector.extract_strided_slice %816 {offsets = [0, 0], sizes = [1, 16], strides = [1, 1]} : vector<1x32xf32> to vector<1x16xf32>
    %818 = vector.extract_strided_slice %816 {offsets = [0, 16], sizes = [1, 16], strides = [1, 1]} : vector<1x32xf32> to vector<1x16xf32>
    %819 = vector.extract_strided_slice %810 {offsets = [0, 32], sizes = [1, 16], strides = [1, 1]} : vector<1x64xf32> to vector<1x16xf32>
    %820 = math.tanh %819 : vector<1x16xf32>
    %821 = vector.extract_strided_slice %810 {offsets = [0, 48], sizes = [1, 16], strides = [1, 1]} : vector<1x64xf32> to vector<1x16xf32>
    %822 = arith.negf %821 : vector<1x16xf32>
    %823 = math.exp %822 : vector<1x16xf32>
    %cst_345 = arith.constant 1.000000e+00 : f32
    %824 = vector.broadcast %cst_345 : f32 to vector<1x16xf32>
    %825 = arith.addf %824, %823 : vector<1x16xf32>
    %826 = arith.divf %824, %825 : vector<1x16xf32>
    %c0_346 = arith.constant 0 : index
    %c0_347 = arith.constant 0 : index
    %827 = vector.load %arg14[%c0_346, %c0_347] : memref<1x16xf32, #tpu.memory_space<vmem>>, vector<1x16xf32>
    %828 = arith.mulf %818, %827 : vector<1x16xf32>
    %829 = arith.mulf %817, %820 : vector<1x16xf32>
    %830 = arith.addf %828, %829 : vector<1x16xf32>
    %831 = math.tanh %830 : vector<1x16xf32>
    %832 = arith.mulf %826, %831 : vector<1x16xf32>
    %833 = vector.broadcast %805 : vector<1x1xf32> to vector<1x16xf32>
    %834 = arith.mulf %833, %832 : vector<1x16xf32>
    %cst_348 = arith.constant 1.000000e+00 : f32
    %835 = vector.broadcast %cst_348 : f32 to vector<1x1xf32>
    %836 = arith.subf %835, %805 : vector<1x1xf32>
    %c0_349 = arith.constant 0 : index
    %c0_350 = arith.constant 0 : index
    %837 = vector.load %arg13[%c0_349, %c0_350] : memref<1x16xf32, #tpu.memory_space<vmem>>, vector<1x16xf32>
    %838 = vector.broadcast %836 : vector<1x1xf32> to vector<1x16xf32>
    %839 = arith.mulf %838, %837 : vector<1x16xf32>
    %840 = arith.addf %834, %839 : vector<1x16xf32>
    %c0_351 = arith.constant 0 : index
    %c0_352 = arith.constant 0 : index
    %841 = vector.load %arg13[%c0_351, %c0_352] : memref<1x16xf32, #tpu.memory_space<vmem>>, vector<1x16xf32>
    tpu.vector_store %arg13[%c0_351, %c0_352], %840 {strides = array<i32>} : memref<1x16xf32, #tpu.memory_space<vmem>>, vector<1x16xf32>,
    %842 = vector.broadcast %805 : vector<1x1xf32> to vector<1x16xf32>
    %843 = arith.mulf %842, %830 : vector<1x16xf32>
    %cst_353 = arith.constant 1.000000e+00 : f32
    %844 = vector.broadcast %cst_353 : f32 to vector<1x1xf32>
    %845 = arith.subf %844, %805 : vector<1x1xf32>
    %c0_354 = arith.constant 0 : index
    %c0_355 = arith.constant 0 : index
    %846 = vector.load %arg14[%c0_354, %c0_355] : memref<1x16xf32, #tpu.memory_space<vmem>>, vector<1x16xf32>
    %847 = vector.broadcast %845 : vector<1x1xf32> to vector<1x16xf32>
    %848 = arith.mulf %847, %846 : vector<1x16xf32>
    %849 = arith.addf %843, %848 : vector<1x16xf32>
    %c0_356 = arith.constant 0 : index
    %c0_357 = arith.constant 0 : index
    %850 = vector.load %arg14[%c0_356, %c0_357] : memref<1x16xf32, #tpu.memory_space<vmem>>, vector<1x16xf32>
    tpu.vector_store %arg14[%c0_356, %c0_357], %849 {strides = array<i32>} : memref<1x16xf32, #tpu.memory_space<vmem>>, vector<1x16xf32>,
    %851 = vector.broadcast %805 : vector<1x1xf32> to vector<1x16xf32>
    %852 = arith.mulf %851, %832 : vector<1x16xf32>
    %c7_358 = arith.constant 7 : index
    %c0_359 = arith.constant 0 : index
    %c0_360 = arith.constant 0 : index
    %853 = vector.load %arg19[%c7_358, %c0_359, %c0_360] : memref<16x1x16xf32, #tpu.memory_space<vmem>>, vector<1x1x16xf32>
    %854 = vector.shape_cast %853 : vector<1x1x16xf32> to vector<1x16xf32>
    %855 = vector.shape_cast %852 : vector<1x16xf32> to vector<1x1x16xf32>
    tpu.vector_store %arg19[%c7_358, %c0_359, %c0_360], %855 {strides = array<i32>} : memref<16x1x16xf32, #tpu.memory_space<vmem>>, vector<1x1x16xf32>,
    %c8_i32 = arith.constant 8 : i32
    %856 = arith.addi %30, %c8_i32 : i32
    %857 = vector.broadcast %856 : i32 to vector<1x1xi32>
    %858 = arith.cmpi slt, %857, %27 : vector<1x1xi32>
    %859 = arith.extui %858 : vector<1x1xi1> to vector<1x1xi32>
    %860 = arith.sitofp %859 : vector<1x1xi32> to vector<1x1xf32>
    %c8 = arith.constant 8 : index
    %c0_361 = arith.constant 0 : index
    %c0_362 = arith.constant 0 : index
    %861 = vector.load %arg18[%c8, %c0_361, %c0_362] : memref<16x1x64xf32, #tpu.memory_space<vmem>>, vector<1x1x64xf32>
    %862 = vector.shape_cast %861 : vector<1x1x64xf32> to vector<1x64xf32>
    %c0_363 = arith.constant 0 : index
    %c0_364 = arith.constant 0 : index
    %863 = vector.load %arg15[%c0_363, %c0_364] : memref<1x16xf32, #tpu.memory_space<vmem>>, vector<1x16xf32>
    %cst_365 = arith.constant dense<0.000000e+00> : vector<1x64xf32>
    %864 = tpu.matmul %863, %24, %cst_365 {dimension_numbers = #tpu.dot_dimension_numbers<[1], [0], [0], [1], [0, 0, 1, 1], [], []>} : vector<1x16xf32>, vector<16x64xf32>, vector<1x64xf32> -> vector<1x64xf32>
    %865 = arith.addf %862, %864 : vector<1x64xf32>
    %866 = vector.extract_strided_slice %865 {offsets = [0, 0], sizes = [1, 32], strides = [1, 1]} : vector<1x64xf32> to vector<1x32xf32>
    %867 = arith.negf %866 : vector<1x32xf32>
    %868 = math.exp %867 : vector<1x32xf32>
    %cst_366 = arith.constant 1.000000e+00 : f32
    %869 = vector.broadcast %cst_366 : f32 to vector<1x32xf32>
    %870 = arith.addf %869, %868 : vector<1x32xf32>
    %871 = arith.divf %869, %870 : vector<1x32xf32>
    %872 = vector.extract_strided_slice %871 {offsets = [0, 0], sizes = [1, 16], strides = [1, 1]} : vector<1x32xf32> to vector<1x16xf32>
    %873 = vector.extract_strided_slice %871 {offsets = [0, 16], sizes = [1, 16], strides = [1, 1]} : vector<1x32xf32> to vector<1x16xf32>
    %874 = vector.extract_strided_slice %865 {offsets = [0, 32], sizes = [1, 16], strides = [1, 1]} : vector<1x64xf32> to vector<1x16xf32>
    %875 = math.tanh %874 : vector<1x16xf32>
    %876 = vector.extract_strided_slice %865 {offsets = [0, 48], sizes = [1, 16], strides = [1, 1]} : vector<1x64xf32> to vector<1x16xf32>
    %877 = arith.negf %876 : vector<1x16xf32>
    %878 = math.exp %877 : vector<1x16xf32>
    %cst_367 = arith.constant 1.000000e+00 : f32
    %879 = vector.broadcast %cst_367 : f32 to vector<1x16xf32>
    %880 = arith.addf %879, %878 : vector<1x16xf32>
    %881 = arith.divf %879, %880 : vector<1x16xf32>
    %c0_368 = arith.constant 0 : index
    %c0_369 = arith.constant 0 : index
    %882 = vector.load %arg16[%c0_368, %c0_369] : memref<1x16xf32, #tpu.memory_space<vmem>>, vector<1x16xf32>
    %883 = arith.mulf %873, %882 : vector<1x16xf32>
    %884 = arith.mulf %872, %875 : vector<1x16xf32>
    %885 = arith.addf %883, %884 : vector<1x16xf32>
    %886 = math.tanh %885 : vector<1x16xf32>
    %887 = arith.mulf %881, %886 : vector<1x16xf32>
    %888 = vector.broadcast %860 : vector<1x1xf32> to vector<1x16xf32>
    %889 = arith.mulf %888, %887 : vector<1x16xf32>
    %cst_370 = arith.constant 1.000000e+00 : f32
    %890 = vector.broadcast %cst_370 : f32 to vector<1x1xf32>
    %891 = arith.subf %890, %860 : vector<1x1xf32>
    %c0_371 = arith.constant 0 : index
    %c0_372 = arith.constant 0 : index
    %892 = vector.load %arg15[%c0_371, %c0_372] : memref<1x16xf32, #tpu.memory_space<vmem>>, vector<1x16xf32>
    %893 = vector.broadcast %891 : vector<1x1xf32> to vector<1x16xf32>
    %894 = arith.mulf %893, %892 : vector<1x16xf32>
    %895 = arith.addf %889, %894 : vector<1x16xf32>
    %c0_373 = arith.constant 0 : index
    %c0_374 = arith.constant 0 : index
    %896 = vector.load %arg15[%c0_373, %c0_374] : memref<1x16xf32, #tpu.memory_space<vmem>>, vector<1x16xf32>
    tpu.vector_store %arg15[%c0_373, %c0_374], %895 {strides = array<i32>} : memref<1x16xf32, #tpu.memory_space<vmem>>, vector<1x16xf32>,
    %897 = vector.broadcast %860 : vector<1x1xf32> to vector<1x16xf32>
    %898 = arith.mulf %897, %885 : vector<1x16xf32>
    %cst_375 = arith.constant 1.000000e+00 : f32
    %899 = vector.broadcast %cst_375 : f32 to vector<1x1xf32>
    %900 = arith.subf %899, %860 : vector<1x1xf32>
    %c0_376 = arith.constant 0 : index
    %c0_377 = arith.constant 0 : index
    %901 = vector.load %arg16[%c0_376, %c0_377] : memref<1x16xf32, #tpu.memory_space<vmem>>, vector<1x16xf32>
    %902 = vector.broadcast %900 : vector<1x1xf32> to vector<1x16xf32>
    %903 = arith.mulf %902, %901 : vector<1x16xf32>
    %904 = arith.addf %898, %903 : vector<1x16xf32>
    %c0_378 = arith.constant 0 : index
    %c0_379 = arith.constant 0 : index
    %905 = vector.load %arg16[%c0_378, %c0_379] : memref<1x16xf32, #tpu.memory_space<vmem>>, vector<1x16xf32>
    tpu.vector_store %arg16[%c0_378, %c0_379], %904 {strides = array<i32>} : memref<1x16xf32, #tpu.memory_space<vmem>>, vector<1x16xf32>,
    %906 = vector.broadcast %860 : vector<1x1xf32> to vector<1x16xf32>
    %907 = arith.mulf %906, %887 : vector<1x16xf32>
    %c8_380 = arith.constant 8 : index
    %c0_381 = arith.constant 0 : index
    %c0_382 = arith.constant 0 : index
    %908 = vector.load %arg20[%c8_380, %c0_381, %c0_382] : memref<16x1x16xf32, #tpu.memory_space<vmem>>, vector<1x1x16xf32>
    %909 = vector.shape_cast %908 : vector<1x1x16xf32> to vector<1x16xf32>
    %910 = vector.shape_cast %907 : vector<1x16xf32> to vector<1x1x16xf32>
    tpu.vector_store %arg20[%c8_380, %c0_381, %c0_382], %910 {strides = array<i32>} : memref<16x1x16xf32, #tpu.memory_space<vmem>>, vector<1x1x16xf32>,
    %c8_i32_383 = arith.constant 8 : i32
    %911 = arith.addi %28, %c8_i32_383 : i32
    %912 = vector.broadcast %911 : i32 to vector<1x1xi32>
    %913 = arith.cmpi slt, %912, %27 : vector<1x1xi32>
    %914 = arith.extui %913 : vector<1x1xi1> to vector<1x1xi32>
    %915 = arith.sitofp %914 : vector<1x1xi32> to vector<1x1xf32>
    %c8_384 = arith.constant 8 : index
    %c0_385 = arith.constant 0 : index
    %c0_386 = arith.constant 0 : index
    %916 = vector.load %arg17[%c8_384, %c0_385, %c0_386] : memref<16x1x64xf32, #tpu.memory_space<vmem>>, vector<1x1x64xf32>
    %917 = vector.shape_cast %916 : vector<1x1x64xf32> to vector<1x64xf32>
    %c0_387 = arith.constant 0 : index
    %c0_388 = arith.constant 0 : index
    %918 = vector.load %arg13[%c0_387, %c0_388] : memref<1x16xf32, #tpu.memory_space<vmem>>, vector<1x16xf32>
    %cst_389 = arith.constant dense<0.000000e+00> : vector<1x64xf32>
    %919 = tpu.matmul %918, %23, %cst_389 {dimension_numbers = #tpu.dot_dimension_numbers<[1], [0], [0], [1], [0, 0, 1, 1], [], []>} : vector<1x16xf32>, vector<16x64xf32>, vector<1x64xf32> -> vector<1x64xf32>
    %920 = arith.addf %917, %919 : vector<1x64xf32>
    %921 = vector.extract_strided_slice %920 {offsets = [0, 0], sizes = [1, 32], strides = [1, 1]} : vector<1x64xf32> to vector<1x32xf32>
    %922 = arith.negf %921 : vector<1x32xf32>
    %923 = math.exp %922 : vector<1x32xf32>
    %cst_390 = arith.constant 1.000000e+00 : f32
    %924 = vector.broadcast %cst_390 : f32 to vector<1x32xf32>
    %925 = arith.addf %924, %923 : vector<1x32xf32>
    %926 = arith.divf %924, %925 : vector<1x32xf32>
    %927 = vector.extract_strided_slice %926 {offsets = [0, 0], sizes = [1, 16], strides = [1, 1]} : vector<1x32xf32> to vector<1x16xf32>
    %928 = vector.extract_strided_slice %926 {offsets = [0, 16], sizes = [1, 16], strides = [1, 1]} : vector<1x32xf32> to vector<1x16xf32>
    %929 = vector.extract_strided_slice %920 {offsets = [0, 32], sizes = [1, 16], strides = [1, 1]} : vector<1x64xf32> to vector<1x16xf32>
    %930 = math.tanh %929 : vector<1x16xf32>
    %931 = vector.extract_strided_slice %920 {offsets = [0, 48], sizes = [1, 16], strides = [1, 1]} : vector<1x64xf32> to vector<1x16xf32>
    %932 = arith.negf %931 : vector<1x16xf32>
    %933 = math.exp %932 : vector<1x16xf32>
    %cst_391 = arith.constant 1.000000e+00 : f32
    %934 = vector.broadcast %cst_391 : f32 to vector<1x16xf32>
    %935 = arith.addf %934, %933 : vector<1x16xf32>
    %936 = arith.divf %934, %935 : vector<1x16xf32>
    %c0_392 = arith.constant 0 : index
    %c0_393 = arith.constant 0 : index
    %937 = vector.load %arg14[%c0_392, %c0_393] : memref<1x16xf32, #tpu.memory_space<vmem>>, vector<1x16xf32>
    %938 = arith.mulf %928, %937 : vector<1x16xf32>
    %939 = arith.mulf %927, %930 : vector<1x16xf32>
    %940 = arith.addf %938, %939 : vector<1x16xf32>
    %941 = math.tanh %940 : vector<1x16xf32>
    %942 = arith.mulf %936, %941 : vector<1x16xf32>
    %943 = vector.broadcast %915 : vector<1x1xf32> to vector<1x16xf32>
    %944 = arith.mulf %943, %942 : vector<1x16xf32>
    %cst_394 = arith.constant 1.000000e+00 : f32
    %945 = vector.broadcast %cst_394 : f32 to vector<1x1xf32>
    %946 = arith.subf %945, %915 : vector<1x1xf32>
    %c0_395 = arith.constant 0 : index
    %c0_396 = arith.constant 0 : index
    %947 = vector.load %arg13[%c0_395, %c0_396] : memref<1x16xf32, #tpu.memory_space<vmem>>, vector<1x16xf32>
    %948 = vector.broadcast %946 : vector<1x1xf32> to vector<1x16xf32>
    %949 = arith.mulf %948, %947 : vector<1x16xf32>
    %950 = arith.addf %944, %949 : vector<1x16xf32>
    %c0_397 = arith.constant 0 : index
    %c0_398 = arith.constant 0 : index
    %951 = vector.load %arg13[%c0_397, %c0_398] : memref<1x16xf32, #tpu.memory_space<vmem>>, vector<1x16xf32>
    tpu.vector_store %arg13[%c0_397, %c0_398], %950 {strides = array<i32>} : memref<1x16xf32, #tpu.memory_space<vmem>>, vector<1x16xf32>,
    %952 = vector.broadcast %915 : vector<1x1xf32> to vector<1x16xf32>
    %953 = arith.mulf %952, %940 : vector<1x16xf32>
    %cst_399 = arith.constant 1.000000e+00 : f32
    %954 = vector.broadcast %cst_399 : f32 to vector<1x1xf32>
    %955 = arith.subf %954, %915 : vector<1x1xf32>
    %c0_400 = arith.constant 0 : index
    %c0_401 = arith.constant 0 : index
    %956 = vector.load %arg14[%c0_400, %c0_401] : memref<1x16xf32, #tpu.memory_space<vmem>>, vector<1x16xf32>
    %957 = vector.broadcast %955 : vector<1x1xf32> to vector<1x16xf32>
    %958 = arith.mulf %957, %956 : vector<1x16xf32>
    %959 = arith.addf %953, %958 : vector<1x16xf32>
    %c0_402 = arith.constant 0 : index
    %c0_403 = arith.constant 0 : index
    %960 = vector.load %arg14[%c0_402, %c0_403] : memref<1x16xf32, #tpu.memory_space<vmem>>, vector<1x16xf32>
    tpu.vector_store %arg14[%c0_402, %c0_403], %959 {strides = array<i32>} : memref<1x16xf32, #tpu.memory_space<vmem>>, vector<1x16xf32>,
    %961 = vector.broadcast %915 : vector<1x1xf32> to vector<1x16xf32>
    %962 = arith.mulf %961, %942 : vector<1x16xf32>
    %c8_404 = arith.constant 8 : index
    %c0_405 = arith.constant 0 : index
    %c0_406 = arith.constant 0 : index
    %963 = vector.load %arg19[%c8_404, %c0_405, %c0_406] : memref<16x1x16xf32, #tpu.memory_space<vmem>>, vector<1x1x16xf32>
    %964 = vector.shape_cast %963 : vector<1x1x16xf32> to vector<1x16xf32>
    %965 = vector.shape_cast %962 : vector<1x16xf32> to vector<1x1x16xf32>
    tpu.vector_store %arg19[%c8_404, %c0_405, %c0_406], %965 {strides = array<i32>} : memref<16x1x16xf32, #tpu.memory_space<vmem>>, vector<1x1x16xf32>,
    %c7_i32_407 = arith.constant 7 : i32
    %966 = arith.addi %30, %c7_i32_407 : i32
    %967 = vector.broadcast %966 : i32 to vector<1x1xi32>
    %968 = arith.cmpi slt, %967, %27 : vector<1x1xi32>
    %969 = arith.extui %968 : vector<1x1xi1> to vector<1x1xi32>
    %970 = arith.sitofp %969 : vector<1x1xi32> to vector<1x1xf32>
    %c7_408 = arith.constant 7 : index
    %c0_409 = arith.constant 0 : index
    %c0_410 = arith.constant 0 : index
    %971 = vector.load %arg18[%c7_408, %c0_409, %c0_410] : memref<16x1x64xf32, #tpu.memory_space<vmem>>, vector<1x1x64xf32>
    %972 = vector.shape_cast %971 : vector<1x1x64xf32> to vector<1x64xf32>
    %c0_411 = arith.constant 0 : index
    %c0_412 = arith.constant 0 : index
    %973 = vector.load %arg15[%c0_411, %c0_412] : memref<1x16xf32, #tpu.memory_space<vmem>>, vector<1x16xf32>
    %cst_413 = arith.constant dense<0.000000e+00> : vector<1x64xf32>
    %974 = tpu.matmul %973, %24, %cst_413 {dimension_numbers = #tpu.dot_dimension_numbers<[1], [0], [0], [1], [0, 0, 1, 1], [], []>} : vector<1x16xf32>, vector<16x64xf32>, vector<1x64xf32> -> vector<1x64xf32>
    %975 = arith.addf %972, %974 : vector<1x64xf32>
    %976 = vector.extract_strided_slice %975 {offsets = [0, 0], sizes = [1, 32], strides = [1, 1]} : vector<1x64xf32> to vector<1x32xf32>
    %977 = arith.negf %976 : vector<1x32xf32>
    %978 = math.exp %977 : vector<1x32xf32>
    %cst_414 = arith.constant 1.000000e+00 : f32
    %979 = vector.broadcast %cst_414 : f32 to vector<1x32xf32>
    %980 = arith.addf %979, %978 : vector<1x32xf32>
    %981 = arith.divf %979, %980 : vector<1x32xf32>
    %982 = vector.extract_strided_slice %981 {offsets = [0, 0], sizes = [1, 16], strides = [1, 1]} : vector<1x32xf32> to vector<1x16xf32>
    %983 = vector.extract_strided_slice %981 {offsets = [0, 16], sizes = [1, 16], strides = [1, 1]} : vector<1x32xf32> to vector<1x16xf32>
    %984 = vector.extract_strided_slice %975 {offsets = [0, 32], sizes = [1, 16], strides = [1, 1]} : vector<1x64xf32> to vector<1x16xf32>
    %985 = math.tanh %984 : vector<1x16xf32>
    %986 = vector.extract_strided_slice %975 {offsets = [0, 48], sizes = [1, 16], strides = [1, 1]} : vector<1x64xf32> to vector<1x16xf32>
    %987 = arith.negf %986 : vector<1x16xf32>
    %988 = math.exp %987 : vector<1x16xf32>
    %cst_415 = arith.constant 1.000000e+00 : f32
    %989 = vector.broadcast %cst_415 : f32 to vector<1x16xf32>
    %990 = arith.addf %989, %988 : vector<1x16xf32>
    %991 = arith.divf %989, %990 : vector<1x16xf32>
    %c0_416 = arith.constant 0 : index
    %c0_417 = arith.constant 0 : index
    %992 = vector.load %arg16[%c0_416, %c0_417] : memref<1x16xf32, #tpu.memory_space<vmem>>, vector<1x16xf32>
    %993 = arith.mulf %983, %992 : vector<1x16xf32>
    %994 = arith.mulf %982, %985 : vector<1x16xf32>
    %995 = arith.addf %993, %994 : vector<1x16xf32>
    %996 = math.tanh %995 : vector<1x16xf32>
    %997 = arith.mulf %991, %996 : vector<1x16xf32>
    %998 = vector.broadcast %970 : vector<1x1xf32> to vector<1x16xf32>
    %999 = arith.mulf %998, %997 : vector<1x16xf32>
    %cst_418 = arith.constant 1.000000e+00 : f32
    %1000 = vector.broadcast %cst_418 : f32 to vector<1x1xf32>
    %1001 = arith.subf %1000, %970 : vector<1x1xf32>
    %c0_419 = arith.constant 0 : index
    %c0_420 = arith.constant 0 : index
    %1002 = vector.load %arg15[%c0_419, %c0_420] : memref<1x16xf32, #tpu.memory_space<vmem>>, vector<1x16xf32>
    %1003 = vector.broadcast %1001 : vector<1x1xf32> to vector<1x16xf32>
    %1004 = arith.mulf %1003, %1002 : vector<1x16xf32>
    %1005 = arith.addf %999, %1004 : vector<1x16xf32>
    %c0_421 = arith.constant 0 : index
    %c0_422 = arith.constant 0 : index
    %1006 = vector.load %arg15[%c0_421, %c0_422] : memref<1x16xf32, #tpu.memory_space<vmem>>, vector<1x16xf32>
    tpu.vector_store %arg15[%c0_421, %c0_422], %1005 {strides = array<i32>} : memref<1x16xf32, #tpu.memory_space<vmem>>, vector<1x16xf32>,
    %1007 = vector.broadcast %970 : vector<1x1xf32> to vector<1x16xf32>
    %1008 = arith.mulf %1007, %995 : vector<1x16xf32>
    %cst_423 = arith.constant 1.000000e+00 : f32
    %1009 = vector.broadcast %cst_423 : f32 to vector<1x1xf32>
    %1010 = arith.subf %1009, %970 : vector<1x1xf32>
    %c0_424 = arith.constant 0 : index
    %c0_425 = arith.constant 0 : index
    %1011 = vector.load %arg16[%c0_424, %c0_425] : memref<1x16xf32, #tpu.memory_space<vmem>>, vector<1x16xf32>
    %1012 = vector.broadcast %1010 : vector<1x1xf32> to vector<1x16xf32>
    %1013 = arith.mulf %1012, %1011 : vector<1x16xf32>
    %1014 = arith.addf %1008, %1013 : vector<1x16xf32>
    %c0_426 = arith.constant 0 : index
    %c0_427 = arith.constant 0 : index
    %1015 = vector.load %arg16[%c0_426, %c0_427] : memref<1x16xf32, #tpu.memory_space<vmem>>, vector<1x16xf32>
    tpu.vector_store %arg16[%c0_426, %c0_427], %1014 {strides = array<i32>} : memref<1x16xf32, #tpu.memory_space<vmem>>, vector<1x16xf32>,
    %1016 = vector.broadcast %970 : vector<1x1xf32> to vector<1x16xf32>
    %1017 = arith.mulf %1016, %997 : vector<1x16xf32>
    %c7_428 = arith.constant 7 : index
    %c0_429 = arith.constant 0 : index
    %c0_430 = arith.constant 0 : index
    %1018 = vector.load %arg20[%c7_428, %c0_429, %c0_430] : memref<16x1x16xf32, #tpu.memory_space<vmem>>, vector<1x1x16xf32>
    %1019 = vector.shape_cast %1018 : vector<1x1x16xf32> to vector<1x16xf32>
    %1020 = vector.shape_cast %1017 : vector<1x16xf32> to vector<1x1x16xf32>
    tpu.vector_store %arg20[%c7_428, %c0_429, %c0_430], %1020 {strides = array<i32>} : memref<16x1x16xf32, #tpu.memory_space<vmem>>, vector<1x1x16xf32>,
    %c9_i32_431 = arith.constant 9 : i32
    %1021 = arith.addi %28, %c9_i32_431 : i32
    %1022 = vector.broadcast %1021 : i32 to vector<1x1xi32>
    %1023 = arith.cmpi slt, %1022, %27 : vector<1x1xi32>
    %1024 = arith.extui %1023 : vector<1x1xi1> to vector<1x1xi32>
    %1025 = arith.sitofp %1024 : vector<1x1xi32> to vector<1x1xf32>
    %c9_432 = arith.constant 9 : index
    %c0_433 = arith.constant 0 : index
    %c0_434 = arith.constant 0 : index
    %1026 = vector.load %arg17[%c9_432, %c0_433, %c0_434] : memref<16x1x64xf32, #tpu.memory_space<vmem>>, vector<1x1x64xf32>
    %1027 = vector.shape_cast %1026 : vector<1x1x64xf32> to vector<1x64xf32>
    %c0_435 = arith.constant 0 : index
    %c0_436 = arith.constant 0 : index
    %1028 = vector.load %arg13[%c0_435, %c0_436] : memref<1x16xf32, #tpu.memory_space<vmem>>, vector<1x16xf32>
    %cst_437 = arith.constant dense<0.000000e+00> : vector<1x64xf32>
    %1029 = tpu.matmul %1028, %23, %cst_437 {dimension_numbers = #tpu.dot_dimension_numbers<[1], [0], [0], [1], [0, 0, 1, 1], [], []>} : vector<1x16xf32>, vector<16x64xf32>, vector<1x64xf32> -> vector<1x64xf32>
    %1030 = arith.addf %1027, %1029 : vector<1x64xf32>
    %1031 = vector.extract_strided_slice %1030 {offsets = [0, 0], sizes = [1, 32], strides = [1, 1]} : vector<1x64xf32> to vector<1x32xf32>
    %1032 = arith.negf %1031 : vector<1x32xf32>
    %1033 = math.exp %1032 : vector<1x32xf32>
    %cst_438 = arith.constant 1.000000e+00 : f32
    %1034 = vector.broadcast %cst_438 : f32 to vector<1x32xf32>
    %1035 = arith.addf %1034, %1033 : vector<1x32xf32>
    %1036 = arith.divf %1034, %1035 : vector<1x32xf32>
    %1037 = vector.extract_strided_slice %1036 {offsets = [0, 0], sizes = [1, 16], strides = [1, 1]} : vector<1x32xf32> to vector<1x16xf32>
    %1038 = vector.extract_strided_slice %1036 {offsets = [0, 16], sizes = [1, 16], strides = [1, 1]} : vector<1x32xf32> to vector<1x16xf32>
    %1039 = vector.extract_strided_slice %1030 {offsets = [0, 32], sizes = [1, 16], strides = [1, 1]} : vector<1x64xf32> to vector<1x16xf32>
    %1040 = math.tanh %1039 : vector<1x16xf32>
    %1041 = vector.extract_strided_slice %1030 {offsets = [0, 48], sizes = [1, 16], strides = [1, 1]} : vector<1x64xf32> to vector<1x16xf32>
    %1042 = arith.negf %1041 : vector<1x16xf32>
    %1043 = math.exp %1042 : vector<1x16xf32>
    %cst_439 = arith.constant 1.000000e+00 : f32
    %1044 = vector.broadcast %cst_439 : f32 to vector<1x16xf32>
    %1045 = arith.addf %1044, %1043 : vector<1x16xf32>
    %1046 = arith.divf %1044, %1045 : vector<1x16xf32>
    %c0_440 = arith.constant 0 : index
    %c0_441 = arith.constant 0 : index
    %1047 = vector.load %arg14[%c0_440, %c0_441] : memref<1x16xf32, #tpu.memory_space<vmem>>, vector<1x16xf32>
    %1048 = arith.mulf %1038, %1047 : vector<1x16xf32>
    %1049 = arith.mulf %1037, %1040 : vector<1x16xf32>
    %1050 = arith.addf %1048, %1049 : vector<1x16xf32>
    %1051 = math.tanh %1050 : vector<1x16xf32>
    %1052 = arith.mulf %1046, %1051 : vector<1x16xf32>
    %1053 = vector.broadcast %1025 : vector<1x1xf32> to vector<1x16xf32>
    %1054 = arith.mulf %1053, %1052 : vector<1x16xf32>
    %cst_442 = arith.constant 1.000000e+00 : f32
    %1055 = vector.broadcast %cst_442 : f32 to vector<1x1xf32>
    %1056 = arith.subf %1055, %1025 : vector<1x1xf32>
    %c0_443 = arith.constant 0 : index
    %c0_444 = arith.constant 0 : index
    %1057 = vector.load %arg13[%c0_443, %c0_444] : memref<1x16xf32, #tpu.memory_space<vmem>>, vector<1x16xf32>
    %1058 = vector.broadcast %1056 : vector<1x1xf32> to vector<1x16xf32>
    %1059 = arith.mulf %1058, %1057 : vector<1x16xf32>
    %1060 = arith.addf %1054, %1059 : vector<1x16xf32>
    %c0_445 = arith.constant 0 : index
    %c0_446 = arith.constant 0 : index
    %1061 = vector.load %arg13[%c0_445, %c0_446] : memref<1x16xf32, #tpu.memory_space<vmem>>, vector<1x16xf32>
    tpu.vector_store %arg13[%c0_445, %c0_446], %1060 {strides = array<i32>} : memref<1x16xf32, #tpu.memory_space<vmem>>, vector<1x16xf32>,
    %1062 = vector.broadcast %1025 : vector<1x1xf32> to vector<1x16xf32>
    %1063 = arith.mulf %1062, %1050 : vector<1x16xf32>
    %cst_447 = arith.constant 1.000000e+00 : f32
    %1064 = vector.broadcast %cst_447 : f32 to vector<1x1xf32>
    %1065 = arith.subf %1064, %1025 : vector<1x1xf32>
    %c0_448 = arith.constant 0 : index
    %c0_449 = arith.constant 0 : index
    %1066 = vector.load %arg14[%c0_448, %c0_449] : memref<1x16xf32, #tpu.memory_space<vmem>>, vector<1x16xf32>
    %1067 = vector.broadcast %1065 : vector<1x1xf32> to vector<1x16xf32>
    %1068 = arith.mulf %1067, %1066 : vector<1x16xf32>
    %1069 = arith.addf %1063, %1068 : vector<1x16xf32>
    %c0_450 = arith.constant 0 : index
    %c0_451 = arith.constant 0 : index
    %1070 = vector.load %arg14[%c0_450, %c0_451] : memref<1x16xf32, #tpu.memory_space<vmem>>, vector<1x16xf32>
    tpu.vector_store %arg14[%c0_450, %c0_451], %1069 {strides = array<i32>} : memref<1x16xf32, #tpu.memory_space<vmem>>, vector<1x16xf32>,
    %1071 = vector.broadcast %1025 : vector<1x1xf32> to vector<1x16xf32>
    %1072 = arith.mulf %1071, %1052 : vector<1x16xf32>
    %c9_452 = arith.constant 9 : index
    %c0_453 = arith.constant 0 : index
    %c0_454 = arith.constant 0 : index
    %1073 = vector.load %arg19[%c9_452, %c0_453, %c0_454] : memref<16x1x16xf32, #tpu.memory_space<vmem>>, vector<1x1x16xf32>
    %1074 = vector.shape_cast %1073 : vector<1x1x16xf32> to vector<1x16xf32>
    %1075 = vector.shape_cast %1072 : vector<1x16xf32> to vector<1x1x16xf32>
    tpu.vector_store %arg19[%c9_452, %c0_453, %c0_454], %1075 {strides = array<i32>} : memref<16x1x16xf32, #tpu.memory_space<vmem>>, vector<1x1x16xf32>,
    %c6_i32_455 = arith.constant 6 : i32
    %1076 = arith.addi %30, %c6_i32_455 : i32
    %1077 = vector.broadcast %1076 : i32 to vector<1x1xi32>
    %1078 = arith.cmpi slt, %1077, %27 : vector<1x1xi32>
    %1079 = arith.extui %1078 : vector<1x1xi1> to vector<1x1xi32>
    %1080 = arith.sitofp %1079 : vector<1x1xi32> to vector<1x1xf32>
    %c6_456 = arith.constant 6 : index
    %c0_457 = arith.constant 0 : index
    %c0_458 = arith.constant 0 : index
    %1081 = vector.load %arg18[%c6_456, %c0_457, %c0_458] : memref<16x1x64xf32, #tpu.memory_space<vmem>>, vector<1x1x64xf32>
    %1082 = vector.shape_cast %1081 : vector<1x1x64xf32> to vector<1x64xf32>
    %c0_459 = arith.constant 0 : index
    %c0_460 = arith.constant 0 : index
    %1083 = vector.load %arg15[%c0_459, %c0_460] : memref<1x16xf32, #tpu.memory_space<vmem>>, vector<1x16xf32>
    %cst_461 = arith.constant dense<0.000000e+00> : vector<1x64xf32>
    %1084 = tpu.matmul %1083, %24, %cst_461 {dimension_numbers = #tpu.dot_dimension_numbers<[1], [0], [0], [1], [0, 0, 1, 1], [], []>} : vector<1x16xf32>, vector<16x64xf32>, vector<1x64xf32> -> vector<1x64xf32>
    %1085 = arith.addf %1082, %1084 : vector<1x64xf32>
    %1086 = vector.extract_strided_slice %1085 {offsets = [0, 0], sizes = [1, 32], strides = [1, 1]} : vector<1x64xf32> to vector<1x32xf32>
    %1087 = arith.negf %1086 : vector<1x32xf32>
    %1088 = math.exp %1087 : vector<1x32xf32>
    %cst_462 = arith.constant 1.000000e+00 : f32
    %1089 = vector.broadcast %cst_462 : f32 to vector<1x32xf32>
    %1090 = arith.addf %1089, %1088 : vector<1x32xf32>
    %1091 = arith.divf %1089, %1090 : vector<1x32xf32>
    %1092 = vector.extract_strided_slice %1091 {offsets = [0, 0], sizes = [1, 16], strides = [1, 1]} : vector<1x32xf32> to vector<1x16xf32>
    %1093 = vector.extract_strided_slice %1091 {offsets = [0, 16], sizes = [1, 16], strides = [1, 1]} : vector<1x32xf32> to vector<1x16xf32>
    %1094 = vector.extract_strided_slice %1085 {offsets = [0, 32], sizes = [1, 16], strides = [1, 1]} : vector<1x64xf32> to vector<1x16xf32>
    %1095 = math.tanh %1094 : vector<1x16xf32>
    %1096 = vector.extract_strided_slice %1085 {offsets = [0, 48], sizes = [1, 16], strides = [1, 1]} : vector<1x64xf32> to vector<1x16xf32>
    %1097 = arith.negf %1096 : vector<1x16xf32>
    %1098 = math.exp %1097 : vector<1x16xf32>
    %cst_463 = arith.constant 1.000000e+00 : f32
    %1099 = vector.broadcast %cst_463 : f32 to vector<1x16xf32>
    %1100 = arith.addf %1099, %1098 : vector<1x16xf32>
    %1101 = arith.divf %1099, %1100 : vector<1x16xf32>
    %c0_464 = arith.constant 0 : index
    %c0_465 = arith.constant 0 : index
    %1102 = vector.load %arg16[%c0_464, %c0_465] : memref<1x16xf32, #tpu.memory_space<vmem>>, vector<1x16xf32>
    %1103 = arith.mulf %1093, %1102 : vector<1x16xf32>
    %1104 = arith.mulf %1092, %1095 : vector<1x16xf32>
    %1105 = arith.addf %1103, %1104 : vector<1x16xf32>
    %1106 = math.tanh %1105 : vector<1x16xf32>
    %1107 = arith.mulf %1101, %1106 : vector<1x16xf32>
    %1108 = vector.broadcast %1080 : vector<1x1xf32> to vector<1x16xf32>
    %1109 = arith.mulf %1108, %1107 : vector<1x16xf32>
    %cst_466 = arith.constant 1.000000e+00 : f32
    %1110 = vector.broadcast %cst_466 : f32 to vector<1x1xf32>
    %1111 = arith.subf %1110, %1080 : vector<1x1xf32>
    %c0_467 = arith.constant 0 : index
    %c0_468 = arith.constant 0 : index
    %1112 = vector.load %arg15[%c0_467, %c0_468] : memref<1x16xf32, #tpu.memory_space<vmem>>, vector<1x16xf32>
    %1113 = vector.broadcast %1111 : vector<1x1xf32> to vector<1x16xf32>
    %1114 = arith.mulf %1113, %1112 : vector<1x16xf32>
    %1115 = arith.addf %1109, %1114 : vector<1x16xf32>
    %c0_469 = arith.constant 0 : index
    %c0_470 = arith.constant 0 : index
    %1116 = vector.load %arg15[%c0_469, %c0_470] : memref<1x16xf32, #tpu.memory_space<vmem>>, vector<1x16xf32>
    tpu.vector_store %arg15[%c0_469, %c0_470], %1115 {strides = array<i32>} : memref<1x16xf32, #tpu.memory_space<vmem>>, vector<1x16xf32>,
    %1117 = vector.broadcast %1080 : vector<1x1xf32> to vector<1x16xf32>
    %1118 = arith.mulf %1117, %1105 : vector<1x16xf32>
    %cst_471 = arith.constant 1.000000e+00 : f32
    %1119 = vector.broadcast %cst_471 : f32 to vector<1x1xf32>
    %1120 = arith.subf %1119, %1080 : vector<1x1xf32>
    %c0_472 = arith.constant 0 : index
    %c0_473 = arith.constant 0 : index
    %1121 = vector.load %arg16[%c0_472, %c0_473] : memref<1x16xf32, #tpu.memory_space<vmem>>, vector<1x16xf32>
    %1122 = vector.broadcast %1120 : vector<1x1xf32> to vector<1x16xf32>
    %1123 = arith.mulf %1122, %1121 : vector<1x16xf32>
    %1124 = arith.addf %1118, %1123 : vector<1x16xf32>
    %c0_474 = arith.constant 0 : index
    %c0_475 = arith.constant 0 : index
    %1125 = vector.load %arg16[%c0_474, %c0_475] : memref<1x16xf32, #tpu.memory_space<vmem>>, vector<1x16xf32>
    tpu.vector_store %arg16[%c0_474, %c0_475], %1124 {strides = array<i32>} : memref<1x16xf32, #tpu.memory_space<vmem>>, vector<1x16xf32>,
    %1126 = vector.broadcast %1080 : vector<1x1xf32> to vector<1x16xf32>
    %1127 = arith.mulf %1126, %1107 : vector<1x16xf32>
    %c6_476 = arith.constant 6 : index
    %c0_477 = arith.constant 0 : index
    %c0_478 = arith.constant 0 : index
    %1128 = vector.load %arg20[%c6_476, %c0_477, %c0_478] : memref<16x1x16xf32, #tpu.memory_space<vmem>>, vector<1x1x16xf32>
    %1129 = vector.shape_cast %1128 : vector<1x1x16xf32> to vector<1x16xf32>
    %1130 = vector.shape_cast %1127 : vector<1x16xf32> to vector<1x1x16xf32>
    tpu.vector_store %arg20[%c6_476, %c0_477, %c0_478], %1130 {strides = array<i32>} : memref<16x1x16xf32, #tpu.memory_space<vmem>>, vector<1x1x16xf32>,
    %c10_i32_479 = arith.constant 10 : i32
    %1131 = arith.addi %28, %c10_i32_479 : i32
    %1132 = vector.broadcast %1131 : i32 to vector<1x1xi32>
    %1133 = arith.cmpi slt, %1132, %27 : vector<1x1xi32>
    %1134 = arith.extui %1133 : vector<1x1xi1> to vector<1x1xi32>
    %1135 = arith.sitofp %1134 : vector<1x1xi32> to vector<1x1xf32>
    %c10_480 = arith.constant 10 : index
    %c0_481 = arith.constant 0 : index
    %c0_482 = arith.constant 0 : index
    %1136 = vector.load %arg17[%c10_480, %c0_481, %c0_482] : memref<16x1x64xf32, #tpu.memory_space<vmem>>, vector<1x1x64xf32>
    %1137 = vector.shape_cast %1136 : vector<1x1x64xf32> to vector<1x64xf32>
    %c0_483 = arith.constant 0 : index
    %c0_484 = arith.constant 0 : index
    %1138 = vector.load %arg13[%c0_483, %c0_484] : memref<1x16xf32, #tpu.memory_space<vmem>>, vector<1x16xf32>
    %cst_485 = arith.constant dense<0.000000e+00> : vector<1x64xf32>
    %1139 = tpu.matmul %1138, %23, %cst_485 {dimension_numbers = #tpu.dot_dimension_numbers<[1], [0], [0], [1], [0, 0, 1, 1], [], []>} : vector<1x16xf32>, vector<16x64xf32>, vector<1x64xf32> -> vector<1x64xf32>
    %1140 = arith.addf %1137, %1139 : vector<1x64xf32>
    %1141 = vector.extract_strided_slice %1140 {offsets = [0, 0], sizes = [1, 32], strides = [1, 1]} : vector<1x64xf32> to vector<1x32xf32>
    %1142 = arith.negf %1141 : vector<1x32xf32>
    %1143 = math.exp %1142 : vector<1x32xf32>
    %cst_486 = arith.constant 1.000000e+00 : f32
    %1144 = vector.broadcast %cst_486 : f32 to vector<1x32xf32>
    %1145 = arith.addf %1144, %1143 : vector<1x32xf32>
    %1146 = arith.divf %1144, %1145 : vector<1x32xf32>
    %1147 = vector.extract_strided_slice %1146 {offsets = [0, 0], sizes = [1, 16], strides = [1, 1]} : vector<1x32xf32> to vector<1x16xf32>
    %1148 = vector.extract_strided_slice %1146 {offsets = [0, 16], sizes = [1, 16], strides = [1, 1]} : vector<1x32xf32> to vector<1x16xf32>
    %1149 = vector.extract_strided_slice %1140 {offsets = [0, 32], sizes = [1, 16], strides = [1, 1]} : vector<1x64xf32> to vector<1x16xf32>
    %1150 = math.tanh %1149 : vector<1x16xf32>
    %1151 = vector.extract_strided_slice %1140 {offsets = [0, 48], sizes = [1, 16], strides = [1, 1]} : vector<1x64xf32> to vector<1x16xf32>
    %1152 = arith.negf %1151 : vector<1x16xf32>
    %1153 = math.exp %1152 : vector<1x16xf32>
    %cst_487 = arith.constant 1.000000e+00 : f32
    %1154 = vector.broadcast %cst_487 : f32 to vector<1x16xf32>
    %1155 = arith.addf %1154, %1153 : vector<1x16xf32>
    %1156 = arith.divf %1154, %1155 : vector<1x16xf32>
    %c0_488 = arith.constant 0 : index
    %c0_489 = arith.constant 0 : index
    %1157 = vector.load %arg14[%c0_488, %c0_489] : memref<1x16xf32, #tpu.memory_space<vmem>>, vector<1x16xf32>
    %1158 = arith.mulf %1148, %1157 : vector<1x16xf32>
    %1159 = arith.mulf %1147, %1150 : vector<1x16xf32>
    %1160 = arith.addf %1158, %1159 : vector<1x16xf32>
    %1161 = math.tanh %1160 : vector<1x16xf32>
    %1162 = arith.mulf %1156, %1161 : vector<1x16xf32>
    %1163 = vector.broadcast %1135 : vector<1x1xf32> to vector<1x16xf32>
    %1164 = arith.mulf %1163, %1162 : vector<1x16xf32>
    %cst_490 = arith.constant 1.000000e+00 : f32
    %1165 = vector.broadcast %cst_490 : f32 to vector<1x1xf32>
    %1166 = arith.subf %1165, %1135 : vector<1x1xf32>
    %c0_491 = arith.constant 0 : index
    %c0_492 = arith.constant 0 : index
    %1167 = vector.load %arg13[%c0_491, %c0_492] : memref<1x16xf32, #tpu.memory_space<vmem>>, vector<1x16xf32>
    %1168 = vector.broadcast %1166 : vector<1x1xf32> to vector<1x16xf32>
    %1169 = arith.mulf %1168, %1167 : vector<1x16xf32>
    %1170 = arith.addf %1164, %1169 : vector<1x16xf32>
    %c0_493 = arith.constant 0 : index
    %c0_494 = arith.constant 0 : index
    %1171 = vector.load %arg13[%c0_493, %c0_494] : memref<1x16xf32, #tpu.memory_space<vmem>>, vector<1x16xf32>
    tpu.vector_store %arg13[%c0_493, %c0_494], %1170 {strides = array<i32>} : memref<1x16xf32, #tpu.memory_space<vmem>>, vector<1x16xf32>,
    %1172 = vector.broadcast %1135 : vector<1x1xf32> to vector<1x16xf32>
    %1173 = arith.mulf %1172, %1160 : vector<1x16xf32>
    %cst_495 = arith.constant 1.000000e+00 : f32
    %1174 = vector.broadcast %cst_495 : f32 to vector<1x1xf32>
    %1175 = arith.subf %1174, %1135 : vector<1x1xf32>
    %c0_496 = arith.constant 0 : index
    %c0_497 = arith.constant 0 : index
    %1176 = vector.load %arg14[%c0_496, %c0_497] : memref<1x16xf32, #tpu.memory_space<vmem>>, vector<1x16xf32>
    %1177 = vector.broadcast %1175 : vector<1x1xf32> to vector<1x16xf32>
    %1178 = arith.mulf %1177, %1176 : vector<1x16xf32>
    %1179 = arith.addf %1173, %1178 : vector<1x16xf32>
    %c0_498 = arith.constant 0 : index
    %c0_499 = arith.constant 0 : index
    %1180 = vector.load %arg14[%c0_498, %c0_499] : memref<1x16xf32, #tpu.memory_space<vmem>>, vector<1x16xf32>
    tpu.vector_store %arg14[%c0_498, %c0_499], %1179 {strides = array<i32>} : memref<1x16xf32, #tpu.memory_space<vmem>>, vector<1x16xf32>,
    %1181 = vector.broadcast %1135 : vector<1x1xf32> to vector<1x16xf32>
    %1182 = arith.mulf %1181, %1162 : vector<1x16xf32>
    %c10_500 = arith.constant 10 : index
    %c0_501 = arith.constant 0 : index
    %c0_502 = arith.constant 0 : index
    %1183 = vector.load %arg19[%c10_500, %c0_501, %c0_502] : memref<16x1x16xf32, #tpu.memory_space<vmem>>, vector<1x1x16xf32>
    %1184 = vector.shape_cast %1183 : vector<1x1x16xf32> to vector<1x16xf32>
    %1185 = vector.shape_cast %1182 : vector<1x16xf32> to vector<1x1x16xf32>
    tpu.vector_store %arg19[%c10_500, %c0_501, %c0_502], %1185 {strides = array<i32>} : memref<16x1x16xf32, #tpu.memory_space<vmem>>, vector<1x1x16xf32>,
    %c5_i32_503 = arith.constant 5 : i32
    %1186 = arith.addi %30, %c5_i32_503 : i32
    %1187 = vector.broadcast %1186 : i32 to vector<1x1xi32>
    %1188 = arith.cmpi slt, %1187, %27 : vector<1x1xi32>
    %1189 = arith.extui %1188 : vector<1x1xi1> to vector<1x1xi32>
    %1190 = arith.sitofp %1189 : vector<1x1xi32> to vector<1x1xf32>
    %c5_504 = arith.constant 5 : index
    %c0_505 = arith.constant 0 : index
    %c0_506 = arith.constant 0 : index
    %1191 = vector.load %arg18[%c5_504, %c0_505, %c0_506] : memref<16x1x64xf32, #tpu.memory_space<vmem>>, vector<1x1x64xf32>
    %1192 = vector.shape_cast %1191 : vector<1x1x64xf32> to vector<1x64xf32>
    %c0_507 = arith.constant 0 : index
    %c0_508 = arith.constant 0 : index
    %1193 = vector.load %arg15[%c0_507, %c0_508] : memref<1x16xf32, #tpu.memory_space<vmem>>, vector<1x16xf32>
    %cst_509 = arith.constant dense<0.000000e+00> : vector<1x64xf32>
    %1194 = tpu.matmul %1193, %24, %cst_509 {dimension_numbers = #tpu.dot_dimension_numbers<[1], [0], [0], [1], [0, 0, 1, 1], [], []>} : vector<1x16xf32>, vector<16x64xf32>, vector<1x64xf32> -> vector<1x64xf32>
    %1195 = arith.addf %1192, %1194 : vector<1x64xf32>
    %1196 = vector.extract_strided_slice %1195 {offsets = [0, 0], sizes = [1, 32], strides = [1, 1]} : vector<1x64xf32> to vector<1x32xf32>
    %1197 = arith.negf %1196 : vector<1x32xf32>
    %1198 = math.exp %1197 : vector<1x32xf32>
    %cst_510 = arith.constant 1.000000e+00 : f32
    %1199 = vector.broadcast %cst_510 : f32 to vector<1x32xf32>
    %1200 = arith.addf %1199, %1198 : vector<1x32xf32>
    %1201 = arith.divf %1199, %1200 : vector<1x32xf32>
    %1202 = vector.extract_strided_slice %1201 {offsets = [0, 0], sizes = [1, 16], strides = [1, 1]} : vector<1x32xf32> to vector<1x16xf32>
    %1203 = vector.extract_strided_slice %1201 {offsets = [0, 16], sizes = [1, 16], strides = [1, 1]} : vector<1x32xf32> to vector<1x16xf32>
    %1204 = vector.extract_strided_slice %1195 {offsets = [0, 32], sizes = [1, 16], strides = [1, 1]} : vector<1x64xf32> to vector<1x16xf32>
    %1205 = math.tanh %1204 : vector<1x16xf32>
    %1206 = vector.extract_strided_slice %1195 {offsets = [0, 48], sizes = [1, 16], strides = [1, 1]} : vector<1x64xf32> to vector<1x16xf32>
    %1207 = arith.negf %1206 : vector<1x16xf32>
    %1208 = math.exp %1207 : vector<1x16xf32>
    %cst_511 = arith.constant 1.000000e+00 : f32
    %1209 = vector.broadcast %cst_511 : f32 to vector<1x16xf32>
    %1210 = arith.addf %1209, %1208 : vector<1x16xf32>
    %1211 = arith.divf %1209, %1210 : vector<1x16xf32>
    %c0_512 = arith.constant 0 : index
    %c0_513 = arith.constant 0 : index
    %1212 = vector.load %arg16[%c0_512, %c0_513] : memref<1x16xf32, #tpu.memory_space<vmem>>, vector<1x16xf32>
    %1213 = arith.mulf %1203, %1212 : vector<1x16xf32>
    %1214 = arith.mulf %1202, %1205 : vector<1x16xf32>
    %1215 = arith.addf %1213, %1214 : vector<1x16xf32>
    %1216 = math.tanh %1215 : vector<1x16xf32>
    %1217 = arith.mulf %1211, %1216 : vector<1x16xf32>
    %1218 = vector.broadcast %1190 : vector<1x1xf32> to vector<1x16xf32>
    %1219 = arith.mulf %1218, %1217 : vector<1x16xf32>
    %cst_514 = arith.constant 1.000000e+00 : f32
    %1220 = vector.broadcast %cst_514 : f32 to vector<1x1xf32>
    %1221 = arith.subf %1220, %1190 : vector<1x1xf32>
    %c0_515 = arith.constant 0 : index
    %c0_516 = arith.constant 0 : index
    %1222 = vector.load %arg15[%c0_515, %c0_516] : memref<1x16xf32, #tpu.memory_space<vmem>>, vector<1x16xf32>
    %1223 = vector.broadcast %1221 : vector<1x1xf32> to vector<1x16xf32>
    %1224 = arith.mulf %1223, %1222 : vector<1x16xf32>
    %1225 = arith.addf %1219, %1224 : vector<1x16xf32>
    %c0_517 = arith.constant 0 : index
    %c0_518 = arith.constant 0 : index
    %1226 = vector.load %arg15[%c0_517, %c0_518] : memref<1x16xf32, #tpu.memory_space<vmem>>, vector<1x16xf32>
    tpu.vector_store %arg15[%c0_517, %c0_518], %1225 {strides = array<i32>} : memref<1x16xf32, #tpu.memory_space<vmem>>, vector<1x16xf32>,
    %1227 = vector.broadcast %1190 : vector<1x1xf32> to vector<1x16xf32>
    %1228 = arith.mulf %1227, %1215 : vector<1x16xf32>
    %cst_519 = arith.constant 1.000000e+00 : f32
    %1229 = vector.broadcast %cst_519 : f32 to vector<1x1xf32>
    %1230 = arith.subf %1229, %1190 : vector<1x1xf32>
    %c0_520 = arith.constant 0 : index
    %c0_521 = arith.constant 0 : index
    %1231 = vector.load %arg16[%c0_520, %c0_521] : memref<1x16xf32, #tpu.memory_space<vmem>>, vector<1x16xf32>
    %1232 = vector.broadcast %1230 : vector<1x1xf32> to vector<1x16xf32>
    %1233 = arith.mulf %1232, %1231 : vector<1x16xf32>
    %1234 = arith.addf %1228, %1233 : vector<1x16xf32>
    %c0_522 = arith.constant 0 : index
    %c0_523 = arith.constant 0 : index
    %1235 = vector.load %arg16[%c0_522, %c0_523] : memref<1x16xf32, #tpu.memory_space<vmem>>, vector<1x16xf32>
    tpu.vector_store %arg16[%c0_522, %c0_523], %1234 {strides = array<i32>} : memref<1x16xf32, #tpu.memory_space<vmem>>, vector<1x16xf32>,
    %1236 = vector.broadcast %1190 : vector<1x1xf32> to vector<1x16xf32>
    %1237 = arith.mulf %1236, %1217 : vector<1x16xf32>
    %c5_524 = arith.constant 5 : index
    %c0_525 = arith.constant 0 : index
    %c0_526 = arith.constant 0 : index
    %1238 = vector.load %arg20[%c5_524, %c0_525, %c0_526] : memref<16x1x16xf32, #tpu.memory_space<vmem>>, vector<1x1x16xf32>
    %1239 = vector.shape_cast %1238 : vector<1x1x16xf32> to vector<1x16xf32>
    %1240 = vector.shape_cast %1237 : vector<1x16xf32> to vector<1x1x16xf32>
    tpu.vector_store %arg20[%c5_524, %c0_525, %c0_526], %1240 {strides = array<i32>} : memref<16x1x16xf32, #tpu.memory_space<vmem>>, vector<1x1x16xf32>,
    %c11_i32_527 = arith.constant 11 : i32
    %1241 = arith.addi %28, %c11_i32_527 : i32
    %1242 = vector.broadcast %1241 : i32 to vector<1x1xi32>
    %1243 = arith.cmpi slt, %1242, %27 : vector<1x1xi32>
    %1244 = arith.extui %1243 : vector<1x1xi1> to vector<1x1xi32>
    %1245 = arith.sitofp %1244 : vector<1x1xi32> to vector<1x1xf32>
    %c11_528 = arith.constant 11 : index
    %c0_529 = arith.constant 0 : index
    %c0_530 = arith.constant 0 : index
    %1246 = vector.load %arg17[%c11_528, %c0_529, %c0_530] : memref<16x1x64xf32, #tpu.memory_space<vmem>>, vector<1x1x64xf32>
    %1247 = vector.shape_cast %1246 : vector<1x1x64xf32> to vector<1x64xf32>
    %c0_531 = arith.constant 0 : index
    %c0_532 = arith.constant 0 : index
    %1248 = vector.load %arg13[%c0_531, %c0_532] : memref<1x16xf32, #tpu.memory_space<vmem>>, vector<1x16xf32>
    %cst_533 = arith.constant dense<0.000000e+00> : vector<1x64xf32>
    %1249 = tpu.matmul %1248, %23, %cst_533 {dimension_numbers = #tpu.dot_dimension_numbers<[1], [0], [0], [1], [0, 0, 1, 1], [], []>} : vector<1x16xf32>, vector<16x64xf32>, vector<1x64xf32> -> vector<1x64xf32>
    %1250 = arith.addf %1247, %1249 : vector<1x64xf32>
    %1251 = vector.extract_strided_slice %1250 {offsets = [0, 0], sizes = [1, 32], strides = [1, 1]} : vector<1x64xf32> to vector<1x32xf32>
    %1252 = arith.negf %1251 : vector<1x32xf32>
    %1253 = math.exp %1252 : vector<1x32xf32>
    %cst_534 = arith.constant 1.000000e+00 : f32
    %1254 = vector.broadcast %cst_534 : f32 to vector<1x32xf32>
    %1255 = arith.addf %1254, %1253 : vector<1x32xf32>
    %1256 = arith.divf %1254, %1255 : vector<1x32xf32>
    %1257 = vector.extract_strided_slice %1256 {offsets = [0, 0], sizes = [1, 16], strides = [1, 1]} : vector<1x32xf32> to vector<1x16xf32>
    %1258 = vector.extract_strided_slice %1256 {offsets = [0, 16], sizes = [1, 16], strides = [1, 1]} : vector<1x32xf32> to vector<1x16xf32>
    %1259 = vector.extract_strided_slice %1250 {offsets = [0, 32], sizes = [1, 16], strides = [1, 1]} : vector<1x64xf32> to vector<1x16xf32>
    %1260 = math.tanh %1259 : vector<1x16xf32>
    %1261 = vector.extract_strided_slice %1250 {offsets = [0, 48], sizes = [1, 16], strides = [1, 1]} : vector<1x64xf32> to vector<1x16xf32>
    %1262 = arith.negf %1261 : vector<1x16xf32>
    %1263 = math.exp %1262 : vector<1x16xf32>
    %cst_535 = arith.constant 1.000000e+00 : f32
    %1264 = vector.broadcast %cst_535 : f32 to vector<1x16xf32>
    %1265 = arith.addf %1264, %1263 : vector<1x16xf32>
    %1266 = arith.divf %1264, %1265 : vector<1x16xf32>
    %c0_536 = arith.constant 0 : index
    %c0_537 = arith.constant 0 : index
    %1267 = vector.load %arg14[%c0_536, %c0_537] : memref<1x16xf32, #tpu.memory_space<vmem>>, vector<1x16xf32>
    %1268 = arith.mulf %1258, %1267 : vector<1x16xf32>
    %1269 = arith.mulf %1257, %1260 : vector<1x16xf32>
    %1270 = arith.addf %1268, %1269 : vector<1x16xf32>
    %1271 = math.tanh %1270 : vector<1x16xf32>
    %1272 = arith.mulf %1266, %1271 : vector<1x16xf32>
    %1273 = vector.broadcast %1245 : vector<1x1xf32> to vector<1x16xf32>
    %1274 = arith.mulf %1273, %1272 : vector<1x16xf32>
    %cst_538 = arith.constant 1.000000e+00 : f32
    %1275 = vector.broadcast %cst_538 : f32 to vector<1x1xf32>
    %1276 = arith.subf %1275, %1245 : vector<1x1xf32>
    %c0_539 = arith.constant 0 : index
    %c0_540 = arith.constant 0 : index
    %1277 = vector.load %arg13[%c0_539, %c0_540] : memref<1x16xf32, #tpu.memory_space<vmem>>, vector<1x16xf32>
    %1278 = vector.broadcast %1276 : vector<1x1xf32> to vector<1x16xf32>
    %1279 = arith.mulf %1278, %1277 : vector<1x16xf32>
    %1280 = arith.addf %1274, %1279 : vector<1x16xf32>
    %c0_541 = arith.constant 0 : index
    %c0_542 = arith.constant 0 : index
    %1281 = vector.load %arg13[%c0_541, %c0_542] : memref<1x16xf32, #tpu.memory_space<vmem>>, vector<1x16xf32>
    tpu.vector_store %arg13[%c0_541, %c0_542], %1280 {strides = array<i32>} : memref<1x16xf32, #tpu.memory_space<vmem>>, vector<1x16xf32>,
    %1282 = vector.broadcast %1245 : vector<1x1xf32> to vector<1x16xf32>
    %1283 = arith.mulf %1282, %1270 : vector<1x16xf32>
    %cst_543 = arith.constant 1.000000e+00 : f32
    %1284 = vector.broadcast %cst_543 : f32 to vector<1x1xf32>
    %1285 = arith.subf %1284, %1245 : vector<1x1xf32>
    %c0_544 = arith.constant 0 : index
    %c0_545 = arith.constant 0 : index
    %1286 = vector.load %arg14[%c0_544, %c0_545] : memref<1x16xf32, #tpu.memory_space<vmem>>, vector<1x16xf32>
    %1287 = vector.broadcast %1285 : vector<1x1xf32> to vector<1x16xf32>
    %1288 = arith.mulf %1287, %1286 : vector<1x16xf32>
    %1289 = arith.addf %1283, %1288 : vector<1x16xf32>
    %c0_546 = arith.constant 0 : index
    %c0_547 = arith.constant 0 : index
    %1290 = vector.load %arg14[%c0_546, %c0_547] : memref<1x16xf32, #tpu.memory_space<vmem>>, vector<1x16xf32>
    tpu.vector_store %arg14[%c0_546, %c0_547], %1289 {strides = array<i32>} : memref<1x16xf32, #tpu.memory_space<vmem>>, vector<1x16xf32>,
    %1291 = vector.broadcast %1245 : vector<1x1xf32> to vector<1x16xf32>
    %1292 = arith.mulf %1291, %1272 : vector<1x16xf32>
    %c11_548 = arith.constant 11 : index
    %c0_549 = arith.constant 0 : index
    %c0_550 = arith.constant 0 : index
    %1293 = vector.load %arg19[%c11_548, %c0_549, %c0_550] : memref<16x1x16xf32, #tpu.memory_space<vmem>>, vector<1x1x16xf32>
    %1294 = vector.shape_cast %1293 : vector<1x1x16xf32> to vector<1x16xf32>
    %1295 = vector.shape_cast %1292 : vector<1x16xf32> to vector<1x1x16xf32>
    tpu.vector_store %arg19[%c11_548, %c0_549, %c0_550], %1295 {strides = array<i32>} : memref<16x1x16xf32, #tpu.memory_space<vmem>>, vector<1x1x16xf32>,
    %c4_i32_551 = arith.constant 4 : i32
    %1296 = arith.addi %30, %c4_i32_551 : i32
    %1297 = vector.broadcast %1296 : i32 to vector<1x1xi32>
    %1298 = arith.cmpi slt, %1297, %27 : vector<1x1xi32>
    %1299 = arith.extui %1298 : vector<1x1xi1> to vector<1x1xi32>
    %1300 = arith.sitofp %1299 : vector<1x1xi32> to vector<1x1xf32>
    %c4_552 = arith.constant 4 : index
    %c0_553 = arith.constant 0 : index
    %c0_554 = arith.constant 0 : index
    %1301 = vector.load %arg18[%c4_552, %c0_553, %c0_554] : memref<16x1x64xf32, #tpu.memory_space<vmem>>, vector<1x1x64xf32>
    %1302 = vector.shape_cast %1301 : vector<1x1x64xf32> to vector<1x64xf32>
    %c0_555 = arith.constant 0 : index
    %c0_556 = arith.constant 0 : index
    %1303 = vector.load %arg15[%c0_555, %c0_556] : memref<1x16xf32, #tpu.memory_space<vmem>>, vector<1x16xf32>
    %cst_557 = arith.constant dense<0.000000e+00> : vector<1x64xf32>
    %1304 = tpu.matmul %1303, %24, %cst_557 {dimension_numbers = #tpu.dot_dimension_numbers<[1], [0], [0], [1], [0, 0, 1, 1], [], []>} : vector<1x16xf32>, vector<16x64xf32>, vector<1x64xf32> -> vector<1x64xf32>
    %1305 = arith.addf %1302, %1304 : vector<1x64xf32>
    %1306 = vector.extract_strided_slice %1305 {offsets = [0, 0], sizes = [1, 32], strides = [1, 1]} : vector<1x64xf32> to vector<1x32xf32>
    %1307 = arith.negf %1306 : vector<1x32xf32>
    %1308 = math.exp %1307 : vector<1x32xf32>
    %cst_558 = arith.constant 1.000000e+00 : f32
    %1309 = vector.broadcast %cst_558 : f32 to vector<1x32xf32>
    %1310 = arith.addf %1309, %1308 : vector<1x32xf32>
    %1311 = arith.divf %1309, %1310 : vector<1x32xf32>
    %1312 = vector.extract_strided_slice %1311 {offsets = [0, 0], sizes = [1, 16], strides = [1, 1]} : vector<1x32xf32> to vector<1x16xf32>
    %1313 = vector.extract_strided_slice %1311 {offsets = [0, 16], sizes = [1, 16], strides = [1, 1]} : vector<1x32xf32> to vector<1x16xf32>
    %1314 = vector.extract_strided_slice %1305 {offsets = [0, 32], sizes = [1, 16], strides = [1, 1]} : vector<1x64xf32> to vector<1x16xf32>
    %1315 = math.tanh %1314 : vector<1x16xf32>
    %1316 = vector.extract_strided_slice %1305 {offsets = [0, 48], sizes = [1, 16], strides = [1, 1]} : vector<1x64xf32> to vector<1x16xf32>
    %1317 = arith.negf %1316 : vector<1x16xf32>
    %1318 = math.exp %1317 : vector<1x16xf32>
    %cst_559 = arith.constant 1.000000e+00 : f32
    %1319 = vector.broadcast %cst_559 : f32 to vector<1x16xf32>
    %1320 = arith.addf %1319, %1318 : vector<1x16xf32>
    %1321 = arith.divf %1319, %1320 : vector<1x16xf32>
    %c0_560 = arith.constant 0 : index
    %c0_561 = arith.constant 0 : index
    %1322 = vector.load %arg16[%c0_560, %c0_561] : memref<1x16xf32, #tpu.memory_space<vmem>>, vector<1x16xf32>
    %1323 = arith.mulf %1313, %1322 : vector<1x16xf32>
    %1324 = arith.mulf %1312, %1315 : vector<1x16xf32>
    %1325 = arith.addf %1323, %1324 : vector<1x16xf32>
    %1326 = math.tanh %1325 : vector<1x16xf32>
    %1327 = arith.mulf %1321, %1326 : vector<1x16xf32>
    %1328 = vector.broadcast %1300 : vector<1x1xf32> to vector<1x16xf32>
    %1329 = arith.mulf %1328, %1327 : vector<1x16xf32>
    %cst_562 = arith.constant 1.000000e+00 : f32
    %1330 = vector.broadcast %cst_562 : f32 to vector<1x1xf32>
    %1331 = arith.subf %1330, %1300 : vector<1x1xf32>
    %c0_563 = arith.constant 0 : index
    %c0_564 = arith.constant 0 : index
    %1332 = vector.load %arg15[%c0_563, %c0_564] : memref<1x16xf32, #tpu.memory_space<vmem>>, vector<1x16xf32>
    %1333 = vector.broadcast %1331 : vector<1x1xf32> to vector<1x16xf32>
    %1334 = arith.mulf %1333, %1332 : vector<1x16xf32>
    %1335 = arith.addf %1329, %1334 : vector<1x16xf32>
    %c0_565 = arith.constant 0 : index
    %c0_566 = arith.constant 0 : index
    %1336 = vector.load %arg15[%c0_565, %c0_566] : memref<1x16xf32, #tpu.memory_space<vmem>>, vector<1x16xf32>
    tpu.vector_store %arg15[%c0_565, %c0_566], %1335 {strides = array<i32>} : memref<1x16xf32, #tpu.memory_space<vmem>>, vector<1x16xf32>,
    %1337 = vector.broadcast %1300 : vector<1x1xf32> to vector<1x16xf32>
    %1338 = arith.mulf %1337, %1325 : vector<1x16xf32>
    %cst_567 = arith.constant 1.000000e+00 : f32
    %1339 = vector.broadcast %cst_567 : f32 to vector<1x1xf32>
    %1340 = arith.subf %1339, %1300 : vector<1x1xf32>
    %c0_568 = arith.constant 0 : index
    %c0_569 = arith.constant 0 : index
    %1341 = vector.load %arg16[%c0_568, %c0_569] : memref<1x16xf32, #tpu.memory_space<vmem>>, vector<1x16xf32>
    %1342 = vector.broadcast %1340 : vector<1x1xf32> to vector<1x16xf32>
    %1343 = arith.mulf %1342, %1341 : vector<1x16xf32>
    %1344 = arith.addf %1338, %1343 : vector<1x16xf32>
    %c0_570 = arith.constant 0 : index
    %c0_571 = arith.constant 0 : index
    %1345 = vector.load %arg16[%c0_570, %c0_571] : memref<1x16xf32, #tpu.memory_space<vmem>>, vector<1x16xf32>
    tpu.vector_store %arg16[%c0_570, %c0_571], %1344 {strides = array<i32>} : memref<1x16xf32, #tpu.memory_space<vmem>>, vector<1x16xf32>,
    %1346 = vector.broadcast %1300 : vector<1x1xf32> to vector<1x16xf32>
    %1347 = arith.mulf %1346, %1327 : vector<1x16xf32>
    %c4_572 = arith.constant 4 : index
    %c0_573 = arith.constant 0 : index
    %c0_574 = arith.constant 0 : index
    %1348 = vector.load %arg20[%c4_572, %c0_573, %c0_574] : memref<16x1x16xf32, #tpu.memory_space<vmem>>, vector<1x1x16xf32>
    %1349 = vector.shape_cast %1348 : vector<1x1x16xf32> to vector<1x16xf32>
    %1350 = vector.shape_cast %1347 : vector<1x16xf32> to vector<1x1x16xf32>
    tpu.vector_store %arg20[%c4_572, %c0_573, %c0_574], %1350 {strides = array<i32>} : memref<16x1x16xf32, #tpu.memory_space<vmem>>, vector<1x1x16xf32>,
    %c12_i32_575 = arith.constant 12 : i32
    %1351 = arith.addi %28, %c12_i32_575 : i32
    %1352 = vector.broadcast %1351 : i32 to vector<1x1xi32>
    %1353 = arith.cmpi slt, %1352, %27 : vector<1x1xi32>
    %1354 = arith.extui %1353 : vector<1x1xi1> to vector<1x1xi32>
    %1355 = arith.sitofp %1354 : vector<1x1xi32> to vector<1x1xf32>
    %c12_576 = arith.constant 12 : index
    %c0_577 = arith.constant 0 : index
    %c0_578 = arith.constant 0 : index
    %1356 = vector.load %arg17[%c12_576, %c0_577, %c0_578] : memref<16x1x64xf32, #tpu.memory_space<vmem>>, vector<1x1x64xf32>
    %1357 = vector.shape_cast %1356 : vector<1x1x64xf32> to vector<1x64xf32>
    %c0_579 = arith.constant 0 : index
    %c0_580 = arith.constant 0 : index
    %1358 = vector.load %arg13[%c0_579, %c0_580] : memref<1x16xf32, #tpu.memory_space<vmem>>, vector<1x16xf32>
    %cst_581 = arith.constant dense<0.000000e+00> : vector<1x64xf32>
    %1359 = tpu.matmul %1358, %23, %cst_581 {dimension_numbers = #tpu.dot_dimension_numbers<[1], [0], [0], [1], [0, 0, 1, 1], [], []>} : vector<1x16xf32>, vector<16x64xf32>, vector<1x64xf32> -> vector<1x64xf32>
    %1360 = arith.addf %1357, %1359 : vector<1x64xf32>
    %1361 = vector.extract_strided_slice %1360 {offsets = [0, 0], sizes = [1, 32], strides = [1, 1]} : vector<1x64xf32> to vector<1x32xf32>
    %1362 = arith.negf %1361 : vector<1x32xf32>
    %1363 = math.exp %1362 : vector<1x32xf32>
    %cst_582 = arith.constant 1.000000e+00 : f32
    %1364 = vector.broadcast %cst_582 : f32 to vector<1x32xf32>
    %1365 = arith.addf %1364, %1363 : vector<1x32xf32>
    %1366 = arith.divf %1364, %1365 : vector<1x32xf32>
    %1367 = vector.extract_strided_slice %1366 {offsets = [0, 0], sizes = [1, 16], strides = [1, 1]} : vector<1x32xf32> to vector<1x16xf32>
    %1368 = vector.extract_strided_slice %1366 {offsets = [0, 16], sizes = [1, 16], strides = [1, 1]} : vector<1x32xf32> to vector<1x16xf32>
    %1369 = vector.extract_strided_slice %1360 {offsets = [0, 32], sizes = [1, 16], strides = [1, 1]} : vector<1x64xf32> to vector<1x16xf32>
    %1370 = math.tanh %1369 : vector<1x16xf32>
    %1371 = vector.extract_strided_slice %1360 {offsets = [0, 48], sizes = [1, 16], strides = [1, 1]} : vector<1x64xf32> to vector<1x16xf32>
    %1372 = arith.negf %1371 : vector<1x16xf32>
    %1373 = math.exp %1372 : vector<1x16xf32>
    %cst_583 = arith.constant 1.000000e+00 : f32
    %1374 = vector.broadcast %cst_583 : f32 to vector<1x16xf32>
    %1375 = arith.addf %1374, %1373 : vector<1x16xf32>
    %1376 = arith.divf %1374, %1375 : vector<1x16xf32>
    %c0_584 = arith.constant 0 : index
    %c0_585 = arith.constant 0 : index
    %1377 = vector.load %arg14[%c0_584, %c0_585] : memref<1x16xf32, #tpu.memory_space<vmem>>, vector<1x16xf32>
    %1378 = arith.mulf %1368, %1377 : vector<1x16xf32>
    %1379 = arith.mulf %1367, %1370 : vector<1x16xf32>
    %1380 = arith.addf %1378, %1379 : vector<1x16xf32>
    %1381 = math.tanh %1380 : vector<1x16xf32>
    %1382 = arith.mulf %1376, %1381 : vector<1x16xf32>
    %1383 = vector.broadcast %1355 : vector<1x1xf32> to vector<1x16xf32>
    %1384 = arith.mulf %1383, %1382 : vector<1x16xf32>
    %cst_586 = arith.constant 1.000000e+00 : f32
    %1385 = vector.broadcast %cst_586 : f32 to vector<1x1xf32>
    %1386 = arith.subf %1385, %1355 : vector<1x1xf32>
    %c0_587 = arith.constant 0 : index
    %c0_588 = arith.constant 0 : index
    %1387 = vector.load %arg13[%c0_587, %c0_588] : memref<1x16xf32, #tpu.memory_space<vmem>>, vector<1x16xf32>
    %1388 = vector.broadcast %1386 : vector<1x1xf32> to vector<1x16xf32>
    %1389 = arith.mulf %1388, %1387 : vector<1x16xf32>
    %1390 = arith.addf %1384, %1389 : vector<1x16xf32>
    %c0_589 = arith.constant 0 : index
    %c0_590 = arith.constant 0 : index
    %1391 = vector.load %arg13[%c0_589, %c0_590] : memref<1x16xf32, #tpu.memory_space<vmem>>, vector<1x16xf32>
    tpu.vector_store %arg13[%c0_589, %c0_590], %1390 {strides = array<i32>} : memref<1x16xf32, #tpu.memory_space<vmem>>, vector<1x16xf32>,
    %1392 = vector.broadcast %1355 : vector<1x1xf32> to vector<1x16xf32>
    %1393 = arith.mulf %1392, %1380 : vector<1x16xf32>
    %cst_591 = arith.constant 1.000000e+00 : f32
    %1394 = vector.broadcast %cst_591 : f32 to vector<1x1xf32>
    %1395 = arith.subf %1394, %1355 : vector<1x1xf32>
    %c0_592 = arith.constant 0 : index
    %c0_593 = arith.constant 0 : index
    %1396 = vector.load %arg14[%c0_592, %c0_593] : memref<1x16xf32, #tpu.memory_space<vmem>>, vector<1x16xf32>
    %1397 = vector.broadcast %1395 : vector<1x1xf32> to vector<1x16xf32>
    %1398 = arith.mulf %1397, %1396 : vector<1x16xf32>
    %1399 = arith.addf %1393, %1398 : vector<1x16xf32>
    %c0_594 = arith.constant 0 : index
    %c0_595 = arith.constant 0 : index
    %1400 = vector.load %arg14[%c0_594, %c0_595] : memref<1x16xf32, #tpu.memory_space<vmem>>, vector<1x16xf32>
    tpu.vector_store %arg14[%c0_594, %c0_595], %1399 {strides = array<i32>} : memref<1x16xf32, #tpu.memory_space<vmem>>, vector<1x16xf32>,
    %1401 = vector.broadcast %1355 : vector<1x1xf32> to vector<1x16xf32>
    %1402 = arith.mulf %1401, %1382 : vector<1x16xf32>
    %c12_596 = arith.constant 12 : index
    %c0_597 = arith.constant 0 : index
    %c0_598 = arith.constant 0 : index
    %1403 = vector.load %arg19[%c12_596, %c0_597, %c0_598] : memref<16x1x16xf32, #tpu.memory_space<vmem>>, vector<1x1x16xf32>
    %1404 = vector.shape_cast %1403 : vector<1x1x16xf32> to vector<1x16xf32>
    %1405 = vector.shape_cast %1402 : vector<1x16xf32> to vector<1x1x16xf32>
    tpu.vector_store %arg19[%c12_596, %c0_597, %c0_598], %1405 {strides = array<i32>} : memref<16x1x16xf32, #tpu.memory_space<vmem>>, vector<1x1x16xf32>,
    %c3_i32_599 = arith.constant 3 : i32
    %1406 = arith.addi %30, %c3_i32_599 : i32
    %1407 = vector.broadcast %1406 : i32 to vector<1x1xi32>
    %1408 = arith.cmpi slt, %1407, %27 : vector<1x1xi32>
    %1409 = arith.extui %1408 : vector<1x1xi1> to vector<1x1xi32>
    %1410 = arith.sitofp %1409 : vector<1x1xi32> to vector<1x1xf32>
    %c3_600 = arith.constant 3 : index
    %c0_601 = arith.constant 0 : index
    %c0_602 = arith.constant 0 : index
    %1411 = vector.load %arg18[%c3_600, %c0_601, %c0_602] : memref<16x1x64xf32, #tpu.memory_space<vmem>>, vector<1x1x64xf32>
    %1412 = vector.shape_cast %1411 : vector<1x1x64xf32> to vector<1x64xf32>
    %c0_603 = arith.constant 0 : index
    %c0_604 = arith.constant 0 : index
    %1413 = vector.load %arg15[%c0_603, %c0_604] : memref<1x16xf32, #tpu.memory_space<vmem>>, vector<1x16xf32>
    %cst_605 = arith.constant dense<0.000000e+00> : vector<1x64xf32>
    %1414 = tpu.matmul %1413, %24, %cst_605 {dimension_numbers = #tpu.dot_dimension_numbers<[1], [0], [0], [1], [0, 0, 1, 1], [], []>} : vector<1x16xf32>, vector<16x64xf32>, vector<1x64xf32> -> vector<1x64xf32>
    %1415 = arith.addf %1412, %1414 : vector<1x64xf32>
    %1416 = vector.extract_strided_slice %1415 {offsets = [0, 0], sizes = [1, 32], strides = [1, 1]} : vector<1x64xf32> to vector<1x32xf32>
    %1417 = arith.negf %1416 : vector<1x32xf32>
    %1418 = math.exp %1417 : vector<1x32xf32>
    %cst_606 = arith.constant 1.000000e+00 : f32
    %1419 = vector.broadcast %cst_606 : f32 to vector<1x32xf32>
    %1420 = arith.addf %1419, %1418 : vector<1x32xf32>
    %1421 = arith.divf %1419, %1420 : vector<1x32xf32>
    %1422 = vector.extract_strided_slice %1421 {offsets = [0, 0], sizes = [1, 16], strides = [1, 1]} : vector<1x32xf32> to vector<1x16xf32>
    %1423 = vector.extract_strided_slice %1421 {offsets = [0, 16], sizes = [1, 16], strides = [1, 1]} : vector<1x32xf32> to vector<1x16xf32>
    %1424 = vector.extract_strided_slice %1415 {offsets = [0, 32], sizes = [1, 16], strides = [1, 1]} : vector<1x64xf32> to vector<1x16xf32>
    %1425 = math.tanh %1424 : vector<1x16xf32>
    %1426 = vector.extract_strided_slice %1415 {offsets = [0, 48], sizes = [1, 16], strides = [1, 1]} : vector<1x64xf32> to vector<1x16xf32>
    %1427 = arith.negf %1426 : vector<1x16xf32>
    %1428 = math.exp %1427 : vector<1x16xf32>
    %cst_607 = arith.constant 1.000000e+00 : f32
    %1429 = vector.broadcast %cst_607 : f32 to vector<1x16xf32>
    %1430 = arith.addf %1429, %1428 : vector<1x16xf32>
    %1431 = arith.divf %1429, %1430 : vector<1x16xf32>
    %c0_608 = arith.constant 0 : index
    %c0_609 = arith.constant 0 : index
    %1432 = vector.load %arg16[%c0_608, %c0_609] : memref<1x16xf32, #tpu.memory_space<vmem>>, vector<1x16xf32>
    %1433 = arith.mulf %1423, %1432 : vector<1x16xf32>
    %1434 = arith.mulf %1422, %1425 : vector<1x16xf32>
    %1435 = arith.addf %1433, %1434 : vector<1x16xf32>
    %1436 = math.tanh %1435 : vector<1x16xf32>
    %1437 = arith.mulf %1431, %1436 : vector<1x16xf32>
    %1438 = vector.broadcast %1410 : vector<1x1xf32> to vector<1x16xf32>
    %1439 = arith.mulf %1438, %1437 : vector<1x16xf32>
    %cst_610 = arith.constant 1.000000e+00 : f32
    %1440 = vector.broadcast %cst_610 : f32 to vector<1x1xf32>
    %1441 = arith.subf %1440, %1410 : vector<1x1xf32>
    %c0_611 = arith.constant 0 : index
    %c0_612 = arith.constant 0 : index
    %1442 = vector.load %arg15[%c0_611, %c0_612] : memref<1x16xf32, #tpu.memory_space<vmem>>, vector<1x16xf32>
    %1443 = vector.broadcast %1441 : vector<1x1xf32> to vector<1x16xf32>
    %1444 = arith.mulf %1443, %1442 : vector<1x16xf32>
    %1445 = arith.addf %1439, %1444 : vector<1x16xf32>
    %c0_613 = arith.constant 0 : index
    %c0_614 = arith.constant 0 : index
    %1446 = vector.load %arg15[%c0_613, %c0_614] : memref<1x16xf32, #tpu.memory_space<vmem>>, vector<1x16xf32>
    tpu.vector_store %arg15[%c0_613, %c0_614], %1445 {strides = array<i32>} : memref<1x16xf32, #tpu.memory_space<vmem>>, vector<1x16xf32>,
    %1447 = vector.broadcast %1410 : vector<1x1xf32> to vector<1x16xf32>
    %1448 = arith.mulf %1447, %1435 : vector<1x16xf32>
    %cst_615 = arith.constant 1.000000e+00 : f32
    %1449 = vector.broadcast %cst_615 : f32 to vector<1x1xf32>
    %1450 = arith.subf %1449, %1410 : vector<1x1xf32>
    %c0_616 = arith.constant 0 : index
    %c0_617 = arith.constant 0 : index
    %1451 = vector.load %arg16[%c0_616, %c0_617] : memref<1x16xf32, #tpu.memory_space<vmem>>, vector<1x16xf32>
    %1452 = vector.broadcast %1450 : vector<1x1xf32> to vector<1x16xf32>
    %1453 = arith.mulf %1452, %1451 : vector<1x16xf32>
    %1454 = arith.addf %1448, %1453 : vector<1x16xf32>
    %c0_618 = arith.constant 0 : index
    %c0_619 = arith.constant 0 : index
    %1455 = vector.load %arg16[%c0_618, %c0_619] : memref<1x16xf32, #tpu.memory_space<vmem>>, vector<1x16xf32>
    tpu.vector_store %arg16[%c0_618, %c0_619], %1454 {strides = array<i32>} : memref<1x16xf32, #tpu.memory_space<vmem>>, vector<1x16xf32>,
    %1456 = vector.broadcast %1410 : vector<1x1xf32> to vector<1x16xf32>
    %1457 = arith.mulf %1456, %1437 : vector<1x16xf32>
    %c3_620 = arith.constant 3 : index
    %c0_621 = arith.constant 0 : index
    %c0_622 = arith.constant 0 : index
    %1458 = vector.load %arg20[%c3_620, %c0_621, %c0_622] : memref<16x1x16xf32, #tpu.memory_space<vmem>>, vector<1x1x16xf32>
    %1459 = vector.shape_cast %1458 : vector<1x1x16xf32> to vector<1x16xf32>
    %1460 = vector.shape_cast %1457 : vector<1x16xf32> to vector<1x1x16xf32>
    tpu.vector_store %arg20[%c3_620, %c0_621, %c0_622], %1460 {strides = array<i32>} : memref<16x1x16xf32, #tpu.memory_space<vmem>>, vector<1x1x16xf32>,
    %c13_i32_623 = arith.constant 13 : i32
    %1461 = arith.addi %28, %c13_i32_623 : i32
    %1462 = vector.broadcast %1461 : i32 to vector<1x1xi32>
    %1463 = arith.cmpi slt, %1462, %27 : vector<1x1xi32>
    %1464 = arith.extui %1463 : vector<1x1xi1> to vector<1x1xi32>
    %1465 = arith.sitofp %1464 : vector<1x1xi32> to vector<1x1xf32>
    %c13_624 = arith.constant 13 : index
    %c0_625 = arith.constant 0 : index
    %c0_626 = arith.constant 0 : index
    %1466 = vector.load %arg17[%c13_624, %c0_625, %c0_626] : memref<16x1x64xf32, #tpu.memory_space<vmem>>, vector<1x1x64xf32>
    %1467 = vector.shape_cast %1466 : vector<1x1x64xf32> to vector<1x64xf32>
    %c0_627 = arith.constant 0 : index
    %c0_628 = arith.constant 0 : index
    %1468 = vector.load %arg13[%c0_627, %c0_628] : memref<1x16xf32, #tpu.memory_space<vmem>>, vector<1x16xf32>
    %cst_629 = arith.constant dense<0.000000e+00> : vector<1x64xf32>
    %1469 = tpu.matmul %1468, %23, %cst_629 {dimension_numbers = #tpu.dot_dimension_numbers<[1], [0], [0], [1], [0, 0, 1, 1], [], []>} : vector<1x16xf32>, vector<16x64xf32>, vector<1x64xf32> -> vector<1x64xf32>
    %1470 = arith.addf %1467, %1469 : vector<1x64xf32>
    %1471 = vector.extract_strided_slice %1470 {offsets = [0, 0], sizes = [1, 32], strides = [1, 1]} : vector<1x64xf32> to vector<1x32xf32>
    %1472 = arith.negf %1471 : vector<1x32xf32>
    %1473 = math.exp %1472 : vector<1x32xf32>
    %cst_630 = arith.constant 1.000000e+00 : f32
    %1474 = vector.broadcast %cst_630 : f32 to vector<1x32xf32>
    %1475 = arith.addf %1474, %1473 : vector<1x32xf32>
    %1476 = arith.divf %1474, %1475 : vector<1x32xf32>
    %1477 = vector.extract_strided_slice %1476 {offsets = [0, 0], sizes = [1, 16], strides = [1, 1]} : vector<1x32xf32> to vector<1x16xf32>
    %1478 = vector.extract_strided_slice %1476 {offsets = [0, 16], sizes = [1, 16], strides = [1, 1]} : vector<1x32xf32> to vector<1x16xf32>
    %1479 = vector.extract_strided_slice %1470 {offsets = [0, 32], sizes = [1, 16], strides = [1, 1]} : vector<1x64xf32> to vector<1x16xf32>
    %1480 = math.tanh %1479 : vector<1x16xf32>
    %1481 = vector.extract_strided_slice %1470 {offsets = [0, 48], sizes = [1, 16], strides = [1, 1]} : vector<1x64xf32> to vector<1x16xf32>
    %1482 = arith.negf %1481 : vector<1x16xf32>
    %1483 = math.exp %1482 : vector<1x16xf32>
    %cst_631 = arith.constant 1.000000e+00 : f32
    %1484 = vector.broadcast %cst_631 : f32 to vector<1x16xf32>
    %1485 = arith.addf %1484, %1483 : vector<1x16xf32>
    %1486 = arith.divf %1484, %1485 : vector<1x16xf32>
    %c0_632 = arith.constant 0 : index
    %c0_633 = arith.constant 0 : index
    %1487 = vector.load %arg14[%c0_632, %c0_633] : memref<1x16xf32, #tpu.memory_space<vmem>>, vector<1x16xf32>
    %1488 = arith.mulf %1478, %1487 : vector<1x16xf32>
    %1489 = arith.mulf %1477, %1480 : vector<1x16xf32>
    %1490 = arith.addf %1488, %1489 : vector<1x16xf32>
    %1491 = math.tanh %1490 : vector<1x16xf32>
    %1492 = arith.mulf %1486, %1491 : vector<1x16xf32>
    %1493 = vector.broadcast %1465 : vector<1x1xf32> to vector<1x16xf32>
    %1494 = arith.mulf %1493, %1492 : vector<1x16xf32>
    %cst_634 = arith.constant 1.000000e+00 : f32
    %1495 = vector.broadcast %cst_634 : f32 to vector<1x1xf32>
    %1496 = arith.subf %1495, %1465 : vector<1x1xf32>
    %c0_635 = arith.constant 0 : index
    %c0_636 = arith.constant 0 : index
    %1497 = vector.load %arg13[%c0_635, %c0_636] : memref<1x16xf32, #tpu.memory_space<vmem>>, vector<1x16xf32>
    %1498 = vector.broadcast %1496 : vector<1x1xf32> to vector<1x16xf32>
    %1499 = arith.mulf %1498, %1497 : vector<1x16xf32>
    %1500 = arith.addf %1494, %1499 : vector<1x16xf32>
    %c0_637 = arith.constant 0 : index
    %c0_638 = arith.constant 0 : index
    %1501 = vector.load %arg13[%c0_637, %c0_638] : memref<1x16xf32, #tpu.memory_space<vmem>>, vector<1x16xf32>
    tpu.vector_store %arg13[%c0_637, %c0_638], %1500 {strides = array<i32>} : memref<1x16xf32, #tpu.memory_space<vmem>>, vector<1x16xf32>,
    %1502 = vector.broadcast %1465 : vector<1x1xf32> to vector<1x16xf32>
    %1503 = arith.mulf %1502, %1490 : vector<1x16xf32>
    %cst_639 = arith.constant 1.000000e+00 : f32
    %1504 = vector.broadcast %cst_639 : f32 to vector<1x1xf32>
    %1505 = arith.subf %1504, %1465 : vector<1x1xf32>
    %c0_640 = arith.constant 0 : index
    %c0_641 = arith.constant 0 : index
    %1506 = vector.load %arg14[%c0_640, %c0_641] : memref<1x16xf32, #tpu.memory_space<vmem>>, vector<1x16xf32>
    %1507 = vector.broadcast %1505 : vector<1x1xf32> to vector<1x16xf32>
    %1508 = arith.mulf %1507, %1506 : vector<1x16xf32>
    %1509 = arith.addf %1503, %1508 : vector<1x16xf32>
    %c0_642 = arith.constant 0 : index
    %c0_643 = arith.constant 0 : index
    %1510 = vector.load %arg14[%c0_642, %c0_643] : memref<1x16xf32, #tpu.memory_space<vmem>>, vector<1x16xf32>
    tpu.vector_store %arg14[%c0_642, %c0_643], %1509 {strides = array<i32>} : memref<1x16xf32, #tpu.memory_space<vmem>>, vector<1x16xf32>,
    %1511 = vector.broadcast %1465 : vector<1x1xf32> to vector<1x16xf32>
    %1512 = arith.mulf %1511, %1492 : vector<1x16xf32>
    %c13_644 = arith.constant 13 : index
    %c0_645 = arith.constant 0 : index
    %c0_646 = arith.constant 0 : index
    %1513 = vector.load %arg19[%c13_644, %c0_645, %c0_646] : memref<16x1x16xf32, #tpu.memory_space<vmem>>, vector<1x1x16xf32>
    %1514 = vector.shape_cast %1513 : vector<1x1x16xf32> to vector<1x16xf32>
    %1515 = vector.shape_cast %1512 : vector<1x16xf32> to vector<1x1x16xf32>
    tpu.vector_store %arg19[%c13_644, %c0_645, %c0_646], %1515 {strides = array<i32>} : memref<16x1x16xf32, #tpu.memory_space<vmem>>, vector<1x1x16xf32>,
    %c2_i32_647 = arith.constant 2 : i32
    %1516 = arith.addi %30, %c2_i32_647 : i32
    %1517 = vector.broadcast %1516 : i32 to vector<1x1xi32>
    %1518 = arith.cmpi slt, %1517, %27 : vector<1x1xi32>
    %1519 = arith.extui %1518 : vector<1x1xi1> to vector<1x1xi32>
    %1520 = arith.sitofp %1519 : vector<1x1xi32> to vector<1x1xf32>
    %c2_648 = arith.constant 2 : index
    %c0_649 = arith.constant 0 : index
    %c0_650 = arith.constant 0 : index
    %1521 = vector.load %arg18[%c2_648, %c0_649, %c0_650] : memref<16x1x64xf32, #tpu.memory_space<vmem>>, vector<1x1x64xf32>
    %1522 = vector.shape_cast %1521 : vector<1x1x64xf32> to vector<1x64xf32>
    %c0_651 = arith.constant 0 : index
    %c0_652 = arith.constant 0 : index
    %1523 = vector.load %arg15[%c0_651, %c0_652] : memref<1x16xf32, #tpu.memory_space<vmem>>, vector<1x16xf32>
    %cst_653 = arith.constant dense<0.000000e+00> : vector<1x64xf32>
    %1524 = tpu.matmul %1523, %24, %cst_653 {dimension_numbers = #tpu.dot_dimension_numbers<[1], [0], [0], [1], [0, 0, 1, 1], [], []>} : vector<1x16xf32>, vector<16x64xf32>, vector<1x64xf32> -> vector<1x64xf32>
    %1525 = arith.addf %1522, %1524 : vector<1x64xf32>
    %1526 = vector.extract_strided_slice %1525 {offsets = [0, 0], sizes = [1, 32], strides = [1, 1]} : vector<1x64xf32> to vector<1x32xf32>
    %1527 = arith.negf %1526 : vector<1x32xf32>
    %1528 = math.exp %1527 : vector<1x32xf32>
    %cst_654 = arith.constant 1.000000e+00 : f32
    %1529 = vector.broadcast %cst_654 : f32 to vector<1x32xf32>
    %1530 = arith.addf %1529, %1528 : vector<1x32xf32>
    %1531 = arith.divf %1529, %1530 : vector<1x32xf32>
    %1532 = vector.extract_strided_slice %1531 {offsets = [0, 0], sizes = [1, 16], strides = [1, 1]} : vector<1x32xf32> to vector<1x16xf32>
    %1533 = vector.extract_strided_slice %1531 {offsets = [0, 16], sizes = [1, 16], strides = [1, 1]} : vector<1x32xf32> to vector<1x16xf32>
    %1534 = vector.extract_strided_slice %1525 {offsets = [0, 32], sizes = [1, 16], strides = [1, 1]} : vector<1x64xf32> to vector<1x16xf32>
    %1535 = math.tanh %1534 : vector<1x16xf32>
    %1536 = vector.extract_strided_slice %1525 {offsets = [0, 48], sizes = [1, 16], strides = [1, 1]} : vector<1x64xf32> to vector<1x16xf32>
    %1537 = arith.negf %1536 : vector<1x16xf32>
    %1538 = math.exp %1537 : vector<1x16xf32>
    %cst_655 = arith.constant 1.000000e+00 : f32
    %1539 = vector.broadcast %cst_655 : f32 to vector<1x16xf32>
    %1540 = arith.addf %1539, %1538 : vector<1x16xf32>
    %1541 = arith.divf %1539, %1540 : vector<1x16xf32>
    %c0_656 = arith.constant 0 : index
    %c0_657 = arith.constant 0 : index
    %1542 = vector.load %arg16[%c0_656, %c0_657] : memref<1x16xf32, #tpu.memory_space<vmem>>, vector<1x16xf32>
    %1543 = arith.mulf %1533, %1542 : vector<1x16xf32>
    %1544 = arith.mulf %1532, %1535 : vector<1x16xf32>
    %1545 = arith.addf %1543, %1544 : vector<1x16xf32>
    %1546 = math.tanh %1545 : vector<1x16xf32>
    %1547 = arith.mulf %1541, %1546 : vector<1x16xf32>
    %1548 = vector.broadcast %1520 : vector<1x1xf32> to vector<1x16xf32>
    %1549 = arith.mulf %1548, %1547 : vector<1x16xf32>
    %cst_658 = arith.constant 1.000000e+00 : f32
    %1550 = vector.broadcast %cst_658 : f32 to vector<1x1xf32>
    %1551 = arith.subf %1550, %1520 : vector<1x1xf32>
    %c0_659 = arith.constant 0 : index
    %c0_660 = arith.constant 0 : index
    %1552 = vector.load %arg15[%c0_659, %c0_660] : memref<1x16xf32, #tpu.memory_space<vmem>>, vector<1x16xf32>
    %1553 = vector.broadcast %1551 : vector<1x1xf32> to vector<1x16xf32>
    %1554 = arith.mulf %1553, %1552 : vector<1x16xf32>
    %1555 = arith.addf %1549, %1554 : vector<1x16xf32>
    %c0_661 = arith.constant 0 : index
    %c0_662 = arith.constant 0 : index
    %1556 = vector.load %arg15[%c0_661, %c0_662] : memref<1x16xf32, #tpu.memory_space<vmem>>, vector<1x16xf32>
    tpu.vector_store %arg15[%c0_661, %c0_662], %1555 {strides = array<i32>} : memref<1x16xf32, #tpu.memory_space<vmem>>, vector<1x16xf32>,
    %1557 = vector.broadcast %1520 : vector<1x1xf32> to vector<1x16xf32>
    %1558 = arith.mulf %1557, %1545 : vector<1x16xf32>
    %cst_663 = arith.constant 1.000000e+00 : f32
    %1559 = vector.broadcast %cst_663 : f32 to vector<1x1xf32>
    %1560 = arith.subf %1559, %1520 : vector<1x1xf32>
    %c0_664 = arith.constant 0 : index
    %c0_665 = arith.constant 0 : index
    %1561 = vector.load %arg16[%c0_664, %c0_665] : memref<1x16xf32, #tpu.memory_space<vmem>>, vector<1x16xf32>
    %1562 = vector.broadcast %1560 : vector<1x1xf32> to vector<1x16xf32>
    %1563 = arith.mulf %1562, %1561 : vector<1x16xf32>
    %1564 = arith.addf %1558, %1563 : vector<1x16xf32>
    %c0_666 = arith.constant 0 : index
    %c0_667 = arith.constant 0 : index
    %1565 = vector.load %arg16[%c0_666, %c0_667] : memref<1x16xf32, #tpu.memory_space<vmem>>, vector<1x16xf32>
    tpu.vector_store %arg16[%c0_666, %c0_667], %1564 {strides = array<i32>} : memref<1x16xf32, #tpu.memory_space<vmem>>, vector<1x16xf32>,
    %1566 = vector.broadcast %1520 : vector<1x1xf32> to vector<1x16xf32>
    %1567 = arith.mulf %1566, %1547 : vector<1x16xf32>
    %c2_668 = arith.constant 2 : index
    %c0_669 = arith.constant 0 : index
    %c0_670 = arith.constant 0 : index
    %1568 = vector.load %arg20[%c2_668, %c0_669, %c0_670] : memref<16x1x16xf32, #tpu.memory_space<vmem>>, vector<1x1x16xf32>
    %1569 = vector.shape_cast %1568 : vector<1x1x16xf32> to vector<1x16xf32>
    %1570 = vector.shape_cast %1567 : vector<1x16xf32> to vector<1x1x16xf32>
    tpu.vector_store %arg20[%c2_668, %c0_669, %c0_670], %1570 {strides = array<i32>} : memref<16x1x16xf32, #tpu.memory_space<vmem>>, vector<1x1x16xf32>,
    %c14_i32_671 = arith.constant 14 : i32
    %1571 = arith.addi %28, %c14_i32_671 : i32
    %1572 = vector.broadcast %1571 : i32 to vector<1x1xi32>
    %1573 = arith.cmpi slt, %1572, %27 : vector<1x1xi32>
    %1574 = arith.extui %1573 : vector<1x1xi1> to vector<1x1xi32>
    %1575 = arith.sitofp %1574 : vector<1x1xi32> to vector<1x1xf32>
    %c14_672 = arith.constant 14 : index
    %c0_673 = arith.constant 0 : index
    %c0_674 = arith.constant 0 : index
    %1576 = vector.load %arg17[%c14_672, %c0_673, %c0_674] : memref<16x1x64xf32, #tpu.memory_space<vmem>>, vector<1x1x64xf32>
    %1577 = vector.shape_cast %1576 : vector<1x1x64xf32> to vector<1x64xf32>
    %c0_675 = arith.constant 0 : index
    %c0_676 = arith.constant 0 : index
    %1578 = vector.load %arg13[%c0_675, %c0_676] : memref<1x16xf32, #tpu.memory_space<vmem>>, vector<1x16xf32>
    %cst_677 = arith.constant dense<0.000000e+00> : vector<1x64xf32>
    %1579 = tpu.matmul %1578, %23, %cst_677 {dimension_numbers = #tpu.dot_dimension_numbers<[1], [0], [0], [1], [0, 0, 1, 1], [], []>} : vector<1x16xf32>, vector<16x64xf32>, vector<1x64xf32> -> vector<1x64xf32>
    %1580 = arith.addf %1577, %1579 : vector<1x64xf32>
    %1581 = vector.extract_strided_slice %1580 {offsets = [0, 0], sizes = [1, 32], strides = [1, 1]} : vector<1x64xf32> to vector<1x32xf32>
    %1582 = arith.negf %1581 : vector<1x32xf32>
    %1583 = math.exp %1582 : vector<1x32xf32>
    %cst_678 = arith.constant 1.000000e+00 : f32
    %1584 = vector.broadcast %cst_678 : f32 to vector<1x32xf32>
    %1585 = arith.addf %1584, %1583 : vector<1x32xf32>
    %1586 = arith.divf %1584, %1585 : vector<1x32xf32>
    %1587 = vector.extract_strided_slice %1586 {offsets = [0, 0], sizes = [1, 16], strides = [1, 1]} : vector<1x32xf32> to vector<1x16xf32>
    %1588 = vector.extract_strided_slice %1586 {offsets = [0, 16], sizes = [1, 16], strides = [1, 1]} : vector<1x32xf32> to vector<1x16xf32>
    %1589 = vector.extract_strided_slice %1580 {offsets = [0, 32], sizes = [1, 16], strides = [1, 1]} : vector<1x64xf32> to vector<1x16xf32>
    %1590 = math.tanh %1589 : vector<1x16xf32>
    %1591 = vector.extract_strided_slice %1580 {offsets = [0, 48], sizes = [1, 16], strides = [1, 1]} : vector<1x64xf32> to vector<1x16xf32>
    %1592 = arith.negf %1591 : vector<1x16xf32>
    %1593 = math.exp %1592 : vector<1x16xf32>
    %cst_679 = arith.constant 1.000000e+00 : f32
    %1594 = vector.broadcast %cst_679 : f32 to vector<1x16xf32>
    %1595 = arith.addf %1594, %1593 : vector<1x16xf32>
    %1596 = arith.divf %1594, %1595 : vector<1x16xf32>
    %c0_680 = arith.constant 0 : index
    %c0_681 = arith.constant 0 : index
    %1597 = vector.load %arg14[%c0_680, %c0_681] : memref<1x16xf32, #tpu.memory_space<vmem>>, vector<1x16xf32>
    %1598 = arith.mulf %1588, %1597 : vector<1x16xf32>
    %1599 = arith.mulf %1587, %1590 : vector<1x16xf32>
    %1600 = arith.addf %1598, %1599 : vector<1x16xf32>
    %1601 = math.tanh %1600 : vector<1x16xf32>
    %1602 = arith.mulf %1596, %1601 : vector<1x16xf32>
    %1603 = vector.broadcast %1575 : vector<1x1xf32> to vector<1x16xf32>
    %1604 = arith.mulf %1603, %1602 : vector<1x16xf32>
    %cst_682 = arith.constant 1.000000e+00 : f32
    %1605 = vector.broadcast %cst_682 : f32 to vector<1x1xf32>
    %1606 = arith.subf %1605, %1575 : vector<1x1xf32>
    %c0_683 = arith.constant 0 : index
    %c0_684 = arith.constant 0 : index
    %1607 = vector.load %arg13[%c0_683, %c0_684] : memref<1x16xf32, #tpu.memory_space<vmem>>, vector<1x16xf32>
    %1608 = vector.broadcast %1606 : vector<1x1xf32> to vector<1x16xf32>
    %1609 = arith.mulf %1608, %1607 : vector<1x16xf32>
    %1610 = arith.addf %1604, %1609 : vector<1x16xf32>
    %c0_685 = arith.constant 0 : index
    %c0_686 = arith.constant 0 : index
    %1611 = vector.load %arg13[%c0_685, %c0_686] : memref<1x16xf32, #tpu.memory_space<vmem>>, vector<1x16xf32>
    tpu.vector_store %arg13[%c0_685, %c0_686], %1610 {strides = array<i32>} : memref<1x16xf32, #tpu.memory_space<vmem>>, vector<1x16xf32>,
    %1612 = vector.broadcast %1575 : vector<1x1xf32> to vector<1x16xf32>
    %1613 = arith.mulf %1612, %1600 : vector<1x16xf32>
    %cst_687 = arith.constant 1.000000e+00 : f32
    %1614 = vector.broadcast %cst_687 : f32 to vector<1x1xf32>
    %1615 = arith.subf %1614, %1575 : vector<1x1xf32>
    %c0_688 = arith.constant 0 : index
    %c0_689 = arith.constant 0 : index
    %1616 = vector.load %arg14[%c0_688, %c0_689] : memref<1x16xf32, #tpu.memory_space<vmem>>, vector<1x16xf32>
    %1617 = vector.broadcast %1615 : vector<1x1xf32> to vector<1x16xf32>
    %1618 = arith.mulf %1617, %1616 : vector<1x16xf32>
    %1619 = arith.addf %1613, %1618 : vector<1x16xf32>
    %c0_690 = arith.constant 0 : index
    %c0_691 = arith.constant 0 : index
    %1620 = vector.load %arg14[%c0_690, %c0_691] : memref<1x16xf32, #tpu.memory_space<vmem>>, vector<1x16xf32>
    tpu.vector_store %arg14[%c0_690, %c0_691], %1619 {strides = array<i32>} : memref<1x16xf32, #tpu.memory_space<vmem>>, vector<1x16xf32>,
    %1621 = vector.broadcast %1575 : vector<1x1xf32> to vector<1x16xf32>
    %1622 = arith.mulf %1621, %1602 : vector<1x16xf32>
    %c14_692 = arith.constant 14 : index
    %c0_693 = arith.constant 0 : index
    %c0_694 = arith.constant 0 : index
    %1623 = vector.load %arg19[%c14_692, %c0_693, %c0_694] : memref<16x1x16xf32, #tpu.memory_space<vmem>>, vector<1x1x16xf32>
    %1624 = vector.shape_cast %1623 : vector<1x1x16xf32> to vector<1x16xf32>
    %1625 = vector.shape_cast %1622 : vector<1x16xf32> to vector<1x1x16xf32>
    tpu.vector_store %arg19[%c14_692, %c0_693, %c0_694], %1625 {strides = array<i32>} : memref<16x1x16xf32, #tpu.memory_space<vmem>>, vector<1x1x16xf32>,
    %c1_i32_695 = arith.constant 1 : i32
    %1626 = arith.addi %30, %c1_i32_695 : i32
    %1627 = vector.broadcast %1626 : i32 to vector<1x1xi32>
    %1628 = arith.cmpi slt, %1627, %27 : vector<1x1xi32>
    %1629 = arith.extui %1628 : vector<1x1xi1> to vector<1x1xi32>
    %1630 = arith.sitofp %1629 : vector<1x1xi32> to vector<1x1xf32>
    %c1_696 = arith.constant 1 : index
    %c0_697 = arith.constant 0 : index
    %c0_698 = arith.constant 0 : index
    %1631 = vector.load %arg18[%c1_696, %c0_697, %c0_698] : memref<16x1x64xf32, #tpu.memory_space<vmem>>, vector<1x1x64xf32>
    %1632 = vector.shape_cast %1631 : vector<1x1x64xf32> to vector<1x64xf32>
    %c0_699 = arith.constant 0 : index
    %c0_700 = arith.constant 0 : index
    %1633 = vector.load %arg15[%c0_699, %c0_700] : memref<1x16xf32, #tpu.memory_space<vmem>>, vector<1x16xf32>
    %cst_701 = arith.constant dense<0.000000e+00> : vector<1x64xf32>
    %1634 = tpu.matmul %1633, %24, %cst_701 {dimension_numbers = #tpu.dot_dimension_numbers<[1], [0], [0], [1], [0, 0, 1, 1], [], []>} : vector<1x16xf32>, vector<16x64xf32>, vector<1x64xf32> -> vector<1x64xf32>
    %1635 = arith.addf %1632, %1634 : vector<1x64xf32>
    %1636 = vector.extract_strided_slice %1635 {offsets = [0, 0], sizes = [1, 32], strides = [1, 1]} : vector<1x64xf32> to vector<1x32xf32>
    %1637 = arith.negf %1636 : vector<1x32xf32>
    %1638 = math.exp %1637 : vector<1x32xf32>
    %cst_702 = arith.constant 1.000000e+00 : f32
    %1639 = vector.broadcast %cst_702 : f32 to vector<1x32xf32>
    %1640 = arith.addf %1639, %1638 : vector<1x32xf32>
    %1641 = arith.divf %1639, %1640 : vector<1x32xf32>
    %1642 = vector.extract_strided_slice %1641 {offsets = [0, 0], sizes = [1, 16], strides = [1, 1]} : vector<1x32xf32> to vector<1x16xf32>
    %1643 = vector.extract_strided_slice %1641 {offsets = [0, 16], sizes = [1, 16], strides = [1, 1]} : vector<1x32xf32> to vector<1x16xf32>
    %1644 = vector.extract_strided_slice %1635 {offsets = [0, 32], sizes = [1, 16], strides = [1, 1]} : vector<1x64xf32> to vector<1x16xf32>
    %1645 = math.tanh %1644 : vector<1x16xf32>
    %1646 = vector.extract_strided_slice %1635 {offsets = [0, 48], sizes = [1, 16], strides = [1, 1]} : vector<1x64xf32> to vector<1x16xf32>
    %1647 = arith.negf %1646 : vector<1x16xf32>
    %1648 = math.exp %1647 : vector<1x16xf32>
    %cst_703 = arith.constant 1.000000e+00 : f32
    %1649 = vector.broadcast %cst_703 : f32 to vector<1x16xf32>
    %1650 = arith.addf %1649, %1648 : vector<1x16xf32>
    %1651 = arith.divf %1649, %1650 : vector<1x16xf32>
    %c0_704 = arith.constant 0 : index
    %c0_705 = arith.constant 0 : index
    %1652 = vector.load %arg16[%c0_704, %c0_705] : memref<1x16xf32, #tpu.memory_space<vmem>>, vector<1x16xf32>
    %1653 = arith.mulf %1643, %1652 : vector<1x16xf32>
    %1654 = arith.mulf %1642, %1645 : vector<1x16xf32>
    %1655 = arith.addf %1653, %1654 : vector<1x16xf32>
    %1656 = math.tanh %1655 : vector<1x16xf32>
    %1657 = arith.mulf %1651, %1656 : vector<1x16xf32>
    %1658 = vector.broadcast %1630 : vector<1x1xf32> to vector<1x16xf32>
    %1659 = arith.mulf %1658, %1657 : vector<1x16xf32>
    %cst_706 = arith.constant 1.000000e+00 : f32
    %1660 = vector.broadcast %cst_706 : f32 to vector<1x1xf32>
    %1661 = arith.subf %1660, %1630 : vector<1x1xf32>
    %c0_707 = arith.constant 0 : index
    %c0_708 = arith.constant 0 : index
    %1662 = vector.load %arg15[%c0_707, %c0_708] : memref<1x16xf32, #tpu.memory_space<vmem>>, vector<1x16xf32>
    %1663 = vector.broadcast %1661 : vector<1x1xf32> to vector<1x16xf32>
    %1664 = arith.mulf %1663, %1662 : vector<1x16xf32>
    %1665 = arith.addf %1659, %1664 : vector<1x16xf32>
    %c0_709 = arith.constant 0 : index
    %c0_710 = arith.constant 0 : index
    %1666 = vector.load %arg15[%c0_709, %c0_710] : memref<1x16xf32, #tpu.memory_space<vmem>>, vector<1x16xf32>
    tpu.vector_store %arg15[%c0_709, %c0_710], %1665 {strides = array<i32>} : memref<1x16xf32, #tpu.memory_space<vmem>>, vector<1x16xf32>,
    %1667 = vector.broadcast %1630 : vector<1x1xf32> to vector<1x16xf32>
    %1668 = arith.mulf %1667, %1655 : vector<1x16xf32>
    %cst_711 = arith.constant 1.000000e+00 : f32
    %1669 = vector.broadcast %cst_711 : f32 to vector<1x1xf32>
    %1670 = arith.subf %1669, %1630 : vector<1x1xf32>
    %c0_712 = arith.constant 0 : index
    %c0_713 = arith.constant 0 : index
    %1671 = vector.load %arg16[%c0_712, %c0_713] : memref<1x16xf32, #tpu.memory_space<vmem>>, vector<1x16xf32>
    %1672 = vector.broadcast %1670 : vector<1x1xf32> to vector<1x16xf32>
    %1673 = arith.mulf %1672, %1671 : vector<1x16xf32>
    %1674 = arith.addf %1668, %1673 : vector<1x16xf32>
    %c0_714 = arith.constant 0 : index
    %c0_715 = arith.constant 0 : index
    %1675 = vector.load %arg16[%c0_714, %c0_715] : memref<1x16xf32, #tpu.memory_space<vmem>>, vector<1x16xf32>
    tpu.vector_store %arg16[%c0_714, %c0_715], %1674 {strides = array<i32>} : memref<1x16xf32, #tpu.memory_space<vmem>>, vector<1x16xf32>,
    %1676 = vector.broadcast %1630 : vector<1x1xf32> to vector<1x16xf32>
    %1677 = arith.mulf %1676, %1657 : vector<1x16xf32>
    %c1_716 = arith.constant 1 : index
    %c0_717 = arith.constant 0 : index
    %c0_718 = arith.constant 0 : index
    %1678 = vector.load %arg20[%c1_716, %c0_717, %c0_718] : memref<16x1x16xf32, #tpu.memory_space<vmem>>, vector<1x1x16xf32>
    %1679 = vector.shape_cast %1678 : vector<1x1x16xf32> to vector<1x16xf32>
    %1680 = vector.shape_cast %1677 : vector<1x16xf32> to vector<1x1x16xf32>
    tpu.vector_store %arg20[%c1_716, %c0_717, %c0_718], %1680 {strides = array<i32>} : memref<16x1x16xf32, #tpu.memory_space<vmem>>, vector<1x1x16xf32>,
    %c15_i32_719 = arith.constant 15 : i32
    %1681 = arith.addi %28, %c15_i32_719 : i32
    %1682 = vector.broadcast %1681 : i32 to vector<1x1xi32>
    %1683 = arith.cmpi slt, %1682, %27 : vector<1x1xi32>
    %1684 = arith.extui %1683 : vector<1x1xi1> to vector<1x1xi32>
    %1685 = arith.sitofp %1684 : vector<1x1xi32> to vector<1x1xf32>
    %c15_720 = arith.constant 15 : index
    %c0_721 = arith.constant 0 : index
    %c0_722 = arith.constant 0 : index
    %1686 = vector.load %arg17[%c15_720, %c0_721, %c0_722] : memref<16x1x64xf32, #tpu.memory_space<vmem>>, vector<1x1x64xf32>
    %1687 = vector.shape_cast %1686 : vector<1x1x64xf32> to vector<1x64xf32>
    %c0_723 = arith.constant 0 : index
    %c0_724 = arith.constant 0 : index
    %1688 = vector.load %arg13[%c0_723, %c0_724] : memref<1x16xf32, #tpu.memory_space<vmem>>, vector<1x16xf32>
    %cst_725 = arith.constant dense<0.000000e+00> : vector<1x64xf32>
    %1689 = tpu.matmul %1688, %23, %cst_725 {dimension_numbers = #tpu.dot_dimension_numbers<[1], [0], [0], [1], [0, 0, 1, 1], [], []>} : vector<1x16xf32>, vector<16x64xf32>, vector<1x64xf32> -> vector<1x64xf32>
    %1690 = arith.addf %1687, %1689 : vector<1x64xf32>
    %1691 = vector.extract_strided_slice %1690 {offsets = [0, 0], sizes = [1, 32], strides = [1, 1]} : vector<1x64xf32> to vector<1x32xf32>
    %1692 = arith.negf %1691 : vector<1x32xf32>
    %1693 = math.exp %1692 : vector<1x32xf32>
    %cst_726 = arith.constant 1.000000e+00 : f32
    %1694 = vector.broadcast %cst_726 : f32 to vector<1x32xf32>
    %1695 = arith.addf %1694, %1693 : vector<1x32xf32>
    %1696 = arith.divf %1694, %1695 : vector<1x32xf32>
    %1697 = vector.extract_strided_slice %1696 {offsets = [0, 0], sizes = [1, 16], strides = [1, 1]} : vector<1x32xf32> to vector<1x16xf32>
    %1698 = vector.extract_strided_slice %1696 {offsets = [0, 16], sizes = [1, 16], strides = [1, 1]} : vector<1x32xf32> to vector<1x16xf32>
    %1699 = vector.extract_strided_slice %1690 {offsets = [0, 32], sizes = [1, 16], strides = [1, 1]} : vector<1x64xf32> to vector<1x16xf32>
    %1700 = math.tanh %1699 : vector<1x16xf32>
    %1701 = vector.extract_strided_slice %1690 {offsets = [0, 48], sizes = [1, 16], strides = [1, 1]} : vector<1x64xf32> to vector<1x16xf32>
    %1702 = arith.negf %1701 : vector<1x16xf32>
    %1703 = math.exp %1702 : vector<1x16xf32>
    %cst_727 = arith.constant 1.000000e+00 : f32
    %1704 = vector.broadcast %cst_727 : f32 to vector<1x16xf32>
    %1705 = arith.addf %1704, %1703 : vector<1x16xf32>
    %1706 = arith.divf %1704, %1705 : vector<1x16xf32>
    %c0_728 = arith.constant 0 : index
    %c0_729 = arith.constant 0 : index
    %1707 = vector.load %arg14[%c0_728, %c0_729] : memref<1x16xf32, #tpu.memory_space<vmem>>, vector<1x16xf32>
    %1708 = arith.mulf %1698, %1707 : vector<1x16xf32>
    %1709 = arith.mulf %1697, %1700 : vector<1x16xf32>
    %1710 = arith.addf %1708, %1709 : vector<1x16xf32>
    %1711 = math.tanh %1710 : vector<1x16xf32>
    %1712 = arith.mulf %1706, %1711 : vector<1x16xf32>
    %1713 = vector.broadcast %1685 : vector<1x1xf32> to vector<1x16xf32>
    %1714 = arith.mulf %1713, %1712 : vector<1x16xf32>
    %cst_730 = arith.constant 1.000000e+00 : f32
    %1715 = vector.broadcast %cst_730 : f32 to vector<1x1xf32>
    %1716 = arith.subf %1715, %1685 : vector<1x1xf32>
    %c0_731 = arith.constant 0 : index
    %c0_732 = arith.constant 0 : index
    %1717 = vector.load %arg13[%c0_731, %c0_732] : memref<1x16xf32, #tpu.memory_space<vmem>>, vector<1x16xf32>
    %1718 = vector.broadcast %1716 : vector<1x1xf32> to vector<1x16xf32>
    %1719 = arith.mulf %1718, %1717 : vector<1x16xf32>
    %1720 = arith.addf %1714, %1719 : vector<1x16xf32>
    %c0_733 = arith.constant 0 : index
    %c0_734 = arith.constant 0 : index
    %1721 = vector.load %arg13[%c0_733, %c0_734] : memref<1x16xf32, #tpu.memory_space<vmem>>, vector<1x16xf32>
    tpu.vector_store %arg13[%c0_733, %c0_734], %1720 {strides = array<i32>} : memref<1x16xf32, #tpu.memory_space<vmem>>, vector<1x16xf32>,
    %1722 = vector.broadcast %1685 : vector<1x1xf32> to vector<1x16xf32>
    %1723 = arith.mulf %1722, %1710 : vector<1x16xf32>
    %cst_735 = arith.constant 1.000000e+00 : f32
    %1724 = vector.broadcast %cst_735 : f32 to vector<1x1xf32>
    %1725 = arith.subf %1724, %1685 : vector<1x1xf32>
    %c0_736 = arith.constant 0 : index
    %c0_737 = arith.constant 0 : index
    %1726 = vector.load %arg14[%c0_736, %c0_737] : memref<1x16xf32, #tpu.memory_space<vmem>>, vector<1x16xf32>
    %1727 = vector.broadcast %1725 : vector<1x1xf32> to vector<1x16xf32>
    %1728 = arith.mulf %1727, %1726 : vector<1x16xf32>
    %1729 = arith.addf %1723, %1728 : vector<1x16xf32>
    %c0_738 = arith.constant 0 : index
    %c0_739 = arith.constant 0 : index
    %1730 = vector.load %arg14[%c0_738, %c0_739] : memref<1x16xf32, #tpu.memory_space<vmem>>, vector<1x16xf32>
    tpu.vector_store %arg14[%c0_738, %c0_739], %1729 {strides = array<i32>} : memref<1x16xf32, #tpu.memory_space<vmem>>, vector<1x16xf32>,
    %1731 = vector.broadcast %1685 : vector<1x1xf32> to vector<1x16xf32>
    %1732 = arith.mulf %1731, %1712 : vector<1x16xf32>
    %c15_740 = arith.constant 15 : index
    %c0_741 = arith.constant 0 : index
    %c0_742 = arith.constant 0 : index
    %1733 = vector.load %arg19[%c15_740, %c0_741, %c0_742] : memref<16x1x16xf32, #tpu.memory_space<vmem>>, vector<1x1x16xf32>
    %1734 = vector.shape_cast %1733 : vector<1x1x16xf32> to vector<1x16xf32>
    %1735 = vector.shape_cast %1732 : vector<1x16xf32> to vector<1x1x16xf32>
    tpu.vector_store %arg19[%c15_740, %c0_741, %c0_742], %1735 {strides = array<i32>} : memref<16x1x16xf32, #tpu.memory_space<vmem>>, vector<1x1x16xf32>,
    %c0_i32_743 = arith.constant 0 : i32
    %1736 = arith.addi %30, %c0_i32_743 : i32
    %1737 = vector.broadcast %1736 : i32 to vector<1x1xi32>
    %1738 = arith.cmpi slt, %1737, %27 : vector<1x1xi32>
    %1739 = arith.extui %1738 : vector<1x1xi1> to vector<1x1xi32>
    %1740 = arith.sitofp %1739 : vector<1x1xi32> to vector<1x1xf32>
    %c0_744 = arith.constant 0 : index
    %c0_745 = arith.constant 0 : index
    %c0_746 = arith.constant 0 : index
    %1741 = vector.load %arg18[%c0_744, %c0_745, %c0_746] : memref<16x1x64xf32, #tpu.memory_space<vmem>>, vector<1x1x64xf32>
    %1742 = vector.shape_cast %1741 : vector<1x1x64xf32> to vector<1x64xf32>
    %c0_747 = arith.constant 0 : index
    %c0_748 = arith.constant 0 : index
    %1743 = vector.load %arg15[%c0_747, %c0_748] : memref<1x16xf32, #tpu.memory_space<vmem>>, vector<1x16xf32>
    %cst_749 = arith.constant dense<0.000000e+00> : vector<1x64xf32>
    %1744 = tpu.matmul %1743, %24, %cst_749 {dimension_numbers = #tpu.dot_dimension_numbers<[1], [0], [0], [1], [0, 0, 1, 1], [], []>} : vector<1x16xf32>, vector<16x64xf32>, vector<1x64xf32> -> vector<1x64xf32>
    %1745 = arith.addf %1742, %1744 : vector<1x64xf32>
    %1746 = vector.extract_strided_slice %1745 {offsets = [0, 0], sizes = [1, 32], strides = [1, 1]} : vector<1x64xf32> to vector<1x32xf32>
    %1747 = arith.negf %1746 : vector<1x32xf32>
    %1748 = math.exp %1747 : vector<1x32xf32>
    %cst_750 = arith.constant 1.000000e+00 : f32
    %1749 = vector.broadcast %cst_750 : f32 to vector<1x32xf32>
    %1750 = arith.addf %1749, %1748 : vector<1x32xf32>
    %1751 = arith.divf %1749, %1750 : vector<1x32xf32>
    %1752 = vector.extract_strided_slice %1751 {offsets = [0, 0], sizes = [1, 16], strides = [1, 1]} : vector<1x32xf32> to vector<1x16xf32>
    %1753 = vector.extract_strided_slice %1751 {offsets = [0, 16], sizes = [1, 16], strides = [1, 1]} : vector<1x32xf32> to vector<1x16xf32>
    %1754 = vector.extract_strided_slice %1745 {offsets = [0, 32], sizes = [1, 16], strides = [1, 1]} : vector<1x64xf32> to vector<1x16xf32>
    %1755 = math.tanh %1754 : vector<1x16xf32>
    %1756 = vector.extract_strided_slice %1745 {offsets = [0, 48], sizes = [1, 16], strides = [1, 1]} : vector<1x64xf32> to vector<1x16xf32>
    %1757 = arith.negf %1756 : vector<1x16xf32>
    %1758 = math.exp %1757 : vector<1x16xf32>
    %cst_751 = arith.constant 1.000000e+00 : f32
    %1759 = vector.broadcast %cst_751 : f32 to vector<1x16xf32>
    %1760 = arith.addf %1759, %1758 : vector<1x16xf32>
    %1761 = arith.divf %1759, %1760 : vector<1x16xf32>
    %c0_752 = arith.constant 0 : index
    %c0_753 = arith.constant 0 : index
    %1762 = vector.load %arg16[%c0_752, %c0_753] : memref<1x16xf32, #tpu.memory_space<vmem>>, vector<1x16xf32>
    %1763 = arith.mulf %1753, %1762 : vector<1x16xf32>
    %1764 = arith.mulf %1752, %1755 : vector<1x16xf32>
    %1765 = arith.addf %1763, %1764 : vector<1x16xf32>
    %1766 = math.tanh %1765 : vector<1x16xf32>
    %1767 = arith.mulf %1761, %1766 : vector<1x16xf32>
    %1768 = vector.broadcast %1740 : vector<1x1xf32> to vector<1x16xf32>
    %1769 = arith.mulf %1768, %1767 : vector<1x16xf32>
    %cst_754 = arith.constant 1.000000e+00 : f32
    %1770 = vector.broadcast %cst_754 : f32 to vector<1x1xf32>
    %1771 = arith.subf %1770, %1740 : vector<1x1xf32>
    %c0_755 = arith.constant 0 : index
    %c0_756 = arith.constant 0 : index
    %1772 = vector.load %arg15[%c0_755, %c0_756] : memref<1x16xf32, #tpu.memory_space<vmem>>, vector<1x16xf32>
    %1773 = vector.broadcast %1771 : vector<1x1xf32> to vector<1x16xf32>
    %1774 = arith.mulf %1773, %1772 : vector<1x16xf32>
    %1775 = arith.addf %1769, %1774 : vector<1x16xf32>
    %c0_757 = arith.constant 0 : index
    %c0_758 = arith.constant 0 : index
    %1776 = vector.load %arg15[%c0_757, %c0_758] : memref<1x16xf32, #tpu.memory_space<vmem>>, vector<1x16xf32>
    tpu.vector_store %arg15[%c0_757, %c0_758], %1775 {strides = array<i32>} : memref<1x16xf32, #tpu.memory_space<vmem>>, vector<1x16xf32>,
    %1777 = vector.broadcast %1740 : vector<1x1xf32> to vector<1x16xf32>
    %1778 = arith.mulf %1777, %1765 : vector<1x16xf32>
    %cst_759 = arith.constant 1.000000e+00 : f32
    %1779 = vector.broadcast %cst_759 : f32 to vector<1x1xf32>
    %1780 = arith.subf %1779, %1740 : vector<1x1xf32>
    %c0_760 = arith.constant 0 : index
    %c0_761 = arith.constant 0 : index
    %1781 = vector.load %arg16[%c0_760, %c0_761] : memref<1x16xf32, #tpu.memory_space<vmem>>, vector<1x16xf32>
    %1782 = vector.broadcast %1780 : vector<1x1xf32> to vector<1x16xf32>
    %1783 = arith.mulf %1782, %1781 : vector<1x16xf32>
    %1784 = arith.addf %1778, %1783 : vector<1x16xf32>
    %c0_762 = arith.constant 0 : index
    %c0_763 = arith.constant 0 : index
    %1785 = vector.load %arg16[%c0_762, %c0_763] : memref<1x16xf32, #tpu.memory_space<vmem>>, vector<1x16xf32>
    tpu.vector_store %arg16[%c0_762, %c0_763], %1784 {strides = array<i32>} : memref<1x16xf32, #tpu.memory_space<vmem>>, vector<1x16xf32>,
    %1786 = vector.broadcast %1740 : vector<1x1xf32> to vector<1x16xf32>
    %1787 = arith.mulf %1786, %1767 : vector<1x16xf32>
    %c0_764 = arith.constant 0 : index
    %c0_765 = arith.constant 0 : index
    %c0_766 = arith.constant 0 : index
    %1788 = vector.load %arg20[%c0_764, %c0_765, %c0_766] : memref<16x1x16xf32, #tpu.memory_space<vmem>>, vector<1x1x16xf32>
    %1789 = vector.shape_cast %1788 : vector<1x1x16xf32> to vector<1x16xf32>
    %1790 = vector.shape_cast %1787 : vector<1x16xf32> to vector<1x1x16xf32>
    tpu.vector_store %arg20[%c0_764, %c0_765, %c0_766], %1790 {strides = array<i32>} : memref<16x1x16xf32, #tpu.memory_space<vmem>>, vector<1x1x16xf32>,
    %c0_767 = arith.constant 0 : index
    %c0_768 = arith.constant 0 : index
    %c0_769 = arith.constant 0 : index
    %1791 = vector.load %arg19[%c0_767, %c0_768, %c0_769] : memref<16x1x16xf32, #tpu.memory_space<vmem>>, vector<16x1x16xf32>
    %1792 = tpu.transpose %1791, [1, 0, 2] : vector<16x1x16xf32> -> vector<1x16x16xf32>
    %c0_770 = arith.constant 0 : index
    %c0_771 = arith.constant 0 : index
    %c0_772 = arith.constant 0 : index
    %1793 = vector.load %arg11[%c0_770, %c0_771, %c0_772] : memref<1x16x16xf32, #tpu.memory_space<vmem>>, vector<1x16x16xf32>
    tpu.vector_store %arg11[%c0_770, %c0_771, %c0_772], %1792 {strides = array<i32>} : memref<1x16x16xf32, #tpu.memory_space<vmem>>, vector<1x16x16xf32>,
    %c0_773 = arith.constant 0 : index
    %c0_774 = arith.constant 0 : index
    %c0_775 = arith.constant 0 : index
    %1794 = vector.load %arg20[%c0_773, %c0_774, %c0_775] : memref<16x1x16xf32, #tpu.memory_space<vmem>>, vector<16x1x16xf32>
    %1795 = tpu.transpose %1794, [1, 0, 2] : vector<16x1x16xf32> -> vector<1x16x16xf32>
    %c0_776 = arith.constant 0 : index
    %c0_777 = arith.constant 0 : index
    %c0_778 = arith.constant 0 : index
    %1796 = vector.load %arg12[%c0_776, %c0_777, %c0_778] : memref<1x16x16xf32, #tpu.memory_space<vmem>>, vector<1x16x16xf32>
    tpu.vector_store %arg12[%c0_776, %c0_777, %c0_778], %1795 {strides = array<i32>} : memref<1x16x16xf32, #tpu.memory_space<vmem>>, vector<1x16x16xf32>,
    return
  }
  func.func @transform_0(%arg0: i32, %arg1: i32) -> (i32, i32) {
    %c0_i32 = arith.constant 0 : i32
    %c0_i32_0 = arith.constant 0 : i32
    %c0_i32_1 = arith.constant 0 : i32
    return %c0_i32, %c0_i32_0 : i32, i32
  }
  func.func @transform_1(%arg0: i32, %arg1: i32) -> (i32, i32, i32) {
    %c0_i32 = arith.constant 0 : i32
    %c0_i32_0 = arith.constant 0 : i32
    return %arg0, %arg1, %c0_i32 : i32, i32, i32
  }
  func.func @transform_2(%arg0: i32, %arg1: i32) -> (i32, i32, i32) {
    %c0_i32 = arith.constant 0 : i32
    %0 = arith.subi %c0_i32, %arg1 : i32
    %c0_i32_0 = arith.constant 0 : i32
    %c0_i32_1 = arith.constant 0 : i32
    return %arg0, %0, %c0_i32_0 : i32, i32, i32
  }
  func.func @transform_3(%arg0: i32, %arg1: i32) -> (i32, i32) {
    %c0_i32 = arith.constant 0 : i32
    %c0_i32_0 = arith.constant 0 : i32
    %c0_i32_1 = arith.constant 0 : i32
    return %c0_i32, %c0_i32_0 : i32, i32
  }
  func.func @transform_4(%arg0: i32, %arg1: i32) -> (i32, i32) {
    %c0_i32 = arith.constant 0 : i32
    %c0_i32_0 = arith.constant 0 : i32
    %c0_i32_1 = arith.constant 0 : i32
    return %c0_i32, %c0_i32_0 : i32, i32
  }
  func.func @transform_5(%arg0: i32, %arg1: i32) -> (i32, i32) {
    %c0_i32 = arith.constant 0 : i32
    %c0_i32_0 = arith.constant 0 : i32
    %c0_i32_1 = arith.constant 0 : i32
    return %c0_i32, %c0_i32_0 : i32, i32
  }
  func.func @transform_6(%arg0: i32, %arg1: i32) -> (i32, i32) {
    %c0_i32 = arith.constant 0 : i32
    %c0_i32_0 = arith.constant 0 : i32
    %c0_i32_1 = arith.constant 0 : i32
    return %c0_i32, %c0_i32_0 : i32, i32
  }
  func.func @transform_7(%arg0: i32, %arg1: i32) -> (i32, i32) {
    %c0_i32 = arith.constant 0 : i32
    %c0_i32_0 = arith.constant 0 : i32
    %c0_i32_1 = arith.constant 0 : i32
    return %c0_i32, %c0_i32_0 : i32, i32
  }
  func.func @transform_8(%arg0: i32, %arg1: i32) -> (i32, i32) {
    %c0_i32 = arith.constant 0 : i32
    %c0_i32_0 = arith.constant 0 : i32
    %c0_i32_1 = arith.constant 0 : i32
    return %c0_i32, %c0_i32_0 : i32, i32
  }
  func.func @transform_9(%arg0: i32, %arg1: i32) -> (i32, i32, i32) {
    %c0_i32 = arith.constant 0 : i32
    %c0_i32_0 = arith.constant 0 : i32
    return %arg0, %arg1, %c0_i32 : i32, i32, i32
  }
  func.func @transform_10(%arg0: i32, %arg1: i32) -> (i32, i32, i32) {
    %c0_i32 = arith.constant 0 : i32
    %0 = arith.subi %c0_i32, %arg1 : i32
    %c0_i32_0 = arith.constant 0 : i32
    %c0_i32_1 = arith.constant 0 : i32
    return %arg0, %0, %c0_i32_0 : i32, i32, i32
  }
}

</mosaic_0001>

<llo_original>
// kernel: encoder_forward.2
$region0: #{encoder_forward.2}
  #allocation0 [shape = 'u32[]', space=smem, size = 0x4, offset = 0x4, fixed_abs, tag = 'smem constant byte address 0x4 - core index']
  #allocation1 [shape = 'u32[144,128]{1,0:T(1,128)}', space=vmem, size = 0x12000, scoped, tag = 'internal scratch']
  #allocation2 [shape = 'f32[24,32]{1,0:T(8,128)}', space=vmem, size = 0x3000, scoped, tag = 'scratch operand']
  %s0 = inlined_call_operand.vmem [shape: f32[2,16,32], index: 0, kind: input, shape index: {}]
  %s1 = inlined_call_operand.vmem [shape: f32[3,160,32], index: 1, kind: input, shape index: {}]
  %s2 = inlined_call_operand.vmem [shape: f32[3,1,32], index: 2, kind: input, shape index: {}]
  %s3 = inlined_call_operand.vmem [shape: f32[3,1,32], index: 3, kind: input, shape index: {}]
  %s4 = inlined_call_operand.vmem [shape: f32[2,16,32], index: 4, kind: output, shape index: {}]
  %s5 = sld [smem:[#allocation0]]
  $region49: #{encoder_forward.2} parent=0
    _
  %s7 = ssub.s32 1, %s5
  %s8 = scalar_select 0, %s7, %s5
  loop: start=0, step=1, limit=4
  $region2: #{encoder_forward.2} parent=0 // loop_pre_header
    _
  $region3: #{encoder_forward.2} parent=0 // loop_header
    %s10 = sphi 0, %s14
    %p11 = scmp.ge.s32.totalorder %s10, 4
    %s20 = sphi 0, %s22
    %s23 = sphi 0, %s20
    %s24 = sphi 0, %s23
    %s40 = sphi 0, %s24
    %s44 = sphi 0, %s44
    %s46 = sphi 0, %s44
    %s47 = sphi 0, %s46
    %s61 = sphi 0, %s47
    %s65 = sphi 0, %s65
    %s67 = sphi 0, %s65
    %s68 = sphi 0, %s67
    %s82 = sphi 0, %s68
    %s86 = sphi 0, %s86
    %s88 = sphi 0, %s86
    %s89 = sphi 0, %s88
    %s103 = sphi 0, %s89
    %s109 = sphi 0, %s111
    %s112 = sphi 0, %s109
    %s113 = sphi 0, %s112
    %s129 = sphi 0, %s113
  $region4: #{encoder_forward.2} parent=0 // loop_header_branch
    %13 = sbr.rel (%p11) target = $region8
  $region5: #{encoder_forward.2} parent=0 // loop_body
    %s15 = ssub.s32 %s10, 1
    %s16 = ssub.s32 %s10, 2
    %s17 = sadd.s32 %s10, 1
    %s18 = ssub.s32 %s10, %s17
    %p19 = scmp.eq.s32.totalorder %s18, 0
    %s21 = sadd.s32 %s20, 1
    %s22 = scalar_select %p19, %s20, %s21
    %p25 = pneg %p19
    %p26 = scmp.eq.s32.totalorder %s10, 1
    %p27 = por %p25, %p26
    %p28 = scmp.ne.s32.totalorder %s20, %s23
    %p29 = scmp.eq.s32.totalorder %s10, 0
    %p30 = por %p28, %p29
    %p31 = scmp.ne.s32.totalorder %s20, %s23
    %p32 = scmp.eq.s32.totalorder %s15, 1
    %p33 = por %p31, %p32
    %p34 = scmp.ne.s32.totalorder %s23, %s24
    %p35 = scmp.eq.s32.totalorder %s15, 0
    %p36 = por %p34, %p35
    %p37 = scmp.ne.s32.totalorder %s23, %s24
    %p38 = scmp.eq.s32.totalorder %s16, 1
    %p39 = por %p37, %p38
    %p41 = scmp.ne.s32.totalorder %s24, %s40
    %p42 = scmp.eq.s32.totalorder %s16, 0
    %p43 = por %p41, %p42
    %s45 = sadd.s32 %s44, 1
    %p48 = scmp.eq.s32.totalorder %s10, 1
    %p49 = scmp.ne.s32.totalorder %s44, %s46
    %p50 = scmp.eq.s32.totalorder %s10, 0
    %p51 = por %p49, %p50
    %p52 = scmp.ne.s32.totalorder %s44, %s46
    %p53 = scmp.eq.s32.totalorder %s15, 1
    %p54 = por %p52, %p53
    %p55 = scmp.ne.s32.totalorder %s46, %s47
    %p56 = scmp.eq.s32.totalorder %s15, 0
    %p57 = por %p55, %p56
    %p58 = scmp.ne.s32.totalorder %s46, %s47
    %p59 = scmp.eq.s32.totalorder %s16, 1
    %p60 = por %p58, %p59
    %p62 = scmp.ne.s32.totalorder %s47, %s61
    %p63 = scmp.eq.s32.totalorder %s16, 0
    %p64 = por %p62, %p63
    %s66 = sadd.s32 %s65, 1
    %p69 = scmp.eq.s32.totalorder %s10, 1
    %p70 = scmp.ne.s32.totalorder %s65, %s67
    %p71 = scmp.eq.s32.totalorder %s10, 0
    %p72 = por %p70, %p71
    %p73 = scmp.ne.s32.totalorder %s65, %s67
    %p74 = scmp.eq.s32.totalorder %s15, 1
    %p75 = por %p73, %p74
    %p76 = scmp.ne.s32.totalorder %s67, %s68
    %p77 = scmp.eq.s32.totalorder %s15, 0
    %p78 = por %p76, %p77
    %p79 = scmp.ne.s32.totalorder %s67, %s68
    %p80 = scmp.eq.s32.totalorder %s16, 1
    %p81 = por %p79, %p80
    %p83 = scmp.ne.s32.totalorder %s68, %s82
    %p84 = scmp.eq.s32.totalorder %s16, 0
    %p85 = por %p83, %p84
    %s87 = sadd.s32 %s86, 1
    %p90 = scmp.eq.s32.totalorder %s10, 1
    %p91 = scmp.ne.s32.totalorder %s86, %s88
    %p92 = scmp.eq.s32.totalorder %s10, 0
    %p93 = por %p91, %p92
    %p94 = scmp.ne.s32.totalorder %s86, %s88
    %p95 = scmp.eq.s32.totalorder %s15, 1
    %p96 = por %p94, %p95
    %p97 = scmp.ne.s32.totalorder %s88, %s89
    %p98 = scmp.eq.s32.totalorder %s15, 0
    %p99 = por %p97, %p98
    %p100 = scmp.ne.s32.totalorder %s88, %s89
    %p101 = scmp.eq.s32.totalorder %s16, 1
    %p102 = por %p100, %p101
    %p104 = scmp.ne.s32.totalorder %s89, %s103
    %p105 = scmp.eq.s32.totalorder %s16, 0
    %p106 = por %p104, %p105
    %s107 = ssub.s32 %s10, %s17
    %p108 = scmp.eq.s32.totalorder %s107, 0
    %s110 = sadd.s32 %s109, 1
    %s111 = scalar_select %p108, %s109, %s110
    %p114 = pneg %p108
    %p115 = scmp.eq.s32.totalorder %s10, 1
    %p116 = por %p114, %p115
    %p117 = scmp.ne.s32.totalorder %s109, %s112
    %p118 = scmp.eq.s32.totalorder %s10, 0
    %p119 = por %p117, %p118
    %p120 = scmp.ne.s32.totalorder %s109, %s112
    %p121 = scmp.eq.s32.totalorder %s15, 1
    %p122 = por %p120, %p121
    %p123 = scmp.ne.s32.totalorder %s112, %s113
    %p124 = scmp.eq.s32.totalorder %s15, 0
    %p125 = por %p123, %p124
    %p126 = scmp.ne.s32.totalorder %s112, %s113
    %p127 = scmp.eq.s32.totalorder %s16, 1
    %p128 = por %p126, %p127
    %p130 = scmp.ne.s32.totalorder %s113, %s129
    %p131 = scmp.eq.s32.totalorder %s16, 0
    %p132 = por %p130, %p131
    %p133 = scmp.le.s32.totalorder 1, %s10
    %p134 = scmp.lt.s32.totalorder %s10, 3
    %p135 = pnand %p133, %p134
    %p136 = pneg %p135
    // Predicated region
    $region9: #{encoder_forward.2} parent=5 // pred_check
      _
    $region10: #{encoder_forward.2} parent=5 // pred_check_branch
      %138 = sbr.rel (%p135) target = $region12
    $region11: #{encoder_forward.2} parent=5 // pred_region
      %s139 = ssub.s32 %s10, 1
      // Predicated region
      $region13: #{encoder_forward.2} parent=11 // pred_check
        %p140 = pneg %p57
      $region14: #{encoder_forward.2} parent=11 // pred_check_branch
        %142 = sbr.rel (%p140) target = $region16
      $region15: #{encoder_forward.2} parent=11 // pred_region
        _
      $region16: #{encoder_forward.2} parent=11 // pred_fallthru
        _
      // Predicated region
      $region17: #{encoder_forward.2} parent=11 // pred_check
        %p143 = pneg %p78
      $region18: #{encoder_forward.2} parent=11 // pred_check_branch
        %145 = sbr.rel (%p143) target = $region20
      $region19: #{encoder_forward.2} parent=11 // pred_region
        _
      $region20: #{encoder_forward.2} parent=11 // pred_fallthru
        _
      // Predicated region
      $region21: #{encoder_forward.2} parent=11 // pred_check
        %p146 = pneg %p99
      $region22: #{encoder_forward.2} parent=11 // pred_check_branch
        %148 = sbr.rel (%p146) target = $region24
      $region23: #{encoder_forward.2} parent=11 // pred_region
        _
      $region24: #{encoder_forward.2} parent=11 // pred_fallthru
        _
    $region12: #{encoder_forward.2} parent=5 // pred_fallthru
      _
    %p149 = scmp.lt.s32.totalorder %s10, 2
    // Predicated region
    $region25: #{encoder_forward.2} parent=5 // pred_check
      %p150 = pneg %p149
    $region26: #{encoder_forward.2} parent=5 // pred_check_branch
      %152 = sbr.rel (%p150) target = $region28
    $region27: #{encoder_forward.2} parent=5 // pred_region
      // Predicated region
      $region29: #{encoder_forward.2} parent=27 // pred_check
        %p153 = pneg %p30
      $region30: #{encoder_forward.2} parent=27 // pred_check_branch
        %155 = sbr.rel (%p153) target = $region32
      $region31: #{encoder_forward.2} parent=27 // pred_region
        %p156 = scmp.lt.s32.totalorder %s10, 1
        %s157 = scalar_select %p156, %s10, 1
        %s158 = smul.addr %s157, 2
        %s159 = smul.addr %s158, 8
        %s160 = scalar_lea.vmem %s0, %s159
      $region32: #{encoder_forward.2} parent=27 // pred_fallthru
        _
    $region28: #{encoder_forward.2} parent=5 // pred_fallthru
      _
    %p161 = scmp.le.s32.totalorder 1, %s10
    %p162 = scmp.lt.s32.totalorder %s10, 3
    %p163 = pnand %p161, %p162
    %p164 = pneg %p163
    // Predicated region
    $region33: #{encoder_forward.2} parent=5 // pred_check
      _
    $region34: #{encoder_forward.2} parent=5 // pred_check_branch
      %166 = sbr.rel (%p163) target = $region36
    $region35: #{encoder_forward.2} parent=5 // pred_region
      %s167 = ssub.s32 %s10, 1
      %p168 = scmp.lt.s32.totalorder %s15, 1
      %s169 = scalar_select %p168, %s15, 1
      %s170 = smul.addr %s169, 2
      %s171 = smul.addr %s170, 8
      %s172 = scalar_lea.vmem %s0, %s171
      %p173 = pneg %p36
      %p174 = pneg %p33
      %p175 = pneg %p57
      %p176 = pneg %p54
      %p177 = pneg %p78
      %p178 = pneg %p75
      %p179 = pneg %p99
      %p180 = pneg %p96
      %p181 = pneg %p125
      %p182 = pneg %p122
      %p183 = scmp.lt.s32.totalorder %s15, 1
      %s184 = scalar_select %p183, %s15, 1
      %s185 = smul.addr %s184, 2
      %s186 = smul.addr %s185, 8
      %s187 = scalar_lea.vmem %s4, %s186
      %p188 = scmp.lt.s32.totalorder %s15, 1
      %s189 = scalar_select %p188, %s15, 1
      %s190 = smul.addr %s189, 2
      %s191 = smul.addr %s190, 8
      %s192 = scalar_lea.vmem %s0, %s191
      %p193 = scmp.lt.s32.totalorder %s15, 1
      %s194 = scalar_select %p193, %s15, 1
      %s195 = smul.addr %s194, 2
      %s196 = smul.addr %s195, 8
      %s197 = scalar_lea.vmem %s4, %s196
      %vm198 = vcmask 261120
      %199 = vst.msk [vmem:[#allocation2] sm:$0xff] %vm198, 0.0
      %200 = vst.msk [vmem:[#allocation2 + $0x8] sm:$0xff] %vm198, 0.0
      %201 = vst.msk [vmem:[#allocation2 + $0x10] sm:$0xff] %vm198, 0.0
      %v202 = vld [vmem:[%s192] sm:$0xff]
      %v203 = vld [vmem:[%s192 + $0x8] sm:$0xff]
      %204 = vst.msk [vmem:[#allocation2 + $0x2] sm:$0xff] %vm198, %v202
      %205 = vst.msk [vmem:[#allocation2 + $0xa] sm:$0xff] %vm198, %v203
      %v206 = vld [vmem:[#allocation2] sm:$0xff]
      %v207 = vld [vmem:[#allocation2 + $0x8] sm:$0xff]
      %v208 = vld [vmem:[#allocation2 + $0x10] sm:$0xff]
      %v209 = vrot.slane %v206, 1
      %v210 = vrot.slane %v207, 1
      %v211 = vrot.slane %v208, 1
      %v212 = vlaneseq
      %v213 = vshrl.u32 %v212, 7
      %vm214 = vcmp.lt.s32.totalorder %v213, 7
      %v215 = vsel %vm214, %v210, %v211
      %v216 = vsel %vm214, %v209, %v210
      %v217 = vrot.slane %v206, 2
      %v218 = vrot.slane %v207, 2
      %v219 = vrot.slane %v208, 2
      %vm220 = vcmp.lt.s32.totalorder %v213, 6
      %v221 = vsel %vm220, %v218, %v219
      %v222 = vsel %vm220, %v217, %v218
      %v223 = vrot.slane %v206, 3
      %v224 = vrot.slane %v207, 3
      %v225 = vrot.slane %v208, 3
      %vm226 = vcmp.lt.s32.totalorder %v213, 5
      %v227 = vsel %vm226, %v224, %v225
      %v228 = vsel %vm226, %v223, %v224
      %v229 = vrot.slane %v206, 4
      %v230 = vrot.slane %v207, 4
      %v231 = vrot.slane %v208, 4
      %vm232 = vcmp.lt.s32.totalorder %v213, 4
      %v233 = vsel %vm232, %v230, %v231
      %v234 = vsel %vm232, %v229, %v230
      %237 = vrot.lane.b32.xlu0 %v216, 32
      %v238 = vpop.permute.xlu0 %237
      %239 = vrot.lane.b32.xlu0 %v215, 32
      %v240 = vpop.permute.xlu0 %239
      %245 = vrot.lane.b32.xlu0 %v222, 64
      %v246 = vpop.permute.xlu0 %245
      %247 = vrot.lane.b32.xlu0 %v221, 64
      %v248 = vpop.permute.xlu0 %247
      %253 = vrot.lane.b32.xlu0 %v228, 96
      %v254 = vpop.permute.xlu0 %253
      %255 = vrot.lane.b32.xlu0 %v227, 96
      %v256 = vpop.permute.xlu0 %255
      %v259 = vsel %vm198, %v206, %v238
      %v260 = vsel %vm198, %v207, %v240
      %vm261 = vcmask 523264
      %v262 = vsel %vm261, %v259, %v246
      %v263 = vsel %vm261, %v260, %v248
      %vm264 = vcmask 785408
      %v265 = vsel %vm264, %v262, %v254
      %v266 = vsel %vm264, %v263, %v256
      %v267 = vld [vmem:[%s1] sm:$0xff]
      %v268 = vld [vmem:[%s1 + $0x8] sm:$0xff]
      %v269 = vld [vmem:[%s1 + $0x10] sm:$0xff]
      %v270 = vld [vmem:[%s1 + $0x18] sm:$0xff]
      %v271 = vld [vmem:[%s1 + $0x20] sm:$0xff]
      %v272 = vld [vmem:[%s1 + $0x28] sm:$0xff]
      %v273 = vld [vmem:[%s1 + $0x30] sm:$0xff]
      %v274 = vld [vmem:[%s1 + $0x38] sm:$0xff]
      %v275 = vld [vmem:[%s1 + $0x40] sm:$0xff]
      %v276 = vld [vmem:[%s1 + $0x48] sm:$0xff]
      %v277 = vld [vmem:[%s1 + $0x50] sm:$0xff]
      %v278 = vld [vmem:[%s1 + $0x58] sm:$0xff]
      %v279 = vld [vmem:[%s1 + $0x60] sm:$0xff]
      %v280 = vld [vmem:[%s1 + $0x68] sm:$0xff]
      %v281 = vld [vmem:[%s1 + $0x70] sm:$0xff]
      %v282 = vld [vmem:[%s1 + $0x78] sm:$0xff]
      %v283 = vld [vmem:[%s1 + $0x80] sm:$0xff]
      %v284 = vld [vmem:[%s1 + $0x88] sm:$0xff]
      %v285 = vld [vmem:[%s1 + $0x90] sm:$0xff]
      %v286 = vld [vmem:[%s1 + $0x98] sm:$0xff]
      %v288 = vsel %vm198, %v234, 0
      %v291 = vsel %vm198, %v233, 0
      %293 = vmatprep.subr.mxu0 0.0
      %294 = vmatpush1.msra.mxu0 %v267
      %295 = vmatprep.subr.mxu0 0.0
      %296 = vmatpush1.msra.mxu0 %v268
      %297 = vmatprep.subr.mxu0 0.0
      %298 = vmatpush1.msra.mxu0 %v269
      %299 = vmatprep.subr.mxu0 0.0
      %300 = vmatpush1.msra.mxu0 %v270
      %301 = vmatprep.subr.mxu0 0.0
      %302 = vmatpush1.msra.mxu0 %v271
      %303 = vmatprep.subr.mxu0 0.0
      %304 = vmatpush1.msra.mxu0 %v272
      %305 = vmatprep.subr.mxu0 0.0
      %306 = vmatpush1.msra.mxu0 %v273
      %307 = vmatprep.subr.mxu0 0.0
      %308 = vmatpush1.msra.mxu0 %v274
      %309 = vmatprep.subr.mxu0 0.0
      %310 = vmatpush1.msra.mxu0 %v275
      %311 = vmatprep.subr.mxu0 0.0
      %312 = vmatpush1.msra.mxu0 %v276
      %313 = vmatprep.subr.mxu0 0.0
      %314 = vmatpush1.msra.mxu0 %v277
      %315 = vmatprep.subr.mxu0 0.0
      %316 = vmatpush1.msra.mxu0 %v278
      %317 = vmatprep.subr.mxu0 0.0
      %318 = vmatpush1.msra.mxu0 %v279
      %319 = vmatprep.subr.mxu0 0.0
      %320 = vmatpush1.msra.mxu0 %v280
      %321 = vmatprep.subr.mxu0 0.0
      %322 = vmatpush1.msra.mxu0 %v281
      %323 = vmatprep.subr.mxu0 0.0
      %324 = vmatpush1.msra.mxu0 %v282
      %325 = vmatprep.subr.mxu0 0.0
      %326 = vmatpush1.msra.mxu0 %v283
      %327 = vmatprep.subr.mxu0 0.0
      %328 = vmatpush1.msra.mxu0 %v284
      %329 = vmatprep.subr.mxu0 0.0
      %330 = vmatpush1.msra.mxu0 %v285
      %331 = vmatprep.subr.mxu0 0.0
      %332 = vmatpush1.msra.mxu0 %v286
      %333 = vmatprep.subr.mxu0 0.0
      %334 = vmatpush1.msra.mxu0 0.0
      %335 = vmatprep.subr.mxu0 0.0
      %336 = vmatpush1.msra.mxu0 0.0
      %337 = vmatprep.subr.mxu0 0.0
      %338 = vmatpush1.msra.mxu0 0.0
      %339 = vmatprep.subr.mxu0 0.0
      %340 = vmatpush1.msra.mxu0 0.0
      %341 = vmatprep.subr.mxu0 0.0
      %342 = vmatpush1.msra.mxu0 0.0
      %343 = vmatprep.subr.mxu0 0.0
      %344 = vmatpush1.msra.mxu0 0.0
      %345 = vmatprep.subr.mxu0 0.0
      %346 = vmatpush1.msra.mxu0 0.0
      %347 = vmatprep.subr.mxu0 0.0
      %348 = vmatpush1.msra.mxu0 0.0
      %349 = vmatprep.subr.mxu0 0.0
      %350 = vmatpush1.msra.mxu0 0.0
      %351 = vmatprep.subr.mxu0 0.0
      %352 = vmatpush1.msra.mxu0 0.0
      %353 = vmatprep.subr.mxu0 0.0
      %354 = vmatpush1.msra.mxu0 0.0
      %355 = vmatprep.subr.mxu0 0.0
      %356 = vmatpush1.msra.mxu0 0.0
      %357 = vmatprep.mubr.f32.mxu0 %v288
      %358 = vmatmul.mubr.f32.gmra.mrb[0].mxu0 %v265
      %v359 = vpop.f32.mrb[0].mxu0
      %v360 = vadd.f32 0.0, %v359
      %v361 = vpop.f32.mrb[0].mxu0
      %362 = vmatprep.mubr.f32.mxu0 %v291
      %363 = vmatmul.mubr.f32.gmra.mrb[0].mxu0 %v266
      %v364 = vpop.f32.mrb[0].mxu0
      %v365 = vadd.f32 0.0, %v364
      %v366 = vpop.f32.mrb[0].mxu0
      %367 = vdwg.mxu0
      %v368 = vld [vmem:[%s2] sm:$0x1]
      %v370 = vlaneseq
      %v371 = vshrl.u32 %v370, 7
      %v372 = vsub.s32 0, %v371
      %v373 = vrot.slane %v368, %v372
      %v375 = vmul.f32 %v360, %v373
      %v376 = vmul.f32 %v365, %v373
      %v377 = vld [vmem:[%s3] sm:$0x1]
      %v379 = vlaneseq
      %v380 = vshrl.u32 %v379, 7
      %v381 = vsub.s32 0, %v380
      %v382 = vrot.slane %v377, %v381
      %v384 = vadd.f32 %v375, %v382
      %v385 = vadd.f32 %v376, %v382
      %v386 = vmax.f32 %v384, 0.0
      %v387 = vmax.f32 %v385, 0.0
      %388 = vst.msk [vmem:[#allocation2 + $0x2] sm:$0xff] %vm198, %v386
      %389 = vst.msk [vmem:[#allocation2 + $0xa] sm:$0xff] %vm198, %v387
      %v390 = vld [vmem:[#allocation2] sm:$0xff]
      %v391 = vld [vmem:[#allocation2 + $0x8] sm:$0xff]
      %v392 = vld [vmem:[#allocation2 + $0x10] sm:$0xff]
      %v393 = vrot.slane %v390, 1
      %v394 = vrot.slane %v391, 1
      %v395 = vrot.slane %v392, 1
      %v396 = vsel %vm214, %v394, %v395
      %v397 = vsel %vm214, %v393, %v394
      %v398 = vrot.slane %v390, 2
      %v399 = vrot.slane %v391, 2
      %v400 = vrot.slane %v392, 2
      %v401 = vsel %vm220, %v399, %v400
      %v402 = vsel %vm220, %v398, %v399
      %v403 = vrot.slane %v390, 3
      %v404 = vrot.slane %v391, 3
      %v405 = vrot.slane %v392, 3
      %v406 = vsel %vm226, %v404, %v405
      %v407 = vsel %vm226, %v403, %v404
      %v408 = vrot.slane %v390, 4
      %v409 = vrot.slane %v391, 4
      %v410 = vrot.slane %v392, 4
      %v411 = vsel %vm232, %v409, %v410
      %v412 = vsel %vm232, %v408, %v409
      %415 = vrot.lane.b32.xlu0 %v397, 32
      %v416 = vpop.permute.xlu0 %415
      %417 = vrot.lane.b32.xlu0 %v396, 32
      %v418 = vpop.permute.xlu0 %417
      %423 = vrot.lane.b32.xlu0 %v402, 64
      %v424 = vpop.permute.xlu0 %423
      %425 = vrot.lane.b32.xlu0 %v401, 64
      %v426 = vpop.permute.xlu0 %425
      %431 = vrot.lane.b32.xlu0 %v407, 96
      %v432 = vpop.permute.xlu0 %431
      %433 = vrot.lane.b32.xlu0 %v406, 96
      %v434 = vpop.permute.xlu0 %433
      %v437 = vsel %vm198, %v390, %v416
      %v438 = vsel %vm198, %v391, %v418
      %v439 = vsel %vm261, %v437, %v424
      %v440 = vsel %vm261, %v438, %v426
      %v441 = vsel %vm264, %v439, %v432
      %v442 = vsel %vm264, %v440, %v434
      %s443 = scalar_lea.vmem %s1, 160
      %v444 = vld [vmem:[%s443] sm:$0xff]
      %v445 = vld [vmem:[%s443 + $0x8] sm:$0xff]
      %v446 = vld [vmem:[%s443 + $0x10] sm:$0xff]
      %v447 = vld [vmem:[%s443 + $0x18] sm:$0xff]
      %v448 = vld [vmem:[%s443 + $0x20] sm:$0xff]
      %v449 = vld [vmem:[%s443 + $0x28] sm:$0xff]
      %v450 = vld [vmem:[%s443 + $0x30] sm:$0xff]
      %v451 = vld [vmem:[%s443 + $0x38] sm:$0xff]
      %v452 = vld [vmem:[%s443 + $0x40] sm:$0xff]
      %v453 = vld [vmem:[%s443 + $0x48] sm:$0xff]
      %v454 = vld [vmem:[%s443 + $0x50] sm:$0xff]
      %v455 = vld [vmem:[%s443 + $0x58] sm:$0xff]
      %v456 = vld [vmem:[%s443 + $0x60] sm:$0xff]
      %v457 = vld [vmem:[%s443 + $0x68] sm:$0xff]
      %v458 = vld [vmem:[%s443 + $0x70] sm:$0xff]
      %v459 = vld [vmem:[%s443 + $0x78] sm:$0xff]
      %v460 = vld [vmem:[%s443 + $0x80] sm:$0xff]
      %v461 = vld [vmem:[%s443 + $0x88] sm:$0xff]
      %v462 = vld [vmem:[%s443 + $0x90] sm:$0xff]
      %v463 = vld [vmem:[%s443 + $0x98] sm:$0xff]
      %v465 = vsel %vm198, %v412, 0
      %v468 = vsel %vm198, %v411, 0
      %470 = vmatprep.subr.mxu0 0.0
      %471 = vmatpush1.msra.mxu0 %v444
      %472 = vmatprep.subr.mxu0 0.0
      %473 = vmatpush1.msra.mxu0 %v445
      %474 = vmatprep.subr.mxu0 0.0
      %475 = vmatpush1.msra.mxu0 %v446
      %476 = vmatprep.subr.mxu0 0.0
      %477 = vmatpush1.msra.mxu0 %v447
      %478 = vmatprep.subr.mxu0 0.0
      %479 = vmatpush1.msra.mxu0 %v448
      %480 = vmatprep.subr.mxu0 0.0
      %481 = vmatpush1.msra.mxu0 %v449
      %482 = vmatprep.subr.mxu0 0.0
      %483 = vmatpush1.msra.mxu0 %v450
      %484 = vmatprep.subr.mxu0 0.0
      %485 = vmatpush1.msra.mxu0 %v451
      %486 = vmatprep.subr.mxu0 0.0
      %487 = vmatpush1.msra.mxu0 %v452
      %488 = vmatprep.subr.mxu0 0.0
      %489 = vmatpush1.msra.mxu0 %v453
      %490 = vmatprep.subr.mxu0 0.0
      %491 = vmatpush1.msra.mxu0 %v454
      %492 = vmatprep.subr.mxu0 0.0
      %493 = vmatpush1.msra.mxu0 %v455
      %494 = vmatprep.subr.mxu0 0.0
      %495 = vmatpush1.msra.mxu0 %v456
      %496 = vmatprep.subr.mxu0 0.0
      %497 = vmatpush1.msra.mxu0 %v457
      %498 = vmatprep.subr.mxu0 0.0
      %499 = vmatpush1.msra.mxu0 %v458
      %500 = vmatprep.subr.mxu0 0.0
      %501 = vmatpush1.msra.mxu0 %v459
      %502 = vmatprep.subr.mxu0 0.0
      %503 = vmatpush1.msra.mxu0 %v460
      %504 = vmatprep.subr.mxu0 0.0
      %505 = vmatpush1.msra.mxu0 %v461
      %506 = vmatprep.subr.mxu0 0.0
      %507 = vmatpush1.msra.mxu0 %v462
      %508 = vmatprep.subr.mxu0 0.0
      %509 = vmatpush1.msra.mxu0 %v463
      %510 = vmatprep.subr.mxu0 0.0
      %511 = vmatpush1.msra.mxu0 0.0
      %512 = vmatprep.subr.mxu0 0.0
      %513 = vmatpush1.msra.mxu0 0.0
      %514 = vmatprep.subr.mxu0 0.0
      %515 = vmatpush1.msra.mxu0 0.0
      %516 = vmatprep.subr.mxu0 0.0
      %517 = vmatpush1.msra.mxu0 0.0
      %518 = vmatprep.subr.mxu0 0.0
      %519 = vmatpush1.msra.mxu0 0.0
      %520 = vmatprep.subr.mxu0 0.0
      %521 = vmatpush1.msra.mxu0 0.0
      %522 = vmatprep.subr.mxu0 0.0
      %523 = vmatpush1.msra.mxu0 0.0
      %524 = vmatprep.subr.mxu0 0.0
      %525 = vmatpush1.msra.mxu0 0.0
      %526 = vmatprep.subr.mxu0 0.0
      %527 = vmatpush1.msra.mxu0 0.0
      %528 = vmatprep.subr.mxu0 0.0
      %529 = vmatpush1.msra.mxu0 0.0
      %530 = vmatprep.subr.mxu0 0.0
      %531 = vmatpush1.msra.mxu0 0.0
      %532 = vmatprep.subr.mxu0 0.0
      %533 = vmatpush1.msra.mxu0 0.0
      %534 = vmatprep.mubr.f32.mxu0 %v465
      %535 = vmatmul.mubr.f32.gmra.mrb[0].mxu0 %v441
      %v536 = vpop.f32.mrb[0].mxu0
      %v537 = vadd.f32 0.0, %v536
      %v538 = vpop.f32.mrb[0].mxu0
      %539 = vmatprep.mubr.f32.mxu0 %v468
      %540 = vmatmul.mubr.f32.gmra.mrb[0].mxu0 %v442
      %v541 = vpop.f32.mrb[0].mxu0
      %v542 = vadd.f32 0.0, %v541
      %v543 = vpop.f32.mrb[0].mxu0
      %544 = vdwg.mxu0
      %s545 = scalar_lea.vmem %s2, 1
      %v546 = vld [vmem:[%s545] sm:$0x1]
      %v548 = vlaneseq
      %v549 = vshrl.u32 %v548, 7
      %v550 = vsub.s32 0, %v549
      %v551 = vrot.slane %v546, %v550
      %v553 = vmul.f32 %v537, %v551
      %v554 = vmul.f32 %v542, %v551
      %s555 = scalar_lea.vmem %s3, 1
      %v556 = vld [vmem:[%s555] sm:$0x1]
      %v558 = vlaneseq
      %v559 = vshrl.u32 %v558, 7
      %v560 = vsub.s32 0, %v559
      %v561 = vrot.slane %v556, %v560
      %v563 = vadd.f32 %v553, %v561
      %v564 = vadd.f32 %v554, %v561
      %v565 = vmax.f32 %v563, 0.0
      %v566 = vmax.f32 %v564, 0.0
      %567 = vst.msk [vmem:[#allocation2 + $0x2] sm:$0xff] %vm198, %v565
      %568 = vst.msk [vmem:[#allocation2 + $0xa] sm:$0xff] %vm198, %v566
      %v569 = vld [vmem:[#allocation2] sm:$0xff]
      %v570 = vld [vmem:[#allocation2 + $0x8] sm:$0xff]
      %v571 = vld [vmem:[#allocation2 + $0x10] sm:$0xff]
      %v572 = vrot.slane %v569, 1
      %v573 = vrot.slane %v570, 1
      %v574 = vrot.slane %v571, 1
      %v575 = vsel %vm214, %v573, %v574
      %v576 = vsel %vm214, %v572, %v573
      %v577 = vrot.slane %v569, 2
      %v578 = vrot.slane %v570, 2
      %v579 = vrot.slane %v571, 2
      %v580 = vsel %vm220, %v578, %v579
      %v581 = vsel %vm220, %v577, %v578
      %v582 = vrot.slane %v569, 3
      %v583 = vrot.slane %v570, 3
      %v584 = vrot.slane %v571, 3
      %v585 = vsel %vm226, %v583, %v584
      %v586 = vsel %vm226, %v582, %v583
      %v587 = vrot.slane %v569, 4
      %v588 = vrot.slane %v570, 4
      %v589 = vrot.slane %v571, 4
      %v590 = vsel %vm232, %v588, %v589
      %v591 = vsel %vm232, %v587, %v588
      %594 = vrot.lane.b32.xlu0 %v576, 32
      %v595 = vpop.permute.xlu0 %594
      %596 = vrot.lane.b32.xlu0 %v575, 32
      %v597 = vpop.permute.xlu0 %596
      %602 = vrot.lane.b32.xlu0 %v581, 64
      %v603 = vpop.permute.xlu0 %602
      %604 = vrot.lane.b32.xlu0 %v580, 64
      %v605 = vpop.permute.xlu0 %604
      %610 = vrot.lane.b32.xlu0 %v586, 96
      %v611 = vpop.permute.xlu0 %610
      %612 = vrot.lane.b32.xlu0 %v585, 96
      %v613 = vpop.permute.xlu0 %612
      %v616 = vsel %vm198, %v569, %v595
      %v617 = vsel %vm198, %v570, %v597
      %v618 = vsel %vm261, %v616, %v603
      %v619 = vsel %vm261, %v617, %v605
      %v620 = vsel %vm264, %v618, %v611
      %v621 = vsel %vm264, %v619, %v613
      %s622 = scalar_lea.vmem %s1, 320
      %v623 = vld [vmem:[%s622] sm:$0xff]
      %v624 = vld [vmem:[%s622 + $0x8] sm:$0xff]
      %v625 = vld [vmem:[%s622 + $0x10] sm:$0xff]
      %v626 = vld [vmem:[%s622 + $0x18] sm:$0xff]
      %v627 = vld [vmem:[%s622 + $0x20] sm:$0xff]
      %v628 = vld [vmem:[%s622 + $0x28] sm:$0xff]
      %v629 = vld [vmem:[%s622 + $0x30] sm:$0xff]
      %v630 = vld [vmem:[%s622 + $0x38] sm:$0xff]
      %v631 = vld [vmem:[%s622 + $0x40] sm:$0xff]
      %v632 = vld [vmem:[%s622 + $0x48] sm:$0xff]
      %v633 = vld [vmem:[%s622 + $0x50] sm:$0xff]
      %v634 = vld [vmem:[%s622 + $0x58] sm:$0xff]
      %v635 = vld [vmem:[%s622 + $0x60] sm:$0xff]
      %v636 = vld [vmem:[%s622 + $0x68] sm:$0xff]
      %v637 = vld [vmem:[%s622 + $0x70] sm:$0xff]
      %v638 = vld [vmem:[%s622 + $0x78] sm:$0xff]
      %v639 = vld [vmem:[%s622 + $0x80] sm:$0xff]
      %v640 = vld [vmem:[%s622 + $0x88] sm:$0xff]
      %v641 = vld [vmem:[%s622 + $0x90] sm:$0xff]
      %v642 = vld [vmem:[%s622 + $0x98] sm:$0xff]
      %v644 = vsel %vm198, %v591, 0
      %v647 = vsel %vm198, %v590, 0
      %649 = vmatprep.subr.mxu0 0.0
      %650 = vmatpush1.msra.mxu0 %v623
      %651 = vmatprep.subr.mxu0 0.0
      %652 = vmatpush1.msra.mxu0 %v624
      %653 = vmatprep.subr.mxu0 0.0
      %654 = vmatpush1.msra.mxu0 %v625
      %655 = vmatprep.subr.mxu0 0.0
      %656 = vmatpush1.msra.mxu0 %v626
      %657 = vmatprep.subr.mxu0 0.0
      %658 = vmatpush1.msra.mxu0 %v627
      %659 = vmatprep.subr.mxu0 0.0
      %660 = vmatpush1.msra.mxu0 %v628
      %661 = vmatprep.subr.mxu0 0.0
      %662 = vmatpush1.msra.mxu0 %v629
      %663 = vmatprep.subr.mxu0 0.0
      %664 = vmatpush1.msra.mxu0 %v630
      %665 = vmatprep.subr.mxu0 0.0
      %666 = vmatpush1.msra.mxu0 %v631
      %667 = vmatprep.subr.mxu0 0.0
      %668 = vmatpush1.msra.mxu0 %v632
      %669 = vmatprep.subr.mxu0 0.0
      %670 = vmatpush1.msra.mxu0 %v633
      %671 = vmatprep.subr.mxu0 0.0
      %672 = vmatpush1.msra.mxu0 %v634
      %673 = vmatprep.subr.mxu0 0.0
      %674 = vmatpush1.msra.mxu0 %v635
      %675 = vmatprep.subr.mxu0 0.0
      %676 = vmatpush1.msra.mxu0 %v636
      %677 = vmatprep.subr.mxu0 0.0
      %678 = vmatpush1.msra.mxu0 %v637
      %679 = vmatprep.subr.mxu0 0.0
      %680 = vmatpush1.msra.mxu0 %v638
      %681 = vmatprep.subr.mxu0 0.0
      %682 = vmatpush1.msra.mxu0 %v639
      %683 = vmatprep.subr.mxu0 0.0
      %684 = vmatpush1.msra.mxu0 %v640
      %685 = vmatprep.subr.mxu0 0.0
      %686 = vmatpush1.msra.mxu0 %v641
      %687 = vmatprep.subr.mxu0 0.0
      %688 = vmatpush1.msra.mxu0 %v642
      %689 = vmatprep.subr.mxu0 0.0
      %690 = vmatpush1.msra.mxu0 0.0
      %691 = vmatprep.subr.mxu0 0.0
      %692 = vmatpush1.msra.mxu0 0.0
      %693 = vmatprep.subr.mxu0 0.0
      %694 = vmatpush1.msra.mxu0 0.0
      %695 = vmatprep.subr.mxu0 0.0
      %696 = vmatpush1.msra.mxu0 0.0
      %697 = vmatprep.subr.mxu0 0.0
      %698 = vmatpush1.msra.mxu0 0.0
      %699 = vmatprep.subr.mxu0 0.0
      %700 = vmatpush1.msra.mxu0 0.0
      %701 = vmatprep.subr.mxu0 0.0
      %702 = vmatpush1.msra.mxu0 0.0
      %703 = vmatprep.subr.mxu0 0.0
      %704 = vmatpush1.msra.mxu0 0.0
      %705 = vmatprep.subr.mxu0 0.0
      %706 = vmatpush1.msra.mxu0 0.0
      %707 = vmatprep.subr.mxu0 0.0
      %708 = vmatpush1.msra.mxu0 0.0
      %709 = vmatprep.subr.mxu0 0.0
      %710 = vmatpush1.msra.mxu0 0.0
      %711 = vmatprep.subr.mxu0 0.0
      %712 = vmatpush1.msra.mxu0 0.0
      %713 = vmatprep.mubr.f32.mxu0 %v644
      %714 = vmatmul.mubr.f32.gmra.mrb[0].mxu0 %v620
      %v715 = vpop.f32.mrb[0].mxu0
      %v716 = vadd.f32 0.0, %v715
      %v717 = vpop.f32.mrb[0].mxu0
      %718 = vmatprep.mubr.f32.mxu0 %v647
      %719 = vmatmul.mubr.f32.gmra.mrb[0].mxu0 %v621
      %v720 = vpop.f32.mrb[0].mxu0
      %v721 = vadd.f32 0.0, %v720
      %v722 = vpop.f32.mrb[0].mxu0
      %723 = vdwg.mxu0
      %s724 = scalar_lea.vmem %s2, 2
      %v725 = vld [vmem:[%s724] sm:$0x1]
      %v727 = vlaneseq
      %v728 = vshrl.u32 %v727, 7
      %v729 = vsub.s32 0, %v728
      %v730 = vrot.slane %v725, %v729
      %v732 = vmul.f32 %v716, %v730
      %v733 = vmul.f32 %v721, %v730
      %s734 = scalar_lea.vmem %s3, 2
      %v735 = vld [vmem:[%s734] sm:$0x1]
      %v737 = vlaneseq
      %v738 = vshrl.u32 %v737, 7
      %v739 = vsub.s32 0, %v738
      %v740 = vrot.slane %v735, %v739
      %v742 = vadd.f32 %v732, %v740
      %v743 = vadd.f32 %v733, %v740
      %v744 = vmax.f32 %v742, 0.0
      %v745 = vmax.f32 %v743, 0.0
      %746 = vst.msk [vmem:[%s197] sm:$0xff] %vm198, %v744
      %747 = vst.msk [vmem:[%s197 + $0x8] sm:$0xff] %vm198, %v745
      %p748 = scmp.lt.s32.totalorder %s15, 1
      %s749 = scalar_select %p748, %s15, 1
      %s750 = smul.addr %s749, 2
      %s751 = smul.addr %s750, 8
      %s752 = scalar_lea.vmem %s4, %s751
      // Predicated region
      $region37: #{encoder_forward.2} parent=35 // pred_check
        %p753 = pneg %p122
      $region38: #{encoder_forward.2} parent=35 // pred_check_branch
        %755 = sbr.rel (%p753) target = $region40
      $region39: #{encoder_forward.2} parent=35 // pred_region
        _
      $region40: #{encoder_forward.2} parent=35 // pred_fallthru
        _
    $region36: #{encoder_forward.2} parent=5 // pred_fallthru
      _
    %p756 = scmp.le.s32.totalorder 2, %s10
    // Predicated region
    $region41: #{encoder_forward.2} parent=5 // pred_check
      %p757 = pneg %p756
    $region42: #{encoder_forward.2} parent=5 // pred_check_branch
      %759 = sbr.rel (%p757) target = $region44
    $region43: #{encoder_forward.2} parent=5 // pred_region
      %s760 = ssub.s32 %s10, 2
      // Predicated region
      $region45: #{encoder_forward.2} parent=43 // pred_check
        %p761 = pneg %p128
      $region46: #{encoder_forward.2} parent=43 // pred_check_branch
        %763 = sbr.rel (%p761) target = $region48
      $region47: #{encoder_forward.2} parent=43 // pred_region
        %p764 = scmp.lt.s32.totalorder %s16, 1
        %s765 = scalar_select %p764, %s16, 1
        %s766 = smul.addr %s765, 2
        %s767 = smul.addr %s766, 8
        %s768 = scalar_lea.vmem %s4, %s767
      $region48: #{encoder_forward.2} parent=43 // pred_fallthru
        _
    $region44: #{encoder_forward.2} parent=5 // pred_fallthru
      _
  $region6: #{encoder_forward.2} parent=0 // loop_footer
    %s14 = sadd.s32 1, %s10
  $region7: #{encoder_forward.2} parent=0 // loop_footer_branch
    %9 = sbr.rel target = $region3
  $region8: #{encoder_forward.2} parent=0 // loop_exit
    _

// kernel: encoder_forward.3
$region0: #{encoder_forward.3}
  #allocation0 [shape = 'u32[]', space=smem, size = 0x4, offset = 0x4, fixed_abs, tag = 'smem constant byte address 0x4 - core index']
  #allocation1 [shape = 'u32[144,128]{1,0:T(1,128)}', space=vmem, size = 0x12000, scoped, tag = 'internal scratch']
  #allocation2 [shape = 'f32[1,16]{1,0:T(1,128)}', space=vmem, size = 0x200, scoped, tag = 'scratch operand']
  #allocation3 [shape = 'f32[1,16]{1,0:T(1,128)}', space=vmem, size = 0x200, scoped, tag = 'scratch operand']
  #allocation4 [shape = 'f32[1,16]{1,0:T(1,128)}', space=vmem, size = 0x200, scoped, tag = 'scratch operand']
  #allocation5 [shape = 'f32[1,16]{1,0:T(1,128)}', space=vmem, size = 0x200, scoped, tag = 'scratch operand']
  #allocation6 [shape = 'f32[16,1,64]{2,1,0:T(1,128)}', space=vmem, size = 0x2000, scoped, tag = 'scratch operand']
  #allocation7 [shape = 'f32[16,1,64]{2,1,0:T(1,128)}', space=vmem, size = 0x2000, scoped, tag = 'scratch operand']
  #allocation8 [shape = 'f32[16,1,16]{2,1,0:T(1,128)}', space=vmem, size = 0x2000, scoped, tag = 'scratch operand']
  #allocation9 [shape = 'f32[16,1,16]{2,1,0:T(1,128)}', space=vmem, size = 0x2000, scoped, tag = 'scratch operand']
  %s0 = inlined_call_operand.vmem [shape: s32[2,1], index: 0, kind: input, shape index: {}]
  %s1 = inlined_call_operand.vmem [shape: f32[2,16,32], index: 1, kind: input, shape index: {}, may-alias: {1,2}]
  %s2 = inlined_call_operand.vmem [shape: f32[2,16,32], index: 2, kind: input, shape index: {}, may-alias: {1,2}]
  %s3 = inlined_call_operand.vmem [shape: f32[32,64], index: 3, kind: input, shape index: {}]
  %s4 = inlined_call_operand.vmem [shape: f32[32,64], index: 4, kind: input, shape index: {}]
  %s5 = inlined_call_operand.vmem [shape: f32[1,64], index: 5, kind: input, shape index: {}]
  %s6 = inlined_call_operand.vmem [shape: f32[1,64], index: 6, kind: input, shape index: {}]
  %s7 = inlined_call_operand.vmem [shape: f32[16,64], index: 7, kind: input, shape index: {}]
  %s8 = inlined_call_operand.vmem [shape: f32[16,64], index: 8, kind: input, shape index: {}]
  %s9 = inlined_call_operand.vmem [shape: f32[2,16,16], index: 9, kind: output, shape index: {0}]
  %s10 = inlined_call_operand.vmem [shape: f32[2,16,16], index: 10, kind: output, shape index: {1}]
  %11 = xla_tuple %s9, %s10
  %s12 = sld [smem:[#allocation0]]
  $region81: #{encoder_forward.3} parent=0
    _
  %s14 = ssub.s32 1, %s12
  %s15 = scalar_select 0, %s14, %s12
  loop: start=0, step=1, limit=4
  $region2: #{encoder_forward.3} parent=0 // loop_pre_header
    _
  $region3: #{encoder_forward.3} parent=0 // loop_header
    %s17 = sphi 0, %s21
    %p18 = scmp.ge.s32.totalorder %s17, 4
    %s24 = sphi 0, %s36
    %s25 = sphi 0, %s32
    %s26 = sphi 0, %s24
    %s27 = sphi 0, %s25
    %s28 = sphi 0, %s26
    %s29 = sphi 0, %s27
    %s37 = sphi 0, %s37
    %s39 = sphi 0, %s37
    %s40 = sphi 0, %s39
    %s54 = sphi 0, %s40
    %s62 = sphi 0, %s64
    %s65 = sphi 0, %s62
    %s66 = sphi 0, %s65
    %s82 = sphi 0, %s66
    %s92 = sphi 0, %s94
    %s95 = sphi 0, %s92
    %s96 = sphi 0, %s95
    %s112 = sphi 0, %s96
    %s116 = sphi 0, %s116
    %s118 = sphi 0, %s116
    %s119 = sphi 0, %s118
    %s133 = sphi 0, %s119
    %s137 = sphi 0, %s137
    %s139 = sphi 0, %s137
    %s140 = sphi 0, %s139
    %s154 = sphi 0, %s140
    %s158 = sphi 0, %s158
    %s160 = sphi 0, %s158
    %s161 = sphi 0, %s160
    %s175 = sphi 0, %s161
    %s179 = sphi 0, %s179
    %s181 = sphi 0, %s179
    %s182 = sphi 0, %s181
    %s196 = sphi 0, %s182
    %s200 = sphi 0, %s200
    %s202 = sphi 0, %s200
    %s203 = sphi 0, %s202
    %s217 = sphi 0, %s203
    %s221 = sphi 0, %s221
    %s223 = sphi 0, %s221
    %s224 = sphi 0, %s223
    %s238 = sphi 0, %s224
    %s246 = sphi 0, %s248
    %s249 = sphi 0, %s246
    %s250 = sphi 0, %s249
    %s266 = sphi 0, %s250
    %s276 = sphi 0, %s278
    %s279 = sphi 0, %s276
    %s280 = sphi 0, %s279
    %s296 = sphi 0, %s280
  $region4: #{encoder_forward.3} parent=0 // loop_header_branch
    %20 = sbr.rel (%p18) target = $region8
  $region5: #{encoder_forward.3} parent=0 // loop_body
    %s22 = ssub.s32 %s17, 1
    %s23 = ssub.s32 %s17, 2
    %s30 = sadd.s32 1, %s25
    %p31 = scmp.ge.s32.totalorder %s30, 1
    %s32 = scalar_select %p31, 0, %s30
    %s33 = sadd.s32 1, %s24
    %s34 = scalar_select %p31, %s33, %s24
    %p35 = scmp.ge.s32.totalorder %s34, 2
    %s36 = scalar_select %p35, 0, %s34
    %s38 = sadd.s32 %s37, 1
    %p41 = scmp.eq.s32.totalorder %s17, 1
    %p42 = scmp.ne.s32.totalorder %s37, %s39
    %p43 = scmp.eq.s32.totalorder %s17, 0
    %p44 = por %p42, %p43
    %p45 = scmp.ne.s32.totalorder %s37, %s39
    %p46 = scmp.eq.s32.totalorder %s22, 1
    %p47 = por %p45, %p46
    %p48 = scmp.ne.s32.totalorder %s39, %s40
    %p49 = scmp.eq.s32.totalorder %s22, 0
    %p50 = por %p48, %p49
    %p51 = scmp.ne.s32.totalorder %s39, %s40
    %p52 = scmp.eq.s32.totalorder %s23, 1
    %p53 = por %p51, %p52
    %p55 = scmp.ne.s32.totalorder %s40, %s54
    %p56 = scmp.eq.s32.totalorder %s23, 0
    %p57 = por %p55, %p56
    %s58 = ssub.s32 %s24, %s36
    %s59 = ssub.s32 %s25, %s32
    %s60 = sor.u32 %s58, %s59
    %p61 = scmp.eq.s32.totalorder %s60, 0
    %s63 = sadd.s32 %s62, 1
    %s64 = scalar_select %p61, %s62, %s63
    %p67 = pneg %p61
    %p68 = scmp.eq.s32.totalorder %s17, 1
    %p69 = por %p67, %p68
    %p70 = scmp.ne.s32.totalorder %s62, %s65
    %p71 = scmp.eq.s32.totalorder %s17, 0
    %p72 = por %p70, %p71
    %p73 = scmp.ne.s32.totalorder %s62, %s65
    %p74 = scmp.eq.s32.totalorder %s22, 1
    %p75 = por %p73, %p74
    %p76 = scmp.ne.s32.totalorder %s65, %s66
    %p77 = scmp.eq.s32.totalorder %s22, 0
    %p78 = por %p76, %p77
    %p79 = scmp.ne.s32.totalorder %s65, %s66
    %p80 = scmp.eq.s32.totalorder %s23, 1
    %p81 = por %p79, %p80
    %p83 = scmp.ne.s32.totalorder %s66, %s82
    %p84 = scmp.eq.s32.totalorder %s23, 0
    %p85 = por %p83, %p84
    %s86 = ssub.s32 0, %s25
    %s87 = ssub.s32 0, %s32
    %s88 = ssub.s32 %s24, %s36
    %s89 = ssub.s32 %s86, %s87
    %s90 = sor.u32 %s88, %s89
    %p91 = scmp.eq.s32.totalorder %s90, 0
    %s93 = sadd.s32 %s92, 1
    %s94 = scalar_select %p91, %s92, %s93
    %p97 = pneg %p91
    %p98 = scmp.eq.s32.totalorder %s17, 1
    %p99 = por %p97, %p98
    %p100 = scmp.ne.s32.totalorder %s92, %s95
    %p101 = scmp.eq.s32.totalorder %s17, 0
    %p102 = por %p100, %p101
    %p103 = scmp.ne.s32.totalorder %s92, %s95
    %p104 = scmp.eq.s32.totalorder %s22, 1
    %p105 = por %p103, %p104
    %p106 = scmp.ne.s32.totalorder %s95, %s96
    %p107 = scmp.eq.s32.totalorder %s22, 0
    %p108 = por %p106, %p107
    %p109 = scmp.ne.s32.totalorder %s95, %s96
    %p110 = scmp.eq.s32.totalorder %s23, 1
    %p111 = por %p109, %p110
    %p113 = scmp.ne.s32.totalorder %s96, %s112
    %p114 = scmp.eq.s32.totalorder %s23, 0
    %p115 = por %p113, %p114
    %s117 = sadd.s32 %s116, 1
    %p120 = scmp.eq.s32.totalorder %s17, 1
    %p121 = scmp.ne.s32.totalorder %s116, %s118
    %p122 = scmp.eq.s32.totalorder %s17, 0
    %p123 = por %p121, %p122
    %p124 = scmp.ne.s32.totalorder %s116, %s118
    %p125 = scmp.eq.s32.totalorder %s22, 1
    %p126 = por %p124, %p125
    %p127 = scmp.ne.s32.totalorder %s118, %s119
    %p128 = scmp.eq.s32.totalorder %s22, 0
    %p129 = por %p127, %p128
    %p130 = scmp.ne.s32.totalorder %s118, %s119
    %p131 = scmp.eq.s32.totalorder %s23, 1
    %p132 = por %p130, %p131
    %p134 = scmp.ne.s32.totalorder %s119, %s133
    %p135 = scmp.eq.s32.totalorder %s23, 0
    %p136 = por %p134, %p135
    %s138 = sadd.s32 %s137, 1
    %p141 = scmp.eq.s32.totalorder %s17, 1
    %p142 = scmp.ne.s32.totalorder %s137, %s139
    %p143 = scmp.eq.s32.totalorder %s17, 0
    %p144 = por %p142, %p143
    %p145 = scmp.ne.s32.totalorder %s137, %s139
    %p146 = scmp.eq.s32.totalorder %s22, 1
    %p147 = por %p145, %p146
    %p148 = scmp.ne.s32.totalorder %s139, %s140
    %p149 = scmp.eq.s32.totalorder %s22, 0
    %p150 = por %p148, %p149
    %p151 = scmp.ne.s32.totalorder %s139, %s140
    %p152 = scmp.eq.s32.totalorder %s23, 1
    %p153 = por %p151, %p152
    %p155 = scmp.ne.s32.totalorder %s140, %s154
    %p156 = scmp.eq.s32.totalorder %s23, 0
    %p157 = por %p155, %p156
    %s159 = sadd.s32 %s158, 1
    %p162 = scmp.eq.s32.totalorder %s17, 1
    %p163 = scmp.ne.s32.totalorder %s158, %s160
    %p164 = scmp.eq.s32.totalorder %s17, 0
    %p165 = por %p163, %p164
    %p166 = scmp.ne.s32.totalorder %s158, %s160
    %p167 = scmp.eq.s32.totalorder %s22, 1
    %p168 = por %p166, %p167
    %p169 = scmp.ne.s32.totalorder %s160, %s161
    %p170 = scmp.eq.s32.totalorder %s22, 0
    %p171 = por %p169, %p170
    %p172 = scmp.ne.s32.totalorder %s160, %s161
    %p173 = scmp.eq.s32.totalorder %s23, 1
    %p174 = por %p172, %p173
    %p176 = scmp.ne.s32.totalorder %s161, %s175
    %p177 = scmp.eq.s32.totalorder %s23, 0
    %p178 = por %p176, %p177
    %s180 = sadd.s32 %s179, 1
    %p183 = scmp.eq.s32.totalorder %s17, 1
    %p184 = scmp.ne.s32.totalorder %s179, %s181
    %p185 = scmp.eq.s32.totalorder %s17, 0
    %p186 = por %p184, %p185
    %p187 = scmp.ne.s32.totalorder %s179, %s181
    %p188 = scmp.eq.s32.totalorder %s22, 1
    %p189 = por %p187, %p188
    %p190 = scmp.ne.s32.totalorder %s181, %s182
    %p191 = scmp.eq.s32.totalorder %s22, 0
    %p192 = por %p190, %p191
    %p193 = scmp.ne.s32.totalorder %s181, %s182
    %p194 = scmp.eq.s32.totalorder %s23, 1
    %p195 = por %p193, %p194
    %p197 = scmp.ne.s32.totalorder %s182, %s196
    %p198 = scmp.eq.s32.totalorder %s23, 0
    %p199 = por %p197, %p198
    %s201 = sadd.s32 %s200, 1
    %p204 = scmp.eq.s32.totalorder %s17, 1
    %p205 = scmp.ne.s32.totalorder %s200, %s202
    %p206 = scmp.eq.s32.totalorder %s17, 0
    %p207 = por %p205, %p206
    %p208 = scmp.ne.s32.totalorder %s200, %s202
    %p209 = scmp.eq.s32.totalorder %s22, 1
    %p210 = por %p208, %p209
    %p211 = scmp.ne.s32.totalorder %s202, %s203
    %p212 = scmp.eq.s32.totalorder %s22, 0
    %p213 = por %p211, %p212
    %p214 = scmp.ne.s32.totalorder %s202, %s203
    %p215 = scmp.eq.s32.totalorder %s23, 1
    %p216 = por %p214, %p215
    %p218 = scmp.ne.s32.totalorder %s203, %s217
    %p219 = scmp.eq.s32.totalorder %s23, 0
    %p220 = por %p218, %p219
    %s222 = sadd.s32 %s221, 1
    %p225 = scmp.eq.s32.totalorder %s17, 1
    %p226 = scmp.ne.s32.totalorder %s221, %s223
    %p227 = scmp.eq.s32.totalorder %s17, 0
    %p228 = por %p226, %p227
    %p229 = scmp.ne.s32.totalorder %s221, %s223
    %p230 = scmp.eq.s32.totalorder %s22, 1
    %p231 = por %p229, %p230
    %p232 = scmp.ne.s32.totalorder %s223, %s224
    %p233 = scmp.eq.s32.totalorder %s22, 0
    %p234 = por %p232, %p233
    %p235 = scmp.ne.s32.totalorder %s223, %s224
    %p236 = scmp.eq.s32.totalorder %s23, 1
    %p237 = por %p235, %p236
    %p239 = scmp.ne.s32.totalorder %s224, %s238
    %p240 = scmp.eq.s32.totalorder %s23, 0
    %p241 = por %p239, %p240
    %s242 = ssub.s32 %s24, %s36
    %s243 = ssub.s32 %s25, %s32
    %s244 = sor.u32 %s242, %s243
    %p245 = scmp.eq.s32.totalorder %s244, 0
    %s247 = sadd.s32 %s246, 1
    %s248 = scalar_select %p245, %s246, %s247
    %p251 = pneg %p245
    %p252 = scmp.eq.s32.totalorder %s17, 1
    %p253 = por %p251, %p252
    %p254 = scmp.ne.s32.totalorder %s246, %s249
    %p255 = scmp.eq.s32.totalorder %s17, 0
    %p256 = por %p254, %p255
    %p257 = scmp.ne.s32.totalorder %s246, %s249
    %p258 = scmp.eq.s32.totalorder %s22, 1
    %p259 = por %p257, %p258
    %p260 = scmp.ne.s32.totalorder %s249, %s250
    %p261 = scmp.eq.s32.totalorder %s22, 0
    %p262 = por %p260, %p261
    %p263 = scmp.ne.s32.totalorder %s249, %s250
    %p264 = scmp.eq.s32.totalorder %s23, 1
    %p265 = por %p263, %p264
    %p267 = scmp.ne.s32.totalorder %s250, %s266
    %p268 = scmp.eq.s32.totalorder %s23, 0
    %p269 = por %p267, %p268
    %s270 = ssub.s32 0, %s25
    %s271 = ssub.s32 0, %s32
    %s272 = ssub.s32 %s24, %s36
    %s273 = ssub.s32 %s270, %s271
    %s274 = sor.u32 %s272, %s273
    %p275 = scmp.eq.s32.totalorder %s274, 0
    %s277 = sadd.s32 %s276, 1
    %s278 = scalar_select %p275, %s276, %s277
    %p281 = pneg %p275
    %p282 = scmp.eq.s32.totalorder %s17, 1
    %p283 = por %p281, %p282
    %p284 = scmp.ne.s32.totalorder %s276, %s279
    %p285 = scmp.eq.s32.totalorder %s17, 0
    %p286 = por %p284, %p285
    %p287 = scmp.ne.s32.totalorder %s276, %s279
    %p288 = scmp.eq.s32.totalorder %s22, 1
    %p289 = por %p287, %p288
    %p290 = scmp.ne.s32.totalorder %s279, %s280
    %p291 = scmp.eq.s32.totalorder %s22, 0
    %p292 = por %p290, %p291
    %p293 = scmp.ne.s32.totalorder %s279, %s280
    %p294 = scmp.eq.s32.totalorder %s23, 1
    %p295 = por %p293, %p294
    %p297 = scmp.ne.s32.totalorder %s280, %s296
    %p298 = scmp.eq.s32.totalorder %s23, 0
    %p299 = por %p297, %p298
    %p300 = scmp.le.s32.totalorder 1, %s17
    %p301 = scmp.lt.s32.totalorder %s17, 3
    %p302 = pnand %p300, %p301
    %p303 = pneg %p302
    // Predicated region
    $region9: #{encoder_forward.3} parent=5 // pred_check
      _
    $region10: #{encoder_forward.3} parent=5 // pred_check_branch
      %305 = sbr.rel (%p302) target = $region12
    $region11: #{encoder_forward.3} parent=5 // pred_region
      %s306 = ssub.s32 %s17, 1
      // Predicated region
      $region13: #{encoder_forward.3} parent=11 // pred_check
        %p307 = pneg %p50
      $region14: #{encoder_forward.3} parent=11 // pred_check_branch
        %309 = sbr.rel (%p307) target = $region16
      $region15: #{encoder_forward.3} parent=11 // pred_region
        _
      $region16: #{encoder_forward.3} parent=11 // pred_fallthru
        _
      // Predicated region
      $region17: #{encoder_forward.3} parent=11 // pred_check
        %p310 = pneg %p129
      $region18: #{encoder_forward.3} parent=11 // pred_check_branch
        %312 = sbr.rel (%p310) target = $region20
      $region19: #{encoder_forward.3} parent=11 // pred_region
        _
      $region20: #{encoder_forward.3} parent=11 // pred_fallthru
        _
      // Predicated region
      $region21: #{encoder_forward.3} parent=11 // pred_check
        %p313 = pneg %p150
      $region22: #{encoder_forward.3} parent=11 // pred_check_branch
        %315 = sbr.rel (%p313) target = $region24
      $region23: #{encoder_forward.3} parent=11 // pred_region
        _
      $region24: #{encoder_forward.3} parent=11 // pred_fallthru
        _
      // Predicated region
      $region25: #{encoder_forward.3} parent=11 // pred_check
        %p316 = pneg %p171
      $region26: #{encoder_forward.3} parent=11 // pred_check_branch
        %318 = sbr.rel (%p316) target = $region28
      $region27: #{encoder_forward.3} parent=11 // pred_region
        _
      $region28: #{encoder_forward.3} parent=11 // pred_fallthru
        _
      // Predicated region
      $region29: #{encoder_forward.3} parent=11 // pred_check
        %p319 = pneg %p192
      $region30: #{encoder_forward.3} parent=11 // pred_check_branch
        %321 = sbr.rel (%p319) target = $region32
      $region31: #{encoder_forward.3} parent=11 // pred_region
        _
      $region32: #{encoder_forward.3} parent=11 // pred_fallthru
        _
      // Predicated region
      $region33: #{encoder_forward.3} parent=11 // pred_check
        %p322 = pneg %p213
      $region34: #{encoder_forward.3} parent=11 // pred_check_branch
        %324 = sbr.rel (%p322) target = $region36
      $region35: #{encoder_forward.3} parent=11 // pred_region
        _
      $region36: #{encoder_forward.3} parent=11 // pred_fallthru
        _
      // Predicated region
      $region37: #{encoder_forward.3} parent=11 // pred_check
        %p325 = pneg %p234
      $region38: #{encoder_forward.3} parent=11 // pred_check_branch
        %327 = sbr.rel (%p325) target = $region40
      $region39: #{encoder_forward.3} parent=11 // pred_region
        _
      $region40: #{encoder_forward.3} parent=11 // pred_fallthru
        _
    $region12: #{encoder_forward.3} parent=5 // pred_fallthru
      _
    %p328 = scmp.lt.s32.totalorder %s17, 2
    // Predicated region
    $region41: #{encoder_forward.3} parent=5 // pred_check
      %p329 = pneg %p328
    $region42: #{encoder_forward.3} parent=5 // pred_check_branch
      %331 = sbr.rel (%p329) target = $region44
    $region43: #{encoder_forward.3} parent=5 // pred_region
      // Predicated region
      $region45: #{encoder_forward.3} parent=43 // pred_check
        %p332 = pneg %p72
      $region46: #{encoder_forward.3} parent=43 // pred_check_branch
        %334 = sbr.rel (%p332) target = $region48
      $region47: #{encoder_forward.3} parent=43 // pred_region
        %s335 = smul.u32 2, %s25
        %p336 = scmp.lt.s32.totalorder %s24, 1
        %s337 = scalar_select %p336, %s24, 1
        %p338 = scmp.lt.s32.totalorder %s335, 1
        %s339 = scalar_select %p338, %s335, 1
        %s340 = smul.addr %s337, 2
        %s341 = sadd.s32 %s339, %s340
        %s342 = smul.addr %s341, 8
        %s343 = scalar_lea.vmem %s1, %s342
        %s344 = smul.u32 2, %s25
      $region48: #{encoder_forward.3} parent=43 // pred_fallthru
        _
      // Predicated region
      $region49: #{encoder_forward.3} parent=43 // pred_check
        %p345 = pneg %p102
      $region50: #{encoder_forward.3} parent=43 // pred_check_branch
        %347 = sbr.rel (%p345) target = $region52
      $region51: #{encoder_forward.3} parent=43 // pred_region
        %s348 = ssub.s32 0, %s25
        %s349 = smul.u32 2, %s348
        %p350 = scmp.lt.s32.totalorder %s24, 1
        %s351 = scalar_select %p350, %s24, 1
        %p352 = scmp.lt.s32.totalorder %s349, 1
        %s353 = scalar_select %p352, %s349, 1
        %s354 = smul.addr %s351, 2
        %s355 = sadd.s32 %s353, %s354
        %s356 = smul.addr %s355, 8
        %s357 = scalar_lea.vmem %s2, %s356
        %s358 = ssub.s32 0, %s25
        %s359 = smul.u32 2, %s358
      $region52: #{encoder_forward.3} parent=43 // pred_fallthru
        _
    $region44: #{encoder_forward.3} parent=5 // pred_fallthru
      _
    %p360 = scmp.le.s32.totalorder 1, %s17
    %p361 = scmp.lt.s32.totalorder %s17, 3
    %p362 = pnand %p360, %p361
    %p363 = pneg %p362
    // Predicated region
    $region53: #{encoder_forward.3} parent=5 // pred_check
      _
    $region54: #{encoder_forward.3} parent=5 // pred_check_branch
      %365 = sbr.rel (%p362) target = $region56
    $region55: #{encoder_forward.3} parent=5 // pred_region
      %s366 = ssub.s32 %s17, 1
      %p367 = pneg %p50
      %p368 = pneg %p47
      %s369 = smul.u32 2, %s27
      %p370 = scmp.lt.s32.totalorder %s26, 1
      %s371 = scalar_select %p370, %s26, 1
      %p372 = scmp.lt.s32.totalorder %s369, 1
      %s373 = scalar_select %p372, %s369, 1
      %s374 = smul.addr %s371, 2
      %s375 = sadd.s32 %s373, %s374
      %s376 = smul.addr %s375, 8
      %s377 = scalar_lea.vmem %s1, %s376
      %p378 = pneg %p78
      %p379 = pneg %p75
      %s380 = ssub.s32 0, %s27
      %s381 = smul.u32 2, %s380
      %p382 = scmp.lt.s32.totalorder %s26, 1
      %s383 = scalar_select %p382, %s26, 1
      %p384 = scmp.lt.s32.totalorder %s381, 1
      %s385 = scalar_select %p384, %s381, 1
      %s386 = smul.addr %s383, 2
      %s387 = sadd.s32 %s385, %s386
      %s388 = smul.addr %s387, 8
      %s389 = scalar_lea.vmem %s2, %s388
      %p390 = pneg %p108
      %p391 = pneg %p105
      %p392 = pneg %p129
      %p393 = pneg %p126
      %p394 = pneg %p150
      %p395 = pneg %p147
      %p396 = pneg %p171
      %p397 = pneg %p168
      %p398 = pneg %p192
      %p399 = pneg %p189
      %p400 = pneg %p213
      %p401 = pneg %p210
      %p402 = pneg %p234
      %p403 = pneg %p231
      %p404 = pneg %p262
      %p405 = pneg %p259
      %s406 = smul.u32 2, %s27
      %p407 = scmp.lt.s32.totalorder %s26, 1
      %s408 = scalar_select %p407, %s26, 1
      %p409 = scmp.lt.s32.totalorder %s406, 1
      %s410 = scalar_select %p409, %s406, 1
      %s411 = smul.addr %s408, 2
      %s412 = sadd.s32 %s410, %s411
      %s413 = smul.addr %s412, 8
      %s414 = scalar_lea.vmem %s9, %s413
      %p415 = pneg %p292
      %p416 = pneg %p289
      %s417 = ssub.s32 0, %s27
      %s418 = smul.u32 2, %s417
      %p419 = scmp.lt.s32.totalorder %s26, 1
      %s420 = scalar_select %p419, %s26, 1
      %p421 = scmp.lt.s32.totalorder %s418, 1
      %s422 = scalar_select %p421, %s418, 1
      %s423 = smul.addr %s420, 2
      %s424 = sadd.s32 %s422, %s423
      %s425 = smul.addr %s424, 8
      %s426 = scalar_lea.vmem %s10, %s425
      %s427 = smul.u32 2, %s27
      %p428 = scmp.lt.s32.totalorder %s26, 1
      %s429 = scalar_select %p428, %s26, 1
      %p430 = scmp.lt.s32.totalorder %s427, 1
      %s431 = scalar_select %p430, %s427, 1
      %s432 = smul.addr %s429, 2
      %s433 = sadd.s32 %s431, %s432
      %s434 = smul.addr %s433, 8
      %s435 = scalar_lea.vmem %s1, %s434
      %s436 = smul.u32 2, %s27
      %s437 = ssub.s32 0, %s27
      %s438 = smul.u32 2, %s437
      %p439 = scmp.lt.s32.totalorder %s26, 1
      %s440 = scalar_select %p439, %s26, 1
      %p441 = scmp.lt.s32.totalorder %s438, 1
      %s442 = scalar_select %p441, %s438, 1
      %s443 = smul.addr %s440, 2
      %s444 = sadd.s32 %s442, %s443
      %s445 = smul.addr %s444, 8
      %s446 = scalar_lea.vmem %s2, %s445
      %s447 = ssub.s32 0, %s27
      %s448 = smul.u32 2, %s447
      %s449 = smul.u32 2, %s27
      %p450 = scmp.lt.s32.totalorder %s26, 1
      %s451 = scalar_select %p450, %s26, 1
      %p452 = scmp.lt.s32.totalorder %s449, 1
      %s453 = scalar_select %p452, %s449, 1
      %s454 = smul.addr %s451, 2
      %s455 = sadd.s32 %s453, %s454
      %s456 = smul.addr %s455, 8
      %s457 = scalar_lea.vmem %s9, %s456
      %s458 = smul.u32 2, %s27
      %s459 = ssub.s32 0, %s27
      %s460 = smul.u32 2, %s459
      %p461 = scmp.lt.s32.totalorder %s26, 1
      %s462 = scalar_select %p461, %s26, 1
      %p463 = scmp.lt.s32.totalorder %s460, 1
      %s464 = scalar_select %p463, %s460, 1
      %s465 = smul.addr %s462, 2
      %s466 = sadd.s32 %s464, %s465
      %s467 = smul.addr %s466, 8
      %s468 = scalar_lea.vmem %s10, %s467
      %s469 = ssub.s32 0, %s27
      %s470 = smul.u32 2, %s469
      %p471 = scmp.eq.s32.totalorder %s27, 0
      // Predicated region
      $region57: #{encoder_forward.3} parent=55 // pred_check
        %p472 = pneg %p471
      $region58: #{encoder_forward.3} parent=55 // pred_check_branch
        %474 = sbr.rel (%p472) target = $region60
      $region59: #{encoder_forward.3} parent=55 // pred_region
        %vm475 = vcmask 122880
        %476 = vst.msk [vmem:[#allocation2] sm:$0x1] %vm475, 0.0
        %477 = vst.msk [vmem:[#allocation3] sm:$0x1] %vm475, 0.0
        %478 = vst.msk [vmem:[#allocation4] sm:$0x1] %vm475, 0.0
        %479 = vst.msk [vmem:[#allocation5] sm:$0x1] %vm475, 0.0
      $region60: #{encoder_forward.3} parent=55 // pred_fallthru
        _
      %v480 = vld [vmem:[%s435] sm:$0xff]
      %v481 = vld [vmem:[%s435 + $0x8] sm:$0xff]
      %v482 = vcombine.high %v480, 0.0
      %v484 = vunpack.c.l.s4 1983009808
      %v485 = vunpack.c.0.s8 %v484
      %v486 = vlaneseq
      %v487 = vshrl.u32 %v486, 7
      %v488 = vsub.s32 %v485, %v487
      %v489 = vrot.slane %v480, %v488
      %v491 = vunpack.c.l.s4 1983009808
      %v492 = vunpack.c.0.s8 %v491
      %v493 = vlaneseq
      %v494 = vshrl.u32 %v493, 7
      %v495 = vsub.s32 %v492, %v494
      %v496 = vrot.slane %v482, %v495
      %v497 = vcombine.high %v489, 0.0
      %v499 = vunpack.c.l.s4 1934713408
      %v500 = vunpack.c.0.s8 %v499
      %v501 = vlaneseq
      %v502 = vshrl.u32 %v501, 7
      %v503 = vsub.s32 %v500, %v502
      %v504 = vrot.slane %v489, %v503
      %v506 = vunpack.c.l.s4 1934713408
      %v507 = vunpack.c.0.s8 %v506
      %v508 = vlaneseq
      %v509 = vshrl.u32 %v508, 7
      %v510 = vsub.s32 %v507, %v509
      %v511 = vrot.slane %v497, %v510
      %v512 = vcombine.high %v496, 0.0
      %v514 = vunpack.c.l.s4 1934713408
      %v515 = vunpack.c.0.s8 %v514
      %v516 = vlaneseq
      %v517 = vshrl.u32 %v516, 7
      %v518 = vsub.s32 %v515, %v517
      %v519 = vrot.slane %v496, %v518
      %v521 = vunpack.c.l.s4 1934713408
      %v522 = vunpack.c.0.s8 %v521
      %v523 = vlaneseq
      %v524 = vshrl.u32 %v523, 7
      %v525 = vsub.s32 %v522, %v524
      %v526 = vrot.slane %v512, %v525
      %v527 = vcombine.high %v504, 0.0
      %v528 = vcombine.high %v511, 0.0
      %v529 = vcombine.high %v519, 0.0
      %v530 = vcombine.high %v526, 0.0
      %v531 = vcombine.high %v481, 0.0
      %v533 = vunpack.c.l.s4 1983009808
      %v534 = vunpack.c.0.s8 %v533
      %v535 = vlaneseq
      %v536 = vshrl.u32 %v535, 7
      %v537 = vsub.s32 %v534, %v536
      %v538 = vrot.slane %v481, %v537
      %v540 = vunpack.c.l.s4 1983009808
      %v541 = vunpack.c.0.s8 %v540
      %v542 = vlaneseq
      %v543 = vshrl.u32 %v542, 7
      %v544 = vsub.s32 %v541, %v543
      %v545 = vrot.slane %v531, %v544
      %v546 = vcombine.high %v538, 0.0
      %v548 = vunpack.c.l.s4 1934713408
      %v549 = vunpack.c.0.s8 %v548
      %v550 = vlaneseq
      %v551 = vshrl.u32 %v550, 7
      %v552 = vsub.s32 %v549, %v551
      %v553 = vrot.slane %v538, %v552
      %v555 = vunpack.c.l.s4 1934713408
      %v556 = vunpack.c.0.s8 %v555
      %v557 = vlaneseq
      %v558 = vshrl.u32 %v557, 7
      %v559 = vsub.s32 %v556, %v558
      %v560 = vrot.slane %v546, %v559
      %v561 = vcombine.high %v545, 0.0
      %v563 = vunpack.c.l.s4 1934713408
      %v564 = vunpack.c.0.s8 %v563
      %v565 = vlaneseq
      %v566 = vshrl.u32 %v565, 7
      %v567 = vsub.s32 %v564, %v566
      %v568 = vrot.slane %v545, %v567
      %v570 = vunpack.c.l.s4 1934713408
      %v571 = vunpack.c.0.s8 %v570
      %v572 = vlaneseq
      %v573 = vshrl.u32 %v572, 7
      %v574 = vsub.s32 %v571, %v573
      %v575 = vrot.slane %v561, %v574
      %v576 = vcombine.high %v553, 0.0
      %v577 = vcombine.high %v560, 0.0
      %v578 = vcombine.high %v568, 0.0
      %v579 = vcombine.high %v575, 0.0
      %v580 = vld [vmem:[%s446] sm:$0xff]
      %v581 = vld [vmem:[%s446 + $0x8] sm:$0xff]
      %v582 = vcombine.high %v580, 0.0
      %v584 = vunpack.c.l.s4 1983009808
      %v585 = vunpack.c.0.s8 %v584
      %v586 = vlaneseq
      %v587 = vshrl.u32 %v586, 7
      %v588 = vsub.s32 %v585, %v587
      %v589 = vrot.slane %v580, %v588
      %v591 = vunpack.c.l.s4 1983009808
      %v592 = vunpack.c.0.s8 %v591
      %v593 = vlaneseq
      %v594 = vshrl.u32 %v593, 7
      %v595 = vsub.s32 %v592, %v594
      %v596 = vrot.slane %v582, %v595
      %v597 = vcombine.high %v589, 0.0
      %v599 = vunpack.c.l.s4 1934713408
      %v600 = vunpack.c.0.s8 %v599
      %v601 = vlaneseq
      %v602 = vshrl.u32 %v601, 7
      %v603 = vsub.s32 %v600, %v602
      %v604 = vrot.slane %v589, %v603
      %v606 = vunpack.c.l.s4 1934713408
      %v607 = vunpack.c.0.s8 %v606
      %v608 = vlaneseq
      %v609 = vshrl.u32 %v608, 7
      %v610 = vsub.s32 %v607, %v609
      %v611 = vrot.slane %v597, %v610
      %v612 = vcombine.high %v596, 0.0
      %v614 = vunpack.c.l.s4 1934713408
      %v615 = vunpack.c.0.s8 %v614
      %v616 = vlaneseq
      %v617 = vshrl.u32 %v616, 7
      %v618 = vsub.s32 %v615, %v617
      %v619 = vrot.slane %v596, %v618
      %v621 = vunpack.c.l.s4 1934713408
      %v622 = vunpack.c.0.s8 %v621
      %v623 = vlaneseq
      %v624 = vshrl.u32 %v623, 7
      %v625 = vsub.s32 %v622, %v624
      %v626 = vrot.slane %v612, %v625
      %v627 = vcombine.high %v604, 0.0
      %v628 = vcombine.high %v611, 0.0
      %v629 = vcombine.high %v619, 0.0
      %v630 = vcombine.high %v626, 0.0
      %v631 = vcombine.high %v581, 0.0
      %v633 = vunpack.c.l.s4 1983009808
      %v634 = vunpack.c.0.s8 %v633
      %v635 = vlaneseq
      %v636 = vshrl.u32 %v635, 7
      %v637 = vsub.s32 %v634, %v636
      %v638 = vrot.slane %v581, %v637
      %v640 = vunpack.c.l.s4 1983009808
      %v641 = vunpack.c.0.s8 %v640
      %v642 = vlaneseq
      %v643 = vshrl.u32 %v642, 7
      %v644 = vsub.s32 %v641, %v643
      %v645 = vrot.slane %v631, %v644
      %v646 = vcombine.high %v638, 0.0
      %v648 = vunpack.c.l.s4 1934713408
      %v649 = vunpack.c.0.s8 %v648
      %v650 = vlaneseq
      %v651 = vshrl.u32 %v650, 7
      %v652 = vsub.s32 %v649, %v651
      %v653 = vrot.slane %v638, %v652
      %v655 = vunpack.c.l.s4 1934713408
      %v656 = vunpack.c.0.s8 %v655
      %v657 = vlaneseq
      %v658 = vshrl.u32 %v657, 7
      %v659 = vsub.s32 %v656, %v658
      %v660 = vrot.slane %v646, %v659
      %v661 = vcombine.high %v645, 0.0
      %v663 = vunpack.c.l.s4 1934713408
      %v664 = vunpack.c.0.s8 %v663
      %v665 = vlaneseq
      %v666 = vshrl.u32 %v665, 7
      %v667 = vsub.s32 %v664, %v666
      %v668 = vrot.slane %v645, %v667
      %v670 = vunpack.c.l.s4 1934713408
      %v671 = vunpack.c.0.s8 %v670
      %v672 = vlaneseq
      %v673 = vshrl.u32 %v672, 7
      %v674 = vsub.s32 %v671, %v673
      %v675 = vrot.slane %v661, %v674
      %v676 = vcombine.high %v653, 0.0
      %v677 = vcombine.high %v660, 0.0
      %v678 = vcombine.high %v668, 0.0
      %v679 = vcombine.high %v675, 0.0
      %v680 = vld [vmem:[%s3] sm:$0xff]
      %v681 = vld [vmem:[%s3 + $0x8] sm:$0xff]
      %v682 = vld [vmem:[%s3 + $0x10] sm:$0xff]
      %v683 = vld [vmem:[%s3 + $0x18] sm:$0xff]
      %v684 = vld [vmem:[%s5] sm:$0x1]
      %v686 = vlaneseq
      %v687 = vshrl.u32 %v686, 7
      %v688 = vsub.s32 0, %v687
      %v689 = vrot.slane %v684, %v688
      %v707 = vrot.slane %v527, 7
      %vm708 = vcmask 1041409
      %v709 = vsel %vm708, %v707, %v504
      %v710 = vrot.slane %v511, 6
      %vm711 = vcmask 1042434
      %v712 = vsel %vm711, %v710, %v709
      %v713 = vrot.slane %v528, 5
      %vm714 = vcmask 1043459
      %v715 = vsel %vm714, %v713, %v712
      %v716 = vrot.slane %v519, 4
      %vm717 = vcmask 1044484
      %v718 = vsel %vm717, %v716, %v715
      %v719 = vrot.slane %v529, 3
      %vm720 = vcmask 1045509
      %v721 = vsel %vm720, %v719, %v718
      %v722 = vrot.slane %v526, 2
      %vm723 = vcmask 1046534
      %v724 = vsel %vm723, %v722, %v721
      %v725 = vrot.slane %v530, 1
      %vm726 = vcmask 1047559
      %v727 = vsel %vm726, %v725, %v724
      %v728 = vrot.slane %v576, 7
      %v729 = vsel %vm708, %v728, %v553
      %v730 = vrot.slane %v560, 6
      %v731 = vsel %vm711, %v730, %v729
      %v732 = vrot.slane %v577, 5
      %v733 = vsel %vm714, %v732, %v731
      %v734 = vrot.slane %v568, 4
      %v735 = vsel %vm717, %v734, %v733
      %v736 = vrot.slane %v578, 3
      %v737 = vsel %vm720, %v736, %v735
      %v738 = vrot.slane %v575, 2
      %v739 = vsel %vm723, %v738, %v737
      %v740 = vrot.slane %v579, 1
      %v741 = vsel %vm726, %v740, %v739
      %vm742 = vcmask 261120
      %v743 = vsel %vm742, %v727, 0
      %v745 = vsel %vm742, %v741, 0
      %747 = vmatprep.subr.mxu0 0.0
      %748 = vmatpush1.msra.mxu0 %v680
      %749 = vmatprep.subr.mxu0 0.0
      %750 = vmatpush1.msra.mxu0 %v681
      %751 = vmatprep.subr.mxu0 0.0
      %752 = vmatpush1.msra.mxu0 %v682
      %753 = vmatprep.subr.mxu0 0.0
      %754 = vmatpush1.msra.mxu0 %v683
      %755 = vmatprep.subr.mxu0 0.0
      %756 = vmatpush1.msra.mxu0 0.0
      %757 = vmatprep.subr.mxu0 0.0
      %758 = vmatpush1.msra.mxu0 0.0
      %759 = vmatprep.subr.mxu0 0.0
      %760 = vmatpush1.msra.mxu0 0.0
      %761 = vmatprep.subr.mxu0 0.0
      %762 = vmatpush1.msra.mxu0 0.0
      %763 = vmatprep.subr.mxu0 0.0
      %764 = vmatpush1.msra.mxu0 0.0
      %765 = vmatprep.subr.mxu0 0.0
      %766 = vmatpush1.msra.mxu0 0.0
      %767 = vmatprep.subr.mxu0 0.0
      %768 = vmatpush1.msra.mxu0 0.0
      %769 = vmatprep.subr.mxu0 0.0
      %770 = vmatpush1.msra.mxu0 0.0
      %771 = vmatprep.subr.mxu0 0.0
      %772 = vmatpush1.msra.mxu0 0.0
      %773 = vmatprep.subr.mxu0 0.0
      %774 = vmatpush1.msra.mxu0 0.0
      %775 = vmatprep.subr.mxu0 0.0
      %776 = vmatpush1.msra.mxu0 0.0
      %777 = vmatprep.subr.mxu0 0.0
      %778 = vmatpush1.msra.mxu0 0.0
      %779 = vmatprep.subr.mxu0 0.0
      %780 = vmatpush1.msra.mxu0 0.0
      %781 = vmatprep.subr.mxu0 0.0
      %782 = vmatpush1.msra.mxu0 0.0
      %783 = vmatprep.subr.mxu0 0.0
      %784 = vmatpush1.msra.mxu0 0.0
      %785 = vmatprep.subr.mxu0 0.0
      %786 = vmatpush1.msra.mxu0 0.0
      %787 = vmatprep.subr.mxu0 0.0
      %788 = vmatpush1.msra.mxu0 0.0
      %789 = vmatprep.subr.mxu0 0.0
      %790 = vmatpush1.msra.mxu0 0.0
      %791 = vmatprep.subr.mxu0 0.0
      %792 = vmatpush1.msra.mxu0 0.0
      %793 = vmatprep.subr.mxu0 0.0
      %794 = vmatpush1.msra.mxu0 0.0
      %795 = vmatprep.subr.mxu0 0.0
      %796 = vmatpush1.msra.mxu0 0.0
      %797 = vmatprep.subr.mxu0 0.0
      %798 = vmatpush1.msra.mxu0 0.0
      %799 = vmatprep.subr.mxu0 0.0
      %800 = vmatpush1.msra.mxu0 0.0
      %801 = vmatprep.subr.mxu0 0.0
      %802 = vmatpush1.msra.mxu0 0.0
      %803 = vmatprep.subr.mxu0 0.0
      %804 = vmatpush1.msra.mxu0 0.0
      %805 = vmatprep.subr.mxu0 0.0
      %806 = vmatpush1.msra.mxu0 0.0
      %807 = vmatprep.subr.mxu0 0.0
      %808 = vmatpush1.msra.mxu0 0.0
      %809 = vmatprep.subr.mxu0 0.0
      %810 = vmatpush1.msra.mxu0 0.0
      %811 = vmatprep.mubr.f32.mxu0 0.0
      %812 = vmatmul.mubr.f32.gmra.mrb[0].mxu0 %v743
      %v813 = vpop.f32.mrb[0].mxu0
      %v814 = vadd.f32 %v689, %v813
      %v815 = vpop.f32.mrb[0].mxu0
      %816 = vmatprep.mubr.f32.mxu0 0.0
      %817 = vmatmul.mubr.f32.gmra.mrb[0].mxu0 %v745
      %v818 = vpop.f32.mrb[0].mxu0
      %v819 = vadd.f32 %v689, %v818
      %v820 = vpop.f32.mrb[0].mxu0
      %821 = vdwg.mxu0
      %v824 = vcombine.high %v814, %v814
      %v826 = vunpack.c.l.s4 1966171168
      %v827 = vunpack.c.0.s8 %v826
      %v828 = vlaneseq
      %v829 = vshrl.u32 %v828, 7
      %v830 = vsub.s32 %v827, %v829
      %v831 = vrot.slane %v814, %v830
      %v833 = vunpack.c.l.s4 1966171168
      %v834 = vunpack.c.0.s8 %v833
      %v835 = vlaneseq
      %v836 = vshrl.u32 %v835, 7
      %v837 = vsub.s32 %v834, %v836
      %v838 = vrot.slane %v824, %v837
      %v839 = vcombine.high %v831, %v831
      %v840 = vcombine.high %v838, %v838
      %v842 = vunpack.c.l.s4 1966171168
      %v843 = vunpack.c.0.s8 %v842
      %v844 = vlaneseq
      %v845 = vshrl.u32 %v844, 7
      %v846 = vsub.s32 %v843, %v845
      %v847 = vrot.slane %v831, %v846
      %v849 = vunpack.c.l.s4 1966171168
      %v850 = vunpack.c.0.s8 %v849
      %v851 = vlaneseq
      %v852 = vshrl.u32 %v851, 7
      %v853 = vsub.s32 %v850, %v852
      %v854 = vrot.slane %v838, %v853
      %v856 = vunpack.c.l.s4 1966171168
      %v857 = vunpack.c.0.s8 %v856
      %v858 = vlaneseq
      %v859 = vshrl.u32 %v858, 7
      %v860 = vsub.s32 %v857, %v859
      %v861 = vrot.slane %v839, %v860
      %v863 = vunpack.c.l.s4 1966171168
      %v864 = vunpack.c.0.s8 %v863
      %v865 = vlaneseq
      %v866 = vshrl.u32 %v865, 7
      %v867 = vsub.s32 %v864, %v866
      %v868 = vrot.slane %v840, %v867
      %v869 = vcombine.high %v847, %v847
      %v870 = vcombine.high %v854, %v854
      %v871 = vcombine.high %v861, %v861
      %v872 = vcombine.high %v868, %v868
      %v873 = vcombine.high %v819, %v819
      %v875 = vunpack.c.l.s4 1966171168
      %v876 = vunpack.c.0.s8 %v875
      %v877 = vlaneseq
      %v878 = vshrl.u32 %v877, 7
      %v879 = vsub.s32 %v876, %v878
      %v880 = vrot.slane %v819, %v879
      %v882 = vunpack.c.l.s4 1966171168
      %v883 = vunpack.c.0.s8 %v882
      %v884 = vlaneseq
      %v885 = vshrl.u32 %v884, 7
      %v886 = vsub.s32 %v883, %v885
      %v887 = vrot.slane %v873, %v886
      %v888 = vcombine.high %v880, %v880
      %v889 = vcombine.high %v887, %v887
      %v891 = vunpack.c.l.s4 1966171168
      %v892 = vunpack.c.0.s8 %v891
      %v893 = vlaneseq
      %v894 = vshrl.u32 %v893, 7
      %v895 = vsub.s32 %v892, %v894
      %v896 = vrot.slane %v880, %v895
      %v898 = vunpack.c.l.s4 1966171168
      %v899 = vunpack.c.0.s8 %v898
      %v900 = vlaneseq
      %v901 = vshrl.u32 %v900, 7
      %v902 = vsub.s32 %v899, %v901
      %v903 = vrot.slane %v887, %v902
      %v905 = vunpack.c.l.s4 1966171168
      %v906 = vunpack.c.0.s8 %v905
      %v907 = vlaneseq
      %v908 = vshrl.u32 %v907, 7
      %v909 = vsub.s32 %v906, %v908
      %v910 = vrot.slane %v888, %v909
      %v912 = vunpack.c.l.s4 1966171168
      %v913 = vunpack.c.0.s8 %v912
      %v914 = vlaneseq
      %v915 = vshrl.u32 %v914, 7
      %v916 = vsub.s32 %v913, %v915
      %v917 = vrot.slane %v889, %v916
      %v918 = vcombine.high %v896, %v896
      %v919 = vcombine.high %v903, %v903
      %v920 = vcombine.high %v910, %v910
      %v921 = vcombine.high %v917, %v917
      %vm938 = vcmask 516096
      %939 = vst.msk [vmem:[#allocation6] sm:$0x1] %vm938, %v847
      %940 = vst.msk [vmem:[#allocation6 + $0x1] sm:$0x1] %vm938, %v861
      %941 = vst.msk [vmem:[#allocation6 + $0x2] sm:$0x1] %vm938, %v869
      %942 = vst.msk [vmem:[#allocation6 + $0x3] sm:$0x1] %vm938, %v871
      %943 = vst.msk [vmem:[#allocation6 + $0x4] sm:$0x1] %vm938, %v854
      %944 = vst.msk [vmem:[#allocation6 + $0x5] sm:$0x1] %vm938, %v868
      %945 = vst.msk [vmem:[#allocation6 + $0x6] sm:$0x1] %vm938, %v870
      %946 = vst.msk [vmem:[#allocation6 + $0x7] sm:$0x1] %vm938, %v872
      %947 = vst.msk [vmem:[#allocation6 + $0x8] sm:$0x1] %vm938, %v896
      %948 = vst.msk [vmem:[#allocation6 + $0x9] sm:$0x1] %vm938, %v910
      %949 = vst.msk [vmem:[#allocation6 + $0xa] sm:$0x1] %vm938, %v918
      %950 = vst.msk [vmem:[#allocation6 + $0xb] sm:$0x1] %vm938, %v920
      %951 = vst.msk [vmem:[#allocation6 + $0xc] sm:$0x1] %vm938, %v903
      %952 = vst.msk [vmem:[#allocation6 + $0xd] sm:$0x1] %vm938, %v917
      %953 = vst.msk [vmem:[#allocation6 + $0xe] sm:$0x1] %vm938, %v919
      %954 = vst.msk [vmem:[#allocation6 + $0xf] sm:$0x1] %vm938, %v921
      %v955 = vld [vmem:[%s4] sm:$0xff]
      %v956 = vld [vmem:[%s4 + $0x8] sm:$0xff]
      %v957 = vld [vmem:[%s4 + $0x10] sm:$0xff]
      %v958 = vld [vmem:[%s4 + $0x18] sm:$0xff]
      %v959 = vld [vmem:[%s6] sm:$0x1]
      %v961 = vlaneseq
      %v962 = vshrl.u32 %v961, 7
      %v963 = vsub.s32 0, %v962
      %v964 = vrot.slane %v959, %v963
      %v982 = vrot.slane %v627, 7
      %v983 = vsel %vm708, %v982, %v604
      %v984 = vrot.slane %v611, 6
      %v985 = vsel %vm711, %v984, %v983
      %v986 = vrot.slane %v628, 5
      %v987 = vsel %vm714, %v986, %v985
      %v988 = vrot.slane %v619, 4
      %v989 = vsel %vm717, %v988, %v987
      %v990 = vrot.slane %v629, 3
      %v991 = vsel %vm720, %v990, %v989
      %v992 = vrot.slane %v626, 2
      %v993 = vsel %vm723, %v992, %v991
      %v994 = vrot.slane %v630, 1
      %v995 = vsel %vm726, %v994, %v993
      %v996 = vrot.slane %v676, 7
      %v997 = vsel %vm708, %v996, %v653
      %v998 = vrot.slane %v660, 6
      %v999 = vsel %vm711, %v998, %v997
      %v1000 = vrot.slane %v677, 5
      %v1001 = vsel %vm714, %v1000, %v999
      %v1002 = vrot.slane %v668, 4
      %v1003 = vsel %vm717, %v1002, %v1001
      %v1004 = vrot.slane %v678, 3
      %v1005 = vsel %vm720, %v1004, %v1003
      %v1006 = vrot.slane %v675, 2
      %v1007 = vsel %vm723, %v1006, %v1005
      %v1008 = vrot.slane %v679, 1
      %v1009 = vsel %vm726, %v1008, %v1007
      %v1010 = vsel %vm742, %v995, 0
      %v1012 = vsel %vm742, %v1009, 0
      %1014 = vmatprep.subr.mxu0 0.0
      %1015 = vmatpush1.msra.mxu0 %v955
      %1016 = vmatprep.subr.mxu0 0.0
      %1017 = vmatpush1.msra.mxu0 %v956
      %1018 = vmatprep.subr.mxu0 0.0
      %1019 = vmatpush1.msra.mxu0 %v957
      %1020 = vmatprep.subr.mxu0 0.0
      %1021 = vmatpush1.msra.mxu0 %v958
      %1022 = vmatprep.subr.mxu0 0.0
      %1023 = vmatpush1.msra.mxu0 0.0
      %1024 = vmatprep.subr.mxu0 0.0
      %1025 = vmatpush1.msra.mxu0 0.0
      %1026 = vmatprep.subr.mxu0 0.0
      %1027 = vmatpush1.msra.mxu0 0.0
      %1028 = vmatprep.subr.mxu0 0.0
      %1029 = vmatpush1.msra.mxu0 0.0
      %1030 = vmatprep.subr.mxu0 0.0
      %1031 = vmatpush1.msra.mxu0 0.0
      %1032 = vmatprep.subr.mxu0 0.0
      %1033 = vmatpush1.msra.mxu0 0.0
      %1034 = vmatprep.subr.mxu0 0.0
      %1035 = vmatpush1.msra.mxu0 0.0
      %1036 = vmatprep.subr.mxu0 0.0
      %1037 = vmatpush1.msra.mxu0 0.0
      %1038 = vmatprep.subr.mxu0 0.0
      %1039 = vmatpush1.msra.mxu0 0.0
      %1040 = vmatprep.subr.mxu0 0.0
      %1041 = vmatpush1.msra.mxu0 0.0
      %1042 = vmatprep.subr.mxu0 0.0
      %1043 = vmatpush1.msra.mxu0 0.0
      %1044 = vmatprep.subr.mxu0 0.0
      %1045 = vmatpush1.msra.mxu0 0.0
      %1046 = vmatprep.subr.mxu0 0.0
      %1047 = vmatpush1.msra.mxu0 0.0
      %1048 = vmatprep.subr.mxu0 0.0
      %1049 = vmatpush1.msra.mxu0 0.0
      %1050 = vmatprep.subr.mxu0 0.0
      %1051 = vmatpush1.msra.mxu0 0.0
      %1052 = vmatprep.subr.mxu0 0.0
      %1053 = vmatpush1.msra.mxu0 0.0
      %1054 = vmatprep.subr.mxu0 0.0
      %1055 = vmatpush1.msra.mxu0 0.0
      %1056 = vmatprep.subr.mxu0 0.0
      %1057 = vmatpush1.msra.mxu0 0.0
      %1058 = vmatprep.subr.mxu0 0.0
      %1059 = vmatpush1.msra.mxu0 0.0
      %1060 = vmatprep.subr.mxu0 0.0
      %1061 = vmatpush1.msra.mxu0 0.0
      %1062 = vmatprep.subr.mxu0 0.0
      %1063 = vmatpush1.msra.mxu0 0.0
      %1064 = vmatprep.subr.mxu0 0.0
      %1065 = vmatpush1.msra.mxu0 0.0
      %1066 = vmatprep.subr.mxu0 0.0
      %1067 = vmatpush1.msra.mxu0 0.0
      %1068 = vmatprep.subr.mxu0 0.0
      %1069 = vmatpush1.msra.mxu0 0.0
      %1070 = vmatprep.subr.mxu0 0.0
      %1071 = vmatpush1.msra.mxu0 0.0
      %1072 = vmatprep.subr.mxu0 0.0
      %1073 = vmatpush1.msra.mxu0 0.0
      %1074 = vmatprep.subr.mxu0 0.0
      %1075 = vmatpush1.msra.mxu0 0.0
      %1076 = vmatprep.subr.mxu0 0.0
      %1077 = vmatpush1.msra.mxu0 0.0
      %1078 = vmatprep.mubr.f32.mxu0 0.0
      %1079 = vmatmul.mubr.f32.gmra.mrb[0].mxu0 %v1010
      %v1080 = vpop.f32.mrb[0].mxu0
      %v1081 = vadd.f32 %v964, %v1080
      %v1082 = vpop.f32.mrb[0].mxu0
      %1083 = vmatprep.mubr.f32.mxu0 0.0
      %1084 = vmatmul.mubr.f32.gmra.mrb[0].mxu0 %v1012
      %v1085 = vpop.f32.mrb[0].mxu0
      %v1086 = vadd.f32 %v964, %v1085
      %v1087 = vpop.f32.mrb[0].mxu0
      %1088 = vdwg.mxu0
      %v1091 = vcombine.high %v1081, %v1081
      %v1093 = vunpack.c.l.s4 1966171168
      %v1094 = vunpack.c.0.s8 %v1093
      %v1095 = vlaneseq
      %v1096 = vshrl.u32 %v1095, 7
      %v1097 = vsub.s32 %v1094, %v1096
      %v1098 = vrot.slane %v1081, %v1097
      %v1100 = vunpack.c.l.s4 1966171168
      %v1101 = vunpack.c.0.s8 %v1100
      %v1102 = vlaneseq
      %v1103 = vshrl.u32 %v1102, 7
      %v1104 = vsub.s32 %v1101, %v1103
      %v1105 = vrot.slane %v1091, %v1104
      %v1106 = vcombine.high %v1098, %v1098
      %v1107 = vcombine.high %v1105, %v1105
      %v1109 = vunpack.c.l.s4 1966171168
      %v1110 = vunpack.c.0.s8 %v1109
      %v1111 = vlaneseq
      %v1112 = vshrl.u32 %v1111, 7
      %v1113 = vsub.s32 %v1110, %v1112
      %v1114 = vrot.slane %v1098, %v1113
      %v1116 = vunpack.c.l.s4 1966171168
      %v1117 = vunpack.c.0.s8 %v1116
      %v1118 = vlaneseq
      %v1119 = vshrl.u32 %v1118, 7
      %v1120 = vsub.s32 %v1117, %v1119
      %v1121 = vrot.slane %v1105, %v1120
      %v1123 = vunpack.c.l.s4 1966171168
      %v1124 = vunpack.c.0.s8 %v1123
      %v1125 = vlaneseq
      %v1126 = vshrl.u32 %v1125, 7
      %v1127 = vsub.s32 %v1124, %v1126
      %v1128 = vrot.slane %v1106, %v1127
      %v1130 = vunpack.c.l.s4 1966171168
      %v1131 = vunpack.c.0.s8 %v1130
      %v1132 = vlaneseq
      %v1133 = vshrl.u32 %v1132, 7
      %v1134 = vsub.s32 %v1131, %v1133
      %v1135 = vrot.slane %v1107, %v1134
      %v1136 = vcombine.high %v1114, %v1114
      %v1137 = vcombine.high %v1121, %v1121
      %v1138 = vcombine.high %v1128, %v1128
      %v1139 = vcombine.high %v1135, %v1135
      %v1140 = vcombine.high %v1086, %v1086
      %v1142 = vunpack.c.l.s4 1966171168
      %v1143 = vunpack.c.0.s8 %v1142
      %v1144 = vlaneseq
      %v1145 = vshrl.u32 %v1144, 7
      %v1146 = vsub.s32 %v1143, %v1145
      %v1147 = vrot.slane %v1086, %v1146
      %v1149 = vunpack.c.l.s4 1966171168
      %v1150 = vunpack.c.0.s8 %v1149
      %v1151 = vlaneseq
      %v1152 = vshrl.u32 %v1151, 7
      %v1153 = vsub.s32 %v1150, %v1152
      %v1154 = vrot.slane %v1140, %v1153
      %v1155 = vcombine.high %v1147, %v1147
      %v1156 = vcombine.high %v1154, %v1154
      %v1158 = vunpack.c.l.s4 1966171168
      %v1159 = vunpack.c.0.s8 %v1158
      %v1160 = vlaneseq
      %v1161 = vshrl.u32 %v1160, 7
      %v1162 = vsub.s32 %v1159, %v1161
      %v1163 = vrot.slane %v1147, %v1162
      %v1165 = vunpack.c.l.s4 1966171168
      %v1166 = vunpack.c.0.s8 %v1165
      %v1167 = vlaneseq
      %v1168 = vshrl.u32 %v1167, 7
      %v1169 = vsub.s32 %v1166, %v1168
      %v1170 = vrot.slane %v1154, %v1169
      %v1172 = vunpack.c.l.s4 1966171168
      %v1173 = vunpack.c.0.s8 %v1172
      %v1174 = vlaneseq
      %v1175 = vshrl.u32 %v1174, 7
      %v1176 = vsub.s32 %v1173, %v1175
      %v1177 = vrot.slane %v1155, %v1176
      %v1179 = vunpack.c.l.s4 1966171168
      %v1180 = vunpack.c.0.s8 %v1179
      %v1181 = vlaneseq
      %v1182 = vshrl.u32 %v1181, 7
      %v1183 = vsub.s32 %v1180, %v1182
      %v1184 = vrot.slane %v1156, %v1183
      %v1185 = vcombine.high %v1163, %v1163
      %v1186 = vcombine.high %v1170, %v1170
      %v1187 = vcombine.high %v1177, %v1177
      %v1188 = vcombine.high %v1184, %v1184
      %1205 = vst.msk [vmem:[#allocation7] sm:$0x1] %vm938, %v1114
      %1206 = vst.msk [vmem:[#allocation7 + $0x1] sm:$0x1] %vm938, %v1128
      %1207 = vst.msk [vmem:[#allocation7 + $0x2] sm:$0x1] %vm938, %v1136
      %1208 = vst.msk [vmem:[#allocation7 + $0x3] sm:$0x1] %vm938, %v1138
      %1209 = vst.msk [vmem:[#allocation7 + $0x4] sm:$0x1] %vm938, %v1121
      %1210 = vst.msk [vmem:[#allocation7 + $0x5] sm:$0x1] %vm938, %v1135
      %1211 = vst.msk [vmem:[#allocation7 + $0x6] sm:$0x1] %vm938, %v1137
      %1212 = vst.msk [vmem:[#allocation7 + $0x7] sm:$0x1] %vm938, %v1139
      %1213 = vst.msk [vmem:[#allocation7 + $0x8] sm:$0x1] %vm938, %v1163
      %1214 = vst.msk [vmem:[#allocation7 + $0x9] sm:$0x1] %vm938, %v1177
      %1215 = vst.msk [vmem:[#allocation7 + $0xa] sm:$0x1] %vm938, %v1185
      %1216 = vst.msk [vmem:[#allocation7 + $0xb] sm:$0x1] %vm938, %v1187
      %1217 = vst.msk [vmem:[#allocation7 + $0xc] sm:$0x1] %vm938, %v1170
      %1218 = vst.msk [vmem:[#allocation7 + $0xd] sm:$0x1] %vm938, %v1184
      %1219 = vst.msk [vmem:[#allocation7 + $0xe] sm:$0x1] %vm938, %v1186
      %1220 = vst.msk [vmem:[#allocation7 + $0xf] sm:$0x1] %vm938, %v1188
      %v1221 = vld [vmem:[%s7] sm:$0xff]
      %v1222 = vld [vmem:[%s7 + $0x8] sm:$0xff]
      %v1223 = vld [vmem:[%s8] sm:$0xff]
      %v1224 = vld [vmem:[%s8 + $0x8] sm:$0xff]
      %s1225 = scalar_lea.vmem %s0, %s26
      %v1226 = vld [vmem:[%s1225] sm:$0x1]
      %s1227 = smul.u32 %s27, 16
      %s1228 = ssub.s32 0, %s27
      %s1229 = smul.u32 %s1228, 16
      %v1230 = vstv %s1227
      %vm1231 = vcmp.lt.s32.totalorder %v1230, %v1226
      %v1232 = vsel %vm1231, 1, 0
      %v1233 = vcvt.s32.f32 %v1232
      %v1234 = vld [vmem:[#allocation6] sm:$0x1]
      %v1235 = vld [vmem:[#allocation2] sm:$0x1]
      %vm1236 = vcmask 130048
      %v1238 = vsel %vm1236, %v1235, 0
      %1240 = vmatprep.subr.mxu0 0.0
      %1241 = vmatpush1.msra.mxu0 %v1221
      %1242 = vmatprep.subr.mxu0 0.0
      %1243 = vmatpush1.msra.mxu0 %v1222
      %1244 = vmatprep.subr.mxu0 0.0
      %1245 = vmatpush1.msra.mxu0 0.0
      %1246 = vmatprep.subr.mxu0 0.0
      %1247 = vmatpush1.msra.mxu0 0.0
      %1248 = vmatprep.subr.mxu0 0.0
      %1249 = vmatpush1.msra.mxu0 0.0
      %1250 = vmatprep.subr.mxu0 0.0
      %1251 = vmatpush1.msra.mxu0 0.0
      %1252 = vmatprep.subr.mxu0 0.0
      %1253 = vmatpush1.msra.mxu0 0.0
      %1254 = vmatprep.subr.mxu0 0.0
      %1255 = vmatpush1.msra.mxu0 0.0
      %1256 = vmatprep.subr.mxu0 0.0
      %1257 = vmatpush1.msra.mxu0 0.0
      %1258 = vmatprep.subr.mxu0 0.0
      %1259 = vmatpush1.msra.mxu0 0.0
      %1260 = vmatprep.subr.mxu0 0.0
      %1261 = vmatpush1.msra.mxu0 0.0
      %1262 = vmatprep.subr.mxu0 0.0
      %1263 = vmatpush1.msra.mxu0 0.0
      %1264 = vmatprep.subr.mxu0 0.0
      %1265 = vmatpush1.msra.mxu0 0.0
      %1266 = vmatprep.subr.mxu0 0.0
      %1267 = vmatpush1.msra.mxu0 0.0
      %1268 = vmatprep.subr.mxu0 0.0
      %1269 = vmatpush1.msra.mxu0 0.0
      %1270 = vmatprep.subr.mxu0 0.0
      %1271 = vmatpush1.msra.mxu0 0.0
      %1272 = vmatprep.subr.mxu0 0.0
      %1273 = vmatpush1.msra.mxu0 0.0
      %1274 = vmatprep.subr.mxu0 0.0
      %1275 = vmatpush1.msra.mxu0 0.0
      %1276 = vmatprep.subr.mxu0 0.0
      %1277 = vmatpush1.msra.mxu0 0.0
      %1278 = vmatprep.subr.mxu0 0.0
      %1279 = vmatpush1.msra.mxu0 0.0
      %1280 = vmatprep.subr.mxu0 0.0
      %1281 = vmatpush1.msra.mxu0 0.0
      %1282 = vmatprep.subr.mxu0 0.0
      %1283 = vmatpush1.msra.mxu0 0.0
      %1284 = vmatprep.subr.mxu0 0.0
      %1285 = vmatpush1.msra.mxu0 0.0
      %1286 = vmatprep.subr.mxu0 0.0
      %1287 = vmatpush1.msra.mxu0 0.0
      %1288 = vmatprep.subr.mxu0 0.0
      %1289 = vmatpush1.msra.mxu0 0.0
      %1290 = vmatprep.subr.mxu0 0.0
      %1291 = vmatpush1.msra.mxu0 0.0
      %1292 = vmatprep.subr.mxu0 0.0
      %1293 = vmatpush1.msra.mxu0 0.0
      %1294 = vmatprep.subr.mxu0 0.0
      %1295 = vmatpush1.msra.mxu0 0.0
      %1296 = vmatprep.subr.mxu0 0.0
      %1297 = vmatpush1.msra.mxu0 0.0
      %1298 = vmatprep.subr.mxu0 0.0
      %1299 = vmatpush1.msra.mxu0 0.0
      %1300 = vmatprep.subr.mxu0 0.0
      %1301 = vmatpush1.msra.mxu0 0.0
      %1302 = vmatprep.subr.mxu0 0.0
      %1303 = vmatpush1.msra.mxu0 0.0
      %1304 = vmatprep.mubr.f32.mxu0 0.0
      %1305 = vmatmul.mubr.f32.gmra.mrb[0].mxu0 %v1238
      %v1306 = vpop.f32.mrb[0].mxu0
      %v1307 = vadd.f32 0.0, %v1306
      %v1308 = vpop.f32.mrb[0].mxu0
      %1309 = vdwg.mxu0
      %v1310 = vadd.f32 %v1234, %v1307
      %v1311 = vxor.u32 %v1310, 2147483648
      %v1312 = vmul.f32 %v1311, 1.442695
      %v1313 = vpow.pop %v1312
      %v1314 = vadd.f32 %v1313, 1.0
      %v1315 = vrcp.pop %v1314
      %v1316 = vmul.f32 1.0, %v1315
      %v1317 = vtanh.pop %v1310
      %v1318 = vld [vmem:[#allocation3] sm:$0x1]
      %1320 = vrot.lane.b32.xlu0 %v1318, 16
      %v1321 = vpop.permute.xlu0 %1320
      %v1323 = vmul.f32 %v1316, %v1321
      %1325 = vrot.lane.b32.xlu0 %v1317, 96
      %v1326 = vpop.permute.xlu0 %1325
      %v1328 = vmul.f32 %v1316, %v1326
      %1330 = vrot.lane.b32.xlu0 %v1328, 16
      %v1331 = vpop.permute.xlu0 %1330
      %v1333 = vadd.f32 %v1323, %v1331
      %v1334 = vtanh.pop %v1333
      %1336 = vrot.lane.b32.xlu0 %v1334, 32
      %v1337 = vpop.permute.xlu0 %1336
      %v1339 = vmul.f32 %v1316, %v1337
      %1341 = vset.pattern.permute.xlu0 0
      %1342 = vperm.xlu0 %1341, %v1233
      %v1343 = vpop.permute.xlu0 %1342
      %v1346 = vlaneseq
      %v1347 = vshrl.u32 %v1346, 7
      %v1348 = vsub.s32 0, %v1347
      %v1349 = vrot.slane %v1339, %v1348
      %1350 = vrot.lane.b32.xlu0 %v1349, 80
      %v1351 = vpop.permute.xlu0 %1350
      %v1353 = vmul.f32 %v1343, %v1351
      %v1354 = vsub.f32 1.0, %v1233
      %1356 = vset.pattern.permute.xlu0 0
      %1357 = vperm.xlu0 %1356, %v1354
      %v1358 = vpop.permute.xlu0 %1357
      %v1360 = vmul.f32 %v1358, %v1235
      %v1361 = vadd.f32 %v1353, %v1360
      %vm1362 = vcmask 122880
      %1363 = vst.msk [vmem:[#allocation2] sm:$0x1] %vm1362, %v1361
      %v1365 = vlaneseq
      %v1366 = vshrl.u32 %v1365, 7
      %v1367 = vsub.s32 0, %v1366
      %v1368 = vrot.slane %v1333, %v1367
      %1369 = vrot.lane.b32.xlu0 %v1368, 112
      %v1370 = vpop.permute.xlu0 %1369
      %v1372 = vmul.f32 %v1343, %v1370
      %v1373 = vld [vmem:[#allocation3] sm:$0x1]
      %v1374 = vmul.f32 %v1358, %v1373
      %v1375 = vadd.f32 %v1372, %v1374
      %1376 = vst.msk [vmem:[#allocation3] sm:$0x1] %vm1362, %v1375
      %1377 = vst.msk [vmem:[#allocation8] sm:$0x1] %vm1362, %v1353
      %s1378 = sadd.s32 %s1229, 15
      %v1379 = vstv %s1378
      %vm1380 = vcmp.lt.s32.totalorder %v1379, %v1226
      %v1381 = vsel %vm1380, 1, 0
      %v1382 = vcvt.s32.f32 %v1381
      %s1383 = scalar_lea.vmem [#allocation7], 15
      %v1384 = vld [vmem:[%s1383] sm:$0x1]
      %v1385 = vld [vmem:[#allocation4] sm:$0x1]
      %v1387 = vsel %vm1236, %v1385, 0
      %1389 = vmatprep.subr.mxu0 0.0
      %1390 = vmatpush1.msra.mxu0 %v1223
      %1391 = vmatprep.subr.mxu0 0.0
      %1392 = vmatpush1.msra.mxu0 %v1224
      %1393 = vmatprep.subr.mxu0 0.0
      %1394 = vmatpush1.msra.mxu0 0.0
      %1395 = vmatprep.subr.mxu0 0.0
      %1396 = vmatpush1.msra.mxu0 0.0
      %1397 = vmatprep.subr.mxu0 0.0
      %1398 = vmatpush1.msra.mxu0 0.0
      %1399 = vmatprep.subr.mxu0 0.0
      %1400 = vmatpush1.msra.mxu0 0.0
      %1401 = vmatprep.subr.mxu0 0.0
      %1402 = vmatpush1.msra.mxu0 0.0
      %1403 = vmatprep.subr.mxu0 0.0
      %1404 = vmatpush1.msra.mxu0 0.0
      %1405 = vmatprep.subr.mxu0 0.0
      %1406 = vmatpush1.msra.mxu0 0.0
      %1407 = vmatprep.subr.mxu0 0.0
      %1408 = vmatpush1.msra.mxu0 0.0
      %1409 = vmatprep.subr.mxu0 0.0
      %1410 = vmatpush1.msra.mxu0 0.0
      %1411 = vmatprep.subr.mxu0 0.0
      %1412 = vmatpush1.msra.mxu0 0.0
      %1413 = vmatprep.subr.mxu0 0.0
      %1414 = vmatpush1.msra.mxu0 0.0
      %1415 = vmatprep.subr.mxu0 0.0
      %1416 = vmatpush1.msra.mxu0 0.0
      %1417 = vmatprep.subr.mxu0 0.0
      %1418 = vmatpush1.msra.mxu0 0.0
      %1419 = vmatprep.subr.mxu0 0.0
      %1420 = vmatpush1.msra.mxu0 0.0
      %1421 = vmatprep.subr.mxu0 0.0
      %1422 = vmatpush1.msra.mxu0 0.0
      %1423 = vmatprep.subr.mxu0 0.0
      %1424 = vmatpush1.msra.mxu0 0.0
      %1425 = vmatprep.subr.mxu0 0.0
      %1426 = vmatpush1.msra.mxu0 0.0
      %1427 = vmatprep.subr.mxu0 0.0
      %1428 = vmatpush1.msra.mxu0 0.0
      %1429 = vmatprep.subr.mxu0 0.0
      %1430 = vmatpush1.msra.mxu0 0.0
      %1431 = vmatprep.subr.mxu0 0.0
      %1432 = vmatpush1.msra.mxu0 0.0
      %1433 = vmatprep.subr.mxu0 0.0
      %1434 = vmatpush1.msra.mxu0 0.0
      %1435 = vmatprep.subr.mxu0 0.0
      %1436 = vmatpush1.msra.mxu0 0.0
      %1437 = vmatprep.subr.mxu0 0.0
      %1438 = vmatpush1.msra.mxu0 0.0
      %1439 = vmatprep.subr.mxu0 0.0
      %1440 = vmatpush1.msra.mxu0 0.0
      %1441 = vmatprep.subr.mxu0 0.0
      %1442 = vmatpush1.msra.mxu0 0.0
      %1443 = vmatprep.subr.mxu0 0.0
      %1444 = vmatpush1.msra.mxu0 0.0
      %1445 = vmatprep.subr.mxu0 0.0
      %1446 = vmatpush1.msra.mxu0 0.0
      %1447 = vmatprep.subr.mxu0 0.0
      %1448 = vmatpush1.msra.mxu0 0.0
      %1449 = vmatprep.subr.mxu0 0.0
      %1450 = vmatpush1.msra.mxu0 0.0
      %1451 = vmatprep.subr.mxu0 0.0
      %1452 = vmatpush1.msra.mxu0 0.0
      %1453 = vmatprep.mubr.f32.mxu0 0.0
      %1454 = vmatmul.mubr.f32.gmra.mrb[0].mxu0 %v1387
      %v1455 = vpop.f32.mrb[0].mxu0
      %v1456 = vadd.f32 0.0, %v1455
      %v1457 = vpop.f32.mrb[0].mxu0
      %1458 = vdwg.mxu0
      %v1459 = vadd.f32 %v1384, %v1456
      %v1460 = vxor.u32 %v1459, 2147483648
      %v1461 = vmul.f32 %v1460, 1.442695
      %v1462 = vpow.pop %v1461
      %v1463 = vadd.f32 %v1462, 1.0
      %v1464 = vrcp.pop %v1463
      %v1465 = vmul.f32 1.0, %v1464
      %v1466 = vtanh.pop %v1459
      %v1467 = vld [vmem:[#allocation5] sm:$0x1]
      %1469 = vrot.lane.b32.xlu0 %v1467, 16
      %v1470 = vpop.permute.xlu0 %1469
      %v1472 = vmul.f32 %v1465, %v1470
      %1474 = vrot.lane.b32.xlu0 %v1466, 96
      %v1475 = vpop.permute.xlu0 %1474
      %v1477 = vmul.f32 %v1465, %v1475
      %1479 = vrot.lane.b32.xlu0 %v1477, 16
      %v1480 = vpop.permute.xlu0 %1479
      %v1482 = vadd.f32 %v1472, %v1480
      %v1483 = vtanh.pop %v1482
      %1485 = vrot.lane.b32.xlu0 %v1483, 32
      %v1486 = vpop.permute.xlu0 %1485
      %v1488 = vmul.f32 %v1465, %v1486
      %1490 = vset.pattern.permute.xlu0 0
      %1491 = vperm.xlu0 %1490, %v1382
      %v1492 = vpop.permute.xlu0 %1491
      %v1495 = vlaneseq
      %v1496 = vshrl.u32 %v1495, 7
      %v1497 = vsub.s32 0, %v1496
      %v1498 = vrot.slane %v1488, %v1497
      %1499 = vrot.lane.b32.xlu0 %v1498, 80
      %v1500 = vpop.permute.xlu0 %1499
      %v1502 = vmul.f32 %v1492, %v1500
      %v1503 = vsub.f32 1.0, %v1382
      %1505 = vset.pattern.permute.xlu0 0
      %1506 = vperm.xlu0 %1505, %v1503
      %v1507 = vpop.permute.xlu0 %1506
      %v1509 = vmul.f32 %v1507, %v1385
      %v1510 = vadd.f32 %v1502, %v1509
      %1511 = vst.msk [vmem:[#allocation4] sm:$0x1] %vm1362, %v1510
      %v1513 = vlaneseq
      %v1514 = vshrl.u32 %v1513, 7
      %v1515 = vsub.s32 0, %v1514
      %v1516 = vrot.slane %v1482, %v1515
      %1517 = vrot.lane.b32.xlu0 %v1516, 112
      %v1518 = vpop.permute.xlu0 %1517
      %v1520 = vmul.f32 %v1492, %v1518
      %v1521 = vld [vmem:[#allocation5] sm:$0x1]
      %v1522 = vmul.f32 %v1507, %v1521
      %v1523 = vadd.f32 %v1520, %v1522
      %1524 = vst.msk [vmem:[#allocation5] sm:$0x1] %vm1362, %v1523
      %s1525 = scalar_lea.vmem [#allocation9], 15
      %1526 = vst.msk [vmem:[%s1525] sm:$0x1] %vm1362, %v1502
      %s1527 = sadd.s32 %s1227, 1
      %v1528 = vstv %s1527
      %vm1529 = vcmp.lt.s32.totalorder %v1528, %v1226
      %v1530 = vsel %vm1529, 1, 0
      %v1531 = vcvt.s32.f32 %v1530
      %s1532 = scalar_lea.vmem [#allocation6], 1
      %v1533 = vld [vmem:[%s1532] sm:$0x1]
      %v1534 = vld [vmem:[#allocation2] sm:$0x1]
      %v1536 = vsel %vm1236, %v1534, 0
      %1538 = vmatprep.subr.mxu0 0.0
      %1539 = vmatpush1.msra.mxu0 %v1221
      %1540 = vmatprep.subr.mxu0 0.0
      %1541 = vmatpush1.msra.mxu0 %v1222
      %1542 = vmatprep.subr.mxu0 0.0
      %1543 = vmatpush1.msra.mxu0 0.0
      %1544 = vmatprep.subr.mxu0 0.0
      %1545 = vmatpush1.msra.mxu0 0.0
      %1546 = vmatprep.subr.mxu0 0.0
      %1547 = vmatpush1.msra.mxu0 0.0
      %1548 = vmatprep.subr.mxu0 0.0
      %1549 = vmatpush1.msra.mxu0 0.0
      %1550 = vmatprep.subr.mxu0 0.0
      %1551 = vmatpush1.msra.mxu0 0.0
      %1552 = vmatprep.subr.mxu0 0.0
      %1553 = vmatpush1.msra.mxu0 0.0
      %1554 = vmatprep.subr.mxu0 0.0
      %1555 = vmatpush1.msra.mxu0 0.0
      %1556 = vmatprep.subr.mxu0 0.0
      %1557 = vmatpush1.msra.mxu0 0.0
      %1558 = vmatprep.subr.mxu0 0.0
      %1559 = vmatpush1.msra.mxu0 0.0
      %1560 = vmatprep.subr.mxu0 0.0
      %1561 = vmatpush1.msra.mxu0 0.0
      %1562 = vmatprep.subr.mxu0 0.0
      %1563 = vmatpush1.msra.mxu0 0.0
      %1564 = vmatprep.subr.mxu0 0.0
      %1565 = vmatpush1.msra.mxu0 0.0
      %1566 = vmatprep.subr.mxu0 0.0
      %1567 = vmatpush1.msra.mxu0 0.0
      %1568 = vmatprep.subr.mxu0 0.0
      %1569 = vmatpush1.msra.mxu0 0.0
      %1570 = vmatprep.subr.mxu0 0.0
      %1571 = vmatpush1.msra.mxu0 0.0
      %1572 = vmatprep.subr.mxu0 0.0
      %1573 = vmatpush1.msra.mxu0 0.0
      %1574 = vmatprep.subr.mxu0 0.0
      %1575 = vmatpush1.msra.mxu0 0.0
      %1576 = vmatprep.subr.mxu0 0.0
      %1577 = vmatpush1.msra.mxu0 0.0
      %1578 = vmatprep.subr.mxu0 0.0
      %1579 = vmatpush1.msra.mxu0 0.0
      %1580 = vmatprep.subr.mxu0 0.0
      %1581 = vmatpush1.msra.mxu0 0.0
      %1582 = vmatprep.subr.mxu0 0.0
      %1583 = vmatpush1.msra.mxu0 0.0
      %1584 = vmatprep.subr.mxu0 0.0
      %1585 = vmatpush1.msra.mxu0 0.0
      %1586 = vmatprep.subr.mxu0 0.0
      %1587 = vmatpush1.msra.mxu0 0.0
      %1588 = vmatprep.subr.mxu0 0.0
      %1589 = vmatpush1.msra.mxu0 0.0
      %1590 = vmatprep.subr.mxu0 0.0
      %1591 = vmatpush1.msra.mxu0 0.0
      %1592 = vmatprep.subr.mxu0 0.0
      %1593 = vmatpush1.msra.mxu0 0.0
      %1594 = vmatprep.subr.mxu0 0.0
      %1595 = vmatpush1.msra.mxu0 0.0
      %1596 = vmatprep.subr.mxu0 0.0
      %1597 = vmatpush1.msra.mxu0 0.0
      %1598 = vmatprep.subr.mxu0 0.0
      %1599 = vmatpush1.msra.mxu0 0.0
      %1600 = vmatprep.subr.mxu0 0.0
      %1601 = vmatpush1.msra.mxu0 0.0
      %1602 = vmatprep.mubr.f32.mxu0 0.0
      %1603 = vmatmul.mubr.f32.gmra.mrb[0].mxu0 %v1536
      %v1604 = vpop.f32.mrb[0].mxu0
      %v1605 = vadd.f32 0.0, %v1604
      %v1606 = vpop.f32.mrb[0].mxu0
      %1607 = vdwg.mxu0
      %v1608 = vadd.f32 %v1533, %v1605
      %v1609 = vxor.u32 %v1608, 2147483648
      %v1610 = vmul.f32 %v1609, 1.442695
      %v1611 = vpow.pop %v1610
      %v1612 = vadd.f32 %v1611, 1.0
      %v1613 = vrcp.pop %v1612
      %v1614 = vmul.f32 1.0, %v1613
      %v1615 = vtanh.pop %v1608
      %v1616 = vld [vmem:[#allocation3] sm:$0x1]
      %1618 = vrot.lane.b32.xlu0 %v1616, 16
      %v1619 = vpop.permute.xlu0 %1618
      %v1621 = vmul.f32 %v1614, %v1619
      %1623 = vrot.lane.b32.xlu0 %v1615, 96
      %v1624 = vpop.permute.xlu0 %1623
      %v1626 = vmul.f32 %v1614, %v1624
      %1628 = vrot.lane.b32.xlu0 %v1626, 16
      %v1629 = vpop.permute.xlu0 %1628
      %v1631 = vadd.f32 %v1621, %v1629
      %v1632 = vtanh.pop %v1631
      %1634 = vrot.lane.b32.xlu0 %v1632, 32
      %v1635 = vpop.permute.xlu0 %1634
      %v1637 = vmul.f32 %v1614, %v1635
      %1639 = vset.pattern.permute.xlu0 0
      %1640 = vperm.xlu0 %1639, %v1531
      %v1641 = vpop.permute.xlu0 %1640
      %v1644 = vlaneseq
      %v1645 = vshrl.u32 %v1644, 7
      %v1646 = vsub.s32 0, %v1645
      %v1647 = vrot.slane %v1637, %v1646
      %1648 = vrot.lane.b32.xlu0 %v1647, 80
      %v1649 = vpop.permute.xlu0 %1648
      %v1651 = vmul.f32 %v1641, %v1649
      %v1652 = vsub.f32 1.0, %v1531
      %1654 = vset.pattern.permute.xlu0 0
      %1655 = vperm.xlu0 %1654, %v1652
      %v1656 = vpop.permute.xlu0 %1655
      %v1658 = vmul.f32 %v1656, %v1534
      %v1659 = vadd.f32 %v1651, %v1658
      %1660 = vst.msk [vmem:[#allocation2] sm:$0x1] %vm1362, %v1659
      %v1662 = vlaneseq
      %v1663 = vshrl.u32 %v1662, 7
      %v1664 = vsub.s32 0, %v1663
      %v1665 = vrot.slane %v1631, %v1664
      %1666 = vrot.lane.b32.xlu0 %v1665, 112
      %v1667 = vpop.permute.xlu0 %1666
      %v1669 = vmul.f32 %v1641, %v1667
      %v1670 = vld [vmem:[#allocation3] sm:$0x1]
      %v1671 = vmul.f32 %v1656, %v1670
      %v1672 = vadd.f32 %v1669, %v1671
      %1673 = vst.msk [vmem:[#allocation3] sm:$0x1] %vm1362, %v1672
      %s1674 = scalar_lea.vmem [#allocation8], 1
      %1675 = vst.msk [vmem:[%s1674] sm:$0x1] %vm1362, %v1651
      %s1676 = sadd.s32 %s1229, 14
      %v1677 = vstv %s1676
      %vm1678 = vcmp.lt.s32.totalorder %v1677, %v1226
      %v1679 = vsel %vm1678, 1, 0
      %v1680 = vcvt.s32.f32 %v1679
      %s1681 = scalar_lea.vmem [#allocation7], 14
      %v1682 = vld [vmem:[%s1681] sm:$0x1]
      %v1683 = vld [vmem:[#allocation4] sm:$0x1]
      %v1685 = vsel %vm1236, %v1683, 0
      %1687 = vmatprep.subr.mxu0 0.0
      %1688 = vmatpush1.msra.mxu0 %v1223
      %1689 = vmatprep.subr.mxu0 0.0
      %1690 = vmatpush1.msra.mxu0 %v1224
      %1691 = vmatprep.subr.mxu0 0.0
      %1692 = vmatpush1.msra.mxu0 0.0
      %1693 = vmatprep.subr.mxu0 0.0
      %1694 = vmatpush1.msra.mxu0 0.0
      %1695 = vmatprep.subr.mxu0 0.0
      %1696 = vmatpush1.msra.mxu0 0.0
      %1697 = vmatprep.subr.mxu0 0.0
      %1698 = vmatpush1.msra.mxu0 0.0
      %1699 = vmatprep.subr.mxu0 0.0
      %1700 = vmatpush1.msra.mxu0 0.0
      %1701 = vmatprep.subr.mxu0 0.0
      %1702 = vmatpush1.msra.mxu0 0.0
      %1703 = vmatprep.subr.mxu0 0.0
      %1704 = vmatpush1.msra.mxu0 0.0
      %1705 = vmatprep.subr.mxu0 0.0
      %1706 = vmatpush1.msra.mxu0 0.0
      %1707 = vmatprep.subr.mxu0 0.0
      %1708 = vmatpush1.msra.mxu0 0.0
      %1709 = vmatprep.subr.mxu0 0.0
      %1710 = vmatpush1.msra.mxu0 0.0
      %1711 = vmatprep.subr.mxu0 0.0
      %1712 = vmatpush1.msra.mxu0 0.0
      %1713 = vmatprep.subr.mxu0 0.0
      %1714 = vmatpush1.msra.mxu0 0.0
      %1715 = vmatprep.subr.mxu0 0.0
      %1716 = vmatpush1.msra.mxu0 0.0
      %1717 = vmatprep.subr.mxu0 0.0
      %1718 = vmatpush1.msra.mxu0 0.0
      %1719 = vmatprep.subr.mxu0 0.0
      %1720 = vmatpush1.msra.mxu0 0.0
      %1721 = vmatprep.subr.mxu0 0.0
      %1722 = vmatpush1.msra.mxu0 0.0
      %1723 = vmatprep.subr.mxu0 0.0
      %1724 = vmatpush1.msra.mxu0 0.0
      %1725 = vmatprep.subr.mxu0 0.0
      %1726 = vmatpush1.msra.mxu0 0.0
      %1727 = vmatprep.subr.mxu0 0.0
      %1728 = vmatpush1.msra.mxu0 0.0
      %1729 = vmatprep.subr.mxu0 0.0
      %1730 = vmatpush1.msra.mxu0 0.0
      %1731 = vmatprep.subr.mxu0 0.0
      %1732 = vmatpush1.msra.mxu0 0.0
      %1733 = vmatprep.subr.mxu0 0.0
      %1734 = vmatpush1.msra.mxu0 0.0
      %1735 = vmatprep.subr.mxu0 0.0
      %1736 = vmatpush1.msra.mxu0 0.0
      %1737 = vmatprep.subr.mxu0 0.0
      %1738 = vmatpush1.msra.mxu0 0.0
      %1739 = vmatprep.subr.mxu0 0.0
      %1740 = vmatpush1.msra.mxu0 0.0
      %1741 = vmatprep.subr.mxu0 0.0
      %1742 = vmatpush1.msra.mxu0 0.0
      %1743 = vmatprep.subr.mxu0 0.0
      %1744 = vmatpush1.msra.mxu0 0.0
      %1745 = vmatprep.subr.mxu0 0.0
      %1746 = vmatpush1.msra.mxu0 0.0
      %1747 = vmatprep.subr.mxu0 0.0
      %1748 = vmatpush1.msra.mxu0 0.0
      %1749 = vmatprep.subr.mxu0 0.0
      %1750 = vmatpush1.msra.mxu0 0.0
      %1751 = vmatprep.mubr.f32.mxu0 0.0
      %1752 = vmatmul.mubr.f32.gmra.mrb[0].mxu0 %v1685
      %v1753 = vpop.f32.mrb[0].mxu0
      %v1754 = vadd.f32 0.0, %v1753
      %v1755 = vpop.f32.mrb[0].mxu0
      %1756 = vdwg.mxu0
      %v1757 = vadd.f32 %v1682, %v1754
      %v1758 = vxor.u32 %v1757, 2147483648
      %v1759 = vmul.f32 %v1758, 1.442695
      %v1760 = vpow.pop %v1759
      %v1761 = vadd.f32 %v1760, 1.0
      %v1762 = vrcp.pop %v1761
      %v1763 = vmul.f32 1.0, %v1762
      %v1764 = vtanh.pop %v1757
      %v1765 = vld [vmem:[#allocation5] sm:$0x1]
      %1767 = vrot.lane.b32.xlu0 %v1765, 16
      %v1768 = vpop.permute.xlu0 %1767
      %v1770 = vmul.f32 %v1763, %v1768
      %1772 = vrot.lane.b32.xlu0 %v1764, 96
      %v1773 = vpop.permute.xlu0 %1772
      %v1775 = vmul.f32 %v1763, %v1773
      %1777 = vrot.lane.b32.xlu0 %v1775, 16
      %v1778 = vpop.permute.xlu0 %1777
      %v1780 = vadd.f32 %v1770, %v1778
      %v1781 = vtanh.pop %v1780
      %1783 = vrot.lane.b32.xlu0 %v1781, 32
      %v1784 = vpop.permute.xlu0 %1783
      %v1786 = vmul.f32 %v1763, %v1784
      %1788 = vset.pattern.permute.xlu0 0
      %1789 = vperm.xlu0 %1788, %v1680
      %v1790 = vpop.permute.xlu0 %1789
      %v1793 = vlaneseq
      %v1794 = vshrl.u32 %v1793, 7
      %v1795 = vsub.s32 0, %v1794
      %v1796 = vrot.slane %v1786, %v1795
      %1797 = vrot.lane.b32.xlu0 %v1796, 80
      %v1798 = vpop.permute.xlu0 %1797
      %v1800 = vmul.f32 %v1790, %v1798
      %v1801 = vsub.f32 1.0, %v1680
      %1803 = vset.pattern.permute.xlu0 0
      %1804 = vperm.xlu0 %1803, %v1801
      %v1805 = vpop.permute.xlu0 %1804
      %v1807 = vmul.f32 %v1805, %v1683
      %v1808 = vadd.f32 %v1800, %v1807
      %1809 = vst.msk [vmem:[#allocation4] sm:$0x1] %vm1362, %v1808
      %v1811 = vlaneseq
      %v1812 = vshrl.u32 %v1811, 7
      %v1813 = vsub.s32 0, %v1812
      %v1814 = vrot.slane %v1780, %v1813
      %1815 = vrot.lane.b32.xlu0 %v1814, 112
      %v1816 = vpop.permute.xlu0 %1815
      %v1818 = vmul.f32 %v1790, %v1816
      %v1819 = vld [vmem:[#allocation5] sm:$0x1]
      %v1820 = vmul.f32 %v1805, %v1819
      %v1821 = vadd.f32 %v1818, %v1820
      %1822 = vst.msk [vmem:[#allocation5] sm:$0x1] %vm1362, %v1821
      %s1823 = scalar_lea.vmem [#allocation9], 14
      %1824 = vst.msk [vmem:[%s1823] sm:$0x1] %vm1362, %v1800
      %s1825 = sadd.s32 %s1227, 2
      %v1826 = vstv %s1825
      %vm1827 = vcmp.lt.s32.totalorder %v1826, %v1226
      %v1828 = vsel %vm1827, 1, 0
      %v1829 = vcvt.s32.f32 %v1828
      %s1830 = scalar_lea.vmem [#allocation6], 2
      %v1831 = vld [vmem:[%s1830] sm:$0x1]
      %v1832 = vld [vmem:[#allocation2] sm:$0x1]
      %v1834 = vsel %vm1236, %v1832, 0
      %1836 = vmatprep.subr.mxu0 0.0
      %1837 = vmatpush1.msra.mxu0 %v1221
      %1838 = vmatprep.subr.mxu0 0.0
      %1839 = vmatpush1.msra.mxu0 %v1222
      %1840 = vmatprep.subr.mxu0 0.0
      %1841 = vmatpush1.msra.mxu0 0.0
      %1842 = vmatprep.subr.mxu0 0.0
      %1843 = vmatpush1.msra.mxu0 0.0
      %1844 = vmatprep.subr.mxu0 0.0
      %1845 = vmatpush1.msra.mxu0 0.0
      %1846 = vmatprep.subr.mxu0 0.0
      %1847 = vmatpush1.msra.mxu0 0.0
      %1848 = vmatprep.subr.mxu0 0.0
      %1849 = vmatpush1.msra.mxu0 0.0
      %1850 = vmatprep.subr.mxu0 0.0
      %1851 = vmatpush1.msra.mxu0 0.0
      %1852 = vmatprep.subr.mxu0 0.0
      %1853 = vmatpush1.msra.mxu0 0.0
      %1854 = vmatprep.subr.mxu0 0.0
      %1855 = vmatpush1.msra.mxu0 0.0
      %1856 = vmatprep.subr.mxu0 0.0
      %1857 = vmatpush1.msra.mxu0 0.0
      %1858 = vmatprep.subr.mxu0 0.0
      %1859 = vmatpush1.msra.mxu0 0.0
      %1860 = vmatprep.subr.mxu0 0.0
      %1861 = vmatpush1.msra.mxu0 0.0
      %1862 = vmatprep.subr.mxu0 0.0
      %1863 = vmatpush1.msra.mxu0 0.0
      %1864 = vmatprep.subr.mxu0 0.0
      %1865 = vmatpush1.msra.mxu0 0.0
      %1866 = vmatprep.subr.mxu0 0.0
      %1867 = vmatpush1.msra.mxu0 0.0
      %1868 = vmatprep.subr.mxu0 0.0
      %1869 = vmatpush1.msra.mxu0 0.0
      %1870 = vmatprep.subr.mxu0 0.0
      %1871 = vmatpush1.msra.mxu0 0.0
      %1872 = vmatprep.subr.mxu0 0.0
      %1873 = vmatpush1.msra.mxu0 0.0
      %1874 = vmatprep.subr.mxu0 0.0
      %1875 = vmatpush1.msra.mxu0 0.0
      %1876 = vmatprep.subr.mxu0 0.0
      %1877 = vmatpush1.msra.mxu0 0.0
      %1878 = vmatprep.subr.mxu0 0.0
      %1879 = vmatpush1.msra.mxu0 0.0
      %1880 = vmatprep.subr.mxu0 0.0
      %1881 = vmatpush1.msra.mxu0 0.0
      %1882 = vmatprep.subr.mxu0 0.0
      %1883 = vmatpush1.msra.mxu0 0.0
      %1884 = vmatprep.subr.mxu0 0.0
      %1885 = vmatpush1.msra.mxu0 0.0
      %1886 = vmatprep.subr.mxu0 0.0
      %1887 = vmatpush1.msra.mxu0 0.0
      %1888 = vmatprep.subr.mxu0 0.0
      %1889 = vmatpush1.msra.mxu0 0.0
      %1890 = vmatprep.subr.mxu0 0.0
      %1891 = vmatpush1.msra.mxu0 0.0
      %1892 = vmatprep.subr.mxu0 0.0
      %1893 = vmatpush1.msra.mxu0 0.0
      %1894 = vmatprep.subr.mxu0 0.0
      %1895 = vmatpush1.msra.mxu0 0.0
      %1896 = vmatprep.subr.mxu0 0.0
      %1897 = vmatpush1.msra.mxu0 0.0
      %1898 = vmatprep.subr.mxu0 0.0
      %1899 = vmatpush1.msra.mxu0 0.0
      %1900 = vmatprep.mubr.f32.mxu0 0.0
      %1901 = vmatmul.mubr.f32.gmra.mrb[0].mxu0 %v1834
      %v1902 = vpop.f32.mrb[0].mxu0
      %v1903 = vadd.f32 0.0, %v1902
      %v1904 = vpop.f32.mrb[0].mxu0
      %1905 = vdwg.mxu0
      %v1906 = vadd.f32 %v1831, %v1903
      %v1907 = vxor.u32 %v1906, 2147483648
      %v1908 = vmul.f32 %v1907, 1.442695
      %v1909 = vpow.pop %v1908
      %v1910 = vadd.f32 %v1909, 1.0
      %v1911 = vrcp.pop %v1910
      %v1912 = vmul.f32 1.0, %v1911
      %v1913 = vtanh.pop %v1906
      %v1914 = vld [vmem:[#allocation3] sm:$0x1]
      %1916 = vrot.lane.b32.xlu0 %v1914, 16
      %v1917 = vpop.permute.xlu0 %1916
      %v1919 = vmul.f32 %v1912, %v1917
      %1921 = vrot.lane.b32.xlu0 %v1913, 96
      %v1922 = vpop.permute.xlu0 %1921
      %v1924 = vmul.f32 %v1912, %v1922
      %1926 = vrot.lane.b32.xlu0 %v1924, 16
      %v1927 = vpop.permute.xlu0 %1926
      %v1929 = vadd.f32 %v1919, %v1927
      %v1930 = vtanh.pop %v1929
      %1932 = vrot.lane.b32.xlu0 %v1930, 32
      %v1933 = vpop.permute.xlu0 %1932
      %v1935 = vmul.f32 %v1912, %v1933
      %1937 = vset.pattern.permute.xlu0 0
      %1938 = vperm.xlu0 %1937, %v1829
      %v1939 = vpop.permute.xlu0 %1938
      %v1942 = vlaneseq
      %v1943 = vshrl.u32 %v1942, 7
      %v1944 = vsub.s32 0, %v1943
      %v1945 = vrot.slane %v1935, %v1944
      %1946 = vrot.lane.b32.xlu0 %v1945, 80
      %v1947 = vpop.permute.xlu0 %1946
      %v1949 = vmul.f32 %v1939, %v1947
      %v1950 = vsub.f32 1.0, %v1829
      %1952 = vset.pattern.permute.xlu0 0
      %1953 = vperm.xlu0 %1952, %v1950
      %v1954 = vpop.permute.xlu0 %1953
      %v1956 = vmul.f32 %v1954, %v1832
      %v1957 = vadd.f32 %v1949, %v1956
      %1958 = vst.msk [vmem:[#allocation2] sm:$0x1] %vm1362, %v1957
      %v1960 = vlaneseq
      %v1961 = vshrl.u32 %v1960, 7
      %v1962 = vsub.s32 0, %v1961
      %v1963 = vrot.slane %v1929, %v1962
      %1964 = vrot.lane.b32.xlu0 %v1963, 112
      %v1965 = vpop.permute.xlu0 %1964
      %v1967 = vmul.f32 %v1939, %v1965
      %v1968 = vld [vmem:[#allocation3] sm:$0x1]
      %v1969 = vmul.f32 %v1954, %v1968
      %v1970 = vadd.f32 %v1967, %v1969
      %1971 = vst.msk [vmem:[#allocation3] sm:$0x1] %vm1362, %v1970
      %s1972 = scalar_lea.vmem [#allocation8], 2
      %1973 = vst.msk [vmem:[%s1972] sm:$0x1] %vm1362, %v1949
      %s1974 = sadd.s32 %s1229, 13
      %v1975 = vstv %s1974
      %vm1976 = vcmp.lt.s32.totalorder %v1975, %v1226
      %v1977 = vsel %vm1976, 1, 0
      %v1978 = vcvt.s32.f32 %v1977
      %s1979 = scalar_lea.vmem [#allocation7], 13
      %v1980 = vld [vmem:[%s1979] sm:$0x1]
      %v1981 = vld [vmem:[#allocation4] sm:$0x1]
      %v1983 = vsel %vm1236, %v1981, 0
      %1985 = vmatprep.subr.mxu0 0.0
      %1986 = vmatpush1.msra.mxu0 %v1223
      %1987 = vmatprep.subr.mxu0 0.0
      %1988 = vmatpush1.msra.mxu0 %v1224
      %1989 = vmatprep.subr.mxu0 0.0
      %1990 = vmatpush1.msra.mxu0 0.0
      %1991 = vmatprep.subr.mxu0 0.0
      %1992 = vmatpush1.msra.mxu0 0.0
      %1993 = vmatprep.subr.mxu0 0.0
      %1994 = vmatpush1.msra.mxu0 0.0
      %1995 = vmatprep.subr.mxu0 0.0
      %1996 = vmatpush1.msra.mxu0 0.0
      %1997 = vmatprep.subr.mxu0 0.0
      %1998 = vmatpush1.msra.mxu0 0.0
      %1999 = vmatprep.subr.mxu0 0.0
      %2000 = vmatpush1.msra.mxu0 0.0
      %2001 = vmatprep.subr.mxu0 0.0
      %2002 = vmatpush1.msra.mxu0 0.0
      %2003 = vmatprep.subr.mxu0 0.0
      %2004 = vmatpush1.msra.mxu0 0.0
      %2005 = vmatprep.subr.mxu0 0.0
      %2006 = vmatpush1.msra.mxu0 0.0
      %2007 = vmatprep.subr.mxu0 0.0
      %2008 = vmatpush1.msra.mxu0 0.0
      %2009 = vmatprep.subr.mxu0 0.0
      %2010 = vmatpush1.msra.mxu0 0.0
      %2011 = vmatprep.subr.mxu0 0.0
      %2012 = vmatpush1.msra.mxu0 0.0
      %2013 = vmatprep.subr.mxu0 0.0
      %2014 = vmatpush1.msra.mxu0 0.0
      %2015 = vmatprep.subr.mxu0 0.0
      %2016 = vmatpush1.msra.mxu0 0.0
      %2017 = vmatprep.subr.mxu0 0.0
      %2018 = vmatpush1.msra.mxu0 0.0
      %2019 = vmatprep.subr.mxu0 0.0
      %2020 = vmatpush1.msra.mxu0 0.0
      %2021 = vmatprep.subr.mxu0 0.0
      %2022 = vmatpush1.msra.mxu0 0.0
      %2023 = vmatprep.subr.mxu0 0.0
      %2024 = vmatpush1.msra.mxu0 0.0
      %2025 = vmatprep.subr.mxu0 0.0
      %2026 = vmatpush1.msra.mxu0 0.0
      %2027 = vmatprep.subr.mxu0 0.0
      %2028 = vmatpush1.msra.mxu0 0.0
      %2029 = vmatprep.subr.mxu0 0.0
      %2030 = vmatpush1.msra.mxu0 0.0
      %2031 = vmatprep.subr.mxu0 0.0
      %2032 = vmatpush1.msra.mxu0 0.0
      %2033 = vmatprep.subr.mxu0 0.0
      %2034 = vmatpush1.msra.mxu0 0.0
      %2035 = vmatprep.subr.mxu0 0.0
      %2036 = vmatpush1.msra.mxu0 0.0
      %2037 = vmatprep.subr.mxu0 0.0
      %2038 = vmatpush1.msra.mxu0 0.0
      %2039 = vmatprep.subr.mxu0 0.0
      %2040 = vmatpush1.msra.mxu0 0.0
      %2041 = vmatprep.subr.mxu0 0.0
      %2042 = vmatpush1.msra.mxu0 0.0
      %2043 = vmatprep.subr.mxu0 0.0
      %2044 = vmatpush1.msra.mxu0 0.0
      %2045 = vmatprep.subr.mxu0 0.0
      %2046 = vmatpush1.msra.mxu0 0.0
      %2047 = vmatprep.subr.mxu0 0.0
      %2048 = vmatpush1.msra.mxu0 0.0
      %2049 = vmatprep.mubr.f32.mxu0 0.0
      %2050 = vmatmul.mubr.f32.gmra.mrb[0].mxu0 %v1983
      %v2051 = vpop.f32.mrb[0].mxu0
      %v2052 = vadd.f32 0.0, %v2051
      %v2053 = vpop.f32.mrb[0].mxu0
      %2054 = vdwg.mxu0
      %v2055 = vadd.f32 %v1980, %v2052
      %v2056 = vxor.u32 %v2055, 2147483648
      %v2057 = vmul.f32 %v2056, 1.442695
      %v2058 = vpow.pop %v2057
      %v2059 = vadd.f32 %v2058, 1.0
      %v2060 = vrcp.pop %v2059
      %v2061 = vmul.f32 1.0, %v2060
      %v2062 = vtanh.pop %v2055
      %v2063 = vld [vmem:[#allocation5] sm:$0x1]
      %2065 = vrot.lane.b32.xlu0 %v2063, 16
      %v2066 = vpop.permute.xlu0 %2065
      %v2068 = vmul.f32 %v2061, %v2066
      %2070 = vrot.lane.b32.xlu0 %v2062, 96
      %v2071 = vpop.permute.xlu0 %2070
      %v2073 = vmul.f32 %v2061, %v2071
      %2075 = vrot.lane.b32.xlu0 %v2073, 16
      %v2076 = vpop.permute.xlu0 %2075
      %v2078 = vadd.f32 %v2068, %v2076
      %v2079 = vtanh.pop %v2078
      %2081 = vrot.lane.b32.xlu0 %v2079, 32
      %v2082 = vpop.permute.xlu0 %2081
      %v2084 = vmul.f32 %v2061, %v2082
      %2086 = vset.pattern.permute.xlu0 0
      %2087 = vperm.xlu0 %2086, %v1978
      %v2088 = vpop.permute.xlu0 %2087
      %v2091 = vlaneseq
      %v2092 = vshrl.u32 %v2091, 7
      %v2093 = vsub.s32 0, %v2092
      %v2094 = vrot.slane %v2084, %v2093
      %2095 = vrot.lane.b32.xlu0 %v2094, 80
      %v2096 = vpop.permute.xlu0 %2095
      %v2098 = vmul.f32 %v2088, %v2096
      %v2099 = vsub.f32 1.0, %v1978
      %2101 = vset.pattern.permute.xlu0 0
      %2102 = vperm.xlu0 %2101, %v2099
      %v2103 = vpop.permute.xlu0 %2102
      %v2105 = vmul.f32 %v2103, %v1981
      %v2106 = vadd.f32 %v2098, %v2105
      %2107 = vst.msk [vmem:[#allocation4] sm:$0x1] %vm1362, %v2106
      %v2109 = vlaneseq
      %v2110 = vshrl.u32 %v2109, 7
      %v2111 = vsub.s32 0, %v2110
      %v2112 = vrot.slane %v2078, %v2111
      %2113 = vrot.lane.b32.xlu0 %v2112, 112
      %v2114 = vpop.permute.xlu0 %2113
      %v2116 = vmul.f32 %v2088, %v2114
      %v2117 = vld [vmem:[#allocation5] sm:$0x1]
      %v2118 = vmul.f32 %v2103, %v2117
      %v2119 = vadd.f32 %v2116, %v2118
      %2120 = vst.msk [vmem:[#allocation5] sm:$0x1] %vm1362, %v2119
      %s2121 = scalar_lea.vmem [#allocation9], 13
      %2122 = vst.msk [vmem:[%s2121] sm:$0x1] %vm1362, %v2098
      %s2123 = sadd.s32 %s1227, 3
      %v2124 = vstv %s2123
      %vm2125 = vcmp.lt.s32.totalorder %v2124, %v1226
      %v2126 = vsel %vm2125, 1, 0
      %v2127 = vcvt.s32.f32 %v2126
      %s2128 = scalar_lea.vmem [#allocation6], 3
      %v2129 = vld [vmem:[%s2128] sm:$0x1]
      %v2130 = vld [vmem:[#allocation2] sm:$0x1]
      %v2132 = vsel %vm1236, %v2130, 0
      %2134 = vmatprep.subr.mxu0 0.0
      %2135 = vmatpush1.msra.mxu0 %v1221
      %2136 = vmatprep.subr.mxu0 0.0
      %2137 = vmatpush1.msra.mxu0 %v1222
      %2138 = vmatprep.subr.mxu0 0.0
      %2139 = vmatpush1.msra.mxu0 0.0
      %2140 = vmatprep.subr.mxu0 0.0
      %2141 = vmatpush1.msra.mxu0 0.0
      %2142 = vmatprep.subr.mxu0 0.0
      %2143 = vmatpush1.msra.mxu0 0.0
      %2144 = vmatprep.subr.mxu0 0.0
      %2145 = vmatpush1.msra.mxu0 0.0
      %2146 = vmatprep.subr.mxu0 0.0
      %2147 = vmatpush1.msra.mxu0 0.0
      %2148 = vmatprep.subr.mxu0 0.0
      %2149 = vmatpush1.msra.mxu0 0.0
      %2150 = vmatprep.subr.mxu0 0.0
      %2151 = vmatpush1.msra.mxu0 0.0
      %2152 = vmatprep.subr.mxu0 0.0
      %2153 = vmatpush1.msra.mxu0 0.0
      %2154 = vmatprep.subr.mxu0 0.0
      %2155 = vmatpush1.msra.mxu0 0.0
      %2156 = vmatprep.subr.mxu0 0.0
      %2157 = vmatpush1.msra.mxu0 0.0
      %2158 = vmatprep.subr.mxu0 0.0
      %2159 = vmatpush1.msra.mxu0 0.0
      %2160 = vmatprep.subr.mxu0 0.0
      %2161 = vmatpush1.msra.mxu0 0.0
      %2162 = vmatprep.subr.mxu0 0.0
      %2163 = vmatpush1.msra.mxu0 0.0
      %2164 = vmatprep.subr.mxu0 0.0
      %2165 = vmatpush1.msra.mxu0 0.0
      %2166 = vmatprep.subr.mxu0 0.0
      %2167 = vmatpush1.msra.mxu0 0.0
      %2168 = vmatprep.subr.mxu0 0.0
      %2169 = vmatpush1.msra.mxu0 0.0
      %2170 = vmatprep.subr.mxu0 0.0
      %2171 = vmatpush1.msra.mxu0 0.0
      %2172 = vmatprep.subr.mxu0 0.0
      %2173 = vmatpush1.msra.mxu0 0.0
      %2174 = vmatprep.subr.mxu0 0.0
      %2175 = vmatpush1.msra.mxu0 0.0
      %2176 = vmatprep.subr.mxu0 0.0
      %2177 = vmatpush1.msra.mxu0 0.0
      %2178 = vmatprep.subr.mxu0 0.0
      %2179 = vmatpush1.msra.mxu0 0.0
      %2180 = vmatprep.subr.mxu0 0.0
      %2181 = vmatpush1.msra.mxu0 0.0
      %2182 = vmatprep.subr.mxu0 0.0
      %2183 = vmatpush1.msra.mxu0 0.0
      %2184 = vmatprep.subr.mxu0 0.0
      %2185 = vmatpush1.msra.mxu0 0.0
      %2186 = vmatprep.subr.mxu0 0.0
      %2187 = vmatpush1.msra.mxu0 0.0
      %2188 = vmatprep.subr.mxu0 0.0
      %2189 = vmatpush1.msra.mxu0 0.0
      %2190 = vmatprep.subr.mxu0 0.0
      %2191 = vmatpush1.msra.mxu0 0.0
      %2192 = vmatprep.subr.mxu0 0.0
      %2193 = vmatpush1.msra.mxu0 0.0
      %2194 = vmatprep.subr.mxu0 0.0
      %2195 = vmatpush1.msra.mxu0 0.0
      %2196 = vmatprep.subr.mxu0 0.0
      %2197 = vmatpush1.msra.mxu0 0.0
      %2198 = vmatprep.mubr.f32.mxu0 0.0
      %2199 = vmatmul.mubr.f32.gmra.mrb[0].mxu0 %v2132
      %v2200 = vpop.f32.mrb[0].mxu0
      %v2201 = vadd.f32 0.0, %v2200
      %v2202 = vpop.f32.mrb[0].mxu0
      %2203 = vdwg.mxu0
      %v2204 = vadd.f32 %v2129, %v2201
      %v2205 = vxor.u32 %v2204, 2147483648
      %v2206 = vmul.f32 %v2205, 1.442695
      %v2207 = vpow.pop %v2206
      %v2208 = vadd.f32 %v2207, 1.0
      %v2209 = vrcp.pop %v2208
      %v2210 = vmul.f32 1.0, %v2209
      %v2211 = vtanh.pop %v2204
      %v2212 = vld [vmem:[#allocation3] sm:$0x1]
      %2214 = vrot.lane.b32.xlu0 %v2212, 16
      %v2215 = vpop.permute.xlu0 %2214
      %v2217 = vmul.f32 %v2210, %v2215
      %2219 = vrot.lane.b32.xlu0 %v2211, 96
      %v2220 = vpop.permute.xlu0 %2219
      %v2222 = vmul.f32 %v2210, %v2220
      %2224 = vrot.lane.b32.xlu0 %v2222, 16
      %v2225 = vpop.permute.xlu0 %2224
      %v2227 = vadd.f32 %v2217, %v2225
      %v2228 = vtanh.pop %v2227
      %2230 = vrot.lane.b32.xlu0 %v2228, 32
      %v2231 = vpop.permute.xlu0 %2230
      %v2233 = vmul.f32 %v2210, %v2231
      %2235 = vset.pattern.permute.xlu0 0
      %2236 = vperm.xlu0 %2235, %v2127
      %v2237 = vpop.permute.xlu0 %2236
      %v2240 = vlaneseq
      %v2241 = vshrl.u32 %v2240, 7
      %v2242 = vsub.s32 0, %v2241
      %v2243 = vrot.slane %v2233, %v2242
      %2244 = vrot.lane.b32.xlu0 %v2243, 80
      %v2245 = vpop.permute.xlu0 %2244
      %v2247 = vmul.f32 %v2237, %v2245
      %v2248 = vsub.f32 1.0, %v2127
      %2250 = vset.pattern.permute.xlu0 0
      %2251 = vperm.xlu0 %2250, %v2248
      %v2252 = vpop.permute.xlu0 %2251
      %v2254 = vmul.f32 %v2252, %v2130
      %v2255 = vadd.f32 %v2247, %v2254
      %2256 = vst.msk [vmem:[#allocation2] sm:$0x1] %vm1362, %v2255
      %v2258 = vlaneseq
      %v2259 = vshrl.u32 %v2258, 7
      %v2260 = vsub.s32 0, %v2259
      %v2261 = vrot.slane %v2227, %v2260
      %2262 = vrot.lane.b32.xlu0 %v2261, 112
      %v2263 = vpop.permute.xlu0 %2262
      %v2265 = vmul.f32 %v2237, %v2263
      %v2266 = vld [vmem:[#allocation3] sm:$0x1]
      %v2267 = vmul.f32 %v2252, %v2266
      %v2268 = vadd.f32 %v2265, %v2267
      %2269 = vst.msk [vmem:[#allocation3] sm:$0x1] %vm1362, %v2268
      %s2270 = scalar_lea.vmem [#allocation8], 3
      %2271 = vst.msk [vmem:[%s2270] sm:$0x1] %vm1362, %v2247
      %s2272 = sadd.s32 %s1229, 12
      %v2273 = vstv %s2272
      %vm2274 = vcmp.lt.s32.totalorder %v2273, %v1226
      %v2275 = vsel %vm2274, 1, 0
      %v2276 = vcvt.s32.f32 %v2275
      %s2277 = scalar_lea.vmem [#allocation7], 12
      %v2278 = vld [vmem:[%s2277] sm:$0x1]
      %v2279 = vld [vmem:[#allocation4] sm:$0x1]
      %v2281 = vsel %vm1236, %v2279, 0
      %2283 = vmatprep.subr.mxu0 0.0
      %2284 = vmatpush1.msra.mxu0 %v1223
      %2285 = vmatprep.subr.mxu0 0.0
      %2286 = vmatpush1.msra.mxu0 %v1224
      %2287 = vmatprep.subr.mxu0 0.0
      %2288 = vmatpush1.msra.mxu0 0.0
      %2289 = vmatprep.subr.mxu0 0.0
      %2290 = vmatpush1.msra.mxu0 0.0
      %2291 = vmatprep.subr.mxu0 0.0
      %2292 = vmatpush1.msra.mxu0 0.0
      %2293 = vmatprep.subr.mxu0 0.0
      %2294 = vmatpush1.msra.mxu0 0.0
      %2295 = vmatprep.subr.mxu0 0.0
      %2296 = vmatpush1.msra.mxu0 0.0
      %2297 = vmatprep.subr.mxu0 0.0
      %2298 = vmatpush1.msra.mxu0 0.0
      %2299 = vmatprep.subr.mxu0 0.0
      %2300 = vmatpush1.msra.mxu0 0.0
      %2301 = vmatprep.subr.mxu0 0.0
      %2302 = vmatpush1.msra.mxu0 0.0
      %2303 = vmatprep.subr.mxu0 0.0
      %2304 = vmatpush1.msra.mxu0 0.0
      %2305 = vmatprep.subr.mxu0 0.0
      %2306 = vmatpush1.msra.mxu0 0.0
      %2307 = vmatprep.subr.mxu0 0.0
      %2308 = vmatpush1.msra.mxu0 0.0
      %2309 = vmatprep.subr.mxu0 0.0
      %2310 = vmatpush1.msra.mxu0 0.0
      %2311 = vmatprep.subr.mxu0 0.0
      %2312 = vmatpush1.msra.mxu0 0.0
      %2313 = vmatprep.subr.mxu0 0.0
      %2314 = vmatpush1.msra.mxu0 0.0
      %2315 = vmatprep.subr.mxu0 0.0
      %2316 = vmatpush1.msra.mxu0 0.0
      %2317 = vmatprep.subr.mxu0 0.0
      %2318 = vmatpush1.msra.mxu0 0.0
      %2319 = vmatprep.subr.mxu0 0.0
      %2320 = vmatpush1.msra.mxu0 0.0
      %2321 = vmatprep.subr.mxu0 0.0
      %2322 = vmatpush1.msra.mxu0 0.0
      %2323 = vmatprep.subr.mxu0 0.0
      %2324 = vmatpush1.msra.mxu0 0.0
      %2325 = vmatprep.subr.mxu0 0.0
      %2326 = vmatpush1.msra.mxu0 0.0
      %2327 = vmatprep.subr.mxu0 0.0
      %2328 = vmatpush1.msra.mxu0 0.0
      %2329 = vmatprep.subr.mxu0 0.0
      %2330 = vmatpush1.msra.mxu0 0.0
      %2331 = vmatprep.subr.mxu0 0.0
      %2332 = vmatpush1.msra.mxu0 0.0
      %2333 = vmatprep.subr.mxu0 0.0
      %2334 = vmatpush1.msra.mxu0 0.0
      %2335 = vmatprep.subr.mxu0 0.0
      %2336 = vmatpush1.msra.mxu0 0.0
      %2337 = vmatprep.subr.mxu0 0.0
      %2338 = vmatpush1.msra.mxu0 0.0
      %2339 = vmatprep.subr.mxu0 0.0
      %2340 = vmatpush1.msra.mxu0 0.0
      %2341 = vmatprep.subr.mxu0 0.0
      %2342 = vmatpush1.msra.mxu0 0.0
      %2343 = vmatprep.subr.mxu0 0.0
      %2344 = vmatpush1.msra.mxu0 0.0
      %2345 = vmatprep.subr.mxu0 0.0
      %2346 = vmatpush1.msra.mxu0 0.0
      %2347 = vmatprep.mubr.f32.mxu0 0.0
      %2348 = vmatmul.mubr.f32.gmra.mrb[0].mxu0 %v2281
      %v2349 = vpop.f32.mrb[0].mxu0
      %v2350 = vadd.f32 0.0, %v2349
      %v2351 = vpop.f32.mrb[0].mxu0
      %2352 = vdwg.mxu0
      %v2353 = vadd.f32 %v2278, %v2350
      %v2354 = vxor.u32 %v2353, 2147483648
      %v2355 = vmul.f32 %v2354, 1.442695
      %v2356 = vpow.pop %v2355
      %v2357 = vadd.f32 %v2356, 1.0
      %v2358 = vrcp.pop %v2357
      %v2359 = vmul.f32 1.0, %v2358
      %v2360 = vtanh.pop %v2353
      %v2361 = vld [vmem:[#allocation5] sm:$0x1]
      %2363 = vrot.lane.b32.xlu0 %v2361, 16
      %v2364 = vpop.permute.xlu0 %2363
      %v2366 = vmul.f32 %v2359, %v2364
      %2368 = vrot.lane.b32.xlu0 %v2360, 96
      %v2369 = vpop.permute.xlu0 %2368
      %v2371 = vmul.f32 %v2359, %v2369
      %2373 = vrot.lane.b32.xlu0 %v2371, 16
      %v2374 = vpop.permute.xlu0 %2373
      %v2376 = vadd.f32 %v2366, %v2374
      %v2377 = vtanh.pop %v2376
      %2379 = vrot.lane.b32.xlu0 %v2377, 32
      %v2380 = vpop.permute.xlu0 %2379
      %v2382 = vmul.f32 %v2359, %v2380
      %2384 = vset.pattern.permute.xlu0 0
      %2385 = vperm.xlu0 %2384, %v2276
      %v2386 = vpop.permute.xlu0 %2385
      %v2389 = vlaneseq
      %v2390 = vshrl.u32 %v2389, 7
      %v2391 = vsub.s32 0, %v2390
      %v2392 = vrot.slane %v2382, %v2391
      %2393 = vrot.lane.b32.xlu0 %v2392, 80
      %v2394 = vpop.permute.xlu0 %2393
      %v2396 = vmul.f32 %v2386, %v2394
      %v2397 = vsub.f32 1.0, %v2276
      %2399 = vset.pattern.permute.xlu0 0
      %2400 = vperm.xlu0 %2399, %v2397
      %v2401 = vpop.permute.xlu0 %2400
      %v2403 = vmul.f32 %v2401, %v2279
      %v2404 = vadd.f32 %v2396, %v2403
      %2405 = vst.msk [vmem:[#allocation4] sm:$0x1] %vm1362, %v2404
      %v2407 = vlaneseq
      %v2408 = vshrl.u32 %v2407, 7
      %v2409 = vsub.s32 0, %v2408
      %v2410 = vrot.slane %v2376, %v2409
      %2411 = vrot.lane.b32.xlu0 %v2410, 112
      %v2412 = vpop.permute.xlu0 %2411
      %v2414 = vmul.f32 %v2386, %v2412
      %v2415 = vld [vmem:[#allocation5] sm:$0x1]
      %v2416 = vmul.f32 %v2401, %v2415
      %v2417 = vadd.f32 %v2414, %v2416
      %2418 = vst.msk [vmem:[#allocation5] sm:$0x1] %vm1362, %v2417
      %s2419 = scalar_lea.vmem [#allocation9], 12
      %2420 = vst.msk [vmem:[%s2419] sm:$0x1] %vm1362, %v2396
      %s2421 = sadd.s32 %s1227, 4
      %v2422 = vstv %s2421
      %vm2423 = vcmp.lt.s32.totalorder %v2422, %v1226
      %v2424 = vsel %vm2423, 1, 0
      %v2425 = vcvt.s32.f32 %v2424
      %s2426 = scalar_lea.vmem [#allocation6], 4
      %v2427 = vld [vmem:[%s2426] sm:$0x1]
      %v2428 = vld [vmem:[#allocation2] sm:$0x1]
      %v2430 = vsel %vm1236, %v2428, 0
      %2432 = vmatprep.subr.mxu0 0.0
      %2433 = vmatpush1.msra.mxu0 %v1221
      %2434 = vmatprep.subr.mxu0 0.0
      %2435 = vmatpush1.msra.mxu0 %v1222
      %2436 = vmatprep.subr.mxu0 0.0
      %2437 = vmatpush1.msra.mxu0 0.0
      %2438 = vmatprep.subr.mxu0 0.0
      %2439 = vmatpush1.msra.mxu0 0.0
      %2440 = vmatprep.subr.mxu0 0.0
      %2441 = vmatpush1.msra.mxu0 0.0
      %2442 = vmatprep.subr.mxu0 0.0
      %2443 = vmatpush1.msra.mxu0 0.0
      %2444 = vmatprep.subr.mxu0 0.0
      %2445 = vmatpush1.msra.mxu0 0.0
      %2446 = vmatprep.subr.mxu0 0.0
      %2447 = vmatpush1.msra.mxu0 0.0
      %2448 = vmatprep.subr.mxu0 0.0
      %2449 = vmatpush1.msra.mxu0 0.0
      %2450 = vmatprep.subr.mxu0 0.0
      %2451 = vmatpush1.msra.mxu0 0.0
      %2452 = vmatprep.subr.mxu0 0.0
      %2453 = vmatpush1.msra.mxu0 0.0
      %2454 = vmatprep.subr.mxu0 0.0
      %2455 = vmatpush1.msra.mxu0 0.0
      %2456 = vmatprep.subr.mxu0 0.0
      %2457 = vmatpush1.msra.mxu0 0.0
      %2458 = vmatprep.subr.mxu0 0.0
      %2459 = vmatpush1.msra.mxu0 0.0
      %2460 = vmatprep.subr.mxu0 0.0
      %2461 = vmatpush1.msra.mxu0 0.0
      %2462 = vmatprep.subr.mxu0 0.0
      %2463 = vmatpush1.msra.mxu0 0.0
      %2464 = vmatprep.subr.mxu0 0.0
      %2465 = vmatpush1.msra.mxu0 0.0
      %2466 = vmatprep.subr.mxu0 0.0
      %2467 = vmatpush1.msra.mxu0 0.0
      %2468 = vmatprep.subr.mxu0 0.0
      %2469 = vmatpush1.msra.mxu0 0.0
      %2470 = vmatprep.subr.mxu0 0.0
      %2471 = vmatpush1.msra.mxu0 0.0
      %2472 = vmatprep.subr.mxu0 0.0
      %2473 = vmatpush1.msra.mxu0 0.0
      %2474 = vmatprep.subr.mxu0 0.0
      %2475 = vmatpush1.msra.mxu0 0.0
      %2476 = vmatprep.subr.mxu0 0.0
      %2477 = vmatpush1.msra.mxu0 0.0
      %2478 = vmatprep.subr.mxu0 0.0
      %2479 = vmatpush1.msra.mxu0 0.0
      %2480 = vmatprep.subr.mxu0 0.0
      %2481 = vmatpush1.msra.mxu0 0.0
      %2482 = vmatprep.subr.mxu0 0.0
      %2483 = vmatpush1.msra.mxu0 0.0
      %2484 = vmatprep.subr.mxu0 0.0
      %2485 = vmatpush1.msra.mxu0 0.0
      %2486 = vmatprep.subr.mxu0 0.0
      %2487 = vmatpush1.msra.mxu0 0.0
      %2488 = vmatprep.subr.mxu0 0.0
      %2489 = vmatpush1.msra.mxu0 0.0
      %2490 = vmatprep.subr.mxu0 0.0
      %2491 = vmatpush1.msra.mxu0 0.0
      %2492 = vmatprep.subr.mxu0 0.0
      %2493 = vmatpush1.msra.mxu0 0.0
      %2494 = vmatprep.subr.mxu0 0.0
      %2495 = vmatpush1.msra.mxu0 0.0
      %2496 = vmatprep.mubr.f32.mxu0 0.0
      %2497 = vmatmul.mubr.f32.gmra.mrb[0].mxu0 %v2430
      %v2498 = vpop.f32.mrb[0].mxu0
      %v2499 = vadd.f32 0.0, %v2498
      %v2500 = vpop.f32.mrb[0].mxu0
      %2501 = vdwg.mxu0
      %v2502 = vadd.f32 %v2427, %v2499
      %v2503 = vxor.u32 %v2502, 2147483648
      %v2504 = vmul.f32 %v2503, 1.442695
      %v2505 = vpow.pop %v2504
      %v2506 = vadd.f32 %v2505, 1.0
      %v2507 = vrcp.pop %v2506
      %v2508 = vmul.f32 1.0, %v2507
      %v2509 = vtanh.pop %v2502
      %v2510 = vld [vmem:[#allocation3] sm:$0x1]
      %2512 = vrot.lane.b32.xlu0 %v2510, 16
      %v2513 = vpop.permute.xlu0 %2512
      %v2515 = vmul.f32 %v2508, %v2513
      %2517 = vrot.lane.b32.xlu0 %v2509, 96
      %v2518 = vpop.permute.xlu0 %2517
      %v2520 = vmul.f32 %v2508, %v2518
      %2522 = vrot.lane.b32.xlu0 %v2520, 16
      %v2523 = vpop.permute.xlu0 %2522
      %v2525 = vadd.f32 %v2515, %v2523
      %v2526 = vtanh.pop %v2525
      %2528 = vrot.lane.b32.xlu0 %v2526, 32
      %v2529 = vpop.permute.xlu0 %2528
      %v2531 = vmul.f32 %v2508, %v2529
      %2533 = vset.pattern.permute.xlu0 0
      %2534 = vperm.xlu0 %2533, %v2425
      %v2535 = vpop.permute.xlu0 %2534
      %v2538 = vlaneseq
      %v2539 = vshrl.u32 %v2538, 7
      %v2540 = vsub.s32 0, %v2539
      %v2541 = vrot.slane %v2531, %v2540
      %2542 = vrot.lane.b32.xlu0 %v2541, 80
      %v2543 = vpop.permute.xlu0 %2542
      %v2545 = vmul.f32 %v2535, %v2543
      %v2546 = vsub.f32 1.0, %v2425
      %2548 = vset.pattern.permute.xlu0 0
      %2549 = vperm.xlu0 %2548, %v2546
      %v2550 = vpop.permute.xlu0 %2549
      %v2552 = vmul.f32 %v2550, %v2428
      %v2553 = vadd.f32 %v2545, %v2552
      %2554 = vst.msk [vmem:[#allocation2] sm:$0x1] %vm1362, %v2553
      %v2556 = vlaneseq
      %v2557 = vshrl.u32 %v2556, 7
      %v2558 = vsub.s32 0, %v2557
      %v2559 = vrot.slane %v2525, %v2558
      %2560 = vrot.lane.b32.xlu0 %v2559, 112
      %v2561 = vpop.permute.xlu0 %2560
      %v2563 = vmul.f32 %v2535, %v2561
      %v2564 = vld [vmem:[#allocation3] sm:$0x1]
      %v2565 = vmul.f32 %v2550, %v2564
      %v2566 = vadd.f32 %v2563, %v2565
      %2567 = vst.msk [vmem:[#allocation3] sm:$0x1] %vm1362, %v2566
      %s2568 = scalar_lea.vmem [#allocation8], 4
      %2569 = vst.msk [vmem:[%s2568] sm:$0x1] %vm1362, %v2545
      %s2570 = sadd.s32 %s1229, 11
      %v2571 = vstv %s2570
      %vm2572 = vcmp.lt.s32.totalorder %v2571, %v1226
      %v2573 = vsel %vm2572, 1, 0
      %v2574 = vcvt.s32.f32 %v2573
      %s2575 = scalar_lea.vmem [#allocation7], 11
      %v2576 = vld [vmem:[%s2575] sm:$0x1]
      %v2577 = vld [vmem:[#allocation4] sm:$0x1]
      %v2579 = vsel %vm1236, %v2577, 0
      %2581 = vmatprep.subr.mxu0 0.0
      %2582 = vmatpush1.msra.mxu0 %v1223
      %2583 = vmatprep.subr.mxu0 0.0
      %2584 = vmatpush1.msra.mxu0 %v1224
      %2585 = vmatprep.subr.mxu0 0.0
      %2586 = vmatpush1.msra.mxu0 0.0
      %2587 = vmatprep.subr.mxu0 0.0
      %2588 = vmatpush1.msra.mxu0 0.0
      %2589 = vmatprep.subr.mxu0 0.0
      %2590 = vmatpush1.msra.mxu0 0.0
      %2591 = vmatprep.subr.mxu0 0.0
      %2592 = vmatpush1.msra.mxu0 0.0
      %2593 = vmatprep.subr.mxu0 0.0
      %2594 = vmatpush1.msra.mxu0 0.0
      %2595 = vmatprep.subr.mxu0 0.0
      %2596 = vmatpush1.msra.mxu0 0.0
      %2597 = vmatprep.subr.mxu0 0.0
      %2598 = vmatpush1.msra.mxu0 0.0
      %2599 = vmatprep.subr.mxu0 0.0
      %2600 = vmatpush1.msra.mxu0 0.0
      %2601 = vmatprep.subr.mxu0 0.0
      %2602 = vmatpush1.msra.mxu0 0.0
      %2603 = vmatprep.subr.mxu0 0.0
      %2604 = vmatpush1.msra.mxu0 0.0
      %2605 = vmatprep.subr.mxu0 0.0
      %2606 = vmatpush1.msra.mxu0 0.0
      %2607 = vmatprep.subr.mxu0 0.0
      %2608 = vmatpush1.msra.mxu0 0.0
      %2609 = vmatprep.subr.mxu0 0.0
      %2610 = vmatpush1.msra.mxu0 0.0
      %2611 = vmatprep.subr.mxu0 0.0
      %2612 = vmatpush1.msra.mxu0 0.0
      %2613 = vmatprep.subr.mxu0 0.0
      %2614 = vmatpush1.msra.mxu0 0.0
      %2615 = vmatprep.subr.mxu0 0.0
      %2616 = vmatpush1.msra.mxu0 0.0
      %2617 = vmatprep.subr.mxu0 0.0
      %2618 = vmatpush1.msra.mxu0 0.0
      %2619 = vmatprep.subr.mxu0 0.0
      %2620 = vmatpush1.msra.mxu0 0.0
      %2621 = vmatprep.subr.mxu0 0.0
      %2622 = vmatpush1.msra.mxu0 0.0
      %2623 = vmatprep.subr.mxu0 0.0
      %2624 = vmatpush1.msra.mxu0 0.0
      %2625 = vmatprep.subr.mxu0 0.0
      %2626 = vmatpush1.msra.mxu0 0.0
      %2627 = vmatprep.subr.mxu0 0.0
      %2628 = vmatpush1.msra.mxu0 0.0
      %2629 = vmatprep.subr.mxu0 0.0
      %2630 = vmatpush1.msra.mxu0 0.0
      %2631 = vmatprep.subr.mxu0 0.0
      %2632 = vmatpush1.msra.mxu0 0.0
      %2633 = vmatprep.subr.mxu0 0.0
      %2634 = vmatpush1.msra.mxu0 0.0
      %2635 = vmatprep.subr.mxu0 0.0
      %2636 = vmatpush1.msra.mxu0 0.0
      %2637 = vmatprep.subr.mxu0 0.0
      %2638 = vmatpush1.msra.mxu0 0.0
      %2639 = vmatprep.subr.mxu0 0.0
      %2640 = vmatpush1.msra.mxu0 0.0
      %2641 = vmatprep.subr.mxu0 0.0
      %2642 = vmatpush1.msra.mxu0 0.0
      %2643 = vmatprep.subr.mxu0 0.0
      %2644 = vmatpush1.msra.mxu0 0.0
      %2645 = vmatprep.mubr.f32.mxu0 0.0
      %2646 = vmatmul.mubr.f32.gmra.mrb[0].mxu0 %v2579
      %v2647 = vpop.f32.mrb[0].mxu0
      %v2648 = vadd.f32 0.0, %v2647
      %v2649 = vpop.f32.mrb[0].mxu0
      %2650 = vdwg.mxu0
      %v2651 = vadd.f32 %v2576, %v2648
      %v2652 = vxor.u32 %v2651, 2147483648
      %v2653 = vmul.f32 %v2652, 1.442695
      %v2654 = vpow.pop %v2653
      %v2655 = vadd.f32 %v2654, 1.0
      %v2656 = vrcp.pop %v2655
      %v2657 = vmul.f32 1.0, %v2656
      %v2658 = vtanh.pop %v2651
      %v2659 = vld [vmem:[#allocation5] sm:$0x1]
      %2661 = vrot.lane.b32.xlu0 %v2659, 16
      %v2662 = vpop.permute.xlu0 %2661
      %v2664 = vmul.f32 %v2657, %v2662
      %2666 = vrot.lane.b32.xlu0 %v2658, 96
      %v2667 = vpop.permute.xlu0 %2666
      %v2669 = vmul.f32 %v2657, %v2667
      %2671 = vrot.lane.b32.xlu0 %v2669, 16
      %v2672 = vpop.permute.xlu0 %2671
      %v2674 = vadd.f32 %v2664, %v2672
      %v2675 = vtanh.pop %v2674
      %2677 = vrot.lane.b32.xlu0 %v2675, 32
      %v2678 = vpop.permute.xlu0 %2677
      %v2680 = vmul.f32 %v2657, %v2678
      %2682 = vset.pattern.permute.xlu0 0
      %2683 = vperm.xlu0 %2682, %v2574
      %v2684 = vpop.permute.xlu0 %2683
      %v2687 = vlaneseq
      %v2688 = vshrl.u32 %v2687, 7
      %v2689 = vsub.s32 0, %v2688
      %v2690 = vrot.slane %v2680, %v2689
      %2691 = vrot.lane.b32.xlu0 %v2690, 80
      %v2692 = vpop.permute.xlu0 %2691
      %v2694 = vmul.f32 %v2684, %v2692
      %v2695 = vsub.f32 1.0, %v2574
      %2697 = vset.pattern.permute.xlu0 0
      %2698 = vperm.xlu0 %2697, %v2695
      %v2699 = vpop.permute.xlu0 %2698
      %v2701 = vmul.f32 %v2699, %v2577
      %v2702 = vadd.f32 %v2694, %v2701
      %2703 = vst.msk [vmem:[#allocation4] sm:$0x1] %vm1362, %v2702
      %v2705 = vlaneseq
      %v2706 = vshrl.u32 %v2705, 7
      %v2707 = vsub.s32 0, %v2706
      %v2708 = vrot.slane %v2674, %v2707
      %2709 = vrot.lane.b32.xlu0 %v2708, 112
      %v2710 = vpop.permute.xlu0 %2709
      %v2712 = vmul.f32 %v2684, %v2710
      %v2713 = vld [vmem:[#allocation5] sm:$0x1]
      %v2714 = vmul.f32 %v2699, %v2713
      %v2715 = vadd.f32 %v2712, %v2714
      %2716 = vst.msk [vmem:[#allocation5] sm:$0x1] %vm1362, %v2715
      %s2717 = scalar_lea.vmem [#allocation9], 11
      %2718 = vst.msk [vmem:[%s2717] sm:$0x1] %vm1362, %v2694
      %s2719 = sadd.s32 %s1227, 5
      %v2720 = vstv %s2719
      %vm2721 = vcmp.lt.s32.totalorder %v2720, %v1226
      %v2722 = vsel %vm2721, 1, 0
      %v2723 = vcvt.s32.f32 %v2722
      %s2724 = scalar_lea.vmem [#allocation6], 5
      %v2725 = vld [vmem:[%s2724] sm:$0x1]
      %v2726 = vld [vmem:[#allocation2] sm:$0x1]
      %v2728 = vsel %vm1236, %v2726, 0
      %2730 = vmatprep.subr.mxu0 0.0
      %2731 = vmatpush1.msra.mxu0 %v1221
      %2732 = vmatprep.subr.mxu0 0.0
      %2733 = vmatpush1.msra.mxu0 %v1222
      %2734 = vmatprep.subr.mxu0 0.0
      %2735 = vmatpush1.msra.mxu0 0.0
      %2736 = vmatprep.subr.mxu0 0.0
      %2737 = vmatpush1.msra.mxu0 0.0
      %2738 = vmatprep.subr.mxu0 0.0
      %2739 = vmatpush1.msra.mxu0 0.0
      %2740 = vmatprep.subr.mxu0 0.0
      %2741 = vmatpush1.msra.mxu0 0.0
      %2742 = vmatprep.subr.mxu0 0.0
      %2743 = vmatpush1.msra.mxu0 0.0
      %2744 = vmatprep.subr.mxu0 0.0
      %2745 = vmatpush1.msra.mxu0 0.0
      %2746 = vmatprep.subr.mxu0 0.0
      %2747 = vmatpush1.msra.mxu0 0.0
      %2748 = vmatprep.subr.mxu0 0.0
      %2749 = vmatpush1.msra.mxu0 0.0
      %2750 = vmatprep.subr.mxu0 0.0
      %2751 = vmatpush1.msra.mxu0 0.0
      %2752 = vmatprep.subr.mxu0 0.0
      %2753 = vmatpush1.msra.mxu0 0.0
      %2754 = vmatprep.subr.mxu0 0.0
      %2755 = vmatpush1.msra.mxu0 0.0
      %2756 = vmatprep.subr.mxu0 0.0
      %2757 = vmatpush1.msra.mxu0 0.0
      %2758 = vmatprep.subr.mxu0 0.0
      %2759 = vmatpush1.msra.mxu0 0.0
      %2760 = vmatprep.subr.mxu0 0.0
      %2761 = vmatpush1.msra.mxu0 0.0
      %2762 = vmatprep.subr.mxu0 0.0
      %2763 = vmatpush1.msra.mxu0 0.0
      %2764 = vmatprep.subr.mxu0 0.0
      %2765 = vmatpush1.msra.mxu0 0.0
      %2766 = vmatprep.subr.mxu0 0.0
      %2767 = vmatpush1.msra.mxu0 0.0
      %2768 = vmatprep.subr.mxu0 0.0
      %2769 = vmatpush1.msra.mxu0 0.0
      %2770 = vmatprep.subr.mxu0 0.0
      %2771 = vmatpush1.msra.mxu0 0.0
      %2772 = vmatprep.subr.mxu0 0.0
      %2773 = vmatpush1.msra.mxu0 0.0
      %2774 = vmatprep.subr.mxu0 0.0
      %2775 = vmatpush1.msra.mxu0 0.0
      %2776 = vmatprep.subr.mxu0 0.0
      %2777 = vmatpush1.msra.mxu0 0.0
      %2778 = vmatprep.subr.mxu0 0.0
      %2779 = vmatpush1.msra.mxu0 0.0
      %2780 = vmatprep.subr.mxu0 0.0
      %2781 = vmatpush1.msra.mxu0 0.0
      %2782 = vmatprep.subr.mxu0 0.0
      %2783 = vmatpush1.msra.mxu0 0.0
      %2784 = vmatprep.subr.mxu0 0.0
      %2785 = vmatpush1.msra.mxu0 0.0
      %2786 = vmatprep.subr.mxu0 0.0
      %2787 = vmatpush1.msra.mxu0 0.0
      %2788 = vmatprep.subr.mxu0 0.0
      %2789 = vmatpush1.msra.mxu0 0.0
      %2790 = vmatprep.subr.mxu0 0.0
      %2791 = vmatpush1.msra.mxu0 0.0
      %2792 = vmatprep.subr.mxu0 0.0
      %2793 = vmatpush1.msra.mxu0 0.0
      %2794 = vmatprep.mubr.f32.mxu0 0.0
      %2795 = vmatmul.mubr.f32.gmra.mrb[0].mxu0 %v2728
      %v2796 = vpop.f32.mrb[0].mxu0
      %v2797 = vadd.f32 0.0, %v2796
      %v2798 = vpop.f32.mrb[0].mxu0
      %2799 = vdwg.mxu0
      %v2800 = vadd.f32 %v2725, %v2797
      %v2801 = vxor.u32 %v2800, 2147483648
      %v2802 = vmul.f32 %v2801, 1.442695
      %v2803 = vpow.pop %v2802
      %v2804 = vadd.f32 %v2803, 1.0
      %v2805 = vrcp.pop %v2804
      %v2806 = vmul.f32 1.0, %v2805
      %v2807 = vtanh.pop %v2800
      %v2808 = vld [vmem:[#allocation3] sm:$0x1]
      %2810 = vrot.lane.b32.xlu0 %v2808, 16
      %v2811 = vpop.permute.xlu0 %2810
      %v2813 = vmul.f32 %v2806, %v2811
      %2815 = vrot.lane.b32.xlu0 %v2807, 96
      %v2816 = vpop.permute.xlu0 %2815
      %v2818 = vmul.f32 %v2806, %v2816
      %2820 = vrot.lane.b32.xlu0 %v2818, 16
      %v2821 = vpop.permute.xlu0 %2820
      %v2823 = vadd.f32 %v2813, %v2821
      %v2824 = vtanh.pop %v2823
      %2826 = vrot.lane.b32.xlu0 %v2824, 32
      %v2827 = vpop.permute.xlu0 %2826
      %v2829 = vmul.f32 %v2806, %v2827
      %2831 = vset.pattern.permute.xlu0 0
      %2832 = vperm.xlu0 %2831, %v2723
      %v2833 = vpop.permute.xlu0 %2832
      %v2836 = vlaneseq
      %v2837 = vshrl.u32 %v2836, 7
      %v2838 = vsub.s32 0, %v2837
      %v2839 = vrot.slane %v2829, %v2838
      %2840 = vrot.lane.b32.xlu0 %v2839, 80
      %v2841 = vpop.permute.xlu0 %2840
      %v2843 = vmul.f32 %v2833, %v2841
      %v2844 = vsub.f32 1.0, %v2723
      %2846 = vset.pattern.permute.xlu0 0
      %2847 = vperm.xlu0 %2846, %v2844
      %v2848 = vpop.permute.xlu0 %2847
      %v2850 = vmul.f32 %v2848, %v2726
      %v2851 = vadd.f32 %v2843, %v2850
      %2852 = vst.msk [vmem:[#allocation2] sm:$0x1] %vm1362, %v2851
      %v2854 = vlaneseq
      %v2855 = vshrl.u32 %v2854, 7
      %v2856 = vsub.s32 0, %v2855
      %v2857 = vrot.slane %v2823, %v2856
      %2858 = vrot.lane.b32.xlu0 %v2857, 112
      %v2859 = vpop.permute.xlu0 %2858
      %v2861 = vmul.f32 %v2833, %v2859
      %v2862 = vld [vmem:[#allocation3] sm:$0x1]
      %v2863 = vmul.f32 %v2848, %v2862
      %v2864 = vadd.f32 %v2861, %v2863
      %2865 = vst.msk [vmem:[#allocation3] sm:$0x1] %vm1362, %v2864
      %s2866 = scalar_lea.vmem [#allocation8], 5
      %2867 = vst.msk [vmem:[%s2866] sm:$0x1] %vm1362, %v2843
      %s2868 = sadd.s32 %s1229, 10
      %v2869 = vstv %s2868
      %vm2870 = vcmp.lt.s32.totalorder %v2869, %v1226
      %v2871 = vsel %vm2870, 1, 0
      %v2872 = vcvt.s32.f32 %v2871
      %s2873 = scalar_lea.vmem [#allocation7], 10
      %v2874 = vld [vmem:[%s2873] sm:$0x1]
      %v2875 = vld [vmem:[#allocation4] sm:$0x1]
      %v2877 = vsel %vm1236, %v2875, 0
      %2879 = vmatprep.subr.mxu0 0.0
      %2880 = vmatpush1.msra.mxu0 %v1223
      %2881 = vmatprep.subr.mxu0 0.0
      %2882 = vmatpush1.msra.mxu0 %v1224
      %2883 = vmatprep.subr.mxu0 0.0
      %2884 = vmatpush1.msra.mxu0 0.0
      %2885 = vmatprep.subr.mxu0 0.0
      %2886 = vmatpush1.msra.mxu0 0.0
      %2887 = vmatprep.subr.mxu0 0.0
      %2888 = vmatpush1.msra.mxu0 0.0
      %2889 = vmatprep.subr.mxu0 0.0
      %2890 = vmatpush1.msra.mxu0 0.0
      %2891 = vmatprep.subr.mxu0 0.0
      %2892 = vmatpush1.msra.mxu0 0.0
      %2893 = vmatprep.subr.mxu0 0.0
      %2894 = vmatpush1.msra.mxu0 0.0
      %2895 = vmatprep.subr.mxu0 0.0
      %2896 = vmatpush1.msra.mxu0 0.0
      %2897 = vmatprep.subr.mxu0 0.0
      %2898 = vmatpush1.msra.mxu0 0.0
      %2899 = vmatprep.subr.mxu0 0.0
      %2900 = vmatpush1.msra.mxu0 0.0
      %2901 = vmatprep.subr.mxu0 0.0
      %2902 = vmatpush1.msra.mxu0 0.0
      %2903 = vmatprep.subr.mxu0 0.0
      %2904 = vmatpush1.msra.mxu0 0.0
      %2905 = vmatprep.subr.mxu0 0.0
      %2906 = vmatpush1.msra.mxu0 0.0
      %2907 = vmatprep.subr.mxu0 0.0
      %2908 = vmatpush1.msra.mxu0 0.0
      %2909 = vmatprep.subr.mxu0 0.0
      %2910 = vmatpush1.msra.mxu0 0.0
      %2911 = vmatprep.subr.mxu0 0.0
      %2912 = vmatpush1.msra.mxu0 0.0
      %2913 = vmatprep.subr.mxu0 0.0
      %2914 = vmatpush1.msra.mxu0 0.0
      %2915 = vmatprep.subr.mxu0 0.0
      %2916 = vmatpush1.msra.mxu0 0.0
      %2917 = vmatprep.subr.mxu0 0.0
      %2918 = vmatpush1.msra.mxu0 0.0
      %2919 = vmatprep.subr.mxu0 0.0
      %2920 = vmatpush1.msra.mxu0 0.0
      %2921 = vmatprep.subr.mxu0 0.0
      %2922 = vmatpush1.msra.mxu0 0.0
      %2923 = vmatprep.subr.mxu0 0.0
      %2924 = vmatpush1.msra.mxu0 0.0
      %2925 = vmatprep.subr.mxu0 0.0
      %2926 = vmatpush1.msra.mxu0 0.0
      %2927 = vmatprep.subr.mxu0 0.0
      %2928 = vmatpush1.msra.mxu0 0.0
      %2929 = vmatprep.subr.mxu0 0.0
      %2930 = vmatpush1.msra.mxu0 0.0
      %2931 = vmatprep.subr.mxu0 0.0
      %2932 = vmatpush1.msra.mxu0 0.0
      %2933 = vmatprep.subr.mxu0 0.0
      %2934 = vmatpush1.msra.mxu0 0.0
      %2935 = vmatprep.subr.mxu0 0.0
      %2936 = vmatpush1.msra.mxu0 0.0
      %2937 = vmatprep.subr.mxu0 0.0
      %2938 = vmatpush1.msra.mxu0 0.0
      %2939 = vmatprep.subr.mxu0 0.0
      %2940 = vmatpush1.msra.mxu0 0.0
      %2941 = vmatprep.subr.mxu0 0.0
      %2942 = vmatpush1.msra.mxu0 0.0
      %2943 = vmatprep.mubr.f32.mxu0 0.0
      %2944 = vmatmul.mubr.f32.gmra.mrb[0].mxu0 %v2877
      %v2945 = vpop.f32.mrb[0].mxu0
      %v2946 = vadd.f32 0.0, %v2945
      %v2947 = vpop.f32.mrb[0].mxu0
      %2948 = vdwg.mxu0
      %v2949 = vadd.f32 %v2874, %v2946
      %v2950 = vxor.u32 %v2949, 2147483648
      %v2951 = vmul.f32 %v2950, 1.442695
      %v2952 = vpow.pop %v2951
      %v2953 = vadd.f32 %v2952, 1.0
      %v2954 = vrcp.pop %v2953
      %v2955 = vmul.f32 1.0, %v2954
      %v2956 = vtanh.pop %v2949
      %v2957 = vld [vmem:[#allocation5] sm:$0x1]
      %2959 = vrot.lane.b32.xlu0 %v2957, 16
      %v2960 = vpop.permute.xlu0 %2959
      %v2962 = vmul.f32 %v2955, %v2960
      %2964 = vrot.lane.b32.xlu0 %v2956, 96
      %v2965 = vpop.permute.xlu0 %2964
      %v2967 = vmul.f32 %v2955, %v2965
      %2969 = vrot.lane.b32.xlu0 %v2967, 16
      %v2970 = vpop.permute.xlu0 %2969
      %v2972 = vadd.f32 %v2962, %v2970
      %v2973 = vtanh.pop %v2972
      %2975 = vrot.lane.b32.xlu0 %v2973, 32
      %v2976 = vpop.permute.xlu0 %2975
      %v2978 = vmul.f32 %v2955, %v2976
      %2980 = vset.pattern.permute.xlu0 0
      %2981 = vperm.xlu0 %2980, %v2872
      %v2982 = vpop.permute.xlu0 %2981
      %v2985 = vlaneseq
      %v2986 = vshrl.u32 %v2985, 7
      %v2987 = vsub.s32 0, %v2986
      %v2988 = vrot.slane %v2978, %v2987
      %2989 = vrot.lane.b32.xlu0 %v2988, 80
      %v2990 = vpop.permute.xlu0 %2989
      %v2992 = vmul.f32 %v2982, %v2990
      %v2993 = vsub.f32 1.0, %v2872
      %2995 = vset.pattern.permute.xlu0 0
      %2996 = vperm.xlu0 %2995, %v2993
      %v2997 = vpop.permute.xlu0 %2996
      %v2999 = vmul.f32 %v2997, %v2875
      %v3000 = vadd.f32 %v2992, %v2999
      %3001 = vst.msk [vmem:[#allocation4] sm:$0x1] %vm1362, %v3000
      %v3003 = vlaneseq
      %v3004 = vshrl.u32 %v3003, 7
      %v3005 = vsub.s32 0, %v3004
      %v3006 = vrot.slane %v2972, %v3005
      %3007 = vrot.lane.b32.xlu0 %v3006, 112
      %v3008 = vpop.permute.xlu0 %3007
      %v3010 = vmul.f32 %v2982, %v3008
      %v3011 = vld [vmem:[#allocation5] sm:$0x1]
      %v3012 = vmul.f32 %v2997, %v3011
      %v3013 = vadd.f32 %v3010, %v3012
      %3014 = vst.msk [vmem:[#allocation5] sm:$0x1] %vm1362, %v3013
      %s3015 = scalar_lea.vmem [#allocation9], 10
      %3016 = vst.msk [vmem:[%s3015] sm:$0x1] %vm1362, %v2992
      %s3017 = sadd.s32 %s1227, 6
      %v3018 = vstv %s3017
      %vm3019 = vcmp.lt.s32.totalorder %v3018, %v1226
      %v3020 = vsel %vm3019, 1, 0
      %v3021 = vcvt.s32.f32 %v3020
      %s3022 = scalar_lea.vmem [#allocation6], 6
      %v3023 = vld [vmem:[%s3022] sm:$0x1]
      %v3024 = vld [vmem:[#allocation2] sm:$0x1]
      %v3026 = vsel %vm1236, %v3024, 0
      %3028 = vmatprep.subr.mxu0 0.0
      %3029 = vmatpush1.msra.mxu0 %v1221
      %3030 = vmatprep.subr.mxu0 0.0
      %3031 = vmatpush1.msra.mxu0 %v1222
      %3032 = vmatprep.subr.mxu0 0.0
      %3033 = vmatpush1.msra.mxu0 0.0
      %3034 = vmatprep.subr.mxu0 0.0
      %3035 = vmatpush1.msra.mxu0 0.0
      %3036 = vmatprep.subr.mxu0 0.0
      %3037 = vmatpush1.msra.mxu0 0.0
      %3038 = vmatprep.subr.mxu0 0.0
      %3039 = vmatpush1.msra.mxu0 0.0
      %3040 = vmatprep.subr.mxu0 0.0
      %3041 = vmatpush1.msra.mxu0 0.0
      %3042 = vmatprep.subr.mxu0 0.0
      %3043 = vmatpush1.msra.mxu0 0.0
      %3044 = vmatprep.subr.mxu0 0.0
      %3045 = vmatpush1.msra.mxu0 0.0
      %3046 = vmatprep.subr.mxu0 0.0
      %3047 = vmatpush1.msra.mxu0 0.0
      %3048 = vmatprep.subr.mxu0 0.0
      %3049 = vmatpush1.msra.mxu0 0.0
      %3050 = vmatprep.subr.mxu0 0.0
      %3051 = vmatpush1.msra.mxu0 0.0
      %3052 = vmatprep.subr.mxu0 0.0
      %3053 = vmatpush1.msra.mxu0 0.0
      %3054 = vmatprep.subr.mxu0 0.0
      %3055 = vmatpush1.msra.mxu0 0.0
      %3056 = vmatprep.subr.mxu0 0.0
      %3057 = vmatpush1.msra.mxu0 0.0
      %3058 = vmatprep.subr.mxu0 0.0
      %3059 = vmatpush1.msra.mxu0 0.0
      %3060 = vmatprep.subr.mxu0 0.0
      %3061 = vmatpush1.msra.mxu0 0.0
      %3062 = vmatprep.subr.mxu0 0.0
      %3063 = vmatpush1.msra.mxu0 0.0
      %3064 = vmatprep.subr.mxu0 0.0
      %3065 = vmatpush1.msra.mxu0 0.0
      %3066 = vmatprep.subr.mxu0 0.0
      %3067 = vmatpush1.msra.mxu0 0.0
      %3068 = vmatprep.subr.mxu0 0.0
      %3069 = vmatpush1.msra.mxu0 0.0
      %3070 = vmatprep.subr.mxu0 0.0
      %3071 = vmatpush1.msra.mxu0 0.0
      %3072 = vmatprep.subr.mxu0 0.0
      %3073 = vmatpush1.msra.mxu0 0.0
      %3074 = vmatprep.subr.mxu0 0.0
      %3075 = vmatpush1.msra.mxu0 0.0
      %3076 = vmatprep.subr.mxu0 0.0
      %3077 = vmatpush1.msra.mxu0 0.0
      %3078 = vmatprep.subr.mxu0 0.0
      %3079 = vmatpush1.msra.mxu0 0.0
      %3080 = vmatprep.subr.mxu0 0.0
      %3081 = vmatpush1.msra.mxu0 0.0
      %3082 = vmatprep.subr.mxu0 0.0
      %3083 = vmatpush1.msra.mxu0 0.0
      %3084 = vmatprep.subr.mxu0 0.0
      %3085 = vmatpush1.msra.mxu0 0.0
      %3086 = vmatprep.subr.mxu0 0.0
      %3087 = vmatpush1.msra.mxu0 0.0
      %3088 = vmatprep.subr.mxu0 0.0
      %3089 = vmatpush1.msra.mxu0 0.0
      %3090 = vmatprep.subr.mxu0 0.0
      %3091 = vmatpush1.msra.mxu0 0.0
      %3092 = vmatprep.mubr.f32.mxu0 0.0
      %3093 = vmatmul.mubr.f32.gmra.mrb[0].mxu0 %v3026
      %v3094 = vpop.f32.mrb[0].mxu0
      %v3095 = vadd.f32 0.0, %v3094
      %v3096 = vpop.f32.mrb[0].mxu0
      %3097 = vdwg.mxu0
      %v3098 = vadd.f32 %v3023, %v3095
      %v3099 = vxor.u32 %v3098, 2147483648
      %v3100 = vmul.f32 %v3099, 1.442695
      %v3101 = vpow.pop %v3100
      %v3102 = vadd.f32 %v3101, 1.0
      %v3103 = vrcp.pop %v3102
      %v3104 = vmul.f32 1.0, %v3103
      %v3105 = vtanh.pop %v3098
      %v3106 = vld [vmem:[#allocation3] sm:$0x1]
      %3108 = vrot.lane.b32.xlu0 %v3106, 16
      %v3109 = vpop.permute.xlu0 %3108
      %v3111 = vmul.f32 %v3104, %v3109
      %3113 = vrot.lane.b32.xlu0 %v3105, 96
      %v3114 = vpop.permute.xlu0 %3113
      %v3116 = vmul.f32 %v3104, %v3114
      %3118 = vrot.lane.b32.xlu0 %v3116, 16
      %v3119 = vpop.permute.xlu0 %3118
      %v3121 = vadd.f32 %v3111, %v3119
      %v3122 = vtanh.pop %v3121
      %3124 = vrot.lane.b32.xlu0 %v3122, 32
      %v3125 = vpop.permute.xlu0 %3124
      %v3127 = vmul.f32 %v3104, %v3125
      %3129 = vset.pattern.permute.xlu0 0
      %3130 = vperm.xlu0 %3129, %v3021
      %v3131 = vpop.permute.xlu0 %3130
      %v3134 = vlaneseq
      %v3135 = vshrl.u32 %v3134, 7
      %v3136 = vsub.s32 0, %v3135
      %v3137 = vrot.slane %v3127, %v3136
      %3138 = vrot.lane.b32.xlu0 %v3137, 80
      %v3139 = vpop.permute.xlu0 %3138
      %v3141 = vmul.f32 %v3131, %v3139
      %v3142 = vsub.f32 1.0, %v3021
      %3144 = vset.pattern.permute.xlu0 0
      %3145 = vperm.xlu0 %3144, %v3142
      %v3146 = vpop.permute.xlu0 %3145
      %v3148 = vmul.f32 %v3146, %v3024
      %v3149 = vadd.f32 %v3141, %v3148
      %3150 = vst.msk [vmem:[#allocation2] sm:$0x1] %vm1362, %v3149
      %v3152 = vlaneseq
      %v3153 = vshrl.u32 %v3152, 7
      %v3154 = vsub.s32 0, %v3153
      %v3155 = vrot.slane %v3121, %v3154
      %3156 = vrot.lane.b32.xlu0 %v3155, 112
      %v3157 = vpop.permute.xlu0 %3156
      %v3159 = vmul.f32 %v3131, %v3157
      %v3160 = vld [vmem:[#allocation3] sm:$0x1]
      %v3161 = vmul.f32 %v3146, %v3160
      %v3162 = vadd.f32 %v3159, %v3161
      %3163 = vst.msk [vmem:[#allocation3] sm:$0x1] %vm1362, %v3162
      %s3164 = scalar_lea.vmem [#allocation8], 6
      %3165 = vst.msk [vmem:[%s3164] sm:$0x1] %vm1362, %v3141
      %s3166 = sadd.s32 %s1229, 9
      %v3167 = vstv %s3166
      %vm3168 = vcmp.lt.s32.totalorder %v3167, %v1226
      %v3169 = vsel %vm3168, 1, 0
      %v3170 = vcvt.s32.f32 %v3169
      %s3171 = scalar_lea.vmem [#allocation7], 9
      %v3172 = vld [vmem:[%s3171] sm:$0x1]
      %v3173 = vld [vmem:[#allocation4] sm:$0x1]
      %v3175 = vsel %vm1236, %v3173, 0
      %3177 = vmatprep.subr.mxu0 0.0
      %3178 = vmatpush1.msra.mxu0 %v1223
      %3179 = vmatprep.subr.mxu0 0.0
      %3180 = vmatpush1.msra.mxu0 %v1224
      %3181 = vmatprep.subr.mxu0 0.0
      %3182 = vmatpush1.msra.mxu0 0.0
      %3183 = vmatprep.subr.mxu0 0.0
      %3184 = vmatpush1.msra.mxu0 0.0
      %3185 = vmatprep.subr.mxu0 0.0
      %3186 = vmatpush1.msra.mxu0 0.0
      %3187 = vmatprep.subr.mxu0 0.0
      %3188 = vmatpush1.msra.mxu0 0.0
      %3189 = vmatprep.subr.mxu0 0.0
      %3190 = vmatpush1.msra.mxu0 0.0
      %3191 = vmatprep.subr.mxu0 0.0
      %3192 = vmatpush1.msra.mxu0 0.0
      %3193 = vmatprep.subr.mxu0 0.0
      %3194 = vmatpush1.msra.mxu0 0.0
      %3195 = vmatprep.subr.mxu0 0.0
      %3196 = vmatpush1.msra.mxu0 0.0
      %3197 = vmatprep.subr.mxu0 0.0
      %3198 = vmatpush1.msra.mxu0 0.0
      %3199 = vmatprep.subr.mxu0 0.0
      %3200 = vmatpush1.msra.mxu0 0.0
      %3201 = vmatprep.subr.mxu0 0.0
      %3202 = vmatpush1.msra.mxu0 0.0
      %3203 = vmatprep.subr.mxu0 0.0
      %3204 = vmatpush1.msra.mxu0 0.0
      %3205 = vmatprep.subr.mxu0 0.0
      %3206 = vmatpush1.msra.mxu0 0.0
      %3207 = vmatprep.subr.mxu0 0.0
      %3208 = vmatpush1.msra.mxu0 0.0
      %3209 = vmatprep.subr.mxu0 0.0
      %3210 = vmatpush1.msra.mxu0 0.0
      %3211 = vmatprep.subr.mxu0 0.0
      %3212 = vmatpush1.msra.mxu0 0.0
      %3213 = vmatprep.subr.mxu0 0.0
      %3214 = vmatpush1.msra.mxu0 0.0
      %3215 = vmatprep.subr.mxu0 0.0
      %3216 = vmatpush1.msra.mxu0 0.0
      %3217 = vmatprep.subr.mxu0 0.0
      %3218 = vmatpush1.msra.mxu0 0.0
      %3219 = vmatprep.subr.mxu0 0.0
      %3220 = vmatpush1.msra.mxu0 0.0
      %3221 = vmatprep.subr.mxu0 0.0
      %3222 = vmatpush1.msra.mxu0 0.0
      %3223 = vmatprep.subr.mxu0 0.0
      %3224 = vmatpush1.msra.mxu0 0.0
      %3225 = vmatprep.subr.mxu0 0.0
      %3226 = vmatpush1.msra.mxu0 0.0
      %3227 = vmatprep.subr.mxu0 0.0
      %3228 = vmatpush1.msra.mxu0 0.0
      %3229 = vmatprep.subr.mxu0 0.0
      %3230 = vmatpush1.msra.mxu0 0.0
      %3231 = vmatprep.subr.mxu0 0.0
      %3232 = vmatpush1.msra.mxu0 0.0
      %3233 = vmatprep.subr.mxu0 0.0
      %3234 = vmatpush1.msra.mxu0 0.0
      %3235 = vmatprep.subr.mxu0 0.0
      %3236 = vmatpush1.msra.mxu0 0.0
      %3237 = vmatprep.subr.mxu0 0.0
      %3238 = vmatpush1.msra.mxu0 0.0
      %3239 = vmatprep.subr.mxu0 0.0
      %3240 = vmatpush1.msra.mxu0 0.0
      %3241 = vmatprep.mubr.f32.mxu0 0.0
      %3242 = vmatmul.mubr.f32.gmra.mrb[0].mxu0 %v3175
      %v3243 = vpop.f32.mrb[0].mxu0
      %v3244 = vadd.f32 0.0, %v3243
      %v3245 = vpop.f32.mrb[0].mxu0
      %3246 = vdwg.mxu0
      %v3247 = vadd.f32 %v3172, %v3244
      %v3248 = vxor.u32 %v3247, 2147483648
      %v3249 = vmul.f32 %v3248, 1.442695
      %v3250 = vpow.pop %v3249
      %v3251 = vadd.f32 %v3250, 1.0
      %v3252 = vrcp.pop %v3251
      %v3253 = vmul.f32 1.0, %v3252
      %v3254 = vtanh.pop %v3247
      %v3255 = vld [vmem:[#allocation5] sm:$0x1]
      %3257 = vrot.lane.b32.xlu0 %v3255, 16
      %v3258 = vpop.permute.xlu0 %3257
      %v3260 = vmul.f32 %v3253, %v3258
      %3262 = vrot.lane.b32.xlu0 %v3254, 96
      %v3263 = vpop.permute.xlu0 %3262
      %v3265 = vmul.f32 %v3253, %v3263
      %3267 = vrot.lane.b32.xlu0 %v3265, 16
      %v3268 = vpop.permute.xlu0 %3267
      %v3270 = vadd.f32 %v3260, %v3268
      %v3271 = vtanh.pop %v3270
      %3273 = vrot.lane.b32.xlu0 %v3271, 32
      %v3274 = vpop.permute.xlu0 %3273
      %v3276 = vmul.f32 %v3253, %v3274
      %3278 = vset.pattern.permute.xlu0 0
      %3279 = vperm.xlu0 %3278, %v3170
      %v3280 = vpop.permute.xlu0 %3279
      %v3283 = vlaneseq
      %v3284 = vshrl.u32 %v3283, 7
      %v3285 = vsub.s32 0, %v3284
      %v3286 = vrot.slane %v3276, %v3285
      %3287 = vrot.lane.b32.xlu0 %v3286, 80
      %v3288 = vpop.permute.xlu0 %3287
      %v3290 = vmul.f32 %v3280, %v3288
      %v3291 = vsub.f32 1.0, %v3170
      %3293 = vset.pattern.permute.xlu0 0
      %3294 = vperm.xlu0 %3293, %v3291
      %v3295 = vpop.permute.xlu0 %3294
      %v3297 = vmul.f32 %v3295, %v3173
      %v3298 = vadd.f32 %v3290, %v3297
      %3299 = vst.msk [vmem:[#allocation4] sm:$0x1] %vm1362, %v3298
      %v3301 = vlaneseq
      %v3302 = vshrl.u32 %v3301, 7
      %v3303 = vsub.s32 0, %v3302
      %v3304 = vrot.slane %v3270, %v3303
      %3305 = vrot.lane.b32.xlu0 %v3304, 112
      %v3306 = vpop.permute.xlu0 %3305
      %v3308 = vmul.f32 %v3280, %v3306
      %v3309 = vld [vmem:[#allocation5] sm:$0x1]
      %v3310 = vmul.f32 %v3295, %v3309
      %v3311 = vadd.f32 %v3308, %v3310
      %3312 = vst.msk [vmem:[#allocation5] sm:$0x1] %vm1362, %v3311
      %s3313 = scalar_lea.vmem [#allocation9], 9
      %3314 = vst.msk [vmem:[%s3313] sm:$0x1] %vm1362, %v3290
      %s3315 = sadd.s32 %s1227, 7
      %v3316 = vstv %s3315
      %vm3317 = vcmp.lt.s32.totalorder %v3316, %v1226
      %v3318 = vsel %vm3317, 1, 0
      %v3319 = vcvt.s32.f32 %v3318
      %s3320 = scalar_lea.vmem [#allocation6], 7
      %v3321 = vld [vmem:[%s3320] sm:$0x1]
      %v3322 = vld [vmem:[#allocation2] sm:$0x1]
      %v3324 = vsel %vm1236, %v3322, 0
      %3326 = vmatprep.subr.mxu0 0.0
      %3327 = vmatpush1.msra.mxu0 %v1221
      %3328 = vmatprep.subr.mxu0 0.0
      %3329 = vmatpush1.msra.mxu0 %v1222
      %3330 = vmatprep.subr.mxu0 0.0
      %3331 = vmatpush1.msra.mxu0 0.0
      %3332 = vmatprep.subr.mxu0 0.0
      %3333 = vmatpush1.msra.mxu0 0.0
      %3334 = vmatprep.subr.mxu0 0.0
      %3335 = vmatpush1.msra.mxu0 0.0
      %3336 = vmatprep.subr.mxu0 0.0
      %3337 = vmatpush1.msra.mxu0 0.0
      %3338 = vmatprep.subr.mxu0 0.0
      %3339 = vmatpush1.msra.mxu0 0.0
      %3340 = vmatprep.subr.mxu0 0.0
      %3341 = vmatpush1.msra.mxu0 0.0
      %3342 = vmatprep.subr.mxu0 0.0
      %3343 = vmatpush1.msra.mxu0 0.0
      %3344 = vmatprep.subr.mxu0 0.0
      %3345 = vmatpush1.msra.mxu0 0.0
      %3346 = vmatprep.subr.mxu0 0.0
      %3347 = vmatpush1.msra.mxu0 0.0
      %3348 = vmatprep.subr.mxu0 0.0
      %3349 = vmatpush1.msra.mxu0 0.0
      %3350 = vmatprep.subr.mxu0 0.0
      %3351 = vmatpush1.msra.mxu0 0.0
      %3352 = vmatprep.subr.mxu0 0.0
      %3353 = vmatpush1.msra.mxu0 0.0
      %3354 = vmatprep.subr.mxu0 0.0
      %3355 = vmatpush1.msra.mxu0 0.0
      %3356 = vmatprep.subr.mxu0 0.0
      %3357 = vmatpush1.msra.mxu0 0.0
      %3358 = vmatprep.subr.mxu0 0.0
      %3359 = vmatpush1.msra.mxu0 0.0
      %3360 = vmatprep.subr.mxu0 0.0
      %3361 = vmatpush1.msra.mxu0 0.0
      %3362 = vmatprep.subr.mxu0 0.0
      %3363 = vmatpush1.msra.mxu0 0.0
      %3364 = vmatprep.subr.mxu0 0.0
      %3365 = vmatpush1.msra.mxu0 0.0
      %3366 = vmatprep.subr.mxu0 0.0
      %3367 = vmatpush1.msra.mxu0 0.0
      %3368 = vmatprep.subr.mxu0 0.0
      %3369 = vmatpush1.msra.mxu0 0.0
      %3370 = vmatprep.subr.mxu0 0.0
      %3371 = vmatpush1.msra.mxu0 0.0
      %3372 = vmatprep.subr.mxu0 0.0
      %3373 = vmatpush1.msra.mxu0 0.0
      %3374 = vmatprep.subr.mxu0 0.0
      %3375 = vmatpush1.msra.mxu0 0.0
      %3376 = vmatprep.subr.mxu0 0.0
      %3377 = vmatpush1.msra.mxu0 0.0
      %3378 = vmatprep.subr.mxu0 0.0
      %3379 = vmatpush1.msra.mxu0 0.0
      %3380 = vmatprep.subr.mxu0 0.0
      %3381 = vmatpush1.msra.mxu0 0.0
      %3382 = vmatprep.subr.mxu0 0.0
      %3383 = vmatpush1.msra.mxu0 0.0
      %3384 = vmatprep.subr.mxu0 0.0
      %3385 = vmatpush1.msra.mxu0 0.0
      %3386 = vmatprep.subr.mxu0 0.0
      %3387 = vmatpush1.msra.mxu0 0.0
      %3388 = vmatprep.subr.mxu0 0.0
      %3389 = vmatpush1.msra.mxu0 0.0
      %3390 = vmatprep.mubr.f32.mxu0 0.0
      %3391 = vmatmul.mubr.f32.gmra.mrb[0].mxu0 %v3324
      %v3392 = vpop.f32.mrb[0].mxu0
      %v3393 = vadd.f32 0.0, %v3392
      %v3394 = vpop.f32.mrb[0].mxu0
      %3395 = vdwg.mxu0
      %v3396 = vadd.f32 %v3321, %v3393
      %v3397 = vxor.u32 %v3396, 2147483648
      %v3398 = vmul.f32 %v3397, 1.442695
      %v3399 = vpow.pop %v3398
      %v3400 = vadd.f32 %v3399, 1.0
      %v3401 = vrcp.pop %v3400
      %v3402 = vmul.f32 1.0, %v3401
      %v3403 = vtanh.pop %v3396
      %v3404 = vld [vmem:[#allocation3] sm:$0x1]
      %3406 = vrot.lane.b32.xlu0 %v3404, 16
      %v3407 = vpop.permute.xlu0 %3406
      %v3409 = vmul.f32 %v3402, %v3407
      %3411 = vrot.lane.b32.xlu0 %v3403, 96
      %v3412 = vpop.permute.xlu0 %3411
      %v3414 = vmul.f32 %v3402, %v3412
      %3416 = vrot.lane.b32.xlu0 %v3414, 16
      %v3417 = vpop.permute.xlu0 %3416
      %v3419 = vadd.f32 %v3409, %v3417
      %v3420 = vtanh.pop %v3419
      %3422 = vrot.lane.b32.xlu0 %v3420, 32
      %v3423 = vpop.permute.xlu0 %3422
      %v3425 = vmul.f32 %v3402, %v3423
      %3427 = vset.pattern.permute.xlu0 0
      %3428 = vperm.xlu0 %3427, %v3319
      %v3429 = vpop.permute.xlu0 %3428
      %v3432 = vlaneseq
      %v3433 = vshrl.u32 %v3432, 7
      %v3434 = vsub.s32 0, %v3433
      %v3435 = vrot.slane %v3425, %v3434
      %3436 = vrot.lane.b32.xlu0 %v3435, 80
      %v3437 = vpop.permute.xlu0 %3436
      %v3439 = vmul.f32 %v3429, %v3437
      %v3440 = vsub.f32 1.0, %v3319
      %3442 = vset.pattern.permute.xlu0 0
      %3443 = vperm.xlu0 %3442, %v3440
      %v3444 = vpop.permute.xlu0 %3443
      %v3446 = vmul.f32 %v3444, %v3322
      %v3447 = vadd.f32 %v3439, %v3446
      %3448 = vst.msk [vmem:[#allocation2] sm:$0x1] %vm1362, %v3447
      %v3450 = vlaneseq
      %v3451 = vshrl.u32 %v3450, 7
      %v3452 = vsub.s32 0, %v3451
      %v3453 = vrot.slane %v3419, %v3452
      %3454 = vrot.lane.b32.xlu0 %v3453, 112
      %v3455 = vpop.permute.xlu0 %3454
      %v3457 = vmul.f32 %v3429, %v3455
      %v3458 = vld [vmem:[#allocation3] sm:$0x1]
      %v3459 = vmul.f32 %v3444, %v3458
      %v3460 = vadd.f32 %v3457, %v3459
      %3461 = vst.msk [vmem:[#allocation3] sm:$0x1] %vm1362, %v3460
      %s3462 = scalar_lea.vmem [#allocation8], 7
      %3463 = vst.msk [vmem:[%s3462] sm:$0x1] %vm1362, %v3439
      %s3464 = sadd.s32 %s1229, 8
      %v3465 = vstv %s3464
      %vm3466 = vcmp.lt.s32.totalorder %v3465, %v1226
      %v3467 = vsel %vm3466, 1, 0
      %v3468 = vcvt.s32.f32 %v3467
      %s3469 = scalar_lea.vmem [#allocation7], 8
      %v3470 = vld [vmem:[%s3469] sm:$0x1]
      %v3471 = vld [vmem:[#allocation4] sm:$0x1]
      %v3473 = vsel %vm1236, %v3471, 0
      %3475 = vmatprep.subr.mxu0 0.0
      %3476 = vmatpush1.msra.mxu0 %v1223
      %3477 = vmatprep.subr.mxu0 0.0
      %3478 = vmatpush1.msra.mxu0 %v1224
      %3479 = vmatprep.subr.mxu0 0.0
      %3480 = vmatpush1.msra.mxu0 0.0
      %3481 = vmatprep.subr.mxu0 0.0
      %3482 = vmatpush1.msra.mxu0 0.0
      %3483 = vmatprep.subr.mxu0 0.0
      %3484 = vmatpush1.msra.mxu0 0.0
      %3485 = vmatprep.subr.mxu0 0.0
      %3486 = vmatpush1.msra.mxu0 0.0
      %3487 = vmatprep.subr.mxu0 0.0
      %3488 = vmatpush1.msra.mxu0 0.0
      %3489 = vmatprep.subr.mxu0 0.0
      %3490 = vmatpush1.msra.mxu0 0.0
      %3491 = vmatprep.subr.mxu0 0.0
      %3492 = vmatpush1.msra.mxu0 0.0
      %3493 = vmatprep.subr.mxu0 0.0
      %3494 = vmatpush1.msra.mxu0 0.0
      %3495 = vmatprep.subr.mxu0 0.0
      %3496 = vmatpush1.msra.mxu0 0.0
      %3497 = vmatprep.subr.mxu0 0.0
      %3498 = vmatpush1.msra.mxu0 0.0
      %3499 = vmatprep.subr.mxu0 0.0
      %3500 = vmatpush1.msra.mxu0 0.0
      %3501 = vmatprep.subr.mxu0 0.0
      %3502 = vmatpush1.msra.mxu0 0.0
      %3503 = vmatprep.subr.mxu0 0.0
      %3504 = vmatpush1.msra.mxu0 0.0
      %3505 = vmatprep.subr.mxu0 0.0
      %3506 = vmatpush1.msra.mxu0 0.0
      %3507 = vmatprep.subr.mxu0 0.0
      %3508 = vmatpush1.msra.mxu0 0.0
      %3509 = vmatprep.subr.mxu0 0.0
      %3510 = vmatpush1.msra.mxu0 0.0
      %3511 = vmatprep.subr.mxu0 0.0
      %3512 = vmatpush1.msra.mxu0 0.0
      %3513 = vmatprep.subr.mxu0 0.0
      %3514 = vmatpush1.msra.mxu0 0.0
      %3515 = vmatprep.subr.mxu0 0.0
      %3516 = vmatpush1.msra.mxu0 0.0
      %3517 = vmatprep.subr.mxu0 0.0
      %3518 = vmatpush1.msra.mxu0 0.0
      %3519 = vmatprep.subr.mxu0 0.0
      %3520 = vmatpush1.msra.mxu0 0.0
      %3521 = vmatprep.subr.mxu0 0.0
      %3522 = vmatpush1.msra.mxu0 0.0
      %3523 = vmatprep.subr.mxu0 0.0
      %3524 = vmatpush1.msra.mxu0 0.0
      %3525 = vmatprep.subr.mxu0 0.0
      %3526 = vmatpush1.msra.mxu0 0.0
      %3527 = vmatprep.subr.mxu0 0.0
      %3528 = vmatpush1.msra.mxu0 0.0
      %3529 = vmatprep.subr.mxu0 0.0
      %3530 = vmatpush1.msra.mxu0 0.0
      %3531 = vmatprep.subr.mxu0 0.0
      %3532 = vmatpush1.msra.mxu0 0.0
      %3533 = vmatprep.subr.mxu0 0.0
      %3534 = vmatpush1.msra.mxu0 0.0
      %3535 = vmatprep.subr.mxu0 0.0
      %3536 = vmatpush1.msra.mxu0 0.0
      %3537 = vmatprep.subr.mxu0 0.0
      %3538 = vmatpush1.msra.mxu0 0.0
      %3539 = vmatprep.mubr.f32.mxu0 0.0
      %3540 = vmatmul.mubr.f32.gmra.mrb[0].mxu0 %v3473
      %v3541 = vpop.f32.mrb[0].mxu0
      %v3542 = vadd.f32 0.0, %v3541
      %v3543 = vpop.f32.mrb[0].mxu0
      %3544 = vdwg.mxu0
      %v3545 = vadd.f32 %v3470, %v3542
      %v3546 = vxor.u32 %v3545, 2147483648
      %v3547 = vmul.f32 %v3546, 1.442695
      %v3548 = vpow.pop %v3547
      %v3549 = vadd.f32 %v3548, 1.0
      %v3550 = vrcp.pop %v3549
      %v3551 = vmul.f32 1.0, %v3550
      %v3552 = vtanh.pop %v3545
      %v3553 = vld [vmem:[#allocation5] sm:$0x1]
      %3555 = vrot.lane.b32.xlu0 %v3553, 16
      %v3556 = vpop.permute.xlu0 %3555
      %v3558 = vmul.f32 %v3551, %v3556
      %3560 = vrot.lane.b32.xlu0 %v3552, 96
      %v3561 = vpop.permute.xlu0 %3560
      %v3563 = vmul.f32 %v3551, %v3561
      %3565 = vrot.lane.b32.xlu0 %v3563, 16
      %v3566 = vpop.permute.xlu0 %3565
      %v3568 = vadd.f32 %v3558, %v3566
      %v3569 = vtanh.pop %v3568
      %3571 = vrot.lane.b32.xlu0 %v3569, 32
      %v3572 = vpop.permute.xlu0 %3571
      %v3574 = vmul.f32 %v3551, %v3572
      %3576 = vset.pattern.permute.xlu0 0
      %3577 = vperm.xlu0 %3576, %v3468
      %v3578 = vpop.permute.xlu0 %3577
      %v3581 = vlaneseq
      %v3582 = vshrl.u32 %v3581, 7
      %v3583 = vsub.s32 0, %v3582
      %v3584 = vrot.slane %v3574, %v3583
      %3585 = vrot.lane.b32.xlu0 %v3584, 80
      %v3586 = vpop.permute.xlu0 %3585
      %v3588 = vmul.f32 %v3578, %v3586
      %v3589 = vsub.f32 1.0, %v3468
      %3591 = vset.pattern.permute.xlu0 0
      %3592 = vperm.xlu0 %3591, %v3589
      %v3593 = vpop.permute.xlu0 %3592
      %v3595 = vmul.f32 %v3593, %v3471
      %v3596 = vadd.f32 %v3588, %v3595
      %3597 = vst.msk [vmem:[#allocation4] sm:$0x1] %vm1362, %v3596
      %v3599 = vlaneseq
      %v3600 = vshrl.u32 %v3599, 7
      %v3601 = vsub.s32 0, %v3600
      %v3602 = vrot.slane %v3568, %v3601
      %3603 = vrot.lane.b32.xlu0 %v3602, 112
      %v3604 = vpop.permute.xlu0 %3603
      %v3606 = vmul.f32 %v3578, %v3604
      %v3607 = vld [vmem:[#allocation5] sm:$0x1]
      %v3608 = vmul.f32 %v3593, %v3607
      %v3609 = vadd.f32 %v3606, %v3608
      %3610 = vst.msk [vmem:[#allocation5] sm:$0x1] %vm1362, %v3609
      %s3611 = scalar_lea.vmem [#allocation9], 8
      %3612 = vst.msk [vmem:[%s3611] sm:$0x1] %vm1362, %v3588
      %s3613 = sadd.s32 %s1227, 8
      %v3614 = vstv %s3613
      %vm3615 = vcmp.lt.s32.totalorder %v3614, %v1226
      %v3616 = vsel %vm3615, 1, 0
      %v3617 = vcvt.s32.f32 %v3616
      %s3618 = scalar_lea.vmem [#allocation6], 8
      %v3619 = vld [vmem:[%s3618] sm:$0x1]
      %v3620 = vld [vmem:[#allocation2] sm:$0x1]
      %v3622 = vsel %vm1236, %v3620, 0
      %3624 = vmatprep.subr.mxu0 0.0
      %3625 = vmatpush1.msra.mxu0 %v1221
      %3626 = vmatprep.subr.mxu0 0.0
      %3627 = vmatpush1.msra.mxu0 %v1222
      %3628 = vmatprep.subr.mxu0 0.0
      %3629 = vmatpush1.msra.mxu0 0.0
      %3630 = vmatprep.subr.mxu0 0.0
      %3631 = vmatpush1.msra.mxu0 0.0
      %3632 = vmatprep.subr.mxu0 0.0
      %3633 = vmatpush1.msra.mxu0 0.0
      %3634 = vmatprep.subr.mxu0 0.0
      %3635 = vmatpush1.msra.mxu0 0.0
      %3636 = vmatprep.subr.mxu0 0.0
      %3637 = vmatpush1.msra.mxu0 0.0
      %3638 = vmatprep.subr.mxu0 0.0
      %3639 = vmatpush1.msra.mxu0 0.0
      %3640 = vmatprep.subr.mxu0 0.0
      %3641 = vmatpush1.msra.mxu0 0.0
      %3642 = vmatprep.subr.mxu0 0.0
      %3643 = vmatpush1.msra.mxu0 0.0
      %3644 = vmatprep.subr.mxu0 0.0
      %3645 = vmatpush1.msra.mxu0 0.0
      %3646 = vmatprep.subr.mxu0 0.0
      %3647 = vmatpush1.msra.mxu0 0.0
      %3648 = vmatprep.subr.mxu0 0.0
      %3649 = vmatpush1.msra.mxu0 0.0
      %3650 = vmatprep.subr.mxu0 0.0
      %3651 = vmatpush1.msra.mxu0 0.0
      %3652 = vmatprep.subr.mxu0 0.0
      %3653 = vmatpush1.msra.mxu0 0.0
      %3654 = vmatprep.subr.mxu0 0.0
      %3655 = vmatpush1.msra.mxu0 0.0
      %3656 = vmatprep.subr.mxu0 0.0
      %3657 = vmatpush1.msra.mxu0 0.0
      %3658 = vmatprep.subr.mxu0 0.0
      %3659 = vmatpush1.msra.mxu0 0.0
      %3660 = vmatprep.subr.mxu0 0.0
      %3661 = vmatpush1.msra.mxu0 0.0
      %3662 = vmatprep.subr.mxu0 0.0
      %3663 = vmatpush1.msra.mxu0 0.0
      %3664 = vmatprep.subr.mxu0 0.0
      %3665 = vmatpush1.msra.mxu0 0.0
      %3666 = vmatprep.subr.mxu0 0.0
      %3667 = vmatpush1.msra.mxu0 0.0
      %3668 = vmatprep.subr.mxu0 0.0
      %3669 = vmatpush1.msra.mxu0 0.0
      %3670 = vmatprep.subr.mxu0 0.0
      %3671 = vmatpush1.msra.mxu0 0.0
      %3672 = vmatprep.subr.mxu0 0.0
      %3673 = vmatpush1.msra.mxu0 0.0
      %3674 = vmatprep.subr.mxu0 0.0
      %3675 = vmatpush1.msra.mxu0 0.0
      %3676 = vmatprep.subr.mxu0 0.0
      %3677 = vmatpush1.msra.mxu0 0.0
      %3678 = vmatprep.subr.mxu0 0.0
      %3679 = vmatpush1.msra.mxu0 0.0
      %3680 = vmatprep.subr.mxu0 0.0
      %3681 = vmatpush1.msra.mxu0 0.0
      %3682 = vmatprep.subr.mxu0 0.0
      %3683 = vmatpush1.msra.mxu0 0.0
      %3684 = vmatprep.subr.mxu0 0.0
      %3685 = vmatpush1.msra.mxu0 0.0
      %3686 = vmatprep.subr.mxu0 0.0
      %3687 = vmatpush1.msra.mxu0 0.0
      %3688 = vmatprep.mubr.f32.mxu0 0.0
      %3689 = vmatmul.mubr.f32.gmra.mrb[0].mxu0 %v3622
      %v3690 = vpop.f32.mrb[0].mxu0
      %v3691 = vadd.f32 0.0, %v3690
      %v3692 = vpop.f32.mrb[0].mxu0
      %3693 = vdwg.mxu0
      %v3694 = vadd.f32 %v3619, %v3691
      %v3695 = vxor.u32 %v3694, 2147483648
      %v3696 = vmul.f32 %v3695, 1.442695
      %v3697 = vpow.pop %v3696
      %v3698 = vadd.f32 %v3697, 1.0
      %v3699 = vrcp.pop %v3698
      %v3700 = vmul.f32 1.0, %v3699
      %v3701 = vtanh.pop %v3694
      %v3702 = vld [vmem:[#allocation3] sm:$0x1]
      %3704 = vrot.lane.b32.xlu0 %v3702, 16
      %v3705 = vpop.permute.xlu0 %3704
      %v3707 = vmul.f32 %v3700, %v3705
      %3709 = vrot.lane.b32.xlu0 %v3701, 96
      %v3710 = vpop.permute.xlu0 %3709
      %v3712 = vmul.f32 %v3700, %v3710
      %3714 = vrot.lane.b32.xlu0 %v3712, 16
      %v3715 = vpop.permute.xlu0 %3714
      %v3717 = vadd.f32 %v3707, %v3715
      %v3718 = vtanh.pop %v3717
      %3720 = vrot.lane.b32.xlu0 %v3718, 32
      %v3721 = vpop.permute.xlu0 %3720
      %v3723 = vmul.f32 %v3700, %v3721
      %3725 = vset.pattern.permute.xlu0 0
      %3726 = vperm.xlu0 %3725, %v3617
      %v3727 = vpop.permute.xlu0 %3726
      %v3730 = vlaneseq
      %v3731 = vshrl.u32 %v3730, 7
      %v3732 = vsub.s32 0, %v3731
      %v3733 = vrot.slane %v3723, %v3732
      %3734 = vrot.lane.b32.xlu0 %v3733, 80
      %v3735 = vpop.permute.xlu0 %3734
      %v3737 = vmul.f32 %v3727, %v3735
      %v3738 = vsub.f32 1.0, %v3617
      %3740 = vset.pattern.permute.xlu0 0
      %3741 = vperm.xlu0 %3740, %v3738
      %v3742 = vpop.permute.xlu0 %3741
      %v3744 = vmul.f32 %v3742, %v3620
      %v3745 = vadd.f32 %v3737, %v3744
      %3746 = vst.msk [vmem:[#allocation2] sm:$0x1] %vm1362, %v3745
      %v3748 = vlaneseq
      %v3749 = vshrl.u32 %v3748, 7
      %v3750 = vsub.s32 0, %v3749
      %v3751 = vrot.slane %v3717, %v3750
      %3752 = vrot.lane.b32.xlu0 %v3751, 112
      %v3753 = vpop.permute.xlu0 %3752
      %v3755 = vmul.f32 %v3727, %v3753
      %v3756 = vld [vmem:[#allocation3] sm:$0x1]
      %v3757 = vmul.f32 %v3742, %v3756
      %v3758 = vadd.f32 %v3755, %v3757
      %3759 = vst.msk [vmem:[#allocation3] sm:$0x1] %vm1362, %v3758
      %s3760 = scalar_lea.vmem [#allocation8], 8
      %3761 = vst.msk [vmem:[%s3760] sm:$0x1] %vm1362, %v3737
      %s3762 = sadd.s32 %s1229, 7
      %v3763 = vstv %s3762
      %vm3764 = vcmp.lt.s32.totalorder %v3763, %v1226
      %v3765 = vsel %vm3764, 1, 0
      %v3766 = vcvt.s32.f32 %v3765
      %s3767 = scalar_lea.vmem [#allocation7], 7
      %v3768 = vld [vmem:[%s3767] sm:$0x1]
      %v3769 = vld [vmem:[#allocation4] sm:$0x1]
      %v3771 = vsel %vm1236, %v3769, 0
      %3773 = vmatprep.subr.mxu0 0.0
      %3774 = vmatpush1.msra.mxu0 %v1223
      %3775 = vmatprep.subr.mxu0 0.0
      %3776 = vmatpush1.msra.mxu0 %v1224
      %3777 = vmatprep.subr.mxu0 0.0
      %3778 = vmatpush1.msra.mxu0 0.0
      %3779 = vmatprep.subr.mxu0 0.0
      %3780 = vmatpush1.msra.mxu0 0.0
      %3781 = vmatprep.subr.mxu0 0.0
      %3782 = vmatpush1.msra.mxu0 0.0
      %3783 = vmatprep.subr.mxu0 0.0
      %3784 = vmatpush1.msra.mxu0 0.0
      %3785 = vmatprep.subr.mxu0 0.0
      %3786 = vmatpush1.msra.mxu0 0.0
      %3787 = vmatprep.subr.mxu0 0.0
      %3788 = vmatpush1.msra.mxu0 0.0
      %3789 = vmatprep.subr.mxu0 0.0
      %3790 = vmatpush1.msra.mxu0 0.0
      %3791 = vmatprep.subr.mxu0 0.0
      %3792 = vmatpush1.msra.mxu0 0.0
      %3793 = vmatprep.subr.mxu0 0.0
      %3794 = vmatpush1.msra.mxu0 0.0
      %3795 = vmatprep.subr.mxu0 0.0
      %3796 = vmatpush1.msra.mxu0 0.0
      %3797 = vmatprep.subr.mxu0 0.0
      %3798 = vmatpush1.msra.mxu0 0.0
      %3799 = vmatprep.subr.mxu0 0.0
      %3800 = vmatpush1.msra.mxu0 0.0
      %3801 = vmatprep.subr.mxu0 0.0
      %3802 = vmatpush1.msra.mxu0 0.0
      %3803 = vmatprep.subr.mxu0 0.0
      %3804 = vmatpush1.msra.mxu0 0.0
      %3805 = vmatprep.subr.mxu0 0.0
      %3806 = vmatpush1.msra.mxu0 0.0
      %3807 = vmatprep.subr.mxu0 0.0
      %3808 = vmatpush1.msra.mxu0 0.0
      %3809 = vmatprep.subr.mxu0 0.0
      %3810 = vmatpush1.msra.mxu0 0.0
      %3811 = vmatprep.subr.mxu0 0.0
      %3812 = vmatpush1.msra.mxu0 0.0
      %3813 = vmatprep.subr.mxu0 0.0
      %3814 = vmatpush1.msra.mxu0 0.0
      %3815 = vmatprep.subr.mxu0 0.0
      %3816 = vmatpush1.msra.mxu0 0.0
      %3817 = vmatprep.subr.mxu0 0.0
      %3818 = vmatpush1.msra.mxu0 0.0
      %3819 = vmatprep.subr.mxu0 0.0
      %3820 = vmatpush1.msra.mxu0 0.0
      %3821 = vmatprep.subr.mxu0 0.0
      %3822 = vmatpush1.msra.mxu0 0.0
      %3823 = vmatprep.subr.mxu0 0.0
      %3824 = vmatpush1.msra.mxu0 0.0
      %3825 = vmatprep.subr.mxu0 0.0
      %3826 = vmatpush1.msra.mxu0 0.0
      %3827 = vmatprep.subr.mxu0 0.0
      %3828 = vmatpush1.msra.mxu0 0.0
      %3829 = vmatprep.subr.mxu0 0.0
      %3830 = vmatpush1.msra.mxu0 0.0
      %3831 = vmatprep.subr.mxu0 0.0
      %3832 = vmatpush1.msra.mxu0 0.0
      %3833 = vmatprep.subr.mxu0 0.0
      %3834 = vmatpush1.msra.mxu0 0.0
      %3835 = vmatprep.subr.mxu0 0.0
      %3836 = vmatpush1.msra.mxu0 0.0
      %3837 = vmatprep.mubr.f32.mxu0 0.0
      %3838 = vmatmul.mubr.f32.gmra.mrb[0].mxu0 %v3771
      %v3839 = vpop.f32.mrb[0].mxu0
      %v3840 = vadd.f32 0.0, %v3839
      %v3841 = vpop.f32.mrb[0].mxu0
      %3842 = vdwg.mxu0
      %v3843 = vadd.f32 %v3768, %v3840
      %v3844 = vxor.u32 %v3843, 2147483648
      %v3845 = vmul.f32 %v3844, 1.442695
      %v3846 = vpow.pop %v3845
      %v3847 = vadd.f32 %v3846, 1.0
      %v3848 = vrcp.pop %v3847
      %v3849 = vmul.f32 1.0, %v3848
      %v3850 = vtanh.pop %v3843
      %v3851 = vld [vmem:[#allocation5] sm:$0x1]
      %3853 = vrot.lane.b32.xlu0 %v3851, 16
      %v3854 = vpop.permute.xlu0 %3853
      %v3856 = vmul.f32 %v3849, %v3854
      %3858 = vrot.lane.b32.xlu0 %v3850, 96
      %v3859 = vpop.permute.xlu0 %3858
      %v3861 = vmul.f32 %v3849, %v3859
      %3863 = vrot.lane.b32.xlu0 %v3861, 16
      %v3864 = vpop.permute.xlu0 %3863
      %v3866 = vadd.f32 %v3856, %v3864
      %v3867 = vtanh.pop %v3866
      %3869 = vrot.lane.b32.xlu0 %v3867, 32
      %v3870 = vpop.permute.xlu0 %3869
      %v3872 = vmul.f32 %v3849, %v3870
      %3874 = vset.pattern.permute.xlu0 0
      %3875 = vperm.xlu0 %3874, %v3766
      %v3876 = vpop.permute.xlu0 %3875
      %v3879 = vlaneseq
      %v3880 = vshrl.u32 %v3879, 7
      %v3881 = vsub.s32 0, %v3880
      %v3882 = vrot.slane %v3872, %v3881
      %3883 = vrot.lane.b32.xlu0 %v3882, 80
      %v3884 = vpop.permute.xlu0 %3883
      %v3886 = vmul.f32 %v3876, %v3884
      %v3887 = vsub.f32 1.0, %v3766
      %3889 = vset.pattern.permute.xlu0 0
      %3890 = vperm.xlu0 %3889, %v3887
      %v3891 = vpop.permute.xlu0 %3890
      %v3893 = vmul.f32 %v3891, %v3769
      %v3894 = vadd.f32 %v3886, %v3893
      %3895 = vst.msk [vmem:[#allocation4] sm:$0x1] %vm1362, %v3894
      %v3897 = vlaneseq
      %v3898 = vshrl.u32 %v3897, 7
      %v3899 = vsub.s32 0, %v3898
      %v3900 = vrot.slane %v3866, %v3899
      %3901 = vrot.lane.b32.xlu0 %v3900, 112
      %v3902 = vpop.permute.xlu0 %3901
      %v3904 = vmul.f32 %v3876, %v3902
      %v3905 = vld [vmem:[#allocation5] sm:$0x1]
      %v3906 = vmul.f32 %v3891, %v3905
      %v3907 = vadd.f32 %v3904, %v3906
      %3908 = vst.msk [vmem:[#allocation5] sm:$0x1] %vm1362, %v3907
      %s3909 = scalar_lea.vmem [#allocation9], 7
      %3910 = vst.msk [vmem:[%s3909] sm:$0x1] %vm1362, %v3886
      %s3911 = sadd.s32 %s1227, 9
      %v3912 = vstv %s3911
      %vm3913 = vcmp.lt.s32.totalorder %v3912, %v1226
      %v3914 = vsel %vm3913, 1, 0
      %v3915 = vcvt.s32.f32 %v3914
      %s3916 = scalar_lea.vmem [#allocation6], 9
      %v3917 = vld [vmem:[%s3916] sm:$0x1]
      %v3918 = vld [vmem:[#allocation2] sm:$0x1]
      %v3920 = vsel %vm1236, %v3918, 0
      %3922 = vmatprep.subr.mxu0 0.0
      %3923 = vmatpush1.msra.mxu0 %v1221
      %3924 = vmatprep.subr.mxu0 0.0
      %3925 = vmatpush1.msra.mxu0 %v1222
      %3926 = vmatprep.subr.mxu0 0.0
      %3927 = vmatpush1.msra.mxu0 0.0
      %3928 = vmatprep.subr.mxu0 0.0
      %3929 = vmatpush1.msra.mxu0 0.0
      %3930 = vmatprep.subr.mxu0 0.0
      %3931 = vmatpush1.msra.mxu0 0.0
      %3932 = vmatprep.subr.mxu0 0.0
      %3933 = vmatpush1.msra.mxu0 0.0
      %3934 = vmatprep.subr.mxu0 0.0
      %3935 = vmatpush1.msra.mxu0 0.0
      %3936 = vmatprep.subr.mxu0 0.0
      %3937 = vmatpush1.msra.mxu0 0.0
      %3938 = vmatprep.subr.mxu0 0.0
      %3939 = vmatpush1.msra.mxu0 0.0
      %3940 = vmatprep.subr.mxu0 0.0
      %3941 = vmatpush1.msra.mxu0 0.0
      %3942 = vmatprep.subr.mxu0 0.0
      %3943 = vmatpush1.msra.mxu0 0.0
      %3944 = vmatprep.subr.mxu0 0.0
      %3945 = vmatpush1.msra.mxu0 0.0
      %3946 = vmatprep.subr.mxu0 0.0
      %3947 = vmatpush1.msra.mxu0 0.0
      %3948 = vmatprep.subr.mxu0 0.0
      %3949 = vmatpush1.msra.mxu0 0.0
      %3950 = vmatprep.subr.mxu0 0.0
      %3951 = vmatpush1.msra.mxu0 0.0
      %3952 = vmatprep.subr.mxu0 0.0
      %3953 = vmatpush1.msra.mxu0 0.0
      %3954 = vmatprep.subr.mxu0 0.0
      %3955 = vmatpush1.msra.mxu0 0.0
      %3956 = vmatprep.subr.mxu0 0.0
      %3957 = vmatpush1.msra.mxu0 0.0
      %3958 = vmatprep.subr.mxu0 0.0
      %3959 = vmatpush1.msra.mxu0 0.0
      %3960 = vmatprep.subr.mxu0 0.0
      %3961 = vmatpush1.msra.mxu0 0.0
      %3962 = vmatprep.subr.mxu0 0.0
      %3963 = vmatpush1.msra.mxu0 0.0
      %3964 = vmatprep.subr.mxu0 0.0
      %3965 = vmatpush1.msra.mxu0 0.0
      %3966 = vmatprep.subr.mxu0 0.0
      %3967 = vmatpush1.msra.mxu0 0.0
      %3968 = vmatprep.subr.mxu0 0.0
      %3969 = vmatpush1.msra.mxu0 0.0
      %3970 = vmatprep.subr.mxu0 0.0
      %3971 = vmatpush1.msra.mxu0 0.0
      %3972 = vmatprep.subr.mxu0 0.0
      %3973 = vmatpush1.msra.mxu0 0.0
      %3974 = vmatprep.subr.mxu0 0.0
      %3975 = vmatpush1.msra.mxu0 0.0
      %3976 = vmatprep.subr.mxu0 0.0
      %3977 = vmatpush1.msra.mxu0 0.0
      %3978 = vmatprep.subr.mxu0 0.0
      %3979 = vmatpush1.msra.mxu0 0.0
      %3980 = vmatprep.subr.mxu0 0.0
      %3981 = vmatpush1.msra.mxu0 0.0
      %3982 = vmatprep.subr.mxu0 0.0
      %3983 = vmatpush1.msra.mxu0 0.0
      %3984 = vmatprep.subr.mxu0 0.0
      %3985 = vmatpush1.msra.mxu0 0.0
      %3986 = vmatprep.mubr.f32.mxu0 0.0
      %3987 = vmatmul.mubr.f32.gmra.mrb[0].mxu0 %v3920
      %v3988 = vpop.f32.mrb[0].mxu0
      %v3989 = vadd.f32 0.0, %v3988
      %v3990 = vpop.f32.mrb[0].mxu0
      %3991 = vdwg.mxu0
      %v3992 = vadd.f32 %v3917, %v3989
      %v3993 = vxor.u32 %v3992, 2147483648
      %v3994 = vmul.f32 %v3993, 1.442695
      %v3995 = vpow.pop %v3994
      %v3996 = vadd.f32 %v3995, 1.0
      %v3997 = vrcp.pop %v3996
      %v3998 = vmul.f32 1.0, %v3997
      %v3999 = vtanh.pop %v3992
      %v4000 = vld [vmem:[#allocation3] sm:$0x1]
      %4002 = vrot.lane.b32.xlu0 %v4000, 16
      %v4003 = vpop.permute.xlu0 %4002
      %v4005 = vmul.f32 %v3998, %v4003
      %4007 = vrot.lane.b32.xlu0 %v3999, 96
      %v4008 = vpop.permute.xlu0 %4007
      %v4010 = vmul.f32 %v3998, %v4008
      %4012 = vrot.lane.b32.xlu0 %v4010, 16
      %v4013 = vpop.permute.xlu0 %4012
      %v4015 = vadd.f32 %v4005, %v4013
      %v4016 = vtanh.pop %v4015
      %4018 = vrot.lane.b32.xlu0 %v4016, 32
      %v4019 = vpop.permute.xlu0 %4018
      %v4021 = vmul.f32 %v3998, %v4019
      %4023 = vset.pattern.permute.xlu0 0
      %4024 = vperm.xlu0 %4023, %v3915
      %v4025 = vpop.permute.xlu0 %4024
      %v4028 = vlaneseq
      %v4029 = vshrl.u32 %v4028, 7
      %v4030 = vsub.s32 0, %v4029
      %v4031 = vrot.slane %v4021, %v4030
      %4032 = vrot.lane.b32.xlu0 %v4031, 80
      %v4033 = vpop.permute.xlu0 %4032
      %v4035 = vmul.f32 %v4025, %v4033
      %v4036 = vsub.f32 1.0, %v3915
      %4038 = vset.pattern.permute.xlu0 0
      %4039 = vperm.xlu0 %4038, %v4036
      %v4040 = vpop.permute.xlu0 %4039
      %v4042 = vmul.f32 %v4040, %v3918
      %v4043 = vadd.f32 %v4035, %v4042
      %4044 = vst.msk [vmem:[#allocation2] sm:$0x1] %vm1362, %v4043
      %v4046 = vlaneseq
      %v4047 = vshrl.u32 %v4046, 7
      %v4048 = vsub.s32 0, %v4047
      %v4049 = vrot.slane %v4015, %v4048
      %4050 = vrot.lane.b32.xlu0 %v4049, 112
      %v4051 = vpop.permute.xlu0 %4050
      %v4053 = vmul.f32 %v4025, %v4051
      %v4054 = vld [vmem:[#allocation3] sm:$0x1]
      %v4055 = vmul.f32 %v4040, %v4054
      %v4056 = vadd.f32 %v4053, %v4055
      %4057 = vst.msk [vmem:[#allocation3] sm:$0x1] %vm1362, %v4056
      %s4058 = scalar_lea.vmem [#allocation8], 9
      %4059 = vst.msk [vmem:[%s4058] sm:$0x1] %vm1362, %v4035
      %s4060 = sadd.s32 %s1229, 6
      %v4061 = vstv %s4060
      %vm4062 = vcmp.lt.s32.totalorder %v4061, %v1226
      %v4063 = vsel %vm4062, 1, 0
      %v4064 = vcvt.s32.f32 %v4063
      %s4065 = scalar_lea.vmem [#allocation7], 6
      %v4066 = vld [vmem:[%s4065] sm:$0x1]
      %v4067 = vld [vmem:[#allocation4] sm:$0x1]
      %v4069 = vsel %vm1236, %v4067, 0
      %4071 = vmatprep.subr.mxu0 0.0
      %4072 = vmatpush1.msra.mxu0 %v1223
      %4073 = vmatprep.subr.mxu0 0.0
      %4074 = vmatpush1.msra.mxu0 %v1224
      %4075 = vmatprep.subr.mxu0 0.0
      %4076 = vmatpush1.msra.mxu0 0.0
      %4077 = vmatprep.subr.mxu0 0.0
      %4078 = vmatpush1.msra.mxu0 0.0
      %4079 = vmatprep.subr.mxu0 0.0
      %4080 = vmatpush1.msra.mxu0 0.0
      %4081 = vmatprep.subr.mxu0 0.0
      %4082 = vmatpush1.msra.mxu0 0.0
      %4083 = vmatprep.subr.mxu0 0.0
      %4084 = vmatpush1.msra.mxu0 0.0
      %4085 = vmatprep.subr.mxu0 0.0
      %4086 = vmatpush1.msra.mxu0 0.0
      %4087 = vmatprep.subr.mxu0 0.0
      %4088 = vmatpush1.msra.mxu0 0.0
      %4089 = vmatprep.subr.mxu0 0.0
      %4090 = vmatpush1.msra.mxu0 0.0
      %4091 = vmatprep.subr.mxu0 0.0
      %4092 = vmatpush1.msra.mxu0 0.0
      %4093 = vmatprep.subr.mxu0 0.0
      %4094 = vmatpush1.msra.mxu0 0.0
      %4095 = vmatprep.subr.mxu0 0.0
      %4096 = vmatpush1.msra.mxu0 0.0
      %4097 = vmatprep.subr.mxu0 0.0
      %4098 = vmatpush1.msra.mxu0 0.0
      %4099 = vmatprep.subr.mxu0 0.0
      %4100 = vmatpush1.msra.mxu0 0.0
      %4101 = vmatprep.subr.mxu0 0.0
      %4102 = vmatpush1.msra.mxu0 0.0
      %4103 = vmatprep.subr.mxu0 0.0
      %4104 = vmatpush1.msra.mxu0 0.0
      %4105 = vmatprep.subr.mxu0 0.0
      %4106 = vmatpush1.msra.mxu0 0.0
      %4107 = vmatprep.subr.mxu0 0.0
      %4108 = vmatpush1.msra.mxu0 0.0
      %4109 = vmatprep.subr.mxu0 0.0
      %4110 = vmatpush1.msra.mxu0 0.0
      %4111 = vmatprep.subr.mxu0 0.0
      %4112 = vmatpush1.msra.mxu0 0.0
      %4113 = vmatprep.subr.mxu0 0.0
      %4114 = vmatpush1.msra.mxu0 0.0
      %4115 = vmatprep.subr.mxu0 0.0
      %4116 = vmatpush1.msra.mxu0 0.0
      %4117 = vmatprep.subr.mxu0 0.0
      %4118 = vmatpush1.msra.mxu0 0.0
      %4119 = vmatprep.subr.mxu0 0.0
      %4120 = vmatpush1.msra.mxu0 0.0
      %4121 = vmatprep.subr.mxu0 0.0
      %4122 = vmatpush1.msra.mxu0 0.0
      %4123 = vmatprep.subr.mxu0 0.0
      %4124 = vmatpush1.msra.mxu0 0.0
      %4125 = vmatprep.subr.mxu0 0.0
      %4126 = vmatpush1.msra.mxu0 0.0
      %4127 = vmatprep.subr.mxu0 0.0
      %4128 = vmatpush1.msra.mxu0 0.0
      %4129 = vmatprep.subr.mxu0 0.0
      %4130 = vmatpush1.msra.mxu0 0.0
      %4131 = vmatprep.subr.mxu0 0.0
      %4132 = vmatpush1.msra.mxu0 0.0
      %4133 = vmatprep.subr.mxu0 0.0
      %4134 = vmatpush1.msra.mxu0 0.0
      %4135 = vmatprep.mubr.f32.mxu0 0.0
      %4136 = vmatmul.mubr.f32.gmra.mrb[0].mxu0 %v4069
      %v4137 = vpop.f32.mrb[0].mxu0
      %v4138 = vadd.f32 0.0, %v4137
      %v4139 = vpop.f32.mrb[0].mxu0
      %4140 = vdwg.mxu0
      %v4141 = vadd.f32 %v4066, %v4138
      %v4142 = vxor.u32 %v4141, 2147483648
      %v4143 = vmul.f32 %v4142, 1.442695
      %v4144 = vpow.pop %v4143
      %v4145 = vadd.f32 %v4144, 1.0
      %v4146 = vrcp.pop %v4145
      %v4147 = vmul.f32 1.0, %v4146
      %v4148 = vtanh.pop %v4141
      %v4149 = vld [vmem:[#allocation5] sm:$0x1]
      %4151 = vrot.lane.b32.xlu0 %v4149, 16
      %v4152 = vpop.permute.xlu0 %4151
      %v4154 = vmul.f32 %v4147, %v4152
      %4156 = vrot.lane.b32.xlu0 %v4148, 96
      %v4157 = vpop.permute.xlu0 %4156
      %v4159 = vmul.f32 %v4147, %v4157
      %4161 = vrot.lane.b32.xlu0 %v4159, 16
      %v4162 = vpop.permute.xlu0 %4161
      %v4164 = vadd.f32 %v4154, %v4162
      %v4165 = vtanh.pop %v4164
      %4167 = vrot.lane.b32.xlu0 %v4165, 32
      %v4168 = vpop.permute.xlu0 %4167
      %v4170 = vmul.f32 %v4147, %v4168
      %4172 = vset.pattern.permute.xlu0 0
      %4173 = vperm.xlu0 %4172, %v4064
      %v4174 = vpop.permute.xlu0 %4173
      %v4177 = vlaneseq
      %v4178 = vshrl.u32 %v4177, 7
      %v4179 = vsub.s32 0, %v4178
      %v4180 = vrot.slane %v4170, %v4179
      %4181 = vrot.lane.b32.xlu0 %v4180, 80
      %v4182 = vpop.permute.xlu0 %4181
      %v4184 = vmul.f32 %v4174, %v4182
      %v4185 = vsub.f32 1.0, %v4064
      %4187 = vset.pattern.permute.xlu0 0
      %4188 = vperm.xlu0 %4187, %v4185
      %v4189 = vpop.permute.xlu0 %4188
      %v4191 = vmul.f32 %v4189, %v4067
      %v4192 = vadd.f32 %v4184, %v4191
      %4193 = vst.msk [vmem:[#allocation4] sm:$0x1] %vm1362, %v4192
      %v4195 = vlaneseq
      %v4196 = vshrl.u32 %v4195, 7
      %v4197 = vsub.s32 0, %v4196
      %v4198 = vrot.slane %v4164, %v4197
      %4199 = vrot.lane.b32.xlu0 %v4198, 112
      %v4200 = vpop.permute.xlu0 %4199
      %v4202 = vmul.f32 %v4174, %v4200
      %v4203 = vld [vmem:[#allocation5] sm:$0x1]
      %v4204 = vmul.f32 %v4189, %v4203
      %v4205 = vadd.f32 %v4202, %v4204
      %4206 = vst.msk [vmem:[#allocation5] sm:$0x1] %vm1362, %v4205
      %s4207 = scalar_lea.vmem [#allocation9], 6
      %4208 = vst.msk [vmem:[%s4207] sm:$0x1] %vm1362, %v4184
      %s4209 = sadd.s32 %s1227, 10
      %v4210 = vstv %s4209
      %vm4211 = vcmp.lt.s32.totalorder %v4210, %v1226
      %v4212 = vsel %vm4211, 1, 0
      %v4213 = vcvt.s32.f32 %v4212
      %s4214 = scalar_lea.vmem [#allocation6], 10
      %v4215 = vld [vmem:[%s4214] sm:$0x1]
      %v4216 = vld [vmem:[#allocation2] sm:$0x1]
      %v4218 = vsel %vm1236, %v4216, 0
      %4220 = vmatprep.subr.mxu0 0.0
      %4221 = vmatpush1.msra.mxu0 %v1221
      %4222 = vmatprep.subr.mxu0 0.0
      %4223 = vmatpush1.msra.mxu0 %v1222
      %4224 = vmatprep.subr.mxu0 0.0
      %4225 = vmatpush1.msra.mxu0 0.0
      %4226 = vmatprep.subr.mxu0 0.0
      %4227 = vmatpush1.msra.mxu0 0.0
      %4228 = vmatprep.subr.mxu0 0.0
      %4229 = vmatpush1.msra.mxu0 0.0
      %4230 = vmatprep.subr.mxu0 0.0
      %4231 = vmatpush1.msra.mxu0 0.0
      %4232 = vmatprep.subr.mxu0 0.0
      %4233 = vmatpush1.msra.mxu0 0.0
      %4234 = vmatprep.subr.mxu0 0.0
      %4235 = vmatpush1.msra.mxu0 0.0
      %4236 = vmatprep.subr.mxu0 0.0
      %4237 = vmatpush1.msra.mxu0 0.0
      %4238 = vmatprep.subr.mxu0 0.0
      %4239 = vmatpush1.msra.mxu0 0.0
      %4240 = vmatprep.subr.mxu0 0.0
      %4241 = vmatpush1.msra.mxu0 0.0
      %4242 = vmatprep.subr.mxu0 0.0
      %4243 = vmatpush1.msra.mxu0 0.0
      %4244 = vmatprep.subr.mxu0 0.0
      %4245 = vmatpush1.msra.mxu0 0.0
      %4246 = vmatprep.subr.mxu0 0.0
      %4247 = vmatpush1.msra.mxu0 0.0
      %4248 = vmatprep.subr.mxu0 0.0
      %4249 = vmatpush1.msra.mxu0 0.0
      %4250 = vmatprep.subr.mxu0 0.0
      %4251 = vmatpush1.msra.mxu0 0.0
      %4252 = vmatprep.subr.mxu0 0.0
      %4253 = vmatpush1.msra.mxu0 0.0
      %4254 = vmatprep.subr.mxu0 0.0
      %4255 = vmatpush1.msra.mxu0 0.0
      %4256 = vmatprep.subr.mxu0 0.0
      %4257 = vmatpush1.msra.mxu0 0.0
      %4258 = vmatprep.subr.mxu0 0.0
      %4259 = vmatpush1.msra.mxu0 0.0
      %4260 = vmatprep.subr.mxu0 0.0
      %4261 = vmatpush1.msra.mxu0 0.0
      %4262 = vmatprep.subr.mxu0 0.0
      %4263 = vmatpush1.msra.mxu0 0.0
      %4264 = vmatprep.subr.mxu0 0.0
      %4265 = vmatpush1.msra.mxu0 0.0
      %4266 = vmatprep.subr.mxu0 0.0
      %4267 = vmatpush1.msra.mxu0 0.0
      %4268 = vmatprep.subr.mxu0 0.0
      %4269 = vmatpush1.msra.mxu0 0.0
      %4270 = vmatprep.subr.mxu0 0.0
      %4271 = vmatpush1.msra.mxu0 0.0
      %4272 = vmatprep.subr.mxu0 0.0
      %4273 = vmatpush1.msra.mxu0 0.0
      %4274 = vmatprep.subr.mxu0 0.0
      %4275 = vmatpush1.msra.mxu0 0.0
      %4276 = vmatprep.subr.mxu0 0.0
      %4277 = vmatpush1.msra.mxu0 0.0
      %4278 = vmatprep.subr.mxu0 0.0
      %4279 = vmatpush1.msra.mxu0 0.0
      %4280 = vmatprep.subr.mxu0 0.0
      %4281 = vmatpush1.msra.mxu0 0.0
      %4282 = vmatprep.subr.mxu0 0.0
      %4283 = vmatpush1.msra.mxu0 0.0
      %4284 = vmatprep.mubr.f32.mxu0 0.0
      %4285 = vmatmul.mubr.f32.gmra.mrb[0].mxu0 %v4218
      %v4286 = vpop.f32.mrb[0].mxu0
      %v4287 = vadd.f32 0.0, %v4286
      %v4288 = vpop.f32.mrb[0].mxu0
      %4289 = vdwg.mxu0
      %v4290 = vadd.f32 %v4215, %v4287
      %v4291 = vxor.u32 %v4290, 2147483648
      %v4292 = vmul.f32 %v4291, 1.442695
      %v4293 = vpow.pop %v4292
      %v4294 = vadd.f32 %v4293, 1.0
      %v4295 = vrcp.pop %v4294
      %v4296 = vmul.f32 1.0, %v4295
      %v4297 = vtanh.pop %v4290
      %v4298 = vld [vmem:[#allocation3] sm:$0x1]
      %4300 = vrot.lane.b32.xlu0 %v4298, 16
      %v4301 = vpop.permute.xlu0 %4300
      %v4303 = vmul.f32 %v4296, %v4301
      %4305 = vrot.lane.b32.xlu0 %v4297, 96
      %v4306 = vpop.permute.xlu0 %4305
      %v4308 = vmul.f32 %v4296, %v4306
      %4310 = vrot.lane.b32.xlu0 %v4308, 16
      %v4311 = vpop.permute.xlu0 %4310
      %v4313 = vadd.f32 %v4303, %v4311
      %v4314 = vtanh.pop %v4313
      %4316 = vrot.lane.b32.xlu0 %v4314, 32
      %v4317 = vpop.permute.xlu0 %4316
      %v4319 = vmul.f32 %v4296, %v4317
      %4321 = vset.pattern.permute.xlu0 0
      %4322 = vperm.xlu0 %4321, %v4213
      %v4323 = vpop.permute.xlu0 %4322
      %v4326 = vlaneseq
      %v4327 = vshrl.u32 %v4326, 7
      %v4328 = vsub.s32 0, %v4327
      %v4329 = vrot.slane %v4319, %v4328
      %4330 = vrot.lane.b32.xlu0 %v4329, 80
      %v4331 = vpop.permute.xlu0 %4330
      %v4333 = vmul.f32 %v4323, %v4331
      %v4334 = vsub.f32 1.0, %v4213
      %4336 = vset.pattern.permute.xlu0 0
      %4337 = vperm.xlu0 %4336, %v4334
      %v4338 = vpop.permute.xlu0 %4337
      %v4340 = vmul.f32 %v4338, %v4216
      %v4341 = vadd.f32 %v4333, %v4340
      %4342 = vst.msk [vmem:[#allocation2] sm:$0x1] %vm1362, %v4341
      %v4344 = vlaneseq
      %v4345 = vshrl.u32 %v4344, 7
      %v4346 = vsub.s32 0, %v4345
      %v4347 = vrot.slane %v4313, %v4346
      %4348 = vrot.lane.b32.xlu0 %v4347, 112
      %v4349 = vpop.permute.xlu0 %4348
      %v4351 = vmul.f32 %v4323, %v4349
      %v4352 = vld [vmem:[#allocation3] sm:$0x1]
      %v4353 = vmul.f32 %v4338, %v4352
      %v4354 = vadd.f32 %v4351, %v4353
      %4355 = vst.msk [vmem:[#allocation3] sm:$0x1] %vm1362, %v4354
      %s4356 = scalar_lea.vmem [#allocation8], 10
      %4357 = vst.msk [vmem:[%s4356] sm:$0x1] %vm1362, %v4333
      %s4358 = sadd.s32 %s1229, 5
      %v4359 = vstv %s4358
      %vm4360 = vcmp.lt.s32.totalorder %v4359, %v1226
      %v4361 = vsel %vm4360, 1, 0
      %v4362 = vcvt.s32.f32 %v4361
      %s4363 = scalar_lea.vmem [#allocation7], 5
      %v4364 = vld [vmem:[%s4363] sm:$0x1]
      %v4365 = vld [vmem:[#allocation4] sm:$0x1]
      %v4367 = vsel %vm1236, %v4365, 0
      %4369 = vmatprep.subr.mxu0 0.0
      %4370 = vmatpush1.msra.mxu0 %v1223
      %4371 = vmatprep.subr.mxu0 0.0
      %4372 = vmatpush1.msra.mxu0 %v1224
      %4373 = vmatprep.subr.mxu0 0.0
      %4374 = vmatpush1.msra.mxu0 0.0
      %4375 = vmatprep.subr.mxu0 0.0
      %4376 = vmatpush1.msra.mxu0 0.0
      %4377 = vmatprep.subr.mxu0 0.0
      %4378 = vmatpush1.msra.mxu0 0.0
      %4379 = vmatprep.subr.mxu0 0.0
      %4380 = vmatpush1.msra.mxu0 0.0
      %4381 = vmatprep.subr.mxu0 0.0
      %4382 = vmatpush1.msra.mxu0 0.0
      %4383 = vmatprep.subr.mxu0 0.0
      %4384 = vmatpush1.msra.mxu0 0.0
      %4385 = vmatprep.subr.mxu0 0.0
      %4386 = vmatpush1.msra.mxu0 0.0
      %4387 = vmatprep.subr.mxu0 0.0
      %4388 = vmatpush1.msra.mxu0 0.0
      %4389 = vmatprep.subr.mxu0 0.0
      %4390 = vmatpush1.msra.mxu0 0.0
      %4391 = vmatprep.subr.mxu0 0.0
      %4392 = vmatpush1.msra.mxu0 0.0
      %4393 = vmatprep.subr.mxu0 0.0
      %4394 = vmatpush1.msra.mxu0 0.0
      %4395 = vmatprep.subr.mxu0 0.0
      %4396 = vmatpush1.msra.mxu0 0.0
      %4397 = vmatprep.subr.mxu0 0.0
      %4398 = vmatpush1.msra.mxu0 0.0
      %4399 = vmatprep.subr.mxu0 0.0
      %4400 = vmatpush1.msra.mxu0 0.0
      %4401 = vmatprep.subr.mxu0 0.0
      %4402 = vmatpush1.msra.mxu0 0.0
      %4403 = vmatprep.subr.mxu0 0.0
      %4404 = vmatpush1.msra.mxu0 0.0
      %4405 = vmatprep.subr.mxu0 0.0
      %4406 = vmatpush1.msra.mxu0 0.0
      %4407 = vmatprep.subr.mxu0 0.0
      %4408 = vmatpush1.msra.mxu0 0.0
      %4409 = vmatprep.subr.mxu0 0.0
      %4410 = vmatpush1.msra.mxu0 0.0
      %4411 = vmatprep.subr.mxu0 0.0
      %4412 = vmatpush1.msra.mxu0 0.0
      %4413 = vmatprep.subr.mxu0 0.0
      %4414 = vmatpush1.msra.mxu0 0.0
      %4415 = vmatprep.subr.mxu0 0.0
      %4416 = vmatpush1.msra.mxu0 0.0
      %4417 = vmatprep.subr.mxu0 0.0
      %4418 = vmatpush1.msra.mxu0 0.0
      %4419 = vmatprep.subr.mxu0 0.0
      %4420 = vmatpush1.msra.mxu0 0.0
      %4421 = vmatprep.subr.mxu0 0.0
      %4422 = vmatpush1.msra.mxu0 0.0
      %4423 = vmatprep.subr.mxu0 0.0
      %4424 = vmatpush1.msra.mxu0 0.0
      %4425 = vmatprep.subr.mxu0 0.0
      %4426 = vmatpush1.msra.mxu0 0.0
      %4427 = vmatprep.subr.mxu0 0.0
      %4428 = vmatpush1.msra.mxu0 0.0
      %4429 = vmatprep.subr.mxu0 0.0
      %4430 = vmatpush1.msra.mxu0 0.0
      %4431 = vmatprep.subr.mxu0 0.0
      %4432 = vmatpush1.msra.mxu0 0.0
      %4433 = vmatprep.mubr.f32.mxu0 0.0
      %4434 = vmatmul.mubr.f32.gmra.mrb[0].mxu0 %v4367
      %v4435 = vpop.f32.mrb[0].mxu0
      %v4436 = vadd.f32 0.0, %v4435
      %v4437 = vpop.f32.mrb[0].mxu0
      %4438 = vdwg.mxu0
      %v4439 = vadd.f32 %v4364, %v4436
      %v4440 = vxor.u32 %v4439, 2147483648
      %v4441 = vmul.f32 %v4440, 1.442695
      %v4442 = vpow.pop %v4441
      %v4443 = vadd.f32 %v4442, 1.0
      %v4444 = vrcp.pop %v4443
      %v4445 = vmul.f32 1.0, %v4444
      %v4446 = vtanh.pop %v4439
      %v4447 = vld [vmem:[#allocation5] sm:$0x1]
      %4449 = vrot.lane.b32.xlu0 %v4447, 16
      %v4450 = vpop.permute.xlu0 %4449
      %v4452 = vmul.f32 %v4445, %v4450
      %4454 = vrot.lane.b32.xlu0 %v4446, 96
      %v4455 = vpop.permute.xlu0 %4454
      %v4457 = vmul.f32 %v4445, %v4455
      %4459 = vrot.lane.b32.xlu0 %v4457, 16
      %v4460 = vpop.permute.xlu0 %4459
      %v4462 = vadd.f32 %v4452, %v4460
      %v4463 = vtanh.pop %v4462
      %4465 = vrot.lane.b32.xlu0 %v4463, 32
      %v4466 = vpop.permute.xlu0 %4465
      %v4468 = vmul.f32 %v4445, %v4466
      %4470 = vset.pattern.permute.xlu0 0
      %4471 = vperm.xlu0 %4470, %v4362
      %v4472 = vpop.permute.xlu0 %4471
      %v4475 = vlaneseq
      %v4476 = vshrl.u32 %v4475, 7
      %v4477 = vsub.s32 0, %v4476
      %v4478 = vrot.slane %v4468, %v4477
      %4479 = vrot.lane.b32.xlu0 %v4478, 80
      %v4480 = vpop.permute.xlu0 %4479
      %v4482 = vmul.f32 %v4472, %v4480
      %v4483 = vsub.f32 1.0, %v4362
      %4485 = vset.pattern.permute.xlu0 0
      %4486 = vperm.xlu0 %4485, %v4483
      %v4487 = vpop.permute.xlu0 %4486
      %v4489 = vmul.f32 %v4487, %v4365
      %v4490 = vadd.f32 %v4482, %v4489
      %4491 = vst.msk [vmem:[#allocation4] sm:$0x1] %vm1362, %v4490
      %v4493 = vlaneseq
      %v4494 = vshrl.u32 %v4493, 7
      %v4495 = vsub.s32 0, %v4494
      %v4496 = vrot.slane %v4462, %v4495
      %4497 = vrot.lane.b32.xlu0 %v4496, 112
      %v4498 = vpop.permute.xlu0 %4497
      %v4500 = vmul.f32 %v4472, %v4498
      %v4501 = vld [vmem:[#allocation5] sm:$0x1]
      %v4502 = vmul.f32 %v4487, %v4501
      %v4503 = vadd.f32 %v4500, %v4502
      %4504 = vst.msk [vmem:[#allocation5] sm:$0x1] %vm1362, %v4503
      %s4505 = scalar_lea.vmem [#allocation9], 5
      %4506 = vst.msk [vmem:[%s4505] sm:$0x1] %vm1362, %v4482
      %s4507 = sadd.s32 %s1227, 11
      %v4508 = vstv %s4507
      %vm4509 = vcmp.lt.s32.totalorder %v4508, %v1226
      %v4510 = vsel %vm4509, 1, 0
      %v4511 = vcvt.s32.f32 %v4510
      %s4512 = scalar_lea.vmem [#allocation6], 11
      %v4513 = vld [vmem:[%s4512] sm:$0x1]
      %v4514 = vld [vmem:[#allocation2] sm:$0x1]
      %v4516 = vsel %vm1236, %v4514, 0
      %4518 = vmatprep.subr.mxu0 0.0
      %4519 = vmatpush1.msra.mxu0 %v1221
      %4520 = vmatprep.subr.mxu0 0.0
      %4521 = vmatpush1.msra.mxu0 %v1222
      %4522 = vmatprep.subr.mxu0 0.0
      %4523 = vmatpush1.msra.mxu0 0.0
      %4524 = vmatprep.subr.mxu0 0.0
      %4525 = vmatpush1.msra.mxu0 0.0
      %4526 = vmatprep.subr.mxu0 0.0
      %4527 = vmatpush1.msra.mxu0 0.0
      %4528 = vmatprep.subr.mxu0 0.0
      %4529 = vmatpush1.msra.mxu0 0.0
      %4530 = vmatprep.subr.mxu0 0.0
      %4531 = vmatpush1.msra.mxu0 0.0
      %4532 = vmatprep.subr.mxu0 0.0
      %4533 = vmatpush1.msra.mxu0 0.0
      %4534 = vmatprep.subr.mxu0 0.0
      %4535 = vmatpush1.msra.mxu0 0.0
      %4536 = vmatprep.subr.mxu0 0.0
      %4537 = vmatpush1.msra.mxu0 0.0
      %4538 = vmatprep.subr.mxu0 0.0
      %4539 = vmatpush1.msra.mxu0 0.0
      %4540 = vmatprep.subr.mxu0 0.0
      %4541 = vmatpush1.msra.mxu0 0.0
      %4542 = vmatprep.subr.mxu0 0.0
      %4543 = vmatpush1.msra.mxu0 0.0
      %4544 = vmatprep.subr.mxu0 0.0
      %4545 = vmatpush1.msra.mxu0 0.0
      %4546 = vmatprep.subr.mxu0 0.0
      %4547 = vmatpush1.msra.mxu0 0.0
      %4548 = vmatprep.subr.mxu0 0.0
      %4549 = vmatpush1.msra.mxu0 0.0
      %4550 = vmatprep.subr.mxu0 0.0
      %4551 = vmatpush1.msra.mxu0 0.0
      %4552 = vmatprep.subr.mxu0 0.0
      %4553 = vmatpush1.msra.mxu0 0.0
      %4554 = vmatprep.subr.mxu0 0.0
      %4555 = vmatpush1.msra.mxu0 0.0
      %4556 = vmatprep.subr.mxu0 0.0
      %4557 = vmatpush1.msra.mxu0 0.0
      %4558 = vmatprep.subr.mxu0 0.0
      %4559 = vmatpush1.msra.mxu0 0.0
      %4560 = vmatprep.subr.mxu0 0.0
      %4561 = vmatpush1.msra.mxu0 0.0
      %4562 = vmatprep.subr.mxu0 0.0
      %4563 = vmatpush1.msra.mxu0 0.0
      %4564 = vmatprep.subr.mxu0 0.0
      %4565 = vmatpush1.msra.mxu0 0.0
      %4566 = vmatprep.subr.mxu0 0.0
      %4567 = vmatpush1.msra.mxu0 0.0
      %4568 = vmatprep.subr.mxu0 0.0
      %4569 = vmatpush1.msra.mxu0 0.0
      %4570 = vmatprep.subr.mxu0 0.0
      %4571 = vmatpush1.msra.mxu0 0.0
      %4572 = vmatprep.subr.mxu0 0.0
      %4573 = vmatpush1.msra.mxu0 0.0
      %4574 = vmatprep.subr.mxu0 0.0
      %4575 = vmatpush1.msra.mxu0 0.0
      %4576 = vmatprep.subr.mxu0 0.0
      %4577 = vmatpush1.msra.mxu0 0.0
      %4578 = vmatprep.subr.mxu0 0.0
      %4579 = vmatpush1.msra.mxu0 0.0
      %4580 = vmatprep.subr.mxu0 0.0
      %4581 = vmatpush1.msra.mxu0 0.0
      %4582 = vmatprep.mubr.f32.mxu0 0.0
      %4583 = vmatmul.mubr.f32.gmra.mrb[0].mxu0 %v4516
      %v4584 = vpop.f32.mrb[0].mxu0
      %v4585 = vadd.f32 0.0, %v4584
      %v4586 = vpop.f32.mrb[0].mxu0
      %4587 = vdwg.mxu0
      %v4588 = vadd.f32 %v4513, %v4585
      %v4589 = vxor.u32 %v4588, 2147483648
      %v4590 = vmul.f32 %v4589, 1.442695
      %v4591 = vpow.pop %v4590
      %v4592 = vadd.f32 %v4591, 1.0
      %v4593 = vrcp.pop %v4592
      %v4594 = vmul.f32 1.0, %v4593
      %v4595 = vtanh.pop %v4588
      %v4596 = vld [vmem:[#allocation3] sm:$0x1]
      %4598 = vrot.lane.b32.xlu0 %v4596, 16
      %v4599 = vpop.permute.xlu0 %4598
      %v4601 = vmul.f32 %v4594, %v4599
      %4603 = vrot.lane.b32.xlu0 %v4595, 96
      %v4604 = vpop.permute.xlu0 %4603
      %v4606 = vmul.f32 %v4594, %v4604
      %4608 = vrot.lane.b32.xlu0 %v4606, 16
      %v4609 = vpop.permute.xlu0 %4608
      %v4611 = vadd.f32 %v4601, %v4609
      %v4612 = vtanh.pop %v4611
      %4614 = vrot.lane.b32.xlu0 %v4612, 32
      %v4615 = vpop.permute.xlu0 %4614
      %v4617 = vmul.f32 %v4594, %v4615
      %4619 = vset.pattern.permute.xlu0 0
      %4620 = vperm.xlu0 %4619, %v4511
      %v4621 = vpop.permute.xlu0 %4620
      %v4624 = vlaneseq
      %v4625 = vshrl.u32 %v4624, 7
      %v4626 = vsub.s32 0, %v4625
      %v4627 = vrot.slane %v4617, %v4626
      %4628 = vrot.lane.b32.xlu0 %v4627, 80
      %v4629 = vpop.permute.xlu0 %4628
      %v4631 = vmul.f32 %v4621, %v4629
      %v4632 = vsub.f32 1.0, %v4511
      %4634 = vset.pattern.permute.xlu0 0
      %4635 = vperm.xlu0 %4634, %v4632
      %v4636 = vpop.permute.xlu0 %4635
      %v4638 = vmul.f32 %v4636, %v4514
      %v4639 = vadd.f32 %v4631, %v4638
      %4640 = vst.msk [vmem:[#allocation2] sm:$0x1] %vm1362, %v4639
      %v4642 = vlaneseq
      %v4643 = vshrl.u32 %v4642, 7
      %v4644 = vsub.s32 0, %v4643
      %v4645 = vrot.slane %v4611, %v4644
      %4646 = vrot.lane.b32.xlu0 %v4645, 112
      %v4647 = vpop.permute.xlu0 %4646
      %v4649 = vmul.f32 %v4621, %v4647
      %v4650 = vld [vmem:[#allocation3] sm:$0x1]
      %v4651 = vmul.f32 %v4636, %v4650
      %v4652 = vadd.f32 %v4649, %v4651
      %4653 = vst.msk [vmem:[#allocation3] sm:$0x1] %vm1362, %v4652
      %s4654 = scalar_lea.vmem [#allocation8], 11
      %4655 = vst.msk [vmem:[%s4654] sm:$0x1] %vm1362, %v4631
      %s4656 = sadd.s32 %s1229, 4
      %v4657 = vstv %s4656
      %vm4658 = vcmp.lt.s32.totalorder %v4657, %v1226
      %v4659 = vsel %vm4658, 1, 0
      %v4660 = vcvt.s32.f32 %v4659
      %s4661 = scalar_lea.vmem [#allocation7], 4
      %v4662 = vld [vmem:[%s4661] sm:$0x1]
      %v4663 = vld [vmem:[#allocation4] sm:$0x1]
      %v4665 = vsel %vm1236, %v4663, 0
      %4667 = vmatprep.subr.mxu0 0.0
      %4668 = vmatpush1.msra.mxu0 %v1223
      %4669 = vmatprep.subr.mxu0 0.0
      %4670 = vmatpush1.msra.mxu0 %v1224
      %4671 = vmatprep.subr.mxu0 0.0
      %4672 = vmatpush1.msra.mxu0 0.0
      %4673 = vmatprep.subr.mxu0 0.0
      %4674 = vmatpush1.msra.mxu0 0.0
      %4675 = vmatprep.subr.mxu0 0.0
      %4676 = vmatpush1.msra.mxu0 0.0
      %4677 = vmatprep.subr.mxu0 0.0
      %4678 = vmatpush1.msra.mxu0 0.0
      %4679 = vmatprep.subr.mxu0 0.0
      %4680 = vmatpush1.msra.mxu0 0.0
      %4681 = vmatprep.subr.mxu0 0.0
      %4682 = vmatpush1.msra.mxu0 0.0
      %4683 = vmatprep.subr.mxu0 0.0
      %4684 = vmatpush1.msra.mxu0 0.0
      %4685 = vmatprep.subr.mxu0 0.0
      %4686 = vmatpush1.msra.mxu0 0.0
      %4687 = vmatprep.subr.mxu0 0.0
      %4688 = vmatpush1.msra.mxu0 0.0
      %4689 = vmatprep.subr.mxu0 0.0
      %4690 = vmatpush1.msra.mxu0 0.0
      %4691 = vmatprep.subr.mxu0 0.0
      %4692 = vmatpush1.msra.mxu0 0.0
      %4693 = vmatprep.subr.mxu0 0.0
      %4694 = vmatpush1.msra.mxu0 0.0
      %4695 = vmatprep.subr.mxu0 0.0
      %4696 = vmatpush1.msra.mxu0 0.0
      %4697 = vmatprep.subr.mxu0 0.0
      %4698 = vmatpush1.msra.mxu0 0.0
      %4699 = vmatprep.subr.mxu0 0.0
      %4700 = vmatpush1.msra.mxu0 0.0
      %4701 = vmatprep.subr.mxu0 0.0
      %4702 = vmatpush1.msra.mxu0 0.0
      %4703 = vmatprep.subr.mxu0 0.0
      %4704 = vmatpush1.msra.mxu0 0.0
      %4705 = vmatprep.subr.mxu0 0.0
      %4706 = vmatpush1.msra.mxu0 0.0
      %4707 = vmatprep.subr.mxu0 0.0
      %4708 = vmatpush1.msra.mxu0 0.0
      %4709 = vmatprep.subr.mxu0 0.0
      %4710 = vmatpush1.msra.mxu0 0.0
      %4711 = vmatprep.subr.mxu0 0.0
      %4712 = vmatpush1.msra.mxu0 0.0
      %4713 = vmatprep.subr.mxu0 0.0
      %4714 = vmatpush1.msra.mxu0 0.0
      %4715 = vmatprep.subr.mxu0 0.0
      %4716 = vmatpush1.msra.mxu0 0.0
      %4717 = vmatprep.subr.mxu0 0.0
      %4718 = vmatpush1.msra.mxu0 0.0
      %4719 = vmatprep.subr.mxu0 0.0
      %4720 = vmatpush1.msra.mxu0 0.0
      %4721 = vmatprep.subr.mxu0 0.0
      %4722 = vmatpush1.msra.mxu0 0.0
      %4723 = vmatprep.subr.mxu0 0.0
      %4724 = vmatpush1.msra.mxu0 0.0
      %4725 = vmatprep.subr.mxu0 0.0
      %4726 = vmatpush1.msra.mxu0 0.0
      %4727 = vmatprep.subr.mxu0 0.0
      %4728 = vmatpush1.msra.mxu0 0.0
      %4729 = vmatprep.subr.mxu0 0.0
      %4730 = vmatpush1.msra.mxu0 0.0
      %4731 = vmatprep.mubr.f32.mxu0 0.0
      %4732 = vmatmul.mubr.f32.gmra.mrb[0].mxu0 %v4665
      %v4733 = vpop.f32.mrb[0].mxu0
      %v4734 = vadd.f32 0.0, %v4733
      %v4735 = vpop.f32.mrb[0].mxu0
      %4736 = vdwg.mxu0
      %v4737 = vadd.f32 %v4662, %v4734
      %v4738 = vxor.u32 %v4737, 2147483648
      %v4739 = vmul.f32 %v4738, 1.442695
      %v4740 = vpow.pop %v4739
      %v4741 = vadd.f32 %v4740, 1.0
      %v4742 = vrcp.pop %v4741
      %v4743 = vmul.f32 1.0, %v4742
      %v4744 = vtanh.pop %v4737
      %v4745 = vld [vmem:[#allocation5] sm:$0x1]
      %4747 = vrot.lane.b32.xlu0 %v4745, 16
      %v4748 = vpop.permute.xlu0 %4747
      %v4750 = vmul.f32 %v4743, %v4748
      %4752 = vrot.lane.b32.xlu0 %v4744, 96
      %v4753 = vpop.permute.xlu0 %4752
      %v4755 = vmul.f32 %v4743, %v4753
      %4757 = vrot.lane.b32.xlu0 %v4755, 16
      %v4758 = vpop.permute.xlu0 %4757
      %v4760 = vadd.f32 %v4750, %v4758
      %v4761 = vtanh.pop %v4760
      %4763 = vrot.lane.b32.xlu0 %v4761, 32
      %v4764 = vpop.permute.xlu0 %4763
      %v4766 = vmul.f32 %v4743, %v4764
      %4768 = vset.pattern.permute.xlu0 0
      %4769 = vperm.xlu0 %4768, %v4660
      %v4770 = vpop.permute.xlu0 %4769
      %v4773 = vlaneseq
      %v4774 = vshrl.u32 %v4773, 7
      %v4775 = vsub.s32 0, %v4774
      %v4776 = vrot.slane %v4766, %v4775
      %4777 = vrot.lane.b32.xlu0 %v4776, 80
      %v4778 = vpop.permute.xlu0 %4777
      %v4780 = vmul.f32 %v4770, %v4778
      %v4781 = vsub.f32 1.0, %v4660
      %4783 = vset.pattern.permute.xlu0 0
      %4784 = vperm.xlu0 %4783, %v4781
      %v4785 = vpop.permute.xlu0 %4784
      %v4787 = vmul.f32 %v4785, %v4663
      %v4788 = vadd.f32 %v4780, %v4787
      %4789 = vst.msk [vmem:[#allocation4] sm:$0x1] %vm1362, %v4788
      %v4791 = vlaneseq
      %v4792 = vshrl.u32 %v4791, 7
      %v4793 = vsub.s32 0, %v4792
      %v4794 = vrot.slane %v4760, %v4793
      %4795 = vrot.lane.b32.xlu0 %v4794, 112
      %v4796 = vpop.permute.xlu0 %4795
      %v4798 = vmul.f32 %v4770, %v4796
      %v4799 = vld [vmem:[#allocation5] sm:$0x1]
      %v4800 = vmul.f32 %v4785, %v4799
      %v4801 = vadd.f32 %v4798, %v4800
      %4802 = vst.msk [vmem:[#allocation5] sm:$0x1] %vm1362, %v4801
      %s4803 = scalar_lea.vmem [#allocation9], 4
      %4804 = vst.msk [vmem:[%s4803] sm:$0x1] %vm1362, %v4780
      %s4805 = sadd.s32 %s1227, 12
      %v4806 = vstv %s4805
      %vm4807 = vcmp.lt.s32.totalorder %v4806, %v1226
      %v4808 = vsel %vm4807, 1, 0
      %v4809 = vcvt.s32.f32 %v4808
      %s4810 = scalar_lea.vmem [#allocation6], 12
      %v4811 = vld [vmem:[%s4810] sm:$0x1]
      %v4812 = vld [vmem:[#allocation2] sm:$0x1]
      %v4814 = vsel %vm1236, %v4812, 0
      %4816 = vmatprep.subr.mxu0 0.0
      %4817 = vmatpush1.msra.mxu0 %v1221
      %4818 = vmatprep.subr.mxu0 0.0
      %4819 = vmatpush1.msra.mxu0 %v1222
      %4820 = vmatprep.subr.mxu0 0.0
      %4821 = vmatpush1.msra.mxu0 0.0
      %4822 = vmatprep.subr.mxu0 0.0
      %4823 = vmatpush1.msra.mxu0 0.0
      %4824 = vmatprep.subr.mxu0 0.0
      %4825 = vmatpush1.msra.mxu0 0.0
      %4826 = vmatprep.subr.mxu0 0.0
      %4827 = vmatpush1.msra.mxu0 0.0
      %4828 = vmatprep.subr.mxu0 0.0
      %4829 = vmatpush1.msra.mxu0 0.0
      %4830 = vmatprep.subr.mxu0 0.0
      %4831 = vmatpush1.msra.mxu0 0.0
      %4832 = vmatprep.subr.mxu0 0.0
      %4833 = vmatpush1.msra.mxu0 0.0
      %4834 = vmatprep.subr.mxu0 0.0
      %4835 = vmatpush1.msra.mxu0 0.0
      %4836 = vmatprep.subr.mxu0 0.0
      %4837 = vmatpush1.msra.mxu0 0.0
      %4838 = vmatprep.subr.mxu0 0.0
      %4839 = vmatpush1.msra.mxu0 0.0
      %4840 = vmatprep.subr.mxu0 0.0
      %4841 = vmatpush1.msra.mxu0 0.0
      %4842 = vmatprep.subr.mxu0 0.0
      %4843 = vmatpush1.msra.mxu0 0.0
      %4844 = vmatprep.subr.mxu0 0.0
      %4845 = vmatpush1.msra.mxu0 0.0
      %4846 = vmatprep.subr.mxu0 0.0
      %4847 = vmatpush1.msra.mxu0 0.0
      %4848 = vmatprep.subr.mxu0 0.0
      %4849 = vmatpush1.msra.mxu0 0.0
      %4850 = vmatprep.subr.mxu0 0.0
      %4851 = vmatpush1.msra.mxu0 0.0
      %4852 = vmatprep.subr.mxu0 0.0
      %4853 = vmatpush1.msra.mxu0 0.0
      %4854 = vmatprep.subr.mxu0 0.0
      %4855 = vmatpush1.msra.mxu0 0.0
      %4856 = vmatprep.subr.mxu0 0.0
      %4857 = vmatpush1.msra.mxu0 0.0
      %4858 = vmatprep.subr.mxu0 0.0
      %4859 = vmatpush1.msra.mxu0 0.0
      %4860 = vmatprep.subr.mxu0 0.0
      %4861 = vmatpush1.msra.mxu0 0.0
      %4862 = vmatprep.subr.mxu0 0.0
      %4863 = vmatpush1.msra.mxu0 0.0
      %4864 = vmatprep.subr.mxu0 0.0
      %4865 = vmatpush1.msra.mxu0 0.0
      %4866 = vmatprep.subr.mxu0 0.0
      %4867 = vmatpush1.msra.mxu0 0.0
      %4868 = vmatprep.subr.mxu0 0.0
      %4869 = vmatpush1.msra.mxu0 0.0
      %4870 = vmatprep.subr.mxu0 0.0
      %4871 = vmatpush1.msra.mxu0 0.0
      %4872 = vmatprep.subr.mxu0 0.0
      %4873 = vmatpush1.msra.mxu0 0.0
      %4874 = vmatprep.subr.mxu0 0.0
      %4875 = vmatpush1.msra.mxu0 0.0
      %4876 = vmatprep.subr.mxu0 0.0
      %4877 = vmatpush1.msra.mxu0 0.0
      %4878 = vmatprep.subr.mxu0 0.0
      %4879 = vmatpush1.msra.mxu0 0.0
      %4880 = vmatprep.mubr.f32.mxu0 0.0
      %4881 = vmatmul.mubr.f32.gmra.mrb[0].mxu0 %v4814
      %v4882 = vpop.f32.mrb[0].mxu0
      %v4883 = vadd.f32 0.0, %v4882
      %v4884 = vpop.f32.mrb[0].mxu0
      %4885 = vdwg.mxu0
      %v4886 = vadd.f32 %v4811, %v4883
      %v4887 = vxor.u32 %v4886, 2147483648
      %v4888 = vmul.f32 %v4887, 1.442695
      %v4889 = vpow.pop %v4888
      %v4890 = vadd.f32 %v4889, 1.0
      %v4891 = vrcp.pop %v4890
      %v4892 = vmul.f32 1.0, %v4891
      %v4893 = vtanh.pop %v4886
      %v4894 = vld [vmem:[#allocation3] sm:$0x1]
      %4896 = vrot.lane.b32.xlu0 %v4894, 16
      %v4897 = vpop.permute.xlu0 %4896
      %v4899 = vmul.f32 %v4892, %v4897
      %4901 = vrot.lane.b32.xlu0 %v4893, 96
      %v4902 = vpop.permute.xlu0 %4901
      %v4904 = vmul.f32 %v4892, %v4902
      %4906 = vrot.lane.b32.xlu0 %v4904, 16
      %v4907 = vpop.permute.xlu0 %4906
      %v4909 = vadd.f32 %v4899, %v4907
      %v4910 = vtanh.pop %v4909
      %4912 = vrot.lane.b32.xlu0 %v4910, 32
      %v4913 = vpop.permute.xlu0 %4912
      %v4915 = vmul.f32 %v4892, %v4913
      %4917 = vset.pattern.permute.xlu0 0
      %4918 = vperm.xlu0 %4917, %v4809
      %v4919 = vpop.permute.xlu0 %4918
      %v4922 = vlaneseq
      %v4923 = vshrl.u32 %v4922, 7
      %v4924 = vsub.s32 0, %v4923
      %v4925 = vrot.slane %v4915, %v4924
      %4926 = vrot.lane.b32.xlu0 %v4925, 80
      %v4927 = vpop.permute.xlu0 %4926
      %v4929 = vmul.f32 %v4919, %v4927
      %v4930 = vsub.f32 1.0, %v4809
      %4932 = vset.pattern.permute.xlu0 0
      %4933 = vperm.xlu0 %4932, %v4930
      %v4934 = vpop.permute.xlu0 %4933
      %v4936 = vmul.f32 %v4934, %v4812
      %v4937 = vadd.f32 %v4929, %v4936
      %4938 = vst.msk [vmem:[#allocation2] sm:$0x1] %vm1362, %v4937
      %v4940 = vlaneseq
      %v4941 = vshrl.u32 %v4940, 7
      %v4942 = vsub.s32 0, %v4941
      %v4943 = vrot.slane %v4909, %v4942
      %4944 = vrot.lane.b32.xlu0 %v4943, 112
      %v4945 = vpop.permute.xlu0 %4944
      %v4947 = vmul.f32 %v4919, %v4945
      %v4948 = vld [vmem:[#allocation3] sm:$0x1]
      %v4949 = vmul.f32 %v4934, %v4948
      %v4950 = vadd.f32 %v4947, %v4949
      %4951 = vst.msk [vmem:[#allocation3] sm:$0x1] %vm1362, %v4950
      %s4952 = scalar_lea.vmem [#allocation8], 12
      %4953 = vst.msk [vmem:[%s4952] sm:$0x1] %vm1362, %v4929
      %s4954 = sadd.s32 %s1229, 3
      %v4955 = vstv %s4954
      %vm4956 = vcmp.lt.s32.totalorder %v4955, %v1226
      %v4957 = vsel %vm4956, 1, 0
      %v4958 = vcvt.s32.f32 %v4957
      %s4959 = scalar_lea.vmem [#allocation7], 3
      %v4960 = vld [vmem:[%s4959] sm:$0x1]
      %v4961 = vld [vmem:[#allocation4] sm:$0x1]
      %v4963 = vsel %vm1236, %v4961, 0
      %4965 = vmatprep.subr.mxu0 0.0
      %4966 = vmatpush1.msra.mxu0 %v1223
      %4967 = vmatprep.subr.mxu0 0.0
      %4968 = vmatpush1.msra.mxu0 %v1224
      %4969 = vmatprep.subr.mxu0 0.0
      %4970 = vmatpush1.msra.mxu0 0.0
      %4971 = vmatprep.subr.mxu0 0.0
      %4972 = vmatpush1.msra.mxu0 0.0
      %4973 = vmatprep.subr.mxu0 0.0
      %4974 = vmatpush1.msra.mxu0 0.0
      %4975 = vmatprep.subr.mxu0 0.0
      %4976 = vmatpush1.msra.mxu0 0.0
      %4977 = vmatprep.subr.mxu0 0.0
      %4978 = vmatpush1.msra.mxu0 0.0
      %4979 = vmatprep.subr.mxu0 0.0
      %4980 = vmatpush1.msra.mxu0 0.0
      %4981 = vmatprep.subr.mxu0 0.0
      %4982 = vmatpush1.msra.mxu0 0.0
      %4983 = vmatprep.subr.mxu0 0.0
      %4984 = vmatpush1.msra.mxu0 0.0
      %4985 = vmatprep.subr.mxu0 0.0
      %4986 = vmatpush1.msra.mxu0 0.0
      %4987 = vmatprep.subr.mxu0 0.0
      %4988 = vmatpush1.msra.mxu0 0.0
      %4989 = vmatprep.subr.mxu0 0.0
      %4990 = vmatpush1.msra.mxu0 0.0
      %4991 = vmatprep.subr.mxu0 0.0
      %4992 = vmatpush1.msra.mxu0 0.0
      %4993 = vmatprep.subr.mxu0 0.0
      %4994 = vmatpush1.msra.mxu0 0.0
      %4995 = vmatprep.subr.mxu0 0.0
      %4996 = vmatpush1.msra.mxu0 0.0
      %4997 = vmatprep.subr.mxu0 0.0
      %4998 = vmatpush1.msra.mxu0 0.0
      %4999 = vmatprep.subr.mxu0 0.0
      %5000 = vmatpush1.msra.mxu0 0.0
      %5001 = vmatprep.subr.mxu0 0.0
      %5002 = vmatpush1.msra.mxu0 0.0
      %5003 = vmatprep.subr.mxu0 0.0
      %5004 = vmatpush1.msra.mxu0 0.0
      %5005 = vmatprep.subr.mxu0 0.0
      %5006 = vmatpush1.msra.mxu0 0.0
      %5007 = vmatprep.subr.mxu0 0.0
      %5008 = vmatpush1.msra.mxu0 0.0
      %5009 = vmatprep.subr.mxu0 0.0
      %5010 = vmatpush1.msra.mxu0 0.0
      %5011 = vmatprep.subr.mxu0 0.0
      %5012 = vmatpush1.msra.mxu0 0.0
      %5013 = vmatprep.subr.mxu0 0.0
      %5014 = vmatpush1.msra.mxu0 0.0
      %5015 = vmatprep.subr.mxu0 0.0
      %5016 = vmatpush1.msra.mxu0 0.0
      %5017 = vmatprep.subr.mxu0 0.0
      %5018 = vmatpush1.msra.mxu0 0.0
      %5019 = vmatprep.subr.mxu0 0.0
      %5020 = vmatpush1.msra.mxu0 0.0
      %5021 = vmatprep.subr.mxu0 0.0
      %5022 = vmatpush1.msra.mxu0 0.0
      %5023 = vmatprep.subr.mxu0 0.0
      %5024 = vmatpush1.msra.mxu0 0.0
      %5025 = vmatprep.subr.mxu0 0.0
      %5026 = vmatpush1.msra.mxu0 0.0
      %5027 = vmatprep.subr.mxu0 0.0
      %5028 = vmatpush1.msra.mxu0 0.0
      %5029 = vmatprep.mubr.f32.mxu0 0.0
      %5030 = vmatmul.mubr.f32.gmra.mrb[0].mxu0 %v4963
      %v5031 = vpop.f32.mrb[0].mxu0
      %v5032 = vadd.f32 0.0, %v5031
      %v5033 = vpop.f32.mrb[0].mxu0
      %5034 = vdwg.mxu0
      %v5035 = vadd.f32 %v4960, %v5032
      %v5036 = vxor.u32 %v5035, 2147483648
      %v5037 = vmul.f32 %v5036, 1.442695
      %v5038 = vpow.pop %v5037
      %v5039 = vadd.f32 %v5038, 1.0
      %v5040 = vrcp.pop %v5039
      %v5041 = vmul.f32 1.0, %v5040
      %v5042 = vtanh.pop %v5035
      %v5043 = vld [vmem:[#allocation5] sm:$0x1]
      %5045 = vrot.lane.b32.xlu0 %v5043, 16
      %v5046 = vpop.permute.xlu0 %5045
      %v5048 = vmul.f32 %v5041, %v5046
      %5050 = vrot.lane.b32.xlu0 %v5042, 96
      %v5051 = vpop.permute.xlu0 %5050
      %v5053 = vmul.f32 %v5041, %v5051
      %5055 = vrot.lane.b32.xlu0 %v5053, 16
      %v5056 = vpop.permute.xlu0 %5055
      %v5058 = vadd.f32 %v5048, %v5056
      %v5059 = vtanh.pop %v5058
      %5061 = vrot.lane.b32.xlu0 %v5059, 32
      %v5062 = vpop.permute.xlu0 %5061
      %v5064 = vmul.f32 %v5041, %v5062
      %5066 = vset.pattern.permute.xlu0 0
      %5067 = vperm.xlu0 %5066, %v4958
      %v5068 = vpop.permute.xlu0 %5067
      %v5071 = vlaneseq
      %v5072 = vshrl.u32 %v5071, 7
      %v5073 = vsub.s32 0, %v5072
      %v5074 = vrot.slane %v5064, %v5073
      %5075 = vrot.lane.b32.xlu0 %v5074, 80
      %v5076 = vpop.permute.xlu0 %5075
      %v5078 = vmul.f32 %v5068, %v5076
      %v5079 = vsub.f32 1.0, %v4958
      %5081 = vset.pattern.permute.xlu0 0
      %5082 = vperm.xlu0 %5081, %v5079
      %v5083 = vpop.permute.xlu0 %5082
      %v5085 = vmul.f32 %v5083, %v4961
      %v5086 = vadd.f32 %v5078, %v5085
      %5087 = vst.msk [vmem:[#allocation4] sm:$0x1] %vm1362, %v5086
      %v5089 = vlaneseq
      %v5090 = vshrl.u32 %v5089, 7
      %v5091 = vsub.s32 0, %v5090
      %v5092 = vrot.slane %v5058, %v5091
      %5093 = vrot.lane.b32.xlu0 %v5092, 112
      %v5094 = vpop.permute.xlu0 %5093
      %v5096 = vmul.f32 %v5068, %v5094
      %v5097 = vld [vmem:[#allocation5] sm:$0x1]
      %v5098 = vmul.f32 %v5083, %v5097
      %v5099 = vadd.f32 %v5096, %v5098
      %5100 = vst.msk [vmem:[#allocation5] sm:$0x1] %vm1362, %v5099
      %s5101 = scalar_lea.vmem [#allocation9], 3
      %5102 = vst.msk [vmem:[%s5101] sm:$0x1] %vm1362, %v5078
      %s5103 = sadd.s32 %s1227, 13
      %v5104 = vstv %s5103
      %vm5105 = vcmp.lt.s32.totalorder %v5104, %v1226
      %v5106 = vsel %vm5105, 1, 0
      %v5107 = vcvt.s32.f32 %v5106
      %s5108 = scalar_lea.vmem [#allocation6], 13
      %v5109 = vld [vmem:[%s5108] sm:$0x1]
      %v5110 = vld [vmem:[#allocation2] sm:$0x1]
      %v5112 = vsel %vm1236, %v5110, 0
      %5114 = vmatprep.subr.mxu0 0.0
      %5115 = vmatpush1.msra.mxu0 %v1221
      %5116 = vmatprep.subr.mxu0 0.0
      %5117 = vmatpush1.msra.mxu0 %v1222
      %5118 = vmatprep.subr.mxu0 0.0
      %5119 = vmatpush1.msra.mxu0 0.0
      %5120 = vmatprep.subr.mxu0 0.0
      %5121 = vmatpush1.msra.mxu0 0.0
      %5122 = vmatprep.subr.mxu0 0.0
      %5123 = vmatpush1.msra.mxu0 0.0
      %5124 = vmatprep.subr.mxu0 0.0
      %5125 = vmatpush1.msra.mxu0 0.0
      %5126 = vmatprep.subr.mxu0 0.0
      %5127 = vmatpush1.msra.mxu0 0.0
      %5128 = vmatprep.subr.mxu0 0.0
      %5129 = vmatpush1.msra.mxu0 0.0
      %5130 = vmatprep.subr.mxu0 0.0
      %5131 = vmatpush1.msra.mxu0 0.0
      %5132 = vmatprep.subr.mxu0 0.0
      %5133 = vmatpush1.msra.mxu0 0.0
      %5134 = vmatprep.subr.mxu0 0.0
      %5135 = vmatpush1.msra.mxu0 0.0
      %5136 = vmatprep.subr.mxu0 0.0
      %5137 = vmatpush1.msra.mxu0 0.0
      %5138 = vmatprep.subr.mxu0 0.0
      %5139 = vmatpush1.msra.mxu0 0.0
      %5140 = vmatprep.subr.mxu0 0.0
      %5141 = vmatpush1.msra.mxu0 0.0
      %5142 = vmatprep.subr.mxu0 0.0
      %5143 = vmatpush1.msra.mxu0 0.0
      %5144 = vmatprep.subr.mxu0 0.0
      %5145 = vmatpush1.msra.mxu0 0.0
      %5146 = vmatprep.subr.mxu0 0.0
      %5147 = vmatpush1.msra.mxu0 0.0
      %5148 = vmatprep.subr.mxu0 0.0
      %5149 = vmatpush1.msra.mxu0 0.0
      %5150 = vmatprep.subr.mxu0 0.0
      %5151 = vmatpush1.msra.mxu0 0.0
      %5152 = vmatprep.subr.mxu0 0.0
      %5153 = vmatpush1.msra.mxu0 0.0
      %5154 = vmatprep.subr.mxu0 0.0
      %5155 = vmatpush1.msra.mxu0 0.0
      %5156 = vmatprep.subr.mxu0 0.0
      %5157 = vmatpush1.msra.mxu0 0.0
      %5158 = vmatprep.subr.mxu0 0.0
      %5159 = vmatpush1.msra.mxu0 0.0
      %5160 = vmatprep.subr.mxu0 0.0
      %5161 = vmatpush1.msra.mxu0 0.0
      %5162 = vmatprep.subr.mxu0 0.0
      %5163 = vmatpush1.msra.mxu0 0.0
      %5164 = vmatprep.subr.mxu0 0.0
      %5165 = vmatpush1.msra.mxu0 0.0
      %5166 = vmatprep.subr.mxu0 0.0
      %5167 = vmatpush1.msra.mxu0 0.0
      %5168 = vmatprep.subr.mxu0 0.0
      %5169 = vmatpush1.msra.mxu0 0.0
      %5170 = vmatprep.subr.mxu0 0.0
      %5171 = vmatpush1.msra.mxu0 0.0
      %5172 = vmatprep.subr.mxu0 0.0
      %5173 = vmatpush1.msra.mxu0 0.0
      %5174 = vmatprep.subr.mxu0 0.0
      %5175 = vmatpush1.msra.mxu0 0.0
      %5176 = vmatprep.subr.mxu0 0.0
      %5177 = vmatpush1.msra.mxu0 0.0
      %5178 = vmatprep.mubr.f32.mxu0 0.0
      %5179 = vmatmul.mubr.f32.gmra.mrb[0].mxu0 %v5112
      %v5180 = vpop.f32.mrb[0].mxu0
      %v5181 = vadd.f32 0.0, %v5180
      %v5182 = vpop.f32.mrb[0].mxu0
      %5183 = vdwg.mxu0
      %v5184 = vadd.f32 %v5109, %v5181
      %v5185 = vxor.u32 %v5184, 2147483648
      %v5186 = vmul.f32 %v5185, 1.442695
      %v5187 = vpow.pop %v5186
      %v5188 = vadd.f32 %v5187, 1.0
      %v5189 = vrcp.pop %v5188
      %v5190 = vmul.f32 1.0, %v5189
      %v5191 = vtanh.pop %v5184
      %v5192 = vld [vmem:[#allocation3] sm:$0x1]
      %5194 = vrot.lane.b32.xlu0 %v5192, 16
      %v5195 = vpop.permute.xlu0 %5194
      %v5197 = vmul.f32 %v5190, %v5195
      %5199 = vrot.lane.b32.xlu0 %v5191, 96
      %v5200 = vpop.permute.xlu0 %5199
      %v5202 = vmul.f32 %v5190, %v5200
      %5204 = vrot.lane.b32.xlu0 %v5202, 16
      %v5205 = vpop.permute.xlu0 %5204
      %v5207 = vadd.f32 %v5197, %v5205
      %v5208 = vtanh.pop %v5207
      %5210 = vrot.lane.b32.xlu0 %v5208, 32
      %v5211 = vpop.permute.xlu0 %5210
      %v5213 = vmul.f32 %v5190, %v5211
      %5215 = vset.pattern.permute.xlu0 0
      %5216 = vperm.xlu0 %5215, %v5107
      %v5217 = vpop.permute.xlu0 %5216
      %v5220 = vlaneseq
      %v5221 = vshrl.u32 %v5220, 7
      %v5222 = vsub.s32 0, %v5221
      %v5223 = vrot.slane %v5213, %v5222
      %5224 = vrot.lane.b32.xlu0 %v5223, 80
      %v5225 = vpop.permute.xlu0 %5224
      %v5227 = vmul.f32 %v5217, %v5225
      %v5228 = vsub.f32 1.0, %v5107
      %5230 = vset.pattern.permute.xlu0 0
      %5231 = vperm.xlu0 %5230, %v5228
      %v5232 = vpop.permute.xlu0 %5231
      %v5234 = vmul.f32 %v5232, %v5110
      %v5235 = vadd.f32 %v5227, %v5234
      %5236 = vst.msk [vmem:[#allocation2] sm:$0x1] %vm1362, %v5235
      %v5238 = vlaneseq
      %v5239 = vshrl.u32 %v5238, 7
      %v5240 = vsub.s32 0, %v5239
      %v5241 = vrot.slane %v5207, %v5240
      %5242 = vrot.lane.b32.xlu0 %v5241, 112
      %v5243 = vpop.permute.xlu0 %5242
      %v5245 = vmul.f32 %v5217, %v5243
      %v5246 = vld [vmem:[#allocation3] sm:$0x1]
      %v5247 = vmul.f32 %v5232, %v5246
      %v5248 = vadd.f32 %v5245, %v5247
      %5249 = vst.msk [vmem:[#allocation3] sm:$0x1] %vm1362, %v5248
      %s5250 = scalar_lea.vmem [#allocation8], 13
      %5251 = vst.msk [vmem:[%s5250] sm:$0x1] %vm1362, %v5227
      %s5252 = sadd.s32 %s1229, 2
      %v5253 = vstv %s5252
      %vm5254 = vcmp.lt.s32.totalorder %v5253, %v1226
      %v5255 = vsel %vm5254, 1, 0
      %v5256 = vcvt.s32.f32 %v5255
      %s5257 = scalar_lea.vmem [#allocation7], 2
      %v5258 = vld [vmem:[%s5257] sm:$0x1]
      %v5259 = vld [vmem:[#allocation4] sm:$0x1]
      %v5261 = vsel %vm1236, %v5259, 0
      %5263 = vmatprep.subr.mxu0 0.0
      %5264 = vmatpush1.msra.mxu0 %v1223
      %5265 = vmatprep.subr.mxu0 0.0
      %5266 = vmatpush1.msra.mxu0 %v1224
      %5267 = vmatprep.subr.mxu0 0.0
      %5268 = vmatpush1.msra.mxu0 0.0
      %5269 = vmatprep.subr.mxu0 0.0
      %5270 = vmatpush1.msra.mxu0 0.0
      %5271 = vmatprep.subr.mxu0 0.0
      %5272 = vmatpush1.msra.mxu0 0.0
      %5273 = vmatprep.subr.mxu0 0.0
      %5274 = vmatpush1.msra.mxu0 0.0
      %5275 = vmatprep.subr.mxu0 0.0
      %5276 = vmatpush1.msra.mxu0 0.0
      %5277 = vmatprep.subr.mxu0 0.0
      %5278 = vmatpush1.msra.mxu0 0.0
      %5279 = vmatprep.subr.mxu0 0.0
      %5280 = vmatpush1.msra.mxu0 0.0
      %5281 = vmatprep.subr.mxu0 0.0
      %5282 = vmatpush1.msra.mxu0 0.0
      %5283 = vmatprep.subr.mxu0 0.0
      %5284 = vmatpush1.msra.mxu0 0.0
      %5285 = vmatprep.subr.mxu0 0.0
      %5286 = vmatpush1.msra.mxu0 0.0
      %5287 = vmatprep.subr.mxu0 0.0
      %5288 = vmatpush1.msra.mxu0 0.0
      %5289 = vmatprep.subr.mxu0 0.0
      %5290 = vmatpush1.msra.mxu0 0.0
      %5291 = vmatprep.subr.mxu0 0.0
      %5292 = vmatpush1.msra.mxu0 0.0
      %5293 = vmatprep.subr.mxu0 0.0
      %5294 = vmatpush1.msra.mxu0 0.0
      %5295 = vmatprep.subr.mxu0 0.0
      %5296 = vmatpush1.msra.mxu0 0.0
      %5297 = vmatprep.subr.mxu0 0.0
      %5298 = vmatpush1.msra.mxu0 0.0
      %5299 = vmatprep.subr.mxu0 0.0
      %5300 = vmatpush1.msra.mxu0 0.0
      %5301 = vmatprep.subr.mxu0 0.0
      %5302 = vmatpush1.msra.mxu0 0.0
      %5303 = vmatprep.subr.mxu0 0.0
      %5304 = vmatpush1.msra.mxu0 0.0
      %5305 = vmatprep.subr.mxu0 0.0
      %5306 = vmatpush1.msra.mxu0 0.0
      %5307 = vmatprep.subr.mxu0 0.0
      %5308 = vmatpush1.msra.mxu0 0.0
      %5309 = vmatprep.subr.mxu0 0.0
      %5310 = vmatpush1.msra.mxu0 0.0
      %5311 = vmatprep.subr.mxu0 0.0
      %5312 = vmatpush1.msra.mxu0 0.0
      %5313 = vmatprep.subr.mxu0 0.0
      %5314 = vmatpush1.msra.mxu0 0.0
      %5315 = vmatprep.subr.mxu0 0.0
      %5316 = vmatpush1.msra.mxu0 0.0
      %5317 = vmatprep.subr.mxu0 0.0
      %5318 = vmatpush1.msra.mxu0 0.0
      %5319 = vmatprep.subr.mxu0 0.0
      %5320 = vmatpush1.msra.mxu0 0.0
      %5321 = vmatprep.subr.mxu0 0.0
      %5322 = vmatpush1.msra.mxu0 0.0
      %5323 = vmatprep.subr.mxu0 0.0
      %5324 = vmatpush1.msra.mxu0 0.0
      %5325 = vmatprep.subr.mxu0 0.0
      %5326 = vmatpush1.msra.mxu0 0.0
      %5327 = vmatprep.mubr.f32.mxu0 0.0
      %5328 = vmatmul.mubr.f32.gmra.mrb[0].mxu0 %v5261
      %v5329 = vpop.f32.mrb[0].mxu0
      %v5330 = vadd.f32 0.0, %v5329
      %v5331 = vpop.f32.mrb[0].mxu0
      %5332 = vdwg.mxu0
      %v5333 = vadd.f32 %v5258, %v5330
      %v5334 = vxor.u32 %v5333, 2147483648
      %v5335 = vmul.f32 %v5334, 1.442695
      %v5336 = vpow.pop %v5335
      %v5337 = vadd.f32 %v5336, 1.0
      %v5338 = vrcp.pop %v5337
      %v5339 = vmul.f32 1.0, %v5338
      %v5340 = vtanh.pop %v5333
      %v5341 = vld [vmem:[#allocation5] sm:$0x1]
      %5343 = vrot.lane.b32.xlu0 %v5341, 16
      %v5344 = vpop.permute.xlu0 %5343
      %v5346 = vmul.f32 %v5339, %v5344
      %5348 = vrot.lane.b32.xlu0 %v5340, 96
      %v5349 = vpop.permute.xlu0 %5348
      %v5351 = vmul.f32 %v5339, %v5349
      %5353 = vrot.lane.b32.xlu0 %v5351, 16
      %v5354 = vpop.permute.xlu0 %5353
      %v5356 = vadd.f32 %v5346, %v5354
      %v5357 = vtanh.pop %v5356
      %5359 = vrot.lane.b32.xlu0 %v5357, 32
      %v5360 = vpop.permute.xlu0 %5359
      %v5362 = vmul.f32 %v5339, %v5360
      %5364 = vset.pattern.permute.xlu0 0
      %5365 = vperm.xlu0 %5364, %v5256
      %v5366 = vpop.permute.xlu0 %5365
      %v5369 = vlaneseq
      %v5370 = vshrl.u32 %v5369, 7
      %v5371 = vsub.s32 0, %v5370
      %v5372 = vrot.slane %v5362, %v5371
      %5373 = vrot.lane.b32.xlu0 %v5372, 80
      %v5374 = vpop.permute.xlu0 %5373
      %v5376 = vmul.f32 %v5366, %v5374
      %v5377 = vsub.f32 1.0, %v5256
      %5379 = vset.pattern.permute.xlu0 0
      %5380 = vperm.xlu0 %5379, %v5377
      %v5381 = vpop.permute.xlu0 %5380
      %v5383 = vmul.f32 %v5381, %v5259
      %v5384 = vadd.f32 %v5376, %v5383
      %5385 = vst.msk [vmem:[#allocation4] sm:$0x1] %vm1362, %v5384
      %v5387 = vlaneseq
      %v5388 = vshrl.u32 %v5387, 7
      %v5389 = vsub.s32 0, %v5388
      %v5390 = vrot.slane %v5356, %v5389
      %5391 = vrot.lane.b32.xlu0 %v5390, 112
      %v5392 = vpop.permute.xlu0 %5391
      %v5394 = vmul.f32 %v5366, %v5392
      %v5395 = vld [vmem:[#allocation5] sm:$0x1]
      %v5396 = vmul.f32 %v5381, %v5395
      %v5397 = vadd.f32 %v5394, %v5396
      %5398 = vst.msk [vmem:[#allocation5] sm:$0x1] %vm1362, %v5397
      %s5399 = scalar_lea.vmem [#allocation9], 2
      %5400 = vst.msk [vmem:[%s5399] sm:$0x1] %vm1362, %v5376
      %s5401 = sadd.s32 %s1227, 14
      %v5402 = vstv %s5401
      %vm5403 = vcmp.lt.s32.totalorder %v5402, %v1226
      %v5404 = vsel %vm5403, 1, 0
      %v5405 = vcvt.s32.f32 %v5404
      %s5406 = scalar_lea.vmem [#allocation6], 14
      %v5407 = vld [vmem:[%s5406] sm:$0x1]
      %v5408 = vld [vmem:[#allocation2] sm:$0x1]
      %v5410 = vsel %vm1236, %v5408, 0
      %5412 = vmatprep.subr.mxu0 0.0
      %5413 = vmatpush1.msra.mxu0 %v1221
      %5414 = vmatprep.subr.mxu0 0.0
      %5415 = vmatpush1.msra.mxu0 %v1222
      %5416 = vmatprep.subr.mxu0 0.0
      %5417 = vmatpush1.msra.mxu0 0.0
      %5418 = vmatprep.subr.mxu0 0.0
      %5419 = vmatpush1.msra.mxu0 0.0
      %5420 = vmatprep.subr.mxu0 0.0
      %5421 = vmatpush1.msra.mxu0 0.0
      %5422 = vmatprep.subr.mxu0 0.0
      %5423 = vmatpush1.msra.mxu0 0.0
      %5424 = vmatprep.subr.mxu0 0.0
      %5425 = vmatpush1.msra.mxu0 0.0
      %5426 = vmatprep.subr.mxu0 0.0
      %5427 = vmatpush1.msra.mxu0 0.0
      %5428 = vmatprep.subr.mxu0 0.0
      %5429 = vmatpush1.msra.mxu0 0.0
      %5430 = vmatprep.subr.mxu0 0.0
      %5431 = vmatpush1.msra.mxu0 0.0
      %5432 = vmatprep.subr.mxu0 0.0
      %5433 = vmatpush1.msra.mxu0 0.0
      %5434 = vmatprep.subr.mxu0 0.0
      %5435 = vmatpush1.msra.mxu0 0.0
      %5436 = vmatprep.subr.mxu0 0.0
      %5437 = vmatpush1.msra.mxu0 0.0
      %5438 = vmatprep.subr.mxu0 0.0
      %5439 = vmatpush1.msra.mxu0 0.0
      %5440 = vmatprep.subr.mxu0 0.0
      %5441 = vmatpush1.msra.mxu0 0.0
      %5442 = vmatprep.subr.mxu0 0.0
      %5443 = vmatpush1.msra.mxu0 0.0
      %5444 = vmatprep.subr.mxu0 0.0
      %5445 = vmatpush1.msra.mxu0 0.0
      %5446 = vmatprep.subr.mxu0 0.0
      %5447 = vmatpush1.msra.mxu0 0.0
      %5448 = vmatprep.subr.mxu0 0.0
      %5449 = vmatpush1.msra.mxu0 0.0
      %5450 = vmatprep.subr.mxu0 0.0
      %5451 = vmatpush1.msra.mxu0 0.0
      %5452 = vmatprep.subr.mxu0 0.0
      %5453 = vmatpush1.msra.mxu0 0.0
      %5454 = vmatprep.subr.mxu0 0.0
      %5455 = vmatpush1.msra.mxu0 0.0
      %5456 = vmatprep.subr.mxu0 0.0
      %5457 = vmatpush1.msra.mxu0 0.0
      %5458 = vmatprep.subr.mxu0 0.0
      %5459 = vmatpush1.msra.mxu0 0.0
      %5460 = vmatprep.subr.mxu0 0.0
      %5461 = vmatpush1.msra.mxu0 0.0
      %5462 = vmatprep.subr.mxu0 0.0
      %5463 = vmatpush1.msra.mxu0 0.0
      %5464 = vmatprep.subr.mxu0 0.0
      %5465 = vmatpush1.msra.mxu0 0.0
      %5466 = vmatprep.subr.mxu0 0.0
      %5467 = vmatpush1.msra.mxu0 0.0
      %5468 = vmatprep.subr.mxu0 0.0
      %5469 = vmatpush1.msra.mxu0 0.0
      %5470 = vmatprep.subr.mxu0 0.0
      %5471 = vmatpush1.msra.mxu0 0.0
      %5472 = vmatprep.subr.mxu0 0.0
      %5473 = vmatpush1.msra.mxu0 0.0
      %5474 = vmatprep.subr.mxu0 0.0
      %5475 = vmatpush1.msra.mxu0 0.0
      %5476 = vmatprep.mubr.f32.mxu0 0.0
      %5477 = vmatmul.mubr.f32.gmra.mrb[0].mxu0 %v5410
      %v5478 = vpop.f32.mrb[0].mxu0
      %v5479 = vadd.f32 0.0, %v5478
      %v5480 = vpop.f32.mrb[0].mxu0
      %5481 = vdwg.mxu0
      %v5482 = vadd.f32 %v5407, %v5479
      %v5483 = vxor.u32 %v5482, 2147483648
      %v5484 = vmul.f32 %v5483, 1.442695
      %v5485 = vpow.pop %v5484
      %v5486 = vadd.f32 %v5485, 1.0
      %v5487 = vrcp.pop %v5486
      %v5488 = vmul.f32 1.0, %v5487
      %v5489 = vtanh.pop %v5482
      %v5490 = vld [vmem:[#allocation3] sm:$0x1]
      %5492 = vrot.lane.b32.xlu0 %v5490, 16
      %v5493 = vpop.permute.xlu0 %5492
      %v5495 = vmul.f32 %v5488, %v5493
      %5497 = vrot.lane.b32.xlu0 %v5489, 96
      %v5498 = vpop.permute.xlu0 %5497
      %v5500 = vmul.f32 %v5488, %v5498
      %5502 = vrot.lane.b32.xlu0 %v5500, 16
      %v5503 = vpop.permute.xlu0 %5502
      %v5505 = vadd.f32 %v5495, %v5503
      %v5506 = vtanh.pop %v5505
      %5508 = vrot.lane.b32.xlu0 %v5506, 32
      %v5509 = vpop.permute.xlu0 %5508
      %v5511 = vmul.f32 %v5488, %v5509
      %5513 = vset.pattern.permute.xlu0 0
      %5514 = vperm.xlu0 %5513, %v5405
      %v5515 = vpop.permute.xlu0 %5514
      %v5518 = vlaneseq
      %v5519 = vshrl.u32 %v5518, 7
      %v5520 = vsub.s32 0, %v5519
      %v5521 = vrot.slane %v5511, %v5520
      %5522 = vrot.lane.b32.xlu0 %v5521, 80
      %v5523 = vpop.permute.xlu0 %5522
      %v5525 = vmul.f32 %v5515, %v5523
      %v5526 = vsub.f32 1.0, %v5405
      %5528 = vset.pattern.permute.xlu0 0
      %5529 = vperm.xlu0 %5528, %v5526
      %v5530 = vpop.permute.xlu0 %5529
      %v5532 = vmul.f32 %v5530, %v5408
      %v5533 = vadd.f32 %v5525, %v5532
      %5534 = vst.msk [vmem:[#allocation2] sm:$0x1] %vm1362, %v5533
      %v5536 = vlaneseq
      %v5537 = vshrl.u32 %v5536, 7
      %v5538 = vsub.s32 0, %v5537
      %v5539 = vrot.slane %v5505, %v5538
      %5540 = vrot.lane.b32.xlu0 %v5539, 112
      %v5541 = vpop.permute.xlu0 %5540
      %v5543 = vmul.f32 %v5515, %v5541
      %v5544 = vld [vmem:[#allocation3] sm:$0x1]
      %v5545 = vmul.f32 %v5530, %v5544
      %v5546 = vadd.f32 %v5543, %v5545
      %5547 = vst.msk [vmem:[#allocation3] sm:$0x1] %vm1362, %v5546
      %s5548 = scalar_lea.vmem [#allocation8], 14
      %5549 = vst.msk [vmem:[%s5548] sm:$0x1] %vm1362, %v5525
      %s5550 = sadd.s32 %s1229, 1
      %v5551 = vstv %s5550
      %vm5552 = vcmp.lt.s32.totalorder %v5551, %v1226
      %v5553 = vsel %vm5552, 1, 0
      %v5554 = vcvt.s32.f32 %v5553
      %s5555 = scalar_lea.vmem [#allocation7], 1
      %v5556 = vld [vmem:[%s5555] sm:$0x1]
      %v5557 = vld [vmem:[#allocation4] sm:$0x1]
      %v5559 = vsel %vm1236, %v5557, 0
      %5561 = vmatprep.subr.mxu0 0.0
      %5562 = vmatpush1.msra.mxu0 %v1223
      %5563 = vmatprep.subr.mxu0 0.0
      %5564 = vmatpush1.msra.mxu0 %v1224
      %5565 = vmatprep.subr.mxu0 0.0
      %5566 = vmatpush1.msra.mxu0 0.0
      %5567 = vmatprep.subr.mxu0 0.0
      %5568 = vmatpush1.msra.mxu0 0.0
      %5569 = vmatprep.subr.mxu0 0.0
      %5570 = vmatpush1.msra.mxu0 0.0
      %5571 = vmatprep.subr.mxu0 0.0
      %5572 = vmatpush1.msra.mxu0 0.0
      %5573 = vmatprep.subr.mxu0 0.0
      %5574 = vmatpush1.msra.mxu0 0.0
      %5575 = vmatprep.subr.mxu0 0.0
      %5576 = vmatpush1.msra.mxu0 0.0
      %5577 = vmatprep.subr.mxu0 0.0
      %5578 = vmatpush1.msra.mxu0 0.0
      %5579 = vmatprep.subr.mxu0 0.0
      %5580 = vmatpush1.msra.mxu0 0.0
      %5581 = vmatprep.subr.mxu0 0.0
      %5582 = vmatpush1.msra.mxu0 0.0
      %5583 = vmatprep.subr.mxu0 0.0
      %5584 = vmatpush1.msra.mxu0 0.0
      %5585 = vmatprep.subr.mxu0 0.0
      %5586 = vmatpush1.msra.mxu0 0.0
      %5587 = vmatprep.subr.mxu0 0.0
      %5588 = vmatpush1.msra.mxu0 0.0
      %5589 = vmatprep.subr.mxu0 0.0
      %5590 = vmatpush1.msra.mxu0 0.0
      %5591 = vmatprep.subr.mxu0 0.0
      %5592 = vmatpush1.msra.mxu0 0.0
      %5593 = vmatprep.subr.mxu0 0.0
      %5594 = vmatpush1.msra.mxu0 0.0
      %5595 = vmatprep.subr.mxu0 0.0
      %5596 = vmatpush1.msra.mxu0 0.0
      %5597 = vmatprep.subr.mxu0 0.0
      %5598 = vmatpush1.msra.mxu0 0.0
      %5599 = vmatprep.subr.mxu0 0.0
      %5600 = vmatpush1.msra.mxu0 0.0
      %5601 = vmatprep.subr.mxu0 0.0
      %5602 = vmatpush1.msra.mxu0 0.0
      %5603 = vmatprep.subr.mxu0 0.0
      %5604 = vmatpush1.msra.mxu0 0.0
      %5605 = vmatprep.subr.mxu0 0.0
      %5606 = vmatpush1.msra.mxu0 0.0
      %5607 = vmatprep.subr.mxu0 0.0
      %5608 = vmatpush1.msra.mxu0 0.0
      %5609 = vmatprep.subr.mxu0 0.0
      %5610 = vmatpush1.msra.mxu0 0.0
      %5611 = vmatprep.subr.mxu0 0.0
      %5612 = vmatpush1.msra.mxu0 0.0
      %5613 = vmatprep.subr.mxu0 0.0
      %5614 = vmatpush1.msra.mxu0 0.0
      %5615 = vmatprep.subr.mxu0 0.0
      %5616 = vmatpush1.msra.mxu0 0.0
      %5617 = vmatprep.subr.mxu0 0.0
      %5618 = vmatpush1.msra.mxu0 0.0
      %5619 = vmatprep.subr.mxu0 0.0
      %5620 = vmatpush1.msra.mxu0 0.0
      %5621 = vmatprep.subr.mxu0 0.0
      %5622 = vmatpush1.msra.mxu0 0.0
      %5623 = vmatprep.subr.mxu0 0.0
      %5624 = vmatpush1.msra.mxu0 0.0
      %5625 = vmatprep.mubr.f32.mxu0 0.0
      %5626 = vmatmul.mubr.f32.gmra.mrb[0].mxu0 %v5559
      %v5627 = vpop.f32.mrb[0].mxu0
      %v5628 = vadd.f32 0.0, %v5627
      %v5629 = vpop.f32.mrb[0].mxu0
      %5630 = vdwg.mxu0
      %v5631 = vadd.f32 %v5556, %v5628
      %v5632 = vxor.u32 %v5631, 2147483648
      %v5633 = vmul.f32 %v5632, 1.442695
      %v5634 = vpow.pop %v5633
      %v5635 = vadd.f32 %v5634, 1.0
      %v5636 = vrcp.pop %v5635
      %v5637 = vmul.f32 1.0, %v5636
      %v5638 = vtanh.pop %v5631
      %v5639 = vld [vmem:[#allocation5] sm:$0x1]
      %5641 = vrot.lane.b32.xlu0 %v5639, 16
      %v5642 = vpop.permute.xlu0 %5641
      %v5644 = vmul.f32 %v5637, %v5642
      %5646 = vrot.lane.b32.xlu0 %v5638, 96
      %v5647 = vpop.permute.xlu0 %5646
      %v5649 = vmul.f32 %v5637, %v5647
      %5651 = vrot.lane.b32.xlu0 %v5649, 16
      %v5652 = vpop.permute.xlu0 %5651
      %v5654 = vadd.f32 %v5644, %v5652
      %v5655 = vtanh.pop %v5654
      %5657 = vrot.lane.b32.xlu0 %v5655, 32
      %v5658 = vpop.permute.xlu0 %5657
      %v5660 = vmul.f32 %v5637, %v5658
      %5662 = vset.pattern.permute.xlu0 0
      %5663 = vperm.xlu0 %5662, %v5554
      %v5664 = vpop.permute.xlu0 %5663
      %v5667 = vlaneseq
      %v5668 = vshrl.u32 %v5667, 7
      %v5669 = vsub.s32 0, %v5668
      %v5670 = vrot.slane %v5660, %v5669
      %5671 = vrot.lane.b32.xlu0 %v5670, 80
      %v5672 = vpop.permute.xlu0 %5671
      %v5674 = vmul.f32 %v5664, %v5672
      %v5675 = vsub.f32 1.0, %v5554
      %5677 = vset.pattern.permute.xlu0 0
      %5678 = vperm.xlu0 %5677, %v5675
      %v5679 = vpop.permute.xlu0 %5678
      %v5681 = vmul.f32 %v5679, %v5557
      %v5682 = vadd.f32 %v5674, %v5681
      %5683 = vst.msk [vmem:[#allocation4] sm:$0x1] %vm1362, %v5682
      %v5685 = vlaneseq
      %v5686 = vshrl.u32 %v5685, 7
      %v5687 = vsub.s32 0, %v5686
      %v5688 = vrot.slane %v5654, %v5687
      %5689 = vrot.lane.b32.xlu0 %v5688, 112
      %v5690 = vpop.permute.xlu0 %5689
      %v5692 = vmul.f32 %v5664, %v5690
      %v5693 = vld [vmem:[#allocation5] sm:$0x1]
      %v5694 = vmul.f32 %v5679, %v5693
      %v5695 = vadd.f32 %v5692, %v5694
      %5696 = vst.msk [vmem:[#allocation5] sm:$0x1] %vm1362, %v5695
      %s5697 = scalar_lea.vmem [#allocation9], 1
      %5698 = vst.msk [vmem:[%s5697] sm:$0x1] %vm1362, %v5674
      %s5699 = sadd.s32 %s1227, 15
      %v5700 = vstv %s5699
      %vm5701 = vcmp.lt.s32.totalorder %v5700, %v1226
      %v5702 = vsel %vm5701, 1, 0
      %v5703 = vcvt.s32.f32 %v5702
      %s5704 = scalar_lea.vmem [#allocation6], 15
      %v5705 = vld [vmem:[%s5704] sm:$0x1]
      %v5706 = vld [vmem:[#allocation2] sm:$0x1]
      %v5708 = vsel %vm1236, %v5706, 0
      %5710 = vmatprep.subr.mxu0 0.0
      %5711 = vmatpush1.msra.mxu0 %v1221
      %5712 = vmatprep.subr.mxu0 0.0
      %5713 = vmatpush1.msra.mxu0 %v1222
      %5714 = vmatprep.subr.mxu0 0.0
      %5715 = vmatpush1.msra.mxu0 0.0
      %5716 = vmatprep.subr.mxu0 0.0
      %5717 = vmatpush1.msra.mxu0 0.0
      %5718 = vmatprep.subr.mxu0 0.0
      %5719 = vmatpush1.msra.mxu0 0.0
      %5720 = vmatprep.subr.mxu0 0.0
      %5721 = vmatpush1.msra.mxu0 0.0
      %5722 = vmatprep.subr.mxu0 0.0
      %5723 = vmatpush1.msra.mxu0 0.0
      %5724 = vmatprep.subr.mxu0 0.0
      %5725 = vmatpush1.msra.mxu0 0.0
      %5726 = vmatprep.subr.mxu0 0.0
      %5727 = vmatpush1.msra.mxu0 0.0
      %5728 = vmatprep.subr.mxu0 0.0
      %5729 = vmatpush1.msra.mxu0 0.0
      %5730 = vmatprep.subr.mxu0 0.0
      %5731 = vmatpush1.msra.mxu0 0.0
      %5732 = vmatprep.subr.mxu0 0.0
      %5733 = vmatpush1.msra.mxu0 0.0
      %5734 = vmatprep.subr.mxu0 0.0
      %5735 = vmatpush1.msra.mxu0 0.0
      %5736 = vmatprep.subr.mxu0 0.0
      %5737 = vmatpush1.msra.mxu0 0.0
      %5738 = vmatprep.subr.mxu0 0.0
      %5739 = vmatpush1.msra.mxu0 0.0
      %5740 = vmatprep.subr.mxu0 0.0
      %5741 = vmatpush1.msra.mxu0 0.0
      %5742 = vmatprep.subr.mxu0 0.0
      %5743 = vmatpush1.msra.mxu0 0.0
      %5744 = vmatprep.subr.mxu0 0.0
      %5745 = vmatpush1.msra.mxu0 0.0
      %5746 = vmatprep.subr.mxu0 0.0
      %5747 = vmatpush1.msra.mxu0 0.0
      %5748 = vmatprep.subr.mxu0 0.0
      %5749 = vmatpush1.msra.mxu0 0.0
      %5750 = vmatprep.subr.mxu0 0.0
      %5751 = vmatpush1.msra.mxu0 0.0
      %5752 = vmatprep.subr.mxu0 0.0
      %5753 = vmatpush1.msra.mxu0 0.0
      %5754 = vmatprep.subr.mxu0 0.0
      %5755 = vmatpush1.msra.mxu0 0.0
      %5756 = vmatprep.subr.mxu0 0.0
      %5757 = vmatpush1.msra.mxu0 0.0
      %5758 = vmatprep.subr.mxu0 0.0
      %5759 = vmatpush1.msra.mxu0 0.0
      %5760 = vmatprep.subr.mxu0 0.0
      %5761 = vmatpush1.msra.mxu0 0.0
      %5762 = vmatprep.subr.mxu0 0.0
      %5763 = vmatpush1.msra.mxu0 0.0
      %5764 = vmatprep.subr.mxu0 0.0
      %5765 = vmatpush1.msra.mxu0 0.0
      %5766 = vmatprep.subr.mxu0 0.0
      %5767 = vmatpush1.msra.mxu0 0.0
      %5768 = vmatprep.subr.mxu0 0.0
      %5769 = vmatpush1.msra.mxu0 0.0
      %5770 = vmatprep.subr.mxu0 0.0
      %5771 = vmatpush1.msra.mxu0 0.0
      %5772 = vmatprep.subr.mxu0 0.0
      %5773 = vmatpush1.msra.mxu0 0.0
      %5774 = vmatprep.mubr.f32.mxu0 0.0
      %5775 = vmatmul.mubr.f32.gmra.mrb[0].mxu0 %v5708
      %v5776 = vpop.f32.mrb[0].mxu0
      %v5777 = vadd.f32 0.0, %v5776
      %v5778 = vpop.f32.mrb[0].mxu0
      %5779 = vdwg.mxu0
      %v5780 = vadd.f32 %v5705, %v5777
      %v5781 = vxor.u32 %v5780, 2147483648
      %v5782 = vmul.f32 %v5781, 1.442695
      %v5783 = vpow.pop %v5782
      %v5784 = vadd.f32 %v5783, 1.0
      %v5785 = vrcp.pop %v5784
      %v5786 = vmul.f32 1.0, %v5785
      %v5787 = vtanh.pop %v5780
      %v5788 = vld [vmem:[#allocation3] sm:$0x1]
      %5790 = vrot.lane.b32.xlu0 %v5788, 16
      %v5791 = vpop.permute.xlu0 %5790
      %v5793 = vmul.f32 %v5786, %v5791
      %5795 = vrot.lane.b32.xlu0 %v5787, 96
      %v5796 = vpop.permute.xlu0 %5795
      %v5798 = vmul.f32 %v5786, %v5796
      %5800 = vrot.lane.b32.xlu0 %v5798, 16
      %v5801 = vpop.permute.xlu0 %5800
      %v5803 = vadd.f32 %v5793, %v5801
      %v5804 = vtanh.pop %v5803
      %5806 = vrot.lane.b32.xlu0 %v5804, 32
      %v5807 = vpop.permute.xlu0 %5806
      %v5809 = vmul.f32 %v5786, %v5807
      %5811 = vset.pattern.permute.xlu0 0
      %5812 = vperm.xlu0 %5811, %v5703
      %v5813 = vpop.permute.xlu0 %5812
      %v5816 = vlaneseq
      %v5817 = vshrl.u32 %v5816, 7
      %v5818 = vsub.s32 0, %v5817
      %v5819 = vrot.slane %v5809, %v5818
      %5820 = vrot.lane.b32.xlu0 %v5819, 80
      %v5821 = vpop.permute.xlu0 %5820
      %v5823 = vmul.f32 %v5813, %v5821
      %v5824 = vsub.f32 1.0, %v5703
      %5826 = vset.pattern.permute.xlu0 0
      %5827 = vperm.xlu0 %5826, %v5824
      %v5828 = vpop.permute.xlu0 %5827
      %v5830 = vmul.f32 %v5828, %v5706
      %v5831 = vadd.f32 %v5823, %v5830
      %5832 = vst.msk [vmem:[#allocation2] sm:$0x1] %vm1362, %v5831
      %v5834 = vlaneseq
      %v5835 = vshrl.u32 %v5834, 7
      %v5836 = vsub.s32 0, %v5835
      %v5837 = vrot.slane %v5803, %v5836
      %5838 = vrot.lane.b32.xlu0 %v5837, 112
      %v5839 = vpop.permute.xlu0 %5838
      %v5841 = vmul.f32 %v5813, %v5839
      %v5842 = vld [vmem:[#allocation3] sm:$0x1]
      %v5843 = vmul.f32 %v5828, %v5842
      %v5844 = vadd.f32 %v5841, %v5843
      %5845 = vst.msk [vmem:[#allocation3] sm:$0x1] %vm1362, %v5844
      %s5846 = scalar_lea.vmem [#allocation8], 15
      %5847 = vst.msk [vmem:[%s5846] sm:$0x1] %vm1362, %v5823
      %v5848 = vstv %s1229
      %vm5849 = vcmp.lt.s32.totalorder %v5848, %v1226
      %v5850 = vsel %vm5849, 1, 0
      %v5851 = vcvt.s32.f32 %v5850
      %v5852 = vld [vmem:[#allocation7] sm:$0x1]
      %v5853 = vld [vmem:[#allocation4] sm:$0x1]
      %v5855 = vsel %vm1236, %v5853, 0
      %5857 = vmatprep.subr.mxu0 0.0
      %5858 = vmatpush1.msra.mxu0 %v1223
      %5859 = vmatprep.subr.mxu0 0.0
      %5860 = vmatpush1.msra.mxu0 %v1224
      %5861 = vmatprep.subr.mxu0 0.0
      %5862 = vmatpush1.msra.mxu0 0.0
      %5863 = vmatprep.subr.mxu0 0.0
      %5864 = vmatpush1.msra.mxu0 0.0
      %5865 = vmatprep.subr.mxu0 0.0
      %5866 = vmatpush1.msra.mxu0 0.0
      %5867 = vmatprep.subr.mxu0 0.0
      %5868 = vmatpush1.msra.mxu0 0.0
      %5869 = vmatprep.subr.mxu0 0.0
      %5870 = vmatpush1.msra.mxu0 0.0
      %5871 = vmatprep.subr.mxu0 0.0
      %5872 = vmatpush1.msra.mxu0 0.0
      %5873 = vmatprep.subr.mxu0 0.0
      %5874 = vmatpush1.msra.mxu0 0.0
      %5875 = vmatprep.subr.mxu0 0.0
      %5876 = vmatpush1.msra.mxu0 0.0
      %5877 = vmatprep.subr.mxu0 0.0
      %5878 = vmatpush1.msra.mxu0 0.0
      %5879 = vmatprep.subr.mxu0 0.0
      %5880 = vmatpush1.msra.mxu0 0.0
      %5881 = vmatprep.subr.mxu0 0.0
      %5882 = vmatpush1.msra.mxu0 0.0
      %5883 = vmatprep.subr.mxu0 0.0
      %5884 = vmatpush1.msra.mxu0 0.0
      %5885 = vmatprep.subr.mxu0 0.0
      %5886 = vmatpush1.msra.mxu0 0.0
      %5887 = vmatprep.subr.mxu0 0.0
      %5888 = vmatpush1.msra.mxu0 0.0
      %5889 = vmatprep.subr.mxu0 0.0
      %5890 = vmatpush1.msra.mxu0 0.0
      %5891 = vmatprep.subr.mxu0 0.0
      %5892 = vmatpush1.msra.mxu0 0.0
      %5893 = vmatprep.subr.mxu0 0.0
      %5894 = vmatpush1.msra.mxu0 0.0
      %5895 = vmatprep.subr.mxu0 0.0
      %5896 = vmatpush1.msra.mxu0 0.0
      %5897 = vmatprep.subr.mxu0 0.0
      %5898 = vmatpush1.msra.mxu0 0.0
      %5899 = vmatprep.subr.mxu0 0.0
      %5900 = vmatpush1.msra.mxu0 0.0
      %5901 = vmatprep.subr.mxu0 0.0
      %5902 = vmatpush1.msra.mxu0 0.0
      %5903 = vmatprep.subr.mxu0 0.0
      %5904 = vmatpush1.msra.mxu0 0.0
      %5905 = vmatprep.subr.mxu0 0.0
      %5906 = vmatpush1.msra.mxu0 0.0
      %5907 = vmatprep.subr.mxu0 0.0
      %5908 = vmatpush1.msra.mxu0 0.0
      %5909 = vmatprep.subr.mxu0 0.0
      %5910 = vmatpush1.msra.mxu0 0.0
      %5911 = vmatprep.subr.mxu0 0.0
      %5912 = vmatpush1.msra.mxu0 0.0
      %5913 = vmatprep.subr.mxu0 0.0
      %5914 = vmatpush1.msra.mxu0 0.0
      %5915 = vmatprep.subr.mxu0 0.0
      %5916 = vmatpush1.msra.mxu0 0.0
      %5917 = vmatprep.subr.mxu0 0.0
      %5918 = vmatpush1.msra.mxu0 0.0
      %5919 = vmatprep.subr.mxu0 0.0
      %5920 = vmatpush1.msra.mxu0 0.0
      %5921 = vmatprep.mubr.f32.mxu0 0.0
      %5922 = vmatmul.mubr.f32.gmra.mrb[0].mxu0 %v5855
      %v5923 = vpop.f32.mrb[0].mxu0
      %v5924 = vadd.f32 0.0, %v5923
      %v5925 = vpop.f32.mrb[0].mxu0
      %5926 = vdwg.mxu0
      %v5927 = vadd.f32 %v5852, %v5924
      %v5928 = vxor.u32 %v5927, 2147483648
      %v5929 = vmul.f32 %v5928, 1.442695
      %v5930 = vpow.pop %v5929
      %v5931 = vadd.f32 %v5930, 1.0
      %v5932 = vrcp.pop %v5931
      %v5933 = vmul.f32 1.0, %v5932
      %v5934 = vtanh.pop %v5927
      %v5935 = vld [vmem:[#allocation5] sm:$0x1]
      %5937 = vrot.lane.b32.xlu0 %v5935, 16
      %v5938 = vpop.permute.xlu0 %5937
      %v5940 = vmul.f32 %v5933, %v5938
      %5942 = vrot.lane.b32.xlu0 %v5934, 96
      %v5943 = vpop.permute.xlu0 %5942
      %v5945 = vmul.f32 %v5933, %v5943
      %5947 = vrot.lane.b32.xlu0 %v5945, 16
      %v5948 = vpop.permute.xlu0 %5947
      %v5950 = vadd.f32 %v5940, %v5948
      %v5951 = vtanh.pop %v5950
      %5953 = vrot.lane.b32.xlu0 %v5951, 32
      %v5954 = vpop.permute.xlu0 %5953
      %v5956 = vmul.f32 %v5933, %v5954
      %5958 = vset.pattern.permute.xlu0 0
      %5959 = vperm.xlu0 %5958, %v5851
      %v5960 = vpop.permute.xlu0 %5959
      %v5963 = vlaneseq
      %v5964 = vshrl.u32 %v5963, 7
      %v5965 = vsub.s32 0, %v5964
      %v5966 = vrot.slane %v5956, %v5965
      %5967 = vrot.lane.b32.xlu0 %v5966, 80
      %v5968 = vpop.permute.xlu0 %5967
      %v5970 = vmul.f32 %v5960, %v5968
      %v5971 = vsub.f32 1.0, %v5851
      %5973 = vset.pattern.permute.xlu0 0
      %5974 = vperm.xlu0 %5973, %v5971
      %v5975 = vpop.permute.xlu0 %5974
      %v5977 = vmul.f32 %v5975, %v5853
      %v5978 = vadd.f32 %v5970, %v5977
      %5979 = vst.msk [vmem:[#allocation4] sm:$0x1] %vm1362, %v5978
      %v5981 = vlaneseq
      %v5982 = vshrl.u32 %v5981, 7
      %v5983 = vsub.s32 0, %v5982
      %v5984 = vrot.slane %v5950, %v5983
      %5985 = vrot.lane.b32.xlu0 %v5984, 112
      %v5986 = vpop.permute.xlu0 %5985
      %v5988 = vmul.f32 %v5960, %v5986
      %v5989 = vld [vmem:[#allocation5] sm:$0x1]
      %v5990 = vmul.f32 %v5975, %v5989
      %v5991 = vadd.f32 %v5988, %v5990
      %5992 = vst.msk [vmem:[#allocation5] sm:$0x1] %vm1362, %v5991
      %5993 = vst.msk [vmem:[#allocation9] sm:$0x1] %vm1362, %v5970
      %v5994 = vld [vmem:[#allocation8] sm:$0x1]
      %v5995 = vld [vmem:[#allocation8 + $0x1] sm:$0x1]
      %v5996 = vld [vmem:[#allocation8 + $0x2] sm:$0x1]
      %v5997 = vld [vmem:[#allocation8 + $0x3] sm:$0x1]
      %v5998 = vld [vmem:[#allocation8 + $0x4] sm:$0x1]
      %v5999 = vld [vmem:[#allocation8 + $0x5] sm:$0x1]
      %v6000 = vld [vmem:[#allocation8 + $0x6] sm:$0x1]
      %v6001 = vld [vmem:[#allocation8 + $0x7] sm:$0x1]
      %v6002 = vld [vmem:[#allocation8 + $0x8] sm:$0x1]
      %v6003 = vld [vmem:[#allocation8 + $0x9] sm:$0x1]
      %v6004 = vld [vmem:[#allocation8 + $0xa] sm:$0x1]
      %v6005 = vld [vmem:[#allocation8 + $0xb] sm:$0x1]
      %v6006 = vld [vmem:[#allocation8 + $0xc] sm:$0x1]
      %v6007 = vld [vmem:[#allocation8 + $0xd] sm:$0x1]
      %v6008 = vld [vmem:[#allocation8 + $0xe] sm:$0x1]
      %v6009 = vld [vmem:[#allocation8 + $0xf] sm:$0x1]
      %v6026 = vcombine.low %v5994, %v5995
      %v6027 = vcombine.low %v5996, %v5997
      %v6028 = vcombine.low %v5998, %v5999
      %v6029 = vcombine.low %v6000, %v6001
      %v6031 = vunpack.c.l.s4 1966171168
      %v6032 = vunpack.c.0.s8 %v6031
      %v6033 = vlaneseq
      %v6034 = vshrl.u32 %v6033, 7
      %v6035 = vsub.s32 %v6032, %v6034
      %v6036 = vrot.slane %v6026, %v6035
      %v6038 = vunpack.c.l.s4 1966171168
      %v6039 = vunpack.c.0.s8 %v6038
      %v6040 = vlaneseq
      %v6041 = vshrl.u32 %v6040, 7
      %v6042 = vsub.s32 %v6039, %v6041
      %v6043 = vrot.slane %v6027, %v6042
      %v6045 = vunpack.c.l.s4 1966171168
      %v6046 = vunpack.c.0.s8 %v6045
      %v6047 = vlaneseq
      %v6048 = vshrl.u32 %v6047, 7
      %v6049 = vsub.s32 %v6046, %v6048
      %v6050 = vrot.slane %v6028, %v6049
      %v6052 = vunpack.c.l.s4 1966171168
      %v6053 = vunpack.c.0.s8 %v6052
      %v6054 = vlaneseq
      %v6055 = vshrl.u32 %v6054, 7
      %v6056 = vsub.s32 %v6053, %v6055
      %v6057 = vrot.slane %v6029, %v6056
      %v6058 = vcombine.low %v6036, %v6043
      %v6059 = vcombine.low %v6050, %v6057
      %v6061 = vunpack.c.l.s4 1966171168
      %v6062 = vunpack.c.0.s8 %v6061
      %v6063 = vlaneseq
      %v6064 = vshrl.u32 %v6063, 7
      %v6065 = vsub.s32 %v6062, %v6064
      %v6066 = vrot.slane %v6058, %v6065
      %v6068 = vunpack.c.l.s4 1966171168
      %v6069 = vunpack.c.0.s8 %v6068
      %v6070 = vlaneseq
      %v6071 = vshrl.u32 %v6070, 7
      %v6072 = vsub.s32 %v6069, %v6071
      %v6073 = vrot.slane %v6059, %v6072
      %v6074 = vcombine.low %v6066, %v6073
      %v6075 = vcombine.low %v6002, %v6003
      %v6076 = vcombine.low %v6004, %v6005
      %v6077 = vcombine.low %v6006, %v6007
      %v6078 = vcombine.low %v6008, %v6009
      %v6080 = vunpack.c.l.s4 1966171168
      %v6081 = vunpack.c.0.s8 %v6080
      %v6082 = vlaneseq
      %v6083 = vshrl.u32 %v6082, 7
      %v6084 = vsub.s32 %v6081, %v6083
      %v6085 = vrot.slane %v6075, %v6084
      %v6087 = vunpack.c.l.s4 1966171168
      %v6088 = vunpack.c.0.s8 %v6087
      %v6089 = vlaneseq
      %v6090 = vshrl.u32 %v6089, 7
      %v6091 = vsub.s32 %v6088, %v6090
      %v6092 = vrot.slane %v6076, %v6091
      %v6094 = vunpack.c.l.s4 1966171168
      %v6095 = vunpack.c.0.s8 %v6094
      %v6096 = vlaneseq
      %v6097 = vshrl.u32 %v6096, 7
      %v6098 = vsub.s32 %v6095, %v6097
      %v6099 = vrot.slane %v6077, %v6098
      %v6101 = vunpack.c.l.s4 1966171168
      %v6102 = vunpack.c.0.s8 %v6101
      %v6103 = vlaneseq
      %v6104 = vshrl.u32 %v6103, 7
      %v6105 = vsub.s32 %v6102, %v6104
      %v6106 = vrot.slane %v6078, %v6105
      %v6107 = vcombine.low %v6085, %v6092
      %v6108 = vcombine.low %v6099, %v6106
      %v6110 = vunpack.c.l.s4 1966171168
      %v6111 = vunpack.c.0.s8 %v6110
      %v6112 = vlaneseq
      %v6113 = vshrl.u32 %v6112, 7
      %v6114 = vsub.s32 %v6111, %v6113
      %v6115 = vrot.slane %v6107, %v6114
      %v6117 = vunpack.c.l.s4 1966171168
      %v6118 = vunpack.c.0.s8 %v6117
      %v6119 = vlaneseq
      %v6120 = vshrl.u32 %v6119, 7
      %v6121 = vsub.s32 %v6118, %v6120
      %v6122 = vrot.slane %v6108, %v6121
      %v6123 = vcombine.low %v6115, %v6122
      %6126 = vst.msk [vmem:[%s457] sm:$0xff] %vm1236, %v6074
      %6127 = vst.msk [vmem:[%s457 + $0x8] sm:$0xff] %vm1236, %v6123
      %v6128 = vld [vmem:[#allocation9] sm:$0x1]
      %v6129 = vld [vmem:[#allocation9 + $0x1] sm:$0x1]
      %v6130 = vld [vmem:[#allocation9 + $0x2] sm:$0x1]
      %v6131 = vld [vmem:[#allocation9 + $0x3] sm:$0x1]
      %v6132 = vld [vmem:[#allocation9 + $0x4] sm:$0x1]
      %v6133 = vld [vmem:[#allocation9 + $0x5] sm:$0x1]
      %v6134 = vld [vmem:[#allocation9 + $0x6] sm:$0x1]
      %v6135 = vld [vmem:[#allocation9 + $0x7] sm:$0x1]
      %v6136 = vld [vmem:[#allocation9 + $0x8] sm:$0x1]
      %v6137 = vld [vmem:[#allocation9 + $0x9] sm:$0x1]
      %v6138 = vld [vmem:[#allocation9 + $0xa] sm:$0x1]
      %v6139 = vld [vmem:[#allocation9 + $0xb] sm:$0x1]
      %v6140 = vld [vmem:[#allocation9 + $0xc] sm:$0x1]
      %v6141 = vld [vmem:[#allocation9 + $0xd] sm:$0x1]
      %v6142 = vld [vmem:[#allocation9 + $0xe] sm:$0x1]
      %v6143 = vld [vmem:[#allocation9 + $0xf] sm:$0x1]
      %v6160 = vcombine.low %v6128, %v6129
      %v6161 = vcombine.low %v6130, %v6131
      %v6162 = vcombine.low %v6132, %v6133
      %v6163 = vcombine.low %v6134, %v6135
      %v6165 = vunpack.c.l.s4 1966171168
      %v6166 = vunpack.c.0.s8 %v6165
      %v6167 = vlaneseq
      %v6168 = vshrl.u32 %v6167, 7
      %v6169 = vsub.s32 %v6166, %v6168
      %v6170 = vrot.slane %v6160, %v6169
      %v6172 = vunpack.c.l.s4 1966171168
      %v6173 = vunpack.c.0.s8 %v6172
      %v6174 = vlaneseq
      %v6175 = vshrl.u32 %v6174, 7
      %v6176 = vsub.s32 %v6173, %v6175
      %v6177 = vrot.slane %v6161, %v6176
      %v6179 = vunpack.c.l.s4 1966171168
      %v6180 = vunpack.c.0.s8 %v6179
      %v6181 = vlaneseq
      %v6182 = vshrl.u32 %v6181, 7
      %v6183 = vsub.s32 %v6180, %v6182
      %v6184 = vrot.slane %v6162, %v6183
      %v6186 = vunpack.c.l.s4 1966171168
      %v6187 = vunpack.c.0.s8 %v6186
      %v6188 = vlaneseq
      %v6189 = vshrl.u32 %v6188, 7
      %v6190 = vsub.s32 %v6187, %v6189
      %v6191 = vrot.slane %v6163, %v6190
      %v6192 = vcombine.low %v6170, %v6177
      %v6193 = vcombine.low %v6184, %v6191
      %v6195 = vunpack.c.l.s4 1966171168
      %v6196 = vunpack.c.0.s8 %v6195
      %v6197 = vlaneseq
      %v6198 = vshrl.u32 %v6197, 7
      %v6199 = vsub.s32 %v6196, %v6198
      %v6200 = vrot.slane %v6192, %v6199
      %v6202 = vunpack.c.l.s4 1966171168
      %v6203 = vunpack.c.0.s8 %v6202
      %v6204 = vlaneseq
      %v6205 = vshrl.u32 %v6204, 7
      %v6206 = vsub.s32 %v6203, %v6205
      %v6207 = vrot.slane %v6193, %v6206
      %v6208 = vcombine.low %v6200, %v6207
      %v6209 = vcombine.low %v6136, %v6137
      %v6210 = vcombine.low %v6138, %v6139
      %v6211 = vcombine.low %v6140, %v6141
      %v6212 = vcombine.low %v6142, %v6143
      %v6214 = vunpack.c.l.s4 1966171168
      %v6215 = vunpack.c.0.s8 %v6214
      %v6216 = vlaneseq
      %v6217 = vshrl.u32 %v6216, 7
      %v6218 = vsub.s32 %v6215, %v6217
      %v6219 = vrot.slane %v6209, %v6218
      %v6221 = vunpack.c.l.s4 1966171168
      %v6222 = vunpack.c.0.s8 %v6221
      %v6223 = vlaneseq
      %v6224 = vshrl.u32 %v6223, 7
      %v6225 = vsub.s32 %v6222, %v6224
      %v6226 = vrot.slane %v6210, %v6225
      %v6228 = vunpack.c.l.s4 1966171168
      %v6229 = vunpack.c.0.s8 %v6228
      %v6230 = vlaneseq
      %v6231 = vshrl.u32 %v6230, 7
      %v6232 = vsub.s32 %v6229, %v6231
      %v6233 = vrot.slane %v6211, %v6232
      %v6235 = vunpack.c.l.s4 1966171168
      %v6236 = vunpack.c.0.s8 %v6235
      %v6237 = vlaneseq
      %v6238 = vshrl.u32 %v6237, 7
      %v6239 = vsub.s32 %v6236, %v6238
      %v6240 = vrot.slane %v6212, %v6239
      %v6241 = vcombine.low %v6219, %v6226
      %v6242 = vcombine.low %v6233, %v6240
      %v6244 = vunpack.c.l.s4 1966171168
      %v6245 = vunpack.c.0.s8 %v6244
      %v6246 = vlaneseq
      %v6247 = vshrl.u32 %v6246, 7
      %v6248 = vsub.s32 %v6245, %v6247
      %v6249 = vrot.slane %v6241, %v6248
      %v6251 = vunpack.c.l.s4 1966171168
      %v6252 = vunpack.c.0.s8 %v6251
      %v6253 = vlaneseq
      %v6254 = vshrl.u32 %v6253, 7
      %v6255 = vsub.s32 %v6252, %v6254
      %v6256 = vrot.slane %v6242, %v6255
      %v6257 = vcombine.low %v6249, %v6256
      %6260 = vst.msk [vmem:[%s468] sm:$0xff] %vm1236, %v6208
      %6261 = vst.msk [vmem:[%s468 + $0x8] sm:$0xff] %vm1236, %v6257
      %s6262 = smul.u32 2, %s27
      %p6263 = scmp.lt.s32.totalorder %s26, 1
      %s6264 = scalar_select %p6263, %s26, 1
      %p6265 = scmp.lt.s32.totalorder %s6262, 1
      %s6266 = scalar_select %p6265, %s6262, 1
      %s6267 = smul.addr %s6264, 2
      %s6268 = sadd.s32 %s6266, %s6267
      %s6269 = smul.addr %s6268, 8
      %s6270 = scalar_lea.vmem %s9, %s6269
      %s6271 = ssub.s32 0, %s27
      %s6272 = smul.u32 2, %s6271
      %p6273 = scmp.lt.s32.totalorder %s26, 1
      %s6274 = scalar_select %p6273, %s26, 1
      %p6275 = scmp.lt.s32.totalorder %s6272, 1
      %s6276 = scalar_select %p6275, %s6272, 1
      %s6277 = smul.addr %s6274, 2
      %s6278 = sadd.s32 %s6276, %s6277
      %s6279 = smul.addr %s6278, 8
      %s6280 = scalar_lea.vmem %s10, %s6279
      // Predicated region
      $region61: #{encoder_forward.3} parent=55 // pred_check
        %p6281 = pneg %p259
      $region62: #{encoder_forward.3} parent=55 // pred_check_branch
        %6283 = sbr.rel (%p6281) target = $region64
      $region63: #{encoder_forward.3} parent=55 // pred_region
        %s6284 = smul.u32 2, %s27
      $region64: #{encoder_forward.3} parent=55 // pred_fallthru
        _
      // Predicated region
      $region65: #{encoder_forward.3} parent=55 // pred_check
        %p6285 = pneg %p289
      $region66: #{encoder_forward.3} parent=55 // pred_check_branch
        %6287 = sbr.rel (%p6285) target = $region68
      $region67: #{encoder_forward.3} parent=55 // pred_region
        %s6288 = ssub.s32 0, %s27
        %s6289 = smul.u32 2, %s6288
      $region68: #{encoder_forward.3} parent=55 // pred_fallthru
        _
    $region56: #{encoder_forward.3} parent=5 // pred_fallthru
      _
    %p6290 = scmp.le.s32.totalorder 2, %s17
    // Predicated region
    $region69: #{encoder_forward.3} parent=5 // pred_check
      %p6291 = pneg %p6290
    $region70: #{encoder_forward.3} parent=5 // pred_check_branch
      %6293 = sbr.rel (%p6291) target = $region72
    $region71: #{encoder_forward.3} parent=5 // pred_region
      %s6294 = ssub.s32 %s17, 2
      // Predicated region
      $region73: #{encoder_forward.3} parent=71 // pred_check
        %p6295 = pneg %p265
      $region74: #{encoder_forward.3} parent=71 // pred_check_branch
        %6297 = sbr.rel (%p6295) target = $region76
      $region75: #{encoder_forward.3} parent=71 // pred_region
        %s6298 = smul.u32 2, %s29
        %p6299 = scmp.lt.s32.totalorder %s28, 1
        %s6300 = scalar_select %p6299, %s28, 1
        %p6301 = scmp.lt.s32.totalorder %s6298, 1
        %s6302 = scalar_select %p6301, %s6298, 1
        %s6303 = smul.addr %s6300, 2
        %s6304 = sadd.s32 %s6302, %s6303
        %s6305 = smul.addr %s6304, 8
        %s6306 = scalar_lea.vmem %s9, %s6305
      $region76: #{encoder_forward.3} parent=71 // pred_fallthru
        _
      // Predicated region
      $region77: #{encoder_forward.3} parent=71 // pred_check
        %p6307 = pneg %p295
      $region78: #{encoder_forward.3} parent=71 // pred_check_branch
        %6309 = sbr.rel (%p6307) target = $region80
      $region79: #{encoder_forward.3} parent=71 // pred_region
        %s6310 = ssub.s32 0, %s29
        %s6311 = smul.u32 2, %s6310
        %p6312 = scmp.lt.s32.totalorder %s28, 1
        %s6313 = scalar_select %p6312, %s28, 1
        %p6314 = scmp.lt.s32.totalorder %s6311, 1
        %s6315 = scalar_select %p6314, %s6311, 1
        %s6316 = smul.addr %s6313, 2
        %s6317 = sadd.s32 %s6315, %s6316
        %s6318 = smul.addr %s6317, 8
        %s6319 = scalar_lea.vmem %s10, %s6318
      $region80: #{encoder_forward.3} parent=71 // pred_fallthru
        _
    $region72: #{encoder_forward.3} parent=5 // pred_fallthru
      _
  $region6: #{encoder_forward.3} parent=0 // loop_footer
    %s21 = sadd.s32 1, %s17
  $region7: #{encoder_forward.3} parent=0 // loop_footer_branch
    %16 = sbr.rel target = $region3
  $region8: #{encoder_forward.3} parent=0 // loop_exit
    _

</llo_original>
